<compile_context>
chip_gen: v6e
topology: v6e:2x2x1
jax: 0.10.0
libtpu: 0.0.40
codegen_flags: <defaults>
</compile_context>

<pallas_src>
import jax
import jax.numpy as jnp
import numpy as np
from jax import lax
from jax.experimental import pallas as pl
from jax.experimental.pallas import tpu as pltpu

K = 33          # conv1x33 kernel size (padding=1, bias=False)
EPS = 1e-5      # BatchNorm eps
LANE = 128      # TPU lane width


def _block_kernel(x_ref, w1_ref, w2_ref, fw1_ref, fw2_ref, vec_ref, out_ref):
    B, C, L = x_ref.shape
    L2p = out_ref.shape[-1]          # lane-dense (padded) output length
    L1 = L - 30                      # true length after conv1
    L2 = L - 60                      # true length after conv2
    L1w = L2p + 32                   # working conv1 width (covers conv2 reads)
    Lxw = L1w + 32                   # working padded-x width
    pad_r = Lxw - 1 - L              # right zero pad (>= 3)

    f32 = jnp.float32
    fw1 = fw1_ref[...]
    fw2 = fw2_ref[...]
    b1 = vec_ref[:, 0:1]             # bn1 shift (scale folded into w1)
    b2 = vec_ref[:, 1:2]             # bn2 shift (scale folded into w2)
    fb1 = vec_ref[:, 2:3]            # fc linear-1 bias
    sfc = vec_ref[:, 3:4]            # fc BN scale
    bfc = vec_ref[:, 4:5]            # fc BN shift
    fb2 = vec_ref[:, 5:6]            # fc linear-2 bias

    valid1 = lax.broadcasted_iota(jnp.int32, (1, L1w), 1) < L1
    valid2 = (lax.broadcasted_iota(jnp.int32, (1, L2p), 1) < L2).astype(f32)
    inv_l2 = 1.0 / L2

    @pl.loop(0, B)
    def _per_sample(b):
        xs = x_ref[b].astype(f32)                              # (C, L)
        # conv1's pad=1 on the left plus the right zeros for the working
        # width, built in registers (a few vregs only).
        xp = jnp.concatenate(
            [jnp.zeros((C, 1), f32), xs, jnp.zeros((C, pad_r), f32)],
            axis=-1)                                           # (C, Lxw)

        # ---- conv1 (BN1 scale pre-folded): K accumulated small dots ----
        h1 = jnp.zeros((C, L1w), f32)
        for k in range(K):
            h1 = h1 + jnp.dot(w1_ref[k], xp[:, k:k + L1w],
                              preferred_element_type=f32)
        # BN1 shift + ReLU; zero columns >= L1 so conv2 sees the correct
        # right-hand zero padding of the true-length h1.
        h1 = jnp.where(valid1, jnp.maximum(h1 + b1, 0.0), 0.0)

        # ---- conv2 (BN2 scale pre-folded), pad=1 on the left ----
        h1p = jnp.concatenate([jnp.zeros((C, 1), f32), h1], axis=-1)
        h2 = jnp.zeros((C, L2p), f32)
        for k in range(K):
            h2 = h2 + jnp.dot(w2_ref[k], h1p[:, k:k + L2p],
                              preferred_element_type=f32)
        h2 = h2 + b2                                           # BN2, no ReLU

        # ---- Shrinkage: GAP(|h2|) over the true L2 columns + tiny FC ----
        avg = jnp.sum(jnp.abs(h2) * valid2, axis=1, keepdims=True) * inv_l2
        z = jnp.dot(fw1, avg, preferred_element_type=f32) + fb1
        z = jnp.maximum(z * sfc + bfc, 0.0)                    # BN + ReLU
        z = jnp.dot(fw2, z, preferred_element_type=f32) + fb2
        t = avg * (1.0 / (1.0 + jnp.exp(-z)))                  # (C, 1)

        # ---- new_soft_thresholding + residual add + ReLU ----
        thr = h2 + 0.5 * (jnp.sqrt((h2 - t) ** 2 + 0.003)
                          - jnp.sqrt((h2 + t) ** 2 + 0.003))
        out_ref[b] = jnp.maximum(xp[:, 1:1 + L2p] + thr, 0.0)


def _round_up(v, m):
    return ((v + m - 1) // m) * m


def basic_block_1x33(x, p, *, block_batch=32):
    N, C, L = x.shape
    if L <= 60:
        raise ValueError("need L > 60 so the post-conv length is positive")
    L2 = L - 60
    L2p = _round_up(L2, LANE)        # lane-dense output length
    f32 = jnp.float32

    # Batch chunking: fewer, fatter grid steps (amortize per-step pipeline
    # overhead) but always >= 2 and an even number of steps when N > 1 so
    # the "parallel" grid axis can be split across both v7x TensorCores.
    if N <= 1:
        nsteps, B = 1, max(N, 1)
    else:
        nsteps = max(2, -(-N // block_batch))
        if nsteps % 2:
            nsteps += 1
        B = -(-N // nsteps)
    Np = B * nsteps

    xw = x.astype(f32)
    if Np != N:
        xw = jnp.pad(xw, ((0, Np - N), (0, 0), (0, 0)))

    # Fold inference BatchNorm into scale/shift; conv BN scales go straight
    # into the conv weights.
    def fold(g, b, rm, rv):
        s = g / jnp.sqrt(rv + EPS)
        return s, b - rm * s

    s1, b1 = fold(p['g1'], p['b1'], p['rm1'], p['rv1'])
    s2, b2 = fold(p['g2'], p['b2'], p['rm2'], p['rv2'])
    sfc, bfc = fold(p['gfc'], p['bfc'], p['rmfc'], p['rvfc'])

    # (K, C_out, C_in) conv taps with the BN scale folded in.
    w1k = (jnp.transpose(p['w1'], (2, 0, 1)) * s1[None, :, None]).astype(f32)
    w2k = (jnp.transpose(p['w2'], (2, 0, 1)) * s2[None, :, None]).astype(f32)
    # One consolidated (C, 6) slab for all per-channel shift/bias vectors.
    vecs = jnp.stack([b1, b2, p['fb1'], sfc, bfc, p['fb2']],
                     axis=1).astype(f32)

    grid_spec = pltpu.PrefetchScalarGridSpec(
        num_scalar_prefetch=0,
        grid=(nsteps,),
        in_specs=[
            pl.BlockSpec((B, C, L), lambda n: (n, 0, 0)),        # x chunk
            pl.BlockSpec((K, C, C), lambda n: (0, 0, 0)),        # conv1 taps
            pl.BlockSpec((K, C, C), lambda n: (0, 0, 0)),        # conv2 taps
            pl.BlockSpec((C, C), lambda n: (0, 0)),              # fc W1
            pl.BlockSpec((C, C), lambda n: (0, 0)),              # fc W2
            pl.BlockSpec((C, 6), lambda n: (0, 0)),              # shifts/biases
        ],
        out_specs=pl.BlockSpec((B, C, L2p), lambda n: (n, 0, 0)),
    )

    out = pl.pallas_call(
        _block_kernel,
        out_shape=jax.ShapeDtypeStruct((Np, C, L2p), f32),
        grid_spec=grid_spec,
        compiler_params=pltpu.CompilerParams(
            dimension_semantics=("parallel",)),
    )(xw, w1k, w2k, p['fw1'].astype(f32), p['fw2'].astype(f32), vecs)
    return out[:N, :, :L2]


def init_params(key, C):
    ks = jax.random.split(key, 20)
    n = lambda k, shp, s: jax.random.normal(k, shp, jnp.float32) * s
    u = lambda k, shp: jax.random.uniform(k, shp, jnp.float32, 0.5, 1.5)
    return dict(
        w1=n(ks[0], (C, C, K), 0.05),
        g1=u(ks[1], (C,)), b1=n(ks[2], (C,), 0.1),
        rm1=n(ks[3], (C,), 0.1), rv1=u(ks[4], (C,)),
        w2=n(ks[5], (C, C, K), 0.05),
        g2=u(ks[6], (C,)), b2=n(ks[7], (C,), 0.1),
        rm2=n(ks[8], (C,), 0.1), rv2=u(ks[9], (C,)),
        fw1=n(ks[10], (C, C), 0.3), fb1=n(ks[11], (C,), 0.1),
        gfc=u(ks[12], (C,)), bfc=n(ks[13], (C,), 0.1),
        rmfc=n(ks[14], (C,), 0.1), rvfc=u(ks[15], (C,)),
        fw2=n(ks[16], (C, C), 0.3), fb2=n(ks[17], (C,), 0.1),
    )


def reference(x, p):
    """Pure-JAX reference mirroring the PyTorch forward (eval-mode BN)."""
    def conv(h, w):
        return jax.lax.conv_general_dilated(
            h, w, window_strides=(1,), padding=[(1, 1)],
            dimension_numbers=('NCH', 'OIH', 'NCH'))

    def bn(h, g, b, rm, rv):
        s = (g / jnp.sqrt(rv + EPS))
        return (h - rm[None, :, None]) * s[None, :, None] + b[None, :, None]

    out = jnp.maximum(bn(conv(x, p['w1']), p['g1'], p['b1'], p['rm1'], p['rv1']), 0.0)
    out = bn(conv(out, p['w2']), p['g2'], p['b2'], p['rm2'], p['rv2'])

    avg = jnp.mean(jnp.abs(out), axis=2)                     # (N, C)
    z = avg @ p['fw1'].T + p['fb1']
    z = (z - p['rmfc']) * (p['gfc'] / jnp.sqrt(p['rvfc'] + EPS)) + p['bfc']
    z = jnp.maximum(z, 0.0)
    z = z @ p['fw2'].T + p['fb2']
    t = (avg * jax.nn.sigmoid(z))[:, :, None]
    out = out + 0.5 * (jnp.sqrt((out - t) ** 2 + 0.003)
                       - jnp.sqrt((out + t) ** 2 + 0.003))
    L2 = out.shape[2]
    return jnp.maximum(x[:, :, :L2] + out, 0.0)


if __name__ == "__main__":
    key = jax.random.PRNGKey(0)
    kx, kp = jax.random.split(key)

    C = 8
    params = init_params(kp, C)

    # Config 1: L chosen so the true output length (L-60 = 128) is already
    # lane-dense; 2 parallel grid steps of 4 samples each.
    N, L = 8, 188
    x = jax.random.normal(kx, (N, C, L), jnp.float32)
    out = jax.block_until_ready(basic_block_1x33(x, params))
    ref = reference(x, params)
    np.testing.assert_allclose(np.asarray(out), np.asarray(ref),
                               rtol=2e-4, atol=2e-4)

    # Config 2: true output length 90 is padded to 128 inside the kernel and
    # sliced back in the wrapper; N=3 also exercises the batch-padding path
    # (2 grid steps of 2, one padded sample).
    N2, L2in = 3, 150
    x2 = jax.random.normal(jax.random.fold_in(kx, 1), (N2, C, L2in),
                           jnp.float32)
    out2 = jax.block_until_ready(basic_block_1x33(x2, params))
    np.testing.assert_allclose(np.asarray(out2),
                               np.asarray(reference(x2, params)),
                               rtol=2e-4, atol=2e-4)

    print("KERNEL_OK")
</pallas_src>

<mosaic_0001>
module attributes {stable_mosaic.version = 11 : i64} {
  func.func @_block_kernel(%arg0: i32, %arg1: memref<4x8x188xf32, #tpu.memory_space<vmem>>, %arg2: memref<33x8x8xf32, #tpu.memory_space<vmem>>, %arg3: memref<33x8x8xf32, #tpu.memory_space<vmem>>, %arg4: memref<8x8xf32, #tpu.memory_space<vmem>>, %arg5: memref<8x8xf32, #tpu.memory_space<vmem>>, %arg6: memref<8x6xf32, #tpu.memory_space<vmem>>, %arg7: memref<4x8x128xf32, #tpu.memory_space<vmem>>) attributes {dimension_semantics = [#tpu.dimension_semantics<parallel>], iteration_bounds = array<i64: 2>, scalar_prefetch = 0 : i64, scratch_operands = 0 : i64, tpu.core_type = #tpu.core_type<tc>, window_params = [{transform_indices = @transform_0, window_bounds = array<i64: 4, 8, 188>}, {pipeline_mode = #tpu.pipeline_mode<synchronous>, transform_indices = @transform_1, window_bounds = array<i64: 33, 8, 8>}, {pipeline_mode = #tpu.pipeline_mode<synchronous>, transform_indices = @transform_2, window_bounds = array<i64: 33, 8, 8>}, {pipeline_mode = #tpu.pipeline_mode<synchronous>, transform_indices = @transform_3, window_bounds = array<i64: 8, 8>}, {pipeline_mode = #tpu.pipeline_mode<synchronous>, transform_indices = @transform_4, window_bounds = array<i64: 8, 8>}, {pipeline_mode = #tpu.pipeline_mode<synchronous>, transform_indices = @transform_5, window_bounds = array<i64: 8, 6>}, {transform_indices = @transform_6, window_bounds = array<i64: 4, 8, 128>}]} {
    %c0 = arith.constant 0 : index
    %c0_0 = arith.constant 0 : index
    %0 = vector.load %arg4[%c0, %c0_0] : memref<8x8xf32, #tpu.memory_space<vmem>>, vector<8x8xf32>
    %c0_1 = arith.constant 0 : index
    %c0_2 = arith.constant 0 : index
    %1 = vector.load %arg5[%c0_1, %c0_2] : memref<8x8xf32, #tpu.memory_space<vmem>>, vector<8x8xf32>
    %c0_3 = arith.constant 0 : index
    %c0_4 = arith.constant 0 : index
    %2 = vector.load %arg6[%c0_3, %c0_4] : memref<8x6xf32, #tpu.memory_space<vmem>>, vector<8x1xf32>
    %c0_5 = arith.constant 0 : index
    %c1 = arith.constant 1 : index
    %3 = vector.load %arg6[%c0_5, %c1] : memref<8x6xf32, #tpu.memory_space<vmem>>, vector<8x1xf32>
    %c0_6 = arith.constant 0 : index
    %c2 = arith.constant 2 : index
    %4 = vector.load %arg6[%c0_6, %c2] : memref<8x6xf32, #tpu.memory_space<vmem>>, vector<8x1xf32>
    %c0_7 = arith.constant 0 : index
    %c3 = arith.constant 3 : index
    %5 = vector.load %arg6[%c0_7, %c3] : memref<8x6xf32, #tpu.memory_space<vmem>>, vector<8x1xf32>
    %c0_8 = arith.constant 0 : index
    %c4 = arith.constant 4 : index
    %6 = vector.load %arg6[%c0_8, %c4] : memref<8x6xf32, #tpu.memory_space<vmem>>, vector<8x1xf32>
    %c0_9 = arith.constant 0 : index
    %c5 = arith.constant 5 : index
    %7 = vector.load %arg6[%c0_9, %c5] : memref<8x6xf32, #tpu.memory_space<vmem>>, vector<8x1xf32>
    %8 = tpu.iota {dimensions = array<i32: 1>} : vector<1x160xi32>
    %c158_i32 = arith.constant 158 : i32
    %9 = vector.broadcast %c158_i32 : i32 to vector<1x160xi32>
    %10 = arith.cmpi slt, %8, %9 : vector<1x160xi32>
    %11 = tpu.iota {dimensions = array<i32: 1>} : vector<1x128xi32>
    %c128_i32 = arith.constant 128 : i32
    %12 = vector.broadcast %c128_i32 : i32 to vector<1x128xi32>
    %13 = arith.cmpi slt, %11, %12 : vector<1x128xi32>
    %14 = arith.extui %13 : vector<1x128xi1> to vector<1x128xi32>
    %15 = arith.sitofp %14 : vector<1x128xi32> to vector<1x128xf32>
    %c0_i32 = arith.constant 0 : i32
    %c4_i32 = arith.constant 4 : i32
    %16 = arith.addi %c0_i32, %c4_i32 : i32
    %c1_i32 = arith.constant 1 : i32
    scf.for %arg8 = %c0_i32 to %16 step %c1_i32  : i32 {
      %c1_i32_11 = arith.constant 1 : i32
      %17 = arith.muli %arg8, %c1_i32_11 : i32
      %c0_i32_12 = arith.constant 0 : i32
      %18 = arith.addi %c0_i32_12, %17 : i32
      %19 = arith.index_cast %18 : i32 to index
      %c0_13 = arith.constant 0 : index
      %c0_14 = arith.constant 0 : index
      %20 = vector.load %arg1[%19, %c0_13, %c0_14] : memref<4x8x188xf32, #tpu.memory_space<vmem>>, vector<1x8x188xf32>
      %21 = vector.shape_cast %20 : vector<1x8x188xf32> to vector<8x188xf32>
      %cst = arith.constant 0.000000e+00 : f32
      %22 = vector.broadcast %cst : f32 to vector<8x1xf32>
      %cst_15 = arith.constant 0.000000e+00 : f32
      %23 = vector.broadcast %cst_15 : f32 to vector<8x3xf32>
      %24 = tpu.concatenate %22, %21, %23 in 1 : vector<8x1xf32>, vector<8x188xf32>, vector<8x3xf32> -> vector<8x192xf32>
      %cst_16 = arith.constant 0.000000e+00 : f32
      %25 = vector.broadcast %cst_16 : f32 to vector<8x160xf32>
      %c0_17 = arith.constant 0 : index
      %c0_18 = arith.constant 0 : index
      %c0_19 = arith.constant 0 : index
      %26 = vector.load %arg2[%c0_17, %c0_18, %c0_19] : memref<33x8x8xf32, #tpu.memory_space<vmem>>, vector<1x8x8xf32>
      %27 = vector.shape_cast %26 : vector<1x8x8xf32> to vector<8x8xf32>
      %28 = vector.extract_strided_slice %24 {offsets = [0, 0], sizes = [8, 160], strides = [1, 1]} : vector<8x192xf32> to vector<8x160xf32>
      %cst_20 = arith.constant dense<0.000000e+00> : vector<8x160xf32>
      %29 = tpu.matmul %27, %28, %cst_20 {dimension_numbers = #tpu.dot_dimension_numbers<[1], [0], [0], [1], [0, 0, 1, 1], [], []>} : vector<8x8xf32>, vector<8x160xf32>, vector<8x160xf32> -> vector<8x160xf32>
      %30 = arith.addf %25, %29 : vector<8x160xf32>
      %c1_21 = arith.constant 1 : index
      %c0_22 = arith.constant 0 : index
      %c0_23 = arith.constant 0 : index
      %31 = vector.load %arg2[%c1_21, %c0_22, %c0_23] : memref<33x8x8xf32, #tpu.memory_space<vmem>>, vector<1x8x8xf32>
      %32 = vector.shape_cast %31 : vector<1x8x8xf32> to vector<8x8xf32>
      %33 = vector.extract_strided_slice %24 {offsets = [0, 1], sizes = [8, 160], strides = [1, 1]} : vector<8x192xf32> to vector<8x160xf32>
      %cst_24 = arith.constant dense<0.000000e+00> : vector<8x160xf32>
      %34 = tpu.matmul %32, %33, %cst_24 {dimension_numbers = #tpu.dot_dimension_numbers<[1], [0], [0], [1], [0, 0, 1, 1], [], []>} : vector<8x8xf32>, vector<8x160xf32>, vector<8x160xf32> -> vector<8x160xf32>
      %35 = arith.addf %30, %34 : vector<8x160xf32>
      %c2_25 = arith.constant 2 : index
      %c0_26 = arith.constant 0 : index
      %c0_27 = arith.constant 0 : index
      %36 = vector.load %arg2[%c2_25, %c0_26, %c0_27] : memref<33x8x8xf32, #tpu.memory_space<vmem>>, vector<1x8x8xf32>
      %37 = vector.shape_cast %36 : vector<1x8x8xf32> to vector<8x8xf32>
      %38 = vector.extract_strided_slice %24 {offsets = [0, 2], sizes = [8, 160], strides = [1, 1]} : vector<8x192xf32> to vector<8x160xf32>
      %cst_28 = arith.constant dense<0.000000e+00> : vector<8x160xf32>
      %39 = tpu.matmul %37, %38, %cst_28 {dimension_numbers = #tpu.dot_dimension_numbers<[1], [0], [0], [1], [0, 0, 1, 1], [], []>} : vector<8x8xf32>, vector<8x160xf32>, vector<8x160xf32> -> vector<8x160xf32>
      %40 = arith.addf %35, %39 : vector<8x160xf32>
      %c3_29 = arith.constant 3 : index
      %c0_30 = arith.constant 0 : index
      %c0_31 = arith.constant 0 : index
      %41 = vector.load %arg2[%c3_29, %c0_30, %c0_31] : memref<33x8x8xf32, #tpu.memory_space<vmem>>, vector<1x8x8xf32>
      %42 = vector.shape_cast %41 : vector<1x8x8xf32> to vector<8x8xf32>
      %43 = vector.extract_strided_slice %24 {offsets = [0, 3], sizes = [8, 160], strides = [1, 1]} : vector<8x192xf32> to vector<8x160xf32>
      %cst_32 = arith.constant dense<0.000000e+00> : vector<8x160xf32>
      %44 = tpu.matmul %42, %43, %cst_32 {dimension_numbers = #tpu.dot_dimension_numbers<[1], [0], [0], [1], [0, 0, 1, 1], [], []>} : vector<8x8xf32>, vector<8x160xf32>, vector<8x160xf32> -> vector<8x160xf32>
      %45 = arith.addf %40, %44 : vector<8x160xf32>
      %c4_33 = arith.constant 4 : index
      %c0_34 = arith.constant 0 : index
      %c0_35 = arith.constant 0 : index
      %46 = vector.load %arg2[%c4_33, %c0_34, %c0_35] : memref<33x8x8xf32, #tpu.memory_space<vmem>>, vector<1x8x8xf32>
      %47 = vector.shape_cast %46 : vector<1x8x8xf32> to vector<8x8xf32>
      %48 = vector.extract_strided_slice %24 {offsets = [0, 4], sizes = [8, 160], strides = [1, 1]} : vector<8x192xf32> to vector<8x160xf32>
      %cst_36 = arith.constant dense<0.000000e+00> : vector<8x160xf32>
      %49 = tpu.matmul %47, %48, %cst_36 {dimension_numbers = #tpu.dot_dimension_numbers<[1], [0], [0], [1], [0, 0, 1, 1], [], []>} : vector<8x8xf32>, vector<8x160xf32>, vector<8x160xf32> -> vector<8x160xf32>
      %50 = arith.addf %45, %49 : vector<8x160xf32>
      %c5_37 = arith.constant 5 : index
      %c0_38 = arith.constant 0 : index
      %c0_39 = arith.constant 0 : index
      %51 = vector.load %arg2[%c5_37, %c0_38, %c0_39] : memref<33x8x8xf32, #tpu.memory_space<vmem>>, vector<1x8x8xf32>
      %52 = vector.shape_cast %51 : vector<1x8x8xf32> to vector<8x8xf32>
      %53 = vector.extract_strided_slice %24 {offsets = [0, 5], sizes = [8, 160], strides = [1, 1]} : vector<8x192xf32> to vector<8x160xf32>
      %cst_40 = arith.constant dense<0.000000e+00> : vector<8x160xf32>
      %54 = tpu.matmul %52, %53, %cst_40 {dimension_numbers = #tpu.dot_dimension_numbers<[1], [0], [0], [1], [0, 0, 1, 1], [], []>} : vector<8x8xf32>, vector<8x160xf32>, vector<8x160xf32> -> vector<8x160xf32>
      %55 = arith.addf %50, %54 : vector<8x160xf32>
      %c6 = arith.constant 6 : index
      %c0_41 = arith.constant 0 : index
      %c0_42 = arith.constant 0 : index
      %56 = vector.load %arg2[%c6, %c0_41, %c0_42] : memref<33x8x8xf32, #tpu.memory_space<vmem>>, vector<1x8x8xf32>
      %57 = vector.shape_cast %56 : vector<1x8x8xf32> to vector<8x8xf32>
      %58 = vector.extract_strided_slice %24 {offsets = [0, 6], sizes = [8, 160], strides = [1, 1]} : vector<8x192xf32> to vector<8x160xf32>
      %cst_43 = arith.constant dense<0.000000e+00> : vector<8x160xf32>
      %59 = tpu.matmul %57, %58, %cst_43 {dimension_numbers = #tpu.dot_dimension_numbers<[1], [0], [0], [1], [0, 0, 1, 1], [], []>} : vector<8x8xf32>, vector<8x160xf32>, vector<8x160xf32> -> vector<8x160xf32>
      %60 = arith.addf %55, %59 : vector<8x160xf32>
      %c7 = arith.constant 7 : index
      %c0_44 = arith.constant 0 : index
      %c0_45 = arith.constant 0 : index
      %61 = vector.load %arg2[%c7, %c0_44, %c0_45] : memref<33x8x8xf32, #tpu.memory_space<vmem>>, vector<1x8x8xf32>
      %62 = vector.shape_cast %61 : vector<1x8x8xf32> to vector<8x8xf32>
      %63 = vector.extract_strided_slice %24 {offsets = [0, 7], sizes = [8, 160], strides = [1, 1]} : vector<8x192xf32> to vector<8x160xf32>
      %cst_46 = arith.constant dense<0.000000e+00> : vector<8x160xf32>
      %64 = tpu.matmul %62, %63, %cst_46 {dimension_numbers = #tpu.dot_dimension_numbers<[1], [0], [0], [1], [0, 0, 1, 1], [], []>} : vector<8x8xf32>, vector<8x160xf32>, vector<8x160xf32> -> vector<8x160xf32>
      %65 = arith.addf %60, %64 : vector<8x160xf32>
      %c8 = arith.constant 8 : index
      %c0_47 = arith.constant 0 : index
      %c0_48 = arith.constant 0 : index
      %66 = vector.load %arg2[%c8, %c0_47, %c0_48] : memref<33x8x8xf32, #tpu.memory_space<vmem>>, vector<1x8x8xf32>
      %67 = vector.shape_cast %66 : vector<1x8x8xf32> to vector<8x8xf32>
      %68 = vector.extract_strided_slice %24 {offsets = [0, 8], sizes = [8, 160], strides = [1, 1]} : vector<8x192xf32> to vector<8x160xf32>
      %cst_49 = arith.constant dense<0.000000e+00> : vector<8x160xf32>
      %69 = tpu.matmul %67, %68, %cst_49 {dimension_numbers = #tpu.dot_dimension_numbers<[1], [0], [0], [1], [0, 0, 1, 1], [], []>} : vector<8x8xf32>, vector<8x160xf32>, vector<8x160xf32> -> vector<8x160xf32>
      %70 = arith.addf %65, %69 : vector<8x160xf32>
      %c9 = arith.constant 9 : index
      %c0_50 = arith.constant 0 : index
      %c0_51 = arith.constant 0 : index
      %71 = vector.load %arg2[%c9, %c0_50, %c0_51] : memref<33x8x8xf32, #tpu.memory_space<vmem>>, vector<1x8x8xf32>
      %72 = vector.shape_cast %71 : vector<1x8x8xf32> to vector<8x8xf32>
      %73 = vector.extract_strided_slice %24 {offsets = [0, 9], sizes = [8, 160], strides = [1, 1]} : vector<8x192xf32> to vector<8x160xf32>
      %cst_52 = arith.constant dense<0.000000e+00> : vector<8x160xf32>
      %74 = tpu.matmul %72, %73, %cst_52 {dimension_numbers = #tpu.dot_dimension_numbers<[1], [0], [0], [1], [0, 0, 1, 1], [], []>} : vector<8x8xf32>, vector<8x160xf32>, vector<8x160xf32> -> vector<8x160xf32>
      %75 = arith.addf %70, %74 : vector<8x160xf32>
      %c10 = arith.constant 10 : index
      %c0_53 = arith.constant 0 : index
      %c0_54 = arith.constant 0 : index
      %76 = vector.load %arg2[%c10, %c0_53, %c0_54] : memref<33x8x8xf32, #tpu.memory_space<vmem>>, vector<1x8x8xf32>
      %77 = vector.shape_cast %76 : vector<1x8x8xf32> to vector<8x8xf32>
      %78 = vector.extract_strided_slice %24 {offsets = [0, 10], sizes = [8, 160], strides = [1, 1]} : vector<8x192xf32> to vector<8x160xf32>
      %cst_55 = arith.constant dense<0.000000e+00> : vector<8x160xf32>
      %79 = tpu.matmul %77, %78, %cst_55 {dimension_numbers = #tpu.dot_dimension_numbers<[1], [0], [0], [1], [0, 0, 1, 1], [], []>} : vector<8x8xf32>, vector<8x160xf32>, vector<8x160xf32> -> vector<8x160xf32>
      %80 = arith.addf %75, %79 : vector<8x160xf32>
      %c11 = arith.constant 11 : index
      %c0_56 = arith.constant 0 : index
      %c0_57 = arith.constant 0 : index
      %81 = vector.load %arg2[%c11, %c0_56, %c0_57] : memref<33x8x8xf32, #tpu.memory_space<vmem>>, vector<1x8x8xf32>
      %82 = vector.shape_cast %81 : vector<1x8x8xf32> to vector<8x8xf32>
      %83 = vector.extract_strided_slice %24 {offsets = [0, 11], sizes = [8, 160], strides = [1, 1]} : vector<8x192xf32> to vector<8x160xf32>
      %cst_58 = arith.constant dense<0.000000e+00> : vector<8x160xf32>
      %84 = tpu.matmul %82, %83, %cst_58 {dimension_numbers = #tpu.dot_dimension_numbers<[1], [0], [0], [1], [0, 0, 1, 1], [], []>} : vector<8x8xf32>, vector<8x160xf32>, vector<8x160xf32> -> vector<8x160xf32>
      %85 = arith.addf %80, %84 : vector<8x160xf32>
      %c12 = arith.constant 12 : index
      %c0_59 = arith.constant 0 : index
      %c0_60 = arith.constant 0 : index
      %86 = vector.load %arg2[%c12, %c0_59, %c0_60] : memref<33x8x8xf32, #tpu.memory_space<vmem>>, vector<1x8x8xf32>
      %87 = vector.shape_cast %86 : vector<1x8x8xf32> to vector<8x8xf32>
      %88 = vector.extract_strided_slice %24 {offsets = [0, 12], sizes = [8, 160], strides = [1, 1]} : vector<8x192xf32> to vector<8x160xf32>
      %cst_61 = arith.constant dense<0.000000e+00> : vector<8x160xf32>
      %89 = tpu.matmul %87, %88, %cst_61 {dimension_numbers = #tpu.dot_dimension_numbers<[1], [0], [0], [1], [0, 0, 1, 1], [], []>} : vector<8x8xf32>, vector<8x160xf32>, vector<8x160xf32> -> vector<8x160xf32>
      %90 = arith.addf %85, %89 : vector<8x160xf32>
      %c13 = arith.constant 13 : index
      %c0_62 = arith.constant 0 : index
      %c0_63 = arith.constant 0 : index
      %91 = vector.load %arg2[%c13, %c0_62, %c0_63] : memref<33x8x8xf32, #tpu.memory_space<vmem>>, vector<1x8x8xf32>
      %92 = vector.shape_cast %91 : vector<1x8x8xf32> to vector<8x8xf32>
      %93 = vector.extract_strided_slice %24 {offsets = [0, 13], sizes = [8, 160], strides = [1, 1]} : vector<8x192xf32> to vector<8x160xf32>
      %cst_64 = arith.constant dense<0.000000e+00> : vector<8x160xf32>
      %94 = tpu.matmul %92, %93, %cst_64 {dimension_numbers = #tpu.dot_dimension_numbers<[1], [0], [0], [1], [0, 0, 1, 1], [], []>} : vector<8x8xf32>, vector<8x160xf32>, vector<8x160xf32> -> vector<8x160xf32>
      %95 = arith.addf %90, %94 : vector<8x160xf32>
      %c14 = arith.constant 14 : index
      %c0_65 = arith.constant 0 : index
      %c0_66 = arith.constant 0 : index
      %96 = vector.load %arg2[%c14, %c0_65, %c0_66] : memref<33x8x8xf32, #tpu.memory_space<vmem>>, vector<1x8x8xf32>
      %97 = vector.shape_cast %96 : vector<1x8x8xf32> to vector<8x8xf32>
      %98 = vector.extract_strided_slice %24 {offsets = [0, 14], sizes = [8, 160], strides = [1, 1]} : vector<8x192xf32> to vector<8x160xf32>
      %cst_67 = arith.constant dense<0.000000e+00> : vector<8x160xf32>
      %99 = tpu.matmul %97, %98, %cst_67 {dimension_numbers = #tpu.dot_dimension_numbers<[1], [0], [0], [1], [0, 0, 1, 1], [], []>} : vector<8x8xf32>, vector<8x160xf32>, vector<8x160xf32> -> vector<8x160xf32>
      %100 = arith.addf %95, %99 : vector<8x160xf32>
      %c15 = arith.constant 15 : index
      %c0_68 = arith.constant 0 : index
      %c0_69 = arith.constant 0 : index
      %101 = vector.load %arg2[%c15, %c0_68, %c0_69] : memref<33x8x8xf32, #tpu.memory_space<vmem>>, vector<1x8x8xf32>
      %102 = vector.shape_cast %101 : vector<1x8x8xf32> to vector<8x8xf32>
      %103 = vector.extract_strided_slice %24 {offsets = [0, 15], sizes = [8, 160], strides = [1, 1]} : vector<8x192xf32> to vector<8x160xf32>
      %cst_70 = arith.constant dense<0.000000e+00> : vector<8x160xf32>
      %104 = tpu.matmul %102, %103, %cst_70 {dimension_numbers = #tpu.dot_dimension_numbers<[1], [0], [0], [1], [0, 0, 1, 1], [], []>} : vector<8x8xf32>, vector<8x160xf32>, vector<8x160xf32> -> vector<8x160xf32>
      %105 = arith.addf %100, %104 : vector<8x160xf32>
      %c16 = arith.constant 16 : index
      %c0_71 = arith.constant 0 : index
      %c0_72 = arith.constant 0 : index
      %106 = vector.load %arg2[%c16, %c0_71, %c0_72] : memref<33x8x8xf32, #tpu.memory_space<vmem>>, vector<1x8x8xf32>
      %107 = vector.shape_cast %106 : vector<1x8x8xf32> to vector<8x8xf32>
      %108 = vector.extract_strided_slice %24 {offsets = [0, 16], sizes = [8, 160], strides = [1, 1]} : vector<8x192xf32> to vector<8x160xf32>
      %cst_73 = arith.constant dense<0.000000e+00> : vector<8x160xf32>
      %109 = tpu.matmul %107, %108, %cst_73 {dimension_numbers = #tpu.dot_dimension_numbers<[1], [0], [0], [1], [0, 0, 1, 1], [], []>} : vector<8x8xf32>, vector<8x160xf32>, vector<8x160xf32> -> vector<8x160xf32>
      %110 = arith.addf %105, %109 : vector<8x160xf32>
      %c17 = arith.constant 17 : index
      %c0_74 = arith.constant 0 : index
      %c0_75 = arith.constant 0 : index
      %111 = vector.load %arg2[%c17, %c0_74, %c0_75] : memref<33x8x8xf32, #tpu.memory_space<vmem>>, vector<1x8x8xf32>
      %112 = vector.shape_cast %111 : vector<1x8x8xf32> to vector<8x8xf32>
      %113 = vector.extract_strided_slice %24 {offsets = [0, 17], sizes = [8, 160], strides = [1, 1]} : vector<8x192xf32> to vector<8x160xf32>
      %cst_76 = arith.constant dense<0.000000e+00> : vector<8x160xf32>
      %114 = tpu.matmul %112, %113, %cst_76 {dimension_numbers = #tpu.dot_dimension_numbers<[1], [0], [0], [1], [0, 0, 1, 1], [], []>} : vector<8x8xf32>, vector<8x160xf32>, vector<8x160xf32> -> vector<8x160xf32>
      %115 = arith.addf %110, %114 : vector<8x160xf32>
      %c18 = arith.constant 18 : index
      %c0_77 = arith.constant 0 : index
      %c0_78 = arith.constant 0 : index
      %116 = vector.load %arg2[%c18, %c0_77, %c0_78] : memref<33x8x8xf32, #tpu.memory_space<vmem>>, vector<1x8x8xf32>
      %117 = vector.shape_cast %116 : vector<1x8x8xf32> to vector<8x8xf32>
      %118 = vector.extract_strided_slice %24 {offsets = [0, 18], sizes = [8, 160], strides = [1, 1]} : vector<8x192xf32> to vector<8x160xf32>
      %cst_79 = arith.constant dense<0.000000e+00> : vector<8x160xf32>
      %119 = tpu.matmul %117, %118, %cst_79 {dimension_numbers = #tpu.dot_dimension_numbers<[1], [0], [0], [1], [0, 0, 1, 1], [], []>} : vector<8x8xf32>, vector<8x160xf32>, vector<8x160xf32> -> vector<8x160xf32>
      %120 = arith.addf %115, %119 : vector<8x160xf32>
      %c19 = arith.constant 19 : index
      %c0_80 = arith.constant 0 : index
      %c0_81 = arith.constant 0 : index
      %121 = vector.load %arg2[%c19, %c0_80, %c0_81] : memref<33x8x8xf32, #tpu.memory_space<vmem>>, vector<1x8x8xf32>
      %122 = vector.shape_cast %121 : vector<1x8x8xf32> to vector<8x8xf32>
      %123 = vector.extract_strided_slice %24 {offsets = [0, 19], sizes = [8, 160], strides = [1, 1]} : vector<8x192xf32> to vector<8x160xf32>
      %cst_82 = arith.constant dense<0.000000e+00> : vector<8x160xf32>
      %124 = tpu.matmul %122, %123, %cst_82 {dimension_numbers = #tpu.dot_dimension_numbers<[1], [0], [0], [1], [0, 0, 1, 1], [], []>} : vector<8x8xf32>, vector<8x160xf32>, vector<8x160xf32> -> vector<8x160xf32>
      %125 = arith.addf %120, %124 : vector<8x160xf32>
      %c20 = arith.constant 20 : index
      %c0_83 = arith.constant 0 : index
      %c0_84 = arith.constant 0 : index
      %126 = vector.load %arg2[%c20, %c0_83, %c0_84] : memref<33x8x8xf32, #tpu.memory_space<vmem>>, vector<1x8x8xf32>
      %127 = vector.shape_cast %126 : vector<1x8x8xf32> to vector<8x8xf32>
      %128 = vector.extract_strided_slice %24 {offsets = [0, 20], sizes = [8, 160], strides = [1, 1]} : vector<8x192xf32> to vector<8x160xf32>
      %cst_85 = arith.constant dense<0.000000e+00> : vector<8x160xf32>
      %129 = tpu.matmul %127, %128, %cst_85 {dimension_numbers = #tpu.dot_dimension_numbers<[1], [0], [0], [1], [0, 0, 1, 1], [], []>} : vector<8x8xf32>, vector<8x160xf32>, vector<8x160xf32> -> vector<8x160xf32>
      %130 = arith.addf %125, %129 : vector<8x160xf32>
      %c21 = arith.constant 21 : index
      %c0_86 = arith.constant 0 : index
      %c0_87 = arith.constant 0 : index
      %131 = vector.load %arg2[%c21, %c0_86, %c0_87] : memref<33x8x8xf32, #tpu.memory_space<vmem>>, vector<1x8x8xf32>
      %132 = vector.shape_cast %131 : vector<1x8x8xf32> to vector<8x8xf32>
      %133 = vector.extract_strided_slice %24 {offsets = [0, 21], sizes = [8, 160], strides = [1, 1]} : vector<8x192xf32> to vector<8x160xf32>
      %cst_88 = arith.constant dense<0.000000e+00> : vector<8x160xf32>
      %134 = tpu.matmul %132, %133, %cst_88 {dimension_numbers = #tpu.dot_dimension_numbers<[1], [0], [0], [1], [0, 0, 1, 1], [], []>} : vector<8x8xf32>, vector<8x160xf32>, vector<8x160xf32> -> vector<8x160xf32>
      %135 = arith.addf %130, %134 : vector<8x160xf32>
      %c22 = arith.constant 22 : index
      %c0_89 = arith.constant 0 : index
      %c0_90 = arith.constant 0 : index
      %136 = vector.load %arg2[%c22, %c0_89, %c0_90] : memref<33x8x8xf32, #tpu.memory_space<vmem>>, vector<1x8x8xf32>
      %137 = vector.shape_cast %136 : vector<1x8x8xf32> to vector<8x8xf32>
      %138 = vector.extract_strided_slice %24 {offsets = [0, 22], sizes = [8, 160], strides = [1, 1]} : vector<8x192xf32> to vector<8x160xf32>
      %cst_91 = arith.constant dense<0.000000e+00> : vector<8x160xf32>
      %139 = tpu.matmul %137, %138, %cst_91 {dimension_numbers = #tpu.dot_dimension_numbers<[1], [0], [0], [1], [0, 0, 1, 1], [], []>} : vector<8x8xf32>, vector<8x160xf32>, vector<8x160xf32> -> vector<8x160xf32>
      %140 = arith.addf %135, %139 : vector<8x160xf32>
      %c23 = arith.constant 23 : index
      %c0_92 = arith.constant 0 : index
      %c0_93 = arith.constant 0 : index
      %141 = vector.load %arg2[%c23, %c0_92, %c0_93] : memref<33x8x8xf32, #tpu.memory_space<vmem>>, vector<1x8x8xf32>
      %142 = vector.shape_cast %141 : vector<1x8x8xf32> to vector<8x8xf32>
      %143 = vector.extract_strided_slice %24 {offsets = [0, 23], sizes = [8, 160], strides = [1, 1]} : vector<8x192xf32> to vector<8x160xf32>
      %cst_94 = arith.constant dense<0.000000e+00> : vector<8x160xf32>
      %144 = tpu.matmul %142, %143, %cst_94 {dimension_numbers = #tpu.dot_dimension_numbers<[1], [0], [0], [1], [0, 0, 1, 1], [], []>} : vector<8x8xf32>, vector<8x160xf32>, vector<8x160xf32> -> vector<8x160xf32>
      %145 = arith.addf %140, %144 : vector<8x160xf32>
      %c24 = arith.constant 24 : index
      %c0_95 = arith.constant 0 : index
      %c0_96 = arith.constant 0 : index
      %146 = vector.load %arg2[%c24, %c0_95, %c0_96] : memref<33x8x8xf32, #tpu.memory_space<vmem>>, vector<1x8x8xf32>
      %147 = vector.shape_cast %146 : vector<1x8x8xf32> to vector<8x8xf32>
      %148 = vector.extract_strided_slice %24 {offsets = [0, 24], sizes = [8, 160], strides = [1, 1]} : vector<8x192xf32> to vector<8x160xf32>
      %cst_97 = arith.constant dense<0.000000e+00> : vector<8x160xf32>
      %149 = tpu.matmul %147, %148, %cst_97 {dimension_numbers = #tpu.dot_dimension_numbers<[1], [0], [0], [1], [0, 0, 1, 1], [], []>} : vector<8x8xf32>, vector<8x160xf32>, vector<8x160xf32> -> vector<8x160xf32>
      %150 = arith.addf %145, %149 : vector<8x160xf32>
      %c25 = arith.constant 25 : index
      %c0_98 = arith.constant 0 : index
      %c0_99 = arith.constant 0 : index
      %151 = vector.load %arg2[%c25, %c0_98, %c0_99] : memref<33x8x8xf32, #tpu.memory_space<vmem>>, vector<1x8x8xf32>
      %152 = vector.shape_cast %151 : vector<1x8x8xf32> to vector<8x8xf32>
      %153 = vector.extract_strided_slice %24 {offsets = [0, 25], sizes = [8, 160], strides = [1, 1]} : vector<8x192xf32> to vector<8x160xf32>
      %cst_100 = arith.constant dense<0.000000e+00> : vector<8x160xf32>
      %154 = tpu.matmul %152, %153, %cst_100 {dimension_numbers = #tpu.dot_dimension_numbers<[1], [0], [0], [1], [0, 0, 1, 1], [], []>} : vector<8x8xf32>, vector<8x160xf32>, vector<8x160xf32> -> vector<8x160xf32>
      %155 = arith.addf %150, %154 : vector<8x160xf32>
      %c26 = arith.constant 26 : index
      %c0_101 = arith.constant 0 : index
      %c0_102 = arith.constant 0 : index
      %156 = vector.load %arg2[%c26, %c0_101, %c0_102] : memref<33x8x8xf32, #tpu.memory_space<vmem>>, vector<1x8x8xf32>
      %157 = vector.shape_cast %156 : vector<1x8x8xf32> to vector<8x8xf32>
      %158 = vector.extract_strided_slice %24 {offsets = [0, 26], sizes = [8, 160], strides = [1, 1]} : vector<8x192xf32> to vector<8x160xf32>
      %cst_103 = arith.constant dense<0.000000e+00> : vector<8x160xf32>
      %159 = tpu.matmul %157, %158, %cst_103 {dimension_numbers = #tpu.dot_dimension_numbers<[1], [0], [0], [1], [0, 0, 1, 1], [], []>} : vector<8x8xf32>, vector<8x160xf32>, vector<8x160xf32> -> vector<8x160xf32>
      %160 = arith.addf %155, %159 : vector<8x160xf32>
      %c27 = arith.constant 27 : index
      %c0_104 = arith.constant 0 : index
      %c0_105 = arith.constant 0 : index
      %161 = vector.load %arg2[%c27, %c0_104, %c0_105] : memref<33x8x8xf32, #tpu.memory_space<vmem>>, vector<1x8x8xf32>
      %162 = vector.shape_cast %161 : vector<1x8x8xf32> to vector<8x8xf32>
      %163 = vector.extract_strided_slice %24 {offsets = [0, 27], sizes = [8, 160], strides = [1, 1]} : vector<8x192xf32> to vector<8x160xf32>
      %cst_106 = arith.constant dense<0.000000e+00> : vector<8x160xf32>
      %164 = tpu.matmul %162, %163, %cst_106 {dimension_numbers = #tpu.dot_dimension_numbers<[1], [0], [0], [1], [0, 0, 1, 1], [], []>} : vector<8x8xf32>, vector<8x160xf32>, vector<8x160xf32> -> vector<8x160xf32>
      %165 = arith.addf %160, %164 : vector<8x160xf32>
      %c28 = arith.constant 28 : index
      %c0_107 = arith.constant 0 : index
      %c0_108 = arith.constant 0 : index
      %166 = vector.load %arg2[%c28, %c0_107, %c0_108] : memref<33x8x8xf32, #tpu.memory_space<vmem>>, vector<1x8x8xf32>
      %167 = vector.shape_cast %166 : vector<1x8x8xf32> to vector<8x8xf32>
      %168 = vector.extract_strided_slice %24 {offsets = [0, 28], sizes = [8, 160], strides = [1, 1]} : vector<8x192xf32> to vector<8x160xf32>
      %cst_109 = arith.constant dense<0.000000e+00> : vector<8x160xf32>
      %169 = tpu.matmul %167, %168, %cst_109 {dimension_numbers = #tpu.dot_dimension_numbers<[1], [0], [0], [1], [0, 0, 1, 1], [], []>} : vector<8x8xf32>, vector<8x160xf32>, vector<8x160xf32> -> vector<8x160xf32>
      %170 = arith.addf %165, %169 : vector<8x160xf32>
      %c29 = arith.constant 29 : index
      %c0_110 = arith.constant 0 : index
      %c0_111 = arith.constant 0 : index
      %171 = vector.load %arg2[%c29, %c0_110, %c0_111] : memref<33x8x8xf32, #tpu.memory_space<vmem>>, vector<1x8x8xf32>
      %172 = vector.shape_cast %171 : vector<1x8x8xf32> to vector<8x8xf32>
      %173 = vector.extract_strided_slice %24 {offsets = [0, 29], sizes = [8, 160], strides = [1, 1]} : vector<8x192xf32> to vector<8x160xf32>
      %cst_112 = arith.constant dense<0.000000e+00> : vector<8x160xf32>
      %174 = tpu.matmul %172, %173, %cst_112 {dimension_numbers = #tpu.dot_dimension_numbers<[1], [0], [0], [1], [0, 0, 1, 1], [], []>} : vector<8x8xf32>, vector<8x160xf32>, vector<8x160xf32> -> vector<8x160xf32>
      %175 = arith.addf %170, %174 : vector<8x160xf32>
      %c30 = arith.constant 30 : index
      %c0_113 = arith.constant 0 : index
      %c0_114 = arith.constant 0 : index
      %176 = vector.load %arg2[%c30, %c0_113, %c0_114] : memref<33x8x8xf32, #tpu.memory_space<vmem>>, vector<1x8x8xf32>
      %177 = vector.shape_cast %176 : vector<1x8x8xf32> to vector<8x8xf32>
      %178 = vector.extract_strided_slice %24 {offsets = [0, 30], sizes = [8, 160], strides = [1, 1]} : vector<8x192xf32> to vector<8x160xf32>
      %cst_115 = arith.constant dense<0.000000e+00> : vector<8x160xf32>
      %179 = tpu.matmul %177, %178, %cst_115 {dimension_numbers = #tpu.dot_dimension_numbers<[1], [0], [0], [1], [0, 0, 1, 1], [], []>} : vector<8x8xf32>, vector<8x160xf32>, vector<8x160xf32> -> vector<8x160xf32>
      %180 = arith.addf %175, %179 : vector<8x160xf32>
      %c31 = arith.constant 31 : index
      %c0_116 = arith.constant 0 : index
      %c0_117 = arith.constant 0 : index
      %181 = vector.load %arg2[%c31, %c0_116, %c0_117] : memref<33x8x8xf32, #tpu.memory_space<vmem>>, vector<1x8x8xf32>
      %182 = vector.shape_cast %181 : vector<1x8x8xf32> to vector<8x8xf32>
      %183 = vector.extract_strided_slice %24 {offsets = [0, 31], sizes = [8, 160], strides = [1, 1]} : vector<8x192xf32> to vector<8x160xf32>
      %cst_118 = arith.constant dense<0.000000e+00> : vector<8x160xf32>
      %184 = tpu.matmul %182, %183, %cst_118 {dimension_numbers = #tpu.dot_dimension_numbers<[1], [0], [0], [1], [0, 0, 1, 1], [], []>} : vector<8x8xf32>, vector<8x160xf32>, vector<8x160xf32> -> vector<8x160xf32>
      %185 = arith.addf %180, %184 : vector<8x160xf32>
      %c32 = arith.constant 32 : index
      %c0_119 = arith.constant 0 : index
      %c0_120 = arith.constant 0 : index
      %186 = vector.load %arg2[%c32, %c0_119, %c0_120] : memref<33x8x8xf32, #tpu.memory_space<vmem>>, vector<1x8x8xf32>
      %187 = vector.shape_cast %186 : vector<1x8x8xf32> to vector<8x8xf32>
      %188 = vector.extract_strided_slice %24 {offsets = [0, 32], sizes = [8, 160], strides = [1, 1]} : vector<8x192xf32> to vector<8x160xf32>
      %cst_121 = arith.constant dense<0.000000e+00> : vector<8x160xf32>
      %189 = tpu.matmul %187, %188, %cst_121 {dimension_numbers = #tpu.dot_dimension_numbers<[1], [0], [0], [1], [0, 0, 1, 1], [], []>} : vector<8x8xf32>, vector<8x160xf32>, vector<8x160xf32> -> vector<8x160xf32>
      %190 = arith.addf %185, %189 : vector<8x160xf32>
      %191 = vector.broadcast %2 : vector<8x1xf32> to vector<8x160xf32>
      %192 = arith.addf %190, %191 : vector<8x160xf32>
      %cst_122 = arith.constant 0.000000e+00 : f32
      %193 = vector.broadcast %cst_122 : f32 to vector<8x160xf32>
      %194 = arith.maximumf %192, %193 : vector<8x160xf32>
      %cst_123 = arith.constant 0.000000e+00 : f32
      %195 = vector.shape_cast %10 : vector<1x160xi1> to vector<1x160xi1>
      %196 = vector.broadcast %195 : vector<1x160xi1> to vector<8x160xi1>
      %197 = vector.broadcast %cst_123 : f32 to vector<8x160xf32>
      %198 = arith.select %196, %194, %197 : vector<8x160xi1>, vector<8x160xf32>
      %cst_124 = arith.constant 0.000000e+00 : f32
      %199 = vector.broadcast %cst_124 : f32 to vector<8x1xf32>
      %200 = tpu.concatenate %199, %198 in 1 : vector<8x1xf32>, vector<8x160xf32> -> vector<8x161xf32>
      %cst_125 = arith.constant 0.000000e+00 : f32
      %201 = vector.broadcast %cst_125 : f32 to vector<8x128xf32>
      %c0_126 = arith.constant 0 : index
      %c0_127 = arith.constant 0 : index
      %c0_128 = arith.constant 0 : index
      %202 = vector.load %arg3[%c0_126, %c0_127, %c0_128] : memref<33x8x8xf32, #tpu.memory_space<vmem>>, vector<1x8x8xf32>
      %203 = vector.shape_cast %202 : vector<1x8x8xf32> to vector<8x8xf32>
      %204 = vector.extract_strided_slice %200 {offsets = [0, 0], sizes = [8, 128], strides = [1, 1]} : vector<8x161xf32> to vector<8x128xf32>
      %cst_129 = arith.constant dense<0.000000e+00> : vector<8x128xf32>
      %205 = tpu.matmul %203, %204, %cst_129 {dimension_numbers = #tpu.dot_dimension_numbers<[1], [0], [0], [1], [0, 0, 1, 1], [], []>} : vector<8x8xf32>, vector<8x128xf32>, vector<8x128xf32> -> vector<8x128xf32>
      %206 = arith.addf %201, %205 : vector<8x128xf32>
      %c1_130 = arith.constant 1 : index
      %c0_131 = arith.constant 0 : index
      %c0_132 = arith.constant 0 : index
      %207 = vector.load %arg3[%c1_130, %c0_131, %c0_132] : memref<33x8x8xf32, #tpu.memory_space<vmem>>, vector<1x8x8xf32>
      %208 = vector.shape_cast %207 : vector<1x8x8xf32> to vector<8x8xf32>
      %209 = vector.extract_strided_slice %200 {offsets = [0, 1], sizes = [8, 128], strides = [1, 1]} : vector<8x161xf32> to vector<8x128xf32>
      %cst_133 = arith.constant dense<0.000000e+00> : vector<8x128xf32>
      %210 = tpu.matmul %208, %209, %cst_133 {dimension_numbers = #tpu.dot_dimension_numbers<[1], [0], [0], [1], [0, 0, 1, 1], [], []>} : vector<8x8xf32>, vector<8x128xf32>, vector<8x128xf32> -> vector<8x128xf32>
      %211 = arith.addf %206, %210 : vector<8x128xf32>
      %c2_134 = arith.constant 2 : index
      %c0_135 = arith.constant 0 : index
      %c0_136 = arith.constant 0 : index
      %212 = vector.load %arg3[%c2_134, %c0_135, %c0_136] : memref<33x8x8xf32, #tpu.memory_space<vmem>>, vector<1x8x8xf32>
      %213 = vector.shape_cast %212 : vector<1x8x8xf32> to vector<8x8xf32>
      %214 = vector.extract_strided_slice %200 {offsets = [0, 2], sizes = [8, 128], strides = [1, 1]} : vector<8x161xf32> to vector<8x128xf32>
      %cst_137 = arith.constant dense<0.000000e+00> : vector<8x128xf32>
      %215 = tpu.matmul %213, %214, %cst_137 {dimension_numbers = #tpu.dot_dimension_numbers<[1], [0], [0], [1], [0, 0, 1, 1], [], []>} : vector<8x8xf32>, vector<8x128xf32>, vector<8x128xf32> -> vector<8x128xf32>
      %216 = arith.addf %211, %215 : vector<8x128xf32>
      %c3_138 = arith.constant 3 : index
      %c0_139 = arith.constant 0 : index
      %c0_140 = arith.constant 0 : index
      %217 = vector.load %arg3[%c3_138, %c0_139, %c0_140] : memref<33x8x8xf32, #tpu.memory_space<vmem>>, vector<1x8x8xf32>
      %218 = vector.shape_cast %217 : vector<1x8x8xf32> to vector<8x8xf32>
      %219 = vector.extract_strided_slice %200 {offsets = [0, 3], sizes = [8, 128], strides = [1, 1]} : vector<8x161xf32> to vector<8x128xf32>
      %cst_141 = arith.constant dense<0.000000e+00> : vector<8x128xf32>
      %220 = tpu.matmul %218, %219, %cst_141 {dimension_numbers = #tpu.dot_dimension_numbers<[1], [0], [0], [1], [0, 0, 1, 1], [], []>} : vector<8x8xf32>, vector<8x128xf32>, vector<8x128xf32> -> vector<8x128xf32>
      %221 = arith.addf %216, %220 : vector<8x128xf32>
      %c4_142 = arith.constant 4 : index
      %c0_143 = arith.constant 0 : index
      %c0_144 = arith.constant 0 : index
      %222 = vector.load %arg3[%c4_142, %c0_143, %c0_144] : memref<33x8x8xf32, #tpu.memory_space<vmem>>, vector<1x8x8xf32>
      %223 = vector.shape_cast %222 : vector<1x8x8xf32> to vector<8x8xf32>
      %224 = vector.extract_strided_slice %200 {offsets = [0, 4], sizes = [8, 128], strides = [1, 1]} : vector<8x161xf32> to vector<8x128xf32>
      %cst_145 = arith.constant dense<0.000000e+00> : vector<8x128xf32>
      %225 = tpu.matmul %223, %224, %cst_145 {dimension_numbers = #tpu.dot_dimension_numbers<[1], [0], [0], [1], [0, 0, 1, 1], [], []>} : vector<8x8xf32>, vector<8x128xf32>, vector<8x128xf32> -> vector<8x128xf32>
      %226 = arith.addf %221, %225 : vector<8x128xf32>
      %c5_146 = arith.constant 5 : index
      %c0_147 = arith.constant 0 : index
      %c0_148 = arith.constant 0 : index
      %227 = vector.load %arg3[%c5_146, %c0_147, %c0_148] : memref<33x8x8xf32, #tpu.memory_space<vmem>>, vector<1x8x8xf32>
      %228 = vector.shape_cast %227 : vector<1x8x8xf32> to vector<8x8xf32>
      %229 = vector.extract_strided_slice %200 {offsets = [0, 5], sizes = [8, 128], strides = [1, 1]} : vector<8x161xf32> to vector<8x128xf32>
      %cst_149 = arith.constant dense<0.000000e+00> : vector<8x128xf32>
      %230 = tpu.matmul %228, %229, %cst_149 {dimension_numbers = #tpu.dot_dimension_numbers<[1], [0], [0], [1], [0, 0, 1, 1], [], []>} : vector<8x8xf32>, vector<8x128xf32>, vector<8x128xf32> -> vector<8x128xf32>
      %231 = arith.addf %226, %230 : vector<8x128xf32>
      %c6_150 = arith.constant 6 : index
      %c0_151 = arith.constant 0 : index
      %c0_152 = arith.constant 0 : index
      %232 = vector.load %arg3[%c6_150, %c0_151, %c0_152] : memref<33x8x8xf32, #tpu.memory_space<vmem>>, vector<1x8x8xf32>
      %233 = vector.shape_cast %232 : vector<1x8x8xf32> to vector<8x8xf32>
      %234 = vector.extract_strided_slice %200 {offsets = [0, 6], sizes = [8, 128], strides = [1, 1]} : vector<8x161xf32> to vector<8x128xf32>
      %cst_153 = arith.constant dense<0.000000e+00> : vector<8x128xf32>
      %235 = tpu.matmul %233, %234, %cst_153 {dimension_numbers = #tpu.dot_dimension_numbers<[1], [0], [0], [1], [0, 0, 1, 1], [], []>} : vector<8x8xf32>, vector<8x128xf32>, vector<8x128xf32> -> vector<8x128xf32>
      %236 = arith.addf %231, %235 : vector<8x128xf32>
      %c7_154 = arith.constant 7 : index
      %c0_155 = arith.constant 0 : index
      %c0_156 = arith.constant 0 : index
      %237 = vector.load %arg3[%c7_154, %c0_155, %c0_156] : memref<33x8x8xf32, #tpu.memory_space<vmem>>, vector<1x8x8xf32>
      %238 = vector.shape_cast %237 : vector<1x8x8xf32> to vector<8x8xf32>
      %239 = vector.extract_strided_slice %200 {offsets = [0, 7], sizes = [8, 128], strides = [1, 1]} : vector<8x161xf32> to vector<8x128xf32>
      %cst_157 = arith.constant dense<0.000000e+00> : vector<8x128xf32>
      %240 = tpu.matmul %238, %239, %cst_157 {dimension_numbers = #tpu.dot_dimension_numbers<[1], [0], [0], [1], [0, 0, 1, 1], [], []>} : vector<8x8xf32>, vector<8x128xf32>, vector<8x128xf32> -> vector<8x128xf32>
      %241 = arith.addf %236, %240 : vector<8x128xf32>
      %c8_158 = arith.constant 8 : index
      %c0_159 = arith.constant 0 : index
      %c0_160 = arith.constant 0 : index
      %242 = vector.load %arg3[%c8_158, %c0_159, %c0_160] : memref<33x8x8xf32, #tpu.memory_space<vmem>>, vector<1x8x8xf32>
      %243 = vector.shape_cast %242 : vector<1x8x8xf32> to vector<8x8xf32>
      %244 = vector.extract_strided_slice %200 {offsets = [0, 8], sizes = [8, 128], strides = [1, 1]} : vector<8x161xf32> to vector<8x128xf32>
      %cst_161 = arith.constant dense<0.000000e+00> : vector<8x128xf32>
      %245 = tpu.matmul %243, %244, %cst_161 {dimension_numbers = #tpu.dot_dimension_numbers<[1], [0], [0], [1], [0, 0, 1, 1], [], []>} : vector<8x8xf32>, vector<8x128xf32>, vector<8x128xf32> -> vector<8x128xf32>
      %246 = arith.addf %241, %245 : vector<8x128xf32>
      %c9_162 = arith.constant 9 : index
      %c0_163 = arith.constant 0 : index
      %c0_164 = arith.constant 0 : index
      %247 = vector.load %arg3[%c9_162, %c0_163, %c0_164] : memref<33x8x8xf32, #tpu.memory_space<vmem>>, vector<1x8x8xf32>
      %248 = vector.shape_cast %247 : vector<1x8x8xf32> to vector<8x8xf32>
      %249 = vector.extract_strided_slice %200 {offsets = [0, 9], sizes = [8, 128], strides = [1, 1]} : vector<8x161xf32> to vector<8x128xf32>
      %cst_165 = arith.constant dense<0.000000e+00> : vector<8x128xf32>
      %250 = tpu.matmul %248, %249, %cst_165 {dimension_numbers = #tpu.dot_dimension_numbers<[1], [0], [0], [1], [0, 0, 1, 1], [], []>} : vector<8x8xf32>, vector<8x128xf32>, vector<8x128xf32> -> vector<8x128xf32>
      %251 = arith.addf %246, %250 : vector<8x128xf32>
      %c10_166 = arith.constant 10 : index
      %c0_167 = arith.constant 0 : index
      %c0_168 = arith.constant 0 : index
      %252 = vector.load %arg3[%c10_166, %c0_167, %c0_168] : memref<33x8x8xf32, #tpu.memory_space<vmem>>, vector<1x8x8xf32>
      %253 = vector.shape_cast %252 : vector<1x8x8xf32> to vector<8x8xf32>
      %254 = vector.extract_strided_slice %200 {offsets = [0, 10], sizes = [8, 128], strides = [1, 1]} : vector<8x161xf32> to vector<8x128xf32>
      %cst_169 = arith.constant dense<0.000000e+00> : vector<8x128xf32>
      %255 = tpu.matmul %253, %254, %cst_169 {dimension_numbers = #tpu.dot_dimension_numbers<[1], [0], [0], [1], [0, 0, 1, 1], [], []>} : vector<8x8xf32>, vector<8x128xf32>, vector<8x128xf32> -> vector<8x128xf32>
      %256 = arith.addf %251, %255 : vector<8x128xf32>
      %c11_170 = arith.constant 11 : index
      %c0_171 = arith.constant 0 : index
      %c0_172 = arith.constant 0 : index
      %257 = vector.load %arg3[%c11_170, %c0_171, %c0_172] : memref<33x8x8xf32, #tpu.memory_space<vmem>>, vector<1x8x8xf32>
      %258 = vector.shape_cast %257 : vector<1x8x8xf32> to vector<8x8xf32>
      %259 = vector.extract_strided_slice %200 {offsets = [0, 11], sizes = [8, 128], strides = [1, 1]} : vector<8x161xf32> to vector<8x128xf32>
      %cst_173 = arith.constant dense<0.000000e+00> : vector<8x128xf32>
      %260 = tpu.matmul %258, %259, %cst_173 {dimension_numbers = #tpu.dot_dimension_numbers<[1], [0], [0], [1], [0, 0, 1, 1], [], []>} : vector<8x8xf32>, vector<8x128xf32>, vector<8x128xf32> -> vector<8x128xf32>
      %261 = arith.addf %256, %260 : vector<8x128xf32>
      %c12_174 = arith.constant 12 : index
      %c0_175 = arith.constant 0 : index
      %c0_176 = arith.constant 0 : index
      %262 = vector.load %arg3[%c12_174, %c0_175, %c0_176] : memref<33x8x8xf32, #tpu.memory_space<vmem>>, vector<1x8x8xf32>
      %263 = vector.shape_cast %262 : vector<1x8x8xf32> to vector<8x8xf32>
      %264 = vector.extract_strided_slice %200 {offsets = [0, 12], sizes = [8, 128], strides = [1, 1]} : vector<8x161xf32> to vector<8x128xf32>
      %cst_177 = arith.constant dense<0.000000e+00> : vector<8x128xf32>
      %265 = tpu.matmul %263, %264, %cst_177 {dimension_numbers = #tpu.dot_dimension_numbers<[1], [0], [0], [1], [0, 0, 1, 1], [], []>} : vector<8x8xf32>, vector<8x128xf32>, vector<8x128xf32> -> vector<8x128xf32>
      %266 = arith.addf %261, %265 : vector<8x128xf32>
      %c13_178 = arith.constant 13 : index
      %c0_179 = arith.constant 0 : index
      %c0_180 = arith.constant 0 : index
      %267 = vector.load %arg3[%c13_178, %c0_179, %c0_180] : memref<33x8x8xf32, #tpu.memory_space<vmem>>, vector<1x8x8xf32>
      %268 = vector.shape_cast %267 : vector<1x8x8xf32> to vector<8x8xf32>
      %269 = vector.extract_strided_slice %200 {offsets = [0, 13], sizes = [8, 128], strides = [1, 1]} : vector<8x161xf32> to vector<8x128xf32>
      %cst_181 = arith.constant dense<0.000000e+00> : vector<8x128xf32>
      %270 = tpu.matmul %268, %269, %cst_181 {dimension_numbers = #tpu.dot_dimension_numbers<[1], [0], [0], [1], [0, 0, 1, 1], [], []>} : vector<8x8xf32>, vector<8x128xf32>, vector<8x128xf32> -> vector<8x128xf32>
      %271 = arith.addf %266, %270 : vector<8x128xf32>
      %c14_182 = arith.constant 14 : index
      %c0_183 = arith.constant 0 : index
      %c0_184 = arith.constant 0 : index
      %272 = vector.load %arg3[%c14_182, %c0_183, %c0_184] : memref<33x8x8xf32, #tpu.memory_space<vmem>>, vector<1x8x8xf32>
      %273 = vector.shape_cast %272 : vector<1x8x8xf32> to vector<8x8xf32>
      %274 = vector.extract_strided_slice %200 {offsets = [0, 14], sizes = [8, 128], strides = [1, 1]} : vector<8x161xf32> to vector<8x128xf32>
      %cst_185 = arith.constant dense<0.000000e+00> : vector<8x128xf32>
      %275 = tpu.matmul %273, %274, %cst_185 {dimension_numbers = #tpu.dot_dimension_numbers<[1], [0], [0], [1], [0, 0, 1, 1], [], []>} : vector<8x8xf32>, vector<8x128xf32>, vector<8x128xf32> -> vector<8x128xf32>
      %276 = arith.addf %271, %275 : vector<8x128xf32>
      %c15_186 = arith.constant 15 : index
      %c0_187 = arith.constant 0 : index
      %c0_188 = arith.constant 0 : index
      %277 = vector.load %arg3[%c15_186, %c0_187, %c0_188] : memref<33x8x8xf32, #tpu.memory_space<vmem>>, vector<1x8x8xf32>
      %278 = vector.shape_cast %277 : vector<1x8x8xf32> to vector<8x8xf32>
      %279 = vector.extract_strided_slice %200 {offsets = [0, 15], sizes = [8, 128], strides = [1, 1]} : vector<8x161xf32> to vector<8x128xf32>
      %cst_189 = arith.constant dense<0.000000e+00> : vector<8x128xf32>
      %280 = tpu.matmul %278, %279, %cst_189 {dimension_numbers = #tpu.dot_dimension_numbers<[1], [0], [0], [1], [0, 0, 1, 1], [], []>} : vector<8x8xf32>, vector<8x128xf32>, vector<8x128xf32> -> vector<8x128xf32>
      %281 = arith.addf %276, %280 : vector<8x128xf32>
      %c16_190 = arith.constant 16 : index
      %c0_191 = arith.constant 0 : index
      %c0_192 = arith.constant 0 : index
      %282 = vector.load %arg3[%c16_190, %c0_191, %c0_192] : memref<33x8x8xf32, #tpu.memory_space<vmem>>, vector<1x8x8xf32>
      %283 = vector.shape_cast %282 : vector<1x8x8xf32> to vector<8x8xf32>
      %284 = vector.extract_strided_slice %200 {offsets = [0, 16], sizes = [8, 128], strides = [1, 1]} : vector<8x161xf32> to vector<8x128xf32>
      %cst_193 = arith.constant dense<0.000000e+00> : vector<8x128xf32>
      %285 = tpu.matmul %283, %284, %cst_193 {dimension_numbers = #tpu.dot_dimension_numbers<[1], [0], [0], [1], [0, 0, 1, 1], [], []>} : vector<8x8xf32>, vector<8x128xf32>, vector<8x128xf32> -> vector<8x128xf32>
      %286 = arith.addf %281, %285 : vector<8x128xf32>
      %c17_194 = arith.constant 17 : index
      %c0_195 = arith.constant 0 : index
      %c0_196 = arith.constant 0 : index
      %287 = vector.load %arg3[%c17_194, %c0_195, %c0_196] : memref<33x8x8xf32, #tpu.memory_space<vmem>>, vector<1x8x8xf32>
      %288 = vector.shape_cast %287 : vector<1x8x8xf32> to vector<8x8xf32>
      %289 = vector.extract_strided_slice %200 {offsets = [0, 17], sizes = [8, 128], strides = [1, 1]} : vector<8x161xf32> to vector<8x128xf32>
      %cst_197 = arith.constant dense<0.000000e+00> : vector<8x128xf32>
      %290 = tpu.matmul %288, %289, %cst_197 {dimension_numbers = #tpu.dot_dimension_numbers<[1], [0], [0], [1], [0, 0, 1, 1], [], []>} : vector<8x8xf32>, vector<8x128xf32>, vector<8x128xf32> -> vector<8x128xf32>
      %291 = arith.addf %286, %290 : vector<8x128xf32>
      %c18_198 = arith.constant 18 : index
      %c0_199 = arith.constant 0 : index
      %c0_200 = arith.constant 0 : index
      %292 = vector.load %arg3[%c18_198, %c0_199, %c0_200] : memref<33x8x8xf32, #tpu.memory_space<vmem>>, vector<1x8x8xf32>
      %293 = vector.shape_cast %292 : vector<1x8x8xf32> to vector<8x8xf32>
      %294 = vector.extract_strided_slice %200 {offsets = [0, 18], sizes = [8, 128], strides = [1, 1]} : vector<8x161xf32> to vector<8x128xf32>
      %cst_201 = arith.constant dense<0.000000e+00> : vector<8x128xf32>
      %295 = tpu.matmul %293, %294, %cst_201 {dimension_numbers = #tpu.dot_dimension_numbers<[1], [0], [0], [1], [0, 0, 1, 1], [], []>} : vector<8x8xf32>, vector<8x128xf32>, vector<8x128xf32> -> vector<8x128xf32>
      %296 = arith.addf %291, %295 : vector<8x128xf32>
      %c19_202 = arith.constant 19 : index
      %c0_203 = arith.constant 0 : index
      %c0_204 = arith.constant 0 : index
      %297 = vector.load %arg3[%c19_202, %c0_203, %c0_204] : memref<33x8x8xf32, #tpu.memory_space<vmem>>, vector<1x8x8xf32>
      %298 = vector.shape_cast %297 : vector<1x8x8xf32> to vector<8x8xf32>
      %299 = vector.extract_strided_slice %200 {offsets = [0, 19], sizes = [8, 128], strides = [1, 1]} : vector<8x161xf32> to vector<8x128xf32>
      %cst_205 = arith.constant dense<0.000000e+00> : vector<8x128xf32>
      %300 = tpu.matmul %298, %299, %cst_205 {dimension_numbers = #tpu.dot_dimension_numbers<[1], [0], [0], [1], [0, 0, 1, 1], [], []>} : vector<8x8xf32>, vector<8x128xf32>, vector<8x128xf32> -> vector<8x128xf32>
      %301 = arith.addf %296, %300 : vector<8x128xf32>
      %c20_206 = arith.constant 20 : index
      %c0_207 = arith.constant 0 : index
      %c0_208 = arith.constant 0 : index
      %302 = vector.load %arg3[%c20_206, %c0_207, %c0_208] : memref<33x8x8xf32, #tpu.memory_space<vmem>>, vector<1x8x8xf32>
      %303 = vector.shape_cast %302 : vector<1x8x8xf32> to vector<8x8xf32>
      %304 = vector.extract_strided_slice %200 {offsets = [0, 20], sizes = [8, 128], strides = [1, 1]} : vector<8x161xf32> to vector<8x128xf32>
      %cst_209 = arith.constant dense<0.000000e+00> : vector<8x128xf32>
      %305 = tpu.matmul %303, %304, %cst_209 {dimension_numbers = #tpu.dot_dimension_numbers<[1], [0], [0], [1], [0, 0, 1, 1], [], []>} : vector<8x8xf32>, vector<8x128xf32>, vector<8x128xf32> -> vector<8x128xf32>
      %306 = arith.addf %301, %305 : vector<8x128xf32>
      %c21_210 = arith.constant 21 : index
      %c0_211 = arith.constant 0 : index
      %c0_212 = arith.constant 0 : index
      %307 = vector.load %arg3[%c21_210, %c0_211, %c0_212] : memref<33x8x8xf32, #tpu.memory_space<vmem>>, vector<1x8x8xf32>
      %308 = vector.shape_cast %307 : vector<1x8x8xf32> to vector<8x8xf32>
      %309 = vector.extract_strided_slice %200 {offsets = [0, 21], sizes = [8, 128], strides = [1, 1]} : vector<8x161xf32> to vector<8x128xf32>
      %cst_213 = arith.constant dense<0.000000e+00> : vector<8x128xf32>
      %310 = tpu.matmul %308, %309, %cst_213 {dimension_numbers = #tpu.dot_dimension_numbers<[1], [0], [0], [1], [0, 0, 1, 1], [], []>} : vector<8x8xf32>, vector<8x128xf32>, vector<8x128xf32> -> vector<8x128xf32>
      %311 = arith.addf %306, %310 : vector<8x128xf32>
      %c22_214 = arith.constant 22 : index
      %c0_215 = arith.constant 0 : index
      %c0_216 = arith.constant 0 : index
      %312 = vector.load %arg3[%c22_214, %c0_215, %c0_216] : memref<33x8x8xf32, #tpu.memory_space<vmem>>, vector<1x8x8xf32>
      %313 = vector.shape_cast %312 : vector<1x8x8xf32> to vector<8x8xf32>
      %314 = vector.extract_strided_slice %200 {offsets = [0, 22], sizes = [8, 128], strides = [1, 1]} : vector<8x161xf32> to vector<8x128xf32>
      %cst_217 = arith.constant dense<0.000000e+00> : vector<8x128xf32>
      %315 = tpu.matmul %313, %314, %cst_217 {dimension_numbers = #tpu.dot_dimension_numbers<[1], [0], [0], [1], [0, 0, 1, 1], [], []>} : vector<8x8xf32>, vector<8x128xf32>, vector<8x128xf32> -> vector<8x128xf32>
      %316 = arith.addf %311, %315 : vector<8x128xf32>
      %c23_218 = arith.constant 23 : index
      %c0_219 = arith.constant 0 : index
      %c0_220 = arith.constant 0 : index
      %317 = vector.load %arg3[%c23_218, %c0_219, %c0_220] : memref<33x8x8xf32, #tpu.memory_space<vmem>>, vector<1x8x8xf32>
      %318 = vector.shape_cast %317 : vector<1x8x8xf32> to vector<8x8xf32>
      %319 = vector.extract_strided_slice %200 {offsets = [0, 23], sizes = [8, 128], strides = [1, 1]} : vector<8x161xf32> to vector<8x128xf32>
      %cst_221 = arith.constant dense<0.000000e+00> : vector<8x128xf32>
      %320 = tpu.matmul %318, %319, %cst_221 {dimension_numbers = #tpu.dot_dimension_numbers<[1], [0], [0], [1], [0, 0, 1, 1], [], []>} : vector<8x8xf32>, vector<8x128xf32>, vector<8x128xf32> -> vector<8x128xf32>
      %321 = arith.addf %316, %320 : vector<8x128xf32>
      %c24_222 = arith.constant 24 : index
      %c0_223 = arith.constant 0 : index
      %c0_224 = arith.constant 0 : index
      %322 = vector.load %arg3[%c24_222, %c0_223, %c0_224] : memref<33x8x8xf32, #tpu.memory_space<vmem>>, vector<1x8x8xf32>
      %323 = vector.shape_cast %322 : vector<1x8x8xf32> to vector<8x8xf32>
      %324 = vector.extract_strided_slice %200 {offsets = [0, 24], sizes = [8, 128], strides = [1, 1]} : vector<8x161xf32> to vector<8x128xf32>
      %cst_225 = arith.constant dense<0.000000e+00> : vector<8x128xf32>
      %325 = tpu.matmul %323, %324, %cst_225 {dimension_numbers = #tpu.dot_dimension_numbers<[1], [0], [0], [1], [0, 0, 1, 1], [], []>} : vector<8x8xf32>, vector<8x128xf32>, vector<8x128xf32> -> vector<8x128xf32>
      %326 = arith.addf %321, %325 : vector<8x128xf32>
      %c25_226 = arith.constant 25 : index
      %c0_227 = arith.constant 0 : index
      %c0_228 = arith.constant 0 : index
      %327 = vector.load %arg3[%c25_226, %c0_227, %c0_228] : memref<33x8x8xf32, #tpu.memory_space<vmem>>, vector<1x8x8xf32>
      %328 = vector.shape_cast %327 : vector<1x8x8xf32> to vector<8x8xf32>
      %329 = vector.extract_strided_slice %200 {offsets = [0, 25], sizes = [8, 128], strides = [1, 1]} : vector<8x161xf32> to vector<8x128xf32>
      %cst_229 = arith.constant dense<0.000000e+00> : vector<8x128xf32>
      %330 = tpu.matmul %328, %329, %cst_229 {dimension_numbers = #tpu.dot_dimension_numbers<[1], [0], [0], [1], [0, 0, 1, 1], [], []>} : vector<8x8xf32>, vector<8x128xf32>, vector<8x128xf32> -> vector<8x128xf32>
      %331 = arith.addf %326, %330 : vector<8x128xf32>
      %c26_230 = arith.constant 26 : index
      %c0_231 = arith.constant 0 : index
      %c0_232 = arith.constant 0 : index
      %332 = vector.load %arg3[%c26_230, %c0_231, %c0_232] : memref<33x8x8xf32, #tpu.memory_space<vmem>>, vector<1x8x8xf32>
      %333 = vector.shape_cast %332 : vector<1x8x8xf32> to vector<8x8xf32>
      %334 = vector.extract_strided_slice %200 {offsets = [0, 26], sizes = [8, 128], strides = [1, 1]} : vector<8x161xf32> to vector<8x128xf32>
      %cst_233 = arith.constant dense<0.000000e+00> : vector<8x128xf32>
      %335 = tpu.matmul %333, %334, %cst_233 {dimension_numbers = #tpu.dot_dimension_numbers<[1], [0], [0], [1], [0, 0, 1, 1], [], []>} : vector<8x8xf32>, vector<8x128xf32>, vector<8x128xf32> -> vector<8x128xf32>
      %336 = arith.addf %331, %335 : vector<8x128xf32>
      %c27_234 = arith.constant 27 : index
      %c0_235 = arith.constant 0 : index
      %c0_236 = arith.constant 0 : index
      %337 = vector.load %arg3[%c27_234, %c0_235, %c0_236] : memref<33x8x8xf32, #tpu.memory_space<vmem>>, vector<1x8x8xf32>
      %338 = vector.shape_cast %337 : vector<1x8x8xf32> to vector<8x8xf32>
      %339 = vector.extract_strided_slice %200 {offsets = [0, 27], sizes = [8, 128], strides = [1, 1]} : vector<8x161xf32> to vector<8x128xf32>
      %cst_237 = arith.constant dense<0.000000e+00> : vector<8x128xf32>
      %340 = tpu.matmul %338, %339, %cst_237 {dimension_numbers = #tpu.dot_dimension_numbers<[1], [0], [0], [1], [0, 0, 1, 1], [], []>} : vector<8x8xf32>, vector<8x128xf32>, vector<8x128xf32> -> vector<8x128xf32>
      %341 = arith.addf %336, %340 : vector<8x128xf32>
      %c28_238 = arith.constant 28 : index
      %c0_239 = arith.constant 0 : index
      %c0_240 = arith.constant 0 : index
      %342 = vector.load %arg3[%c28_238, %c0_239, %c0_240] : memref<33x8x8xf32, #tpu.memory_space<vmem>>, vector<1x8x8xf32>
      %343 = vector.shape_cast %342 : vector<1x8x8xf32> to vector<8x8xf32>
      %344 = vector.extract_strided_slice %200 {offsets = [0, 28], sizes = [8, 128], strides = [1, 1]} : vector<8x161xf32> to vector<8x128xf32>
      %cst_241 = arith.constant dense<0.000000e+00> : vector<8x128xf32>
      %345 = tpu.matmul %343, %344, %cst_241 {dimension_numbers = #tpu.dot_dimension_numbers<[1], [0], [0], [1], [0, 0, 1, 1], [], []>} : vector<8x8xf32>, vector<8x128xf32>, vector<8x128xf32> -> vector<8x128xf32>
      %346 = arith.addf %341, %345 : vector<8x128xf32>
      %c29_242 = arith.constant 29 : index
      %c0_243 = arith.constant 0 : index
      %c0_244 = arith.constant 0 : index
      %347 = vector.load %arg3[%c29_242, %c0_243, %c0_244] : memref<33x8x8xf32, #tpu.memory_space<vmem>>, vector<1x8x8xf32>
      %348 = vector.shape_cast %347 : vector<1x8x8xf32> to vector<8x8xf32>
      %349 = vector.extract_strided_slice %200 {offsets = [0, 29], sizes = [8, 128], strides = [1, 1]} : vector<8x161xf32> to vector<8x128xf32>
      %cst_245 = arith.constant dense<0.000000e+00> : vector<8x128xf32>
      %350 = tpu.matmul %348, %349, %cst_245 {dimension_numbers = #tpu.dot_dimension_numbers<[1], [0], [0], [1], [0, 0, 1, 1], [], []>} : vector<8x8xf32>, vector<8x128xf32>, vector<8x128xf32> -> vector<8x128xf32>
      %351 = arith.addf %346, %350 : vector<8x128xf32>
      %c30_246 = arith.constant 30 : index
      %c0_247 = arith.constant 0 : index
      %c0_248 = arith.constant 0 : index
      %352 = vector.load %arg3[%c30_246, %c0_247, %c0_248] : memref<33x8x8xf32, #tpu.memory_space<vmem>>, vector<1x8x8xf32>
      %353 = vector.shape_cast %352 : vector<1x8x8xf32> to vector<8x8xf32>
      %354 = vector.extract_strided_slice %200 {offsets = [0, 30], sizes = [8, 128], strides = [1, 1]} : vector<8x161xf32> to vector<8x128xf32>
      %cst_249 = arith.constant dense<0.000000e+00> : vector<8x128xf32>
      %355 = tpu.matmul %353, %354, %cst_249 {dimension_numbers = #tpu.dot_dimension_numbers<[1], [0], [0], [1], [0, 0, 1, 1], [], []>} : vector<8x8xf32>, vector<8x128xf32>, vector<8x128xf32> -> vector<8x128xf32>
      %356 = arith.addf %351, %355 : vector<8x128xf32>
      %c31_250 = arith.constant 31 : index
      %c0_251 = arith.constant 0 : index
      %c0_252 = arith.constant 0 : index
      %357 = vector.load %arg3[%c31_250, %c0_251, %c0_252] : memref<33x8x8xf32, #tpu.memory_space<vmem>>, vector<1x8x8xf32>
      %358 = vector.shape_cast %357 : vector<1x8x8xf32> to vector<8x8xf32>
      %359 = vector.extract_strided_slice %200 {offsets = [0, 31], sizes = [8, 128], strides = [1, 1]} : vector<8x161xf32> to vector<8x128xf32>
      %cst_253 = arith.constant dense<0.000000e+00> : vector<8x128xf32>
      %360 = tpu.matmul %358, %359, %cst_253 {dimension_numbers = #tpu.dot_dimension_numbers<[1], [0], [0], [1], [0, 0, 1, 1], [], []>} : vector<8x8xf32>, vector<8x128xf32>, vector<8x128xf32> -> vector<8x128xf32>
      %361 = arith.addf %356, %360 : vector<8x128xf32>
      %c32_254 = arith.constant 32 : index
      %c0_255 = arith.constant 0 : index
      %c0_256 = arith.constant 0 : index
      %362 = vector.load %arg3[%c32_254, %c0_255, %c0_256] : memref<33x8x8xf32, #tpu.memory_space<vmem>>, vector<1x8x8xf32>
      %363 = vector.shape_cast %362 : vector<1x8x8xf32> to vector<8x8xf32>
      %364 = vector.extract_strided_slice %200 {offsets = [0, 32], sizes = [8, 128], strides = [1, 1]} : vector<8x161xf32> to vector<8x128xf32>
      %cst_257 = arith.constant dense<0.000000e+00> : vector<8x128xf32>
      %365 = tpu.matmul %363, %364, %cst_257 {dimension_numbers = #tpu.dot_dimension_numbers<[1], [0], [0], [1], [0, 0, 1, 1], [], []>} : vector<8x8xf32>, vector<8x128xf32>, vector<8x128xf32> -> vector<8x128xf32>
      %366 = arith.addf %361, %365 : vector<8x128xf32>
      %367 = vector.broadcast %3 : vector<8x1xf32> to vector<8x128xf32>
      %368 = arith.addf %366, %367 : vector<8x128xf32>
      %369 = math.absf %368 : vector<8x128xf32>
      %370 = vector.broadcast %15 : vector<1x128xf32> to vector<8x128xf32>
      %371 = arith.mulf %369, %370 : vector<8x128xf32>
      %cst_258 = arith.constant dense<0.000000e+00> : vector<8xf32>
      %372 = vector.multi_reduction <add>, %371, %cst_258 [1] : vector<8x128xf32> to vector<8xf32>
      %373 = vector.shape_cast %372 : vector<8xf32> to vector<8x1xf32>
      %cst_259 = arith.constant 7.812500e-03 : f32
      %374 = vector.broadcast %cst_259 : f32 to vector<8x1xf32>
      %375 = arith.mulf %373, %374 : vector<8x1xf32>
      %cst_260 = arith.constant dense<0.000000e+00> : vector<8x1xf32>
      %376 = tpu.matmul %0, %375, %cst_260 {dimension_numbers = #tpu.dot_dimension_numbers<[1], [0], [0], [1], [0, 0, 1, 1], [], []>} : vector<8x8xf32>, vector<8x1xf32>, vector<8x1xf32> -> vector<8x1xf32>
      %377 = arith.addf %376, %4 : vector<8x1xf32>
      %378 = arith.mulf %377, %5 : vector<8x1xf32>
      %379 = arith.addf %378, %6 : vector<8x1xf32>
      %cst_261 = arith.constant 0.000000e+00 : f32
      %380 = vector.broadcast %cst_261 : f32 to vector<8x1xf32>
      %381 = arith.maximumf %379, %380 : vector<8x1xf32>
      %cst_262 = arith.constant dense<0.000000e+00> : vector<8x1xf32>
      %382 = tpu.matmul %1, %381, %cst_262 {dimension_numbers = #tpu.dot_dimension_numbers<[1], [0], [0], [1], [0, 0, 1, 1], [], []>} : vector<8x8xf32>, vector<8x1xf32>, vector<8x1xf32> -> vector<8x1xf32>
      %383 = arith.addf %382, %7 : vector<8x1xf32>
      %cst_263 = arith.constant 0.000000e+00 : f32
      %384 = vector.broadcast %cst_263 : f32 to vector<8x1xf32>
      %385 = arith.subf %384, %383 : vector<8x1xf32>
      %386 = math.exp %385 : vector<8x1xf32>
      %cst_264 = arith.constant 1.000000e+00 : f32
      %387 = vector.broadcast %cst_264 : f32 to vector<8x1xf32>
      %388 = arith.addf %387, %386 : vector<8x1xf32>
      %cst_265 = arith.constant 1.000000e+00 : f32
      %389 = vector.broadcast %cst_265 : f32 to vector<8x1xf32>
      %390 = arith.divf %389, %388 : vector<8x1xf32>
      %391 = arith.mulf %375, %390 : vector<8x1xf32>
      %392 = vector.broadcast %391 : vector<8x1xf32> to vector<8x128xf32>
      %393 = arith.subf %368, %392 : vector<8x128xf32>
      %394 = arith.mulf %393, %393 : vector<8x128xf32>
      %cst_266 = arith.constant 3.000000e-03 : f32
      %395 = vector.broadcast %cst_266 : f32 to vector<8x128xf32>
      %396 = arith.addf %394, %395 : vector<8x128xf32>
      %397 = math.sqrt %396 : vector<8x128xf32>
      %398 = vector.broadcast %391 : vector<8x1xf32> to vector<8x128xf32>
      %399 = arith.addf %368, %398 : vector<8x128xf32>
      %400 = arith.mulf %399, %399 : vector<8x128xf32>
      %cst_267 = arith.constant 3.000000e-03 : f32
      %401 = vector.broadcast %cst_267 : f32 to vector<8x128xf32>
      %402 = arith.addf %400, %401 : vector<8x128xf32>
      %403 = math.sqrt %402 : vector<8x128xf32>
      %404 = arith.subf %397, %403 : vector<8x128xf32>
      %cst_268 = arith.constant 5.000000e-01 : f32
      %405 = vector.broadcast %cst_268 : f32 to vector<8x128xf32>
      %406 = arith.mulf %405, %404 : vector<8x128xf32>
      %407 = arith.addf %368, %406 : vector<8x128xf32>
      %408 = vector.extract_strided_slice %24 {offsets = [0, 1], sizes = [8, 128], strides = [1, 1]} : vector<8x192xf32> to vector<8x128xf32>
      %409 = arith.addf %408, %407 : vector<8x128xf32>
      %cst_269 = arith.constant 0.000000e+00 : f32
      %410 = vector.broadcast %cst_269 : f32 to vector<8x128xf32>
      %411 = arith.maximumf %409, %410 : vector<8x128xf32>
      %412 = arith.index_cast %18 : i32 to index
      %c0_270 = arith.constant 0 : index
      %c0_271 = arith.constant 0 : index
      %413 = vector.load %arg7[%412, %c0_270, %c0_271] : memref<4x8x128xf32, #tpu.memory_space<vmem>>, vector<1x8x128xf32>
      %414 = vector.shape_cast %413 : vector<1x8x128xf32> to vector<8x128xf32>
      %415 = vector.shape_cast %411 : vector<8x128xf32> to vector<1x8x128xf32>
      tpu.vector_store %arg7[%412, %c0_270, %c0_271], %415 {strides = array<i32>} : memref<4x8x128xf32, #tpu.memory_space<vmem>>, vector<1x8x128xf32>,
    }
    %c4_i32_10 = arith.constant 4 : i32
    return
  }
  func.func @transform_0(%arg0: i32) -> (i32, i32, i32) {
    %c0_i32 = arith.constant 0 : i32
    %c0_i32_0 = arith.constant 0 : i32
    %c0_i32_1 = arith.constant 0 : i32
    return %arg0, %c0_i32, %c0_i32_0 : i32, i32, i32
  }
  func.func @transform_1(%arg0: i32) -> (i32, i32, i32) {
    %c0_i32 = arith.constant 0 : i32
    %c0_i32_0 = arith.constant 0 : i32
    %c0_i32_1 = arith.constant 0 : i32
    %c0_i32_2 = arith.constant 0 : i32
    return %c0_i32, %c0_i32_0, %c0_i32_1 : i32, i32, i32
  }
  func.func @transform_2(%arg0: i32) -> (i32, i32, i32) {
    %c0_i32 = arith.constant 0 : i32
    %c0_i32_0 = arith.constant 0 : i32
    %c0_i32_1 = arith.constant 0 : i32
    %c0_i32_2 = arith.constant 0 : i32
    return %c0_i32, %c0_i32_0, %c0_i32_1 : i32, i32, i32
  }
  func.func @transform_3(%arg0: i32) -> (i32, i32) {
    %c0_i32 = arith.constant 0 : i32
    %c0_i32_0 = arith.constant 0 : i32
    %c0_i32_1 = arith.constant 0 : i32
    return %c0_i32, %c0_i32_0 : i32, i32
  }
  func.func @transform_4(%arg0: i32) -> (i32, i32) {
    %c0_i32 = arith.constant 0 : i32
    %c0_i32_0 = arith.constant 0 : i32
    %c0_i32_1 = arith.constant 0 : i32
    return %c0_i32, %c0_i32_0 : i32, i32
  }
  func.func @transform_5(%arg0: i32) -> (i32, i32) {
    %c0_i32 = arith.constant 0 : i32
    %c0_i32_0 = arith.constant 0 : i32
    %c0_i32_1 = arith.constant 0 : i32
    return %c0_i32, %c0_i32_0 : i32, i32
  }
  func.func @transform_6(%arg0: i32) -> (i32, i32, i32) {
    %c0_i32 = arith.constant 0 : i32
    %c0_i32_0 = arith.constant 0 : i32
    %c0_i32_1 = arith.constant 0 : i32
    return %arg0, %c0_i32, %c0_i32_0 : i32, i32, i32
  }
}

</mosaic_0001>

<llo_original>
// kernel: tpu_custom_call.1
$region0: #{tpu_custom_call.1}
  #allocation0 [shape = 'u32[]', space=smem, size = 0x4, offset = 0x4, fixed_abs, tag = 'smem constant byte address 0x4 - core index']
  #allocation1 [shape = 'u32[144,128]{1,0:T(1,128)}', space=vmem, size = 0x12000, scoped, tag = 'internal scratch']
  %s0 = inlined_call_operand.vmem [shape: f32[8,8,188], index: 0, kind: input, shape index: {}]
  %s1 = inlined_call_operand.vmem [shape: f32[33,8,8], index: 1, kind: input, shape index: {}]
  %s2 = inlined_call_operand.vmem [shape: f32[33,8,8], index: 2, kind: input, shape index: {}]
  %s3 = inlined_call_operand.vmem [shape: f32[8,8], index: 3, kind: input, shape index: {}]
  %s4 = inlined_call_operand.vmem [shape: f32[8,8], index: 4, kind: input, shape index: {}]
  %s5 = inlined_call_operand.vmem [shape: f32[8,6], index: 5, kind: input, shape index: {}]
  %s6 = inlined_call_operand.hbm [shape: f32[8,8,128], index: 6, kind: output, shape index: {}]
  %s7 = sld [smem:[#allocation0]]
  $region64: #{tpu_custom_call.1} parent=0
    _
  %s9 = ssub.s32 1, %s7
  %s10 = scalar_select 0, %s9, %s7
  $region1: #{tpu_custom_call.1} parent=0
    #allocation2 [shape = 'u8[32768]{0}', space=vmem, size = 0x8000, scoped, tag = 'output window, operand 0']
    #allocation3 [shape = 's32[2]{0}', space=sflag, size = 0x8, scoped, tag = 'scoped memory for tpu_custom_call.1']
    %11 = vsyncpa [#allocation3], 0
    %s12 = scalar_lea.sflag [#allocation3], 1
    %13 = vsyncpa %s12, 0
    loop: start=0, step=1, limit=4
    $region2: #{tpu_custom_call.1} parent=1 // loop_pre_header
      _
    $region3: #{tpu_custom_call.1} parent=1 // loop_header
      %s15 = sphi 0, %s19
      %p16 = scmp.ge.s32.totalorder %s15, 4
      %s25 = sphi 0, %s27
      %s28 = sphi 0, %s25
      %s29 = sphi 0, %s28
      %s45 = sphi 0, %s29
      %s49 = sphi 0, %s49
      %s51 = sphi 0, %s49
      %s52 = sphi 0, %s51
      %s66 = sphi 0, %s52
      %s70 = sphi 0, %s70
      %s72 = sphi 0, %s70
      %s73 = sphi 0, %s72
      %s87 = sphi 0, %s73
      %s91 = sphi 0, %s91
      %s93 = sphi 0, %s91
      %s94 = sphi 0, %s93
      %s108 = sphi 0, %s94
      %s112 = sphi 0, %s112
      %s114 = sphi 0, %s112
      %s115 = sphi 0, %s114
      %s129 = sphi 0, %s115
      %s133 = sphi 0, %s133
      %s135 = sphi 0, %s133
      %s136 = sphi 0, %s135
      %s150 = sphi 0, %s136
      %s156 = sphi 0, %s158
      %s159 = sphi 0, %s156
      %s160 = sphi 0, %s159
      %s176 = sphi 0, %s160
    $region4: #{tpu_custom_call.1} parent=1 // loop_header_branch
      %18 = sbr.rel (%p16) target = $region8
    $region5: #{tpu_custom_call.1} parent=1 // loop_body
      %s20 = ssub.s32 %s15, 1
      %s21 = ssub.s32 %s15, 2
      %s22 = sadd.s32 %s15, 1
      %s23 = ssub.s32 %s15, %s22
      %p24 = scmp.eq.s32.totalorder %s23, 0
      %s26 = sadd.s32 %s25, 1
      %s27 = scalar_select %p24, %s25, %s26
      %p30 = pneg %p24
      %p31 = scmp.eq.s32.totalorder %s15, 1
      %p32 = por %p30, %p31
      %p33 = scmp.ne.s32.totalorder %s25, %s28
      %p34 = scmp.eq.s32.totalorder %s15, 0
      %p35 = por %p33, %p34
      %p36 = scmp.ne.s32.totalorder %s25, %s28
      %p37 = scmp.eq.s32.totalorder %s20, 1
      %p38 = por %p36, %p37
      %p39 = scmp.ne.s32.totalorder %s28, %s29
      %p40 = scmp.eq.s32.totalorder %s20, 0
      %p41 = por %p39, %p40
      %p42 = scmp.ne.s32.totalorder %s28, %s29
      %p43 = scmp.eq.s32.totalorder %s21, 1
      %p44 = por %p42, %p43
      %p46 = scmp.ne.s32.totalorder %s29, %s45
      %p47 = scmp.eq.s32.totalorder %s21, 0
      %p48 = por %p46, %p47
      %s50 = sadd.s32 %s49, 1
      %p53 = scmp.eq.s32.totalorder %s15, 1
      %p54 = scmp.ne.s32.totalorder %s49, %s51
      %p55 = scmp.eq.s32.totalorder %s15, 0
      %p56 = por %p54, %p55
      %p57 = scmp.ne.s32.totalorder %s49, %s51
      %p58 = scmp.eq.s32.totalorder %s20, 1
      %p59 = por %p57, %p58
      %p60 = scmp.ne.s32.totalorder %s51, %s52
      %p61 = scmp.eq.s32.totalorder %s20, 0
      %p62 = por %p60, %p61
      %p63 = scmp.ne.s32.totalorder %s51, %s52
      %p64 = scmp.eq.s32.totalorder %s21, 1
      %p65 = por %p63, %p64
      %p67 = scmp.ne.s32.totalorder %s52, %s66
      %p68 = scmp.eq.s32.totalorder %s21, 0
      %p69 = por %p67, %p68
      %s71 = sadd.s32 %s70, 1
      %p74 = scmp.eq.s32.totalorder %s15, 1
      %p75 = scmp.ne.s32.totalorder %s70, %s72
      %p76 = scmp.eq.s32.totalorder %s15, 0
      %p77 = por %p75, %p76
      %p78 = scmp.ne.s32.totalorder %s70, %s72
      %p79 = scmp.eq.s32.totalorder %s20, 1
      %p80 = por %p78, %p79
      %p81 = scmp.ne.s32.totalorder %s72, %s73
      %p82 = scmp.eq.s32.totalorder %s20, 0
      %p83 = por %p81, %p82
      %p84 = scmp.ne.s32.totalorder %s72, %s73
      %p85 = scmp.eq.s32.totalorder %s21, 1
      %p86 = por %p84, %p85
      %p88 = scmp.ne.s32.totalorder %s73, %s87
      %p89 = scmp.eq.s32.totalorder %s21, 0
      %p90 = por %p88, %p89
      %s92 = sadd.s32 %s91, 1
      %p95 = scmp.eq.s32.totalorder %s15, 1
      %p96 = scmp.ne.s32.totalorder %s91, %s93
      %p97 = scmp.eq.s32.totalorder %s15, 0
      %p98 = por %p96, %p97
      %p99 = scmp.ne.s32.totalorder %s91, %s93
      %p100 = scmp.eq.s32.totalorder %s20, 1
      %p101 = por %p99, %p100
      %p102 = scmp.ne.s32.totalorder %s93, %s94
      %p103 = scmp.eq.s32.totalorder %s20, 0
      %p104 = por %p102, %p103
      %p105 = scmp.ne.s32.totalorder %s93, %s94
      %p106 = scmp.eq.s32.totalorder %s21, 1
      %p107 = por %p105, %p106
      %p109 = scmp.ne.s32.totalorder %s94, %s108
      %p110 = scmp.eq.s32.totalorder %s21, 0
      %p111 = por %p109, %p110
      %s113 = sadd.s32 %s112, 1
      %p116 = scmp.eq.s32.totalorder %s15, 1
      %p117 = scmp.ne.s32.totalorder %s112, %s114
      %p118 = scmp.eq.s32.totalorder %s15, 0
      %p119 = por %p117, %p118
      %p120 = scmp.ne.s32.totalorder %s112, %s114
      %p121 = scmp.eq.s32.totalorder %s20, 1
      %p122 = por %p120, %p121
      %p123 = scmp.ne.s32.totalorder %s114, %s115
      %p124 = scmp.eq.s32.totalorder %s20, 0
      %p125 = por %p123, %p124
      %p126 = scmp.ne.s32.totalorder %s114, %s115
      %p127 = scmp.eq.s32.totalorder %s21, 1
      %p128 = por %p126, %p127
      %p130 = scmp.ne.s32.totalorder %s115, %s129
      %p131 = scmp.eq.s32.totalorder %s21, 0
      %p132 = por %p130, %p131
      %s134 = sadd.s32 %s133, 1
      %p137 = scmp.eq.s32.totalorder %s15, 1
      %p138 = scmp.ne.s32.totalorder %s133, %s135
      %p139 = scmp.eq.s32.totalorder %s15, 0
      %p140 = por %p138, %p139
      %p141 = scmp.ne.s32.totalorder %s133, %s135
      %p142 = scmp.eq.s32.totalorder %s20, 1
      %p143 = por %p141, %p142
      %p144 = scmp.ne.s32.totalorder %s135, %s136
      %p145 = scmp.eq.s32.totalorder %s20, 0
      %p146 = por %p144, %p145
      %p147 = scmp.ne.s32.totalorder %s135, %s136
      %p148 = scmp.eq.s32.totalorder %s21, 1
      %p149 = por %p147, %p148
      %p151 = scmp.ne.s32.totalorder %s136, %s150
      %p152 = scmp.eq.s32.totalorder %s21, 0
      %p153 = por %p151, %p152
      %s154 = ssub.s32 %s15, %s22
      %p155 = scmp.eq.s32.totalorder %s154, 0
      %s157 = sadd.s32 %s156, 1
      %s158 = scalar_select %p155, %s156, %s157
      %p161 = pneg %p155
      %p162 = scmp.eq.s32.totalorder %s15, 1
      %p163 = por %p161, %p162
      %p164 = scmp.ne.s32.totalorder %s156, %s159
      %p165 = scmp.eq.s32.totalorder %s15, 0
      %p166 = por %p164, %p165
      %p167 = scmp.ne.s32.totalorder %s156, %s159
      %p168 = scmp.eq.s32.totalorder %s20, 1
      %p169 = por %p167, %p168
      %p170 = scmp.ne.s32.totalorder %s159, %s160
      %p171 = scmp.eq.s32.totalorder %s20, 0
      %p172 = por %p170, %p171
      %p173 = scmp.ne.s32.totalorder %s159, %s160
      %p174 = scmp.eq.s32.totalorder %s21, 1
      %p175 = por %p173, %p174
      %p177 = scmp.ne.s32.totalorder %s160, %s176
      %p178 = scmp.eq.s32.totalorder %s21, 0
      %p179 = por %p177, %p178
      %p180 = scmp.le.s32.totalorder 1, %s15
      %p181 = scmp.lt.s32.totalorder %s15, 3
      %p182 = pnand %p180, %p181
      %p183 = pneg %p182
      // Predicated region
      $region9: #{tpu_custom_call.1} parent=5 // pred_check
        _
      $region10: #{tpu_custom_call.1} parent=5 // pred_check_branch
        %185 = sbr.rel (%p182) target = $region12
      $region11: #{tpu_custom_call.1} parent=5 // pred_region
        %s186 = ssub.s32 %s15, 1
        // Predicated region
        $region13: #{tpu_custom_call.1} parent=11 // pred_check
          %p187 = pneg %p62
        $region14: #{tpu_custom_call.1} parent=11 // pred_check_branch
          %189 = sbr.rel (%p187) target = $region16
        $region15: #{tpu_custom_call.1} parent=11 // pred_region
          _
        $region16: #{tpu_custom_call.1} parent=11 // pred_fallthru
          _
        // Predicated region
        $region17: #{tpu_custom_call.1} parent=11 // pred_check
          %p190 = pneg %p83
        $region18: #{tpu_custom_call.1} parent=11 // pred_check_branch
          %192 = sbr.rel (%p190) target = $region20
        $region19: #{tpu_custom_call.1} parent=11 // pred_region
          _
        $region20: #{tpu_custom_call.1} parent=11 // pred_fallthru
          _
        // Predicated region
        $region21: #{tpu_custom_call.1} parent=11 // pred_check
          %p193 = pneg %p104
        $region22: #{tpu_custom_call.1} parent=11 // pred_check_branch
          %195 = sbr.rel (%p193) target = $region24
        $region23: #{tpu_custom_call.1} parent=11 // pred_region
          _
        $region24: #{tpu_custom_call.1} parent=11 // pred_fallthru
          _
        // Predicated region
        $region25: #{tpu_custom_call.1} parent=11 // pred_check
          %p196 = pneg %p125
        $region26: #{tpu_custom_call.1} parent=11 // pred_check_branch
          %198 = sbr.rel (%p196) target = $region28
        $region27: #{tpu_custom_call.1} parent=11 // pred_region
          _
        $region28: #{tpu_custom_call.1} parent=11 // pred_fallthru
          _
        // Predicated region
        $region29: #{tpu_custom_call.1} parent=11 // pred_check
          %p199 = pneg %p146
        $region30: #{tpu_custom_call.1} parent=11 // pred_check_branch
          %201 = sbr.rel (%p199) target = $region32
        $region31: #{tpu_custom_call.1} parent=11 // pred_region
          _
        $region32: #{tpu_custom_call.1} parent=11 // pred_fallthru
          _
      $region12: #{tpu_custom_call.1} parent=5 // pred_fallthru
        _
      %p202 = scmp.lt.s32.totalorder %s15, 2
      // Predicated region
      $region33: #{tpu_custom_call.1} parent=5 // pred_check
        %p203 = pneg %p202
      $region34: #{tpu_custom_call.1} parent=5 // pred_check_branch
        %205 = sbr.rel (%p203) target = $region36
      $region35: #{tpu_custom_call.1} parent=5 // pred_region
        // Predicated region
        $region37: #{tpu_custom_call.1} parent=35 // pred_check
          %p206 = pneg %p35
        $region38: #{tpu_custom_call.1} parent=35 // pred_check_branch
          %208 = sbr.rel (%p206) target = $region40
        $region39: #{tpu_custom_call.1} parent=35 // pred_region
          %s209 = smul.u32 4, %s15
          %p210 = scmp.lt.s32.totalorder %s209, 7
          %s211 = scalar_select %p210, %s209, 7
          %s212 = smul.addr %s211, 2
          %s213 = smul.addr %s212, 8
          %s214 = scalar_lea.vmem %s0, %s213
          %s215 = smul.u32 4, %s15
        $region40: #{tpu_custom_call.1} parent=35 // pred_fallthru
          _
      $region36: #{tpu_custom_call.1} parent=5 // pred_fallthru
        _
      %p216 = scmp.le.s32.totalorder 1, %s15
      %p217 = scmp.lt.s32.totalorder %s15, 3
      %p218 = pnand %p216, %p217
      %p219 = pneg %p218
      // Predicated region
      $region41: #{tpu_custom_call.1} parent=5 // pred_check
        _
      $region42: #{tpu_custom_call.1} parent=5 // pred_check_branch
        %221 = sbr.rel (%p218) target = $region44
      $region43: #{tpu_custom_call.1} parent=5 // pred_region
        %s222 = ssub.s32 %s15, 1
        %s223 = smul.u32 4, %s20
        %p224 = scmp.lt.s32.totalorder %s223, 7
        %s225 = scalar_select %p224, %s223, 7
        %s226 = smul.addr %s225, 2
        %s227 = smul.addr %s226, 8
        %s228 = scalar_lea.vmem %s0, %s227
        %p229 = pneg %p41
        %p230 = pneg %p38
        %p231 = pneg %p62
        %p232 = pneg %p59
        %p233 = pneg %p83
        %p234 = pneg %p80
        %p235 = pneg %p104
        %p236 = pneg %p101
        %p237 = pneg %p125
        %p238 = pneg %p122
        %p239 = pneg %p146
        %p240 = pneg %p143
        %p241 = pneg %p172
        %p242 = pneg %p169
        %s243 = sand.u32 %s159, 1
        %s244 = scalar_lea.sflag [#allocation3], %s243
        %s245 = sand.u32 %s159, 1
        %s246 = smul.addr %s245, 32
        %s247 = scalar_lea.vmem [#allocation2], %s246
        %s248 = smul.u32 4, %s20
        %p249 = scmp.lt.s32.totalorder %s248, 7
        %s250 = scalar_select %p249, %s248, 7
        %s251 = smul.addr %s250, 2
        %s252 = smul.addr %s251, 8
        %s253 = scalar_lea.vmem %s0, %s252
        %s254 = smul.u32 4, %s20
        %s255 = smul.u32 4, %s20
        %v256 = vld [vmem:[%s3] sm:$0xff]
        %v257 = vld [vmem:[%s4] sm:$0xff]
        %v258 = vld [vmem:[%s5] sm:$0xff]
        %v259 = vlaneseq
        %v260 = vand.u32 %v259, 127
        %v261 = vadd.s32 %v260, 128
        %vm262 = vcmp.lt.s32.totalorder %v260, 158
        %vm263 = vcmp.lt.s32.totalorder %v261, 158
        %vm264 = vcmp.lt.s32.totalorder %v260, 128
        %v265 = vsel %vm264, 1, 0
        %v266 = vcvt.s32.f32 %v265
        loop: start=0, step=1, limit=4
        $region45: #{tpu_custom_call.1} parent=43 // loop_pre_header
          _
        $region46: #{tpu_custom_call.1} parent=43 // loop_header
          %s268 = sphi 0, %s272
          %p269 = scmp.ge.s32.totalorder %s268, 4
        $region47: #{tpu_custom_call.1} parent=43 // loop_header_branch
          %271 = sbr.rel (%p269) target = $region51
        $region48: #{tpu_custom_call.1} parent=43 // loop_body
          %s273 = smul.u32 %s268, 2
          %s274 = smul.addr %s273, 8
          %s275 = scalar_lea.vmem %s253, %s274
          %v276 = vld [vmem:[%s275] sm:$0xff]
          %v277 = vld [vmem:[%s275 + $0x8] sm:$0xff]
          %280 = vrot.lane.b32.xlu0 %v276, 1
          %v281 = vpop.permute.xlu0 %280
          %282 = vrot.lane.b32.xlu0 %v277, 1
          %v283 = vpop.permute.xlu0 %282
          %vm284 = vcmask 7168
          %v285 = vsel %vm284, %v281, %v283
          %v288 = vsel %vm284, 0.0, %v281
          %vm289 = vcmask 498688
          %v290 = vsel %vm289, %v285, 0.0
          %v291 = vld [vmem:[%s1] sm:$0xff]
          %s292 = scalar_lea.vmem %s1, 8
          %v293 = vld [vmem:[%s292] sm:$0xff]
          %296 = vrot.lane.b32.xlu0 %v288, 127
          %v297 = vpop.permute.xlu0 %296
          %298 = vrot.lane.b32.xlu0 %v290, 127
          %v299 = vpop.permute.xlu0 %298
          %vm300 = vcmask 1039360
          %v301 = vsel %vm300, %v297, %v299
          %vm304 = vcmask 64512
          %v306 = vsel %vm304, %v293, 0
          %308 = vmatprep.subr.mxu0 0.0
          %309 = vmatpush1.msra.mxu0 0.0
          %310 = vmatprep.subr.mxu0 0.0
          %311 = vmatpush1.msra.mxu0 0.0
          %312 = vmatprep.subr.mxu0 0.0
          %313 = vmatpush1.msra.mxu0 0.0
          %314 = vmatprep.subr.mxu0 0.0
          %315 = vmatpush1.msra.mxu0 0.0
          %316 = vmatprep.subr.mxu0 0.0
          %317 = vmatpush1.msra.mxu0 0.0
          %318 = vmatprep.subr.mxu0 0.0
          %319 = vmatpush1.msra.mxu0 0.0
          %320 = vmatprep.subr.mxu0 0.0
          %321 = vmatpush1.msra.mxu0 0.0
          %322 = vmatprep.subr.mxu0 0.0
          %323 = vmatpush1.msra.mxu0 0.0
          %324 = vmatprep.subr.mxu0 0.0
          %325 = vmatpush1.msra.mxu0 0.0
          %326 = vmatprep.subr.mxu0 0.0
          %327 = vmatpush1.msra.mxu0 0.0
          %328 = vmatprep.subr.mxu0 0.0
          %329 = vmatpush1.msra.mxu0 0.0
          %330 = vmatprep.subr.mxu0 0.0
          %331 = vmatpush1.msra.mxu0 0.0
          %332 = vmatprep.subr.mxu0 0.0
          %333 = vmatpush1.msra.mxu0 0.0
          %334 = vmatprep.subr.mxu0 0.0
          %335 = vmatpush1.msra.mxu0 0.0
          %336 = vmatprep.subr.mxu0 0.0
          %337 = vmatpush1.msra.mxu0 0.0
          %338 = vmatprep.subr.mxu0 %v299
          %339 = vmatpush1.msra.mxu0 %v301
          %340 = vmatprep.subr.mxu0 0.0
          %341 = vmatpush2.msra.mxu0 0.0
          %342 = vmatprep.subr.mxu0 0.0
          %343 = vmatpush2.msra.mxu0 0.0
          %344 = vmatprep.subr.mxu0 0.0
          %345 = vmatpush2.msra.mxu0 0.0
          %346 = vmatprep.subr.mxu0 0.0
          %347 = vmatpush2.msra.mxu0 0.0
          %348 = vmatprep.subr.mxu0 0.0
          %349 = vmatpush2.msra.mxu0 0.0
          %350 = vmatprep.subr.mxu0 0.0
          %351 = vmatpush2.msra.mxu0 0.0
          %352 = vmatprep.subr.mxu0 0.0
          %353 = vmatpush2.msra.mxu0 0.0
          %354 = vmatprep.subr.mxu0 0.0
          %355 = vmatpush2.msra.mxu0 0.0
          %356 = vmatprep.subr.mxu0 0.0
          %357 = vmatpush2.msra.mxu0 0.0
          %358 = vmatprep.subr.mxu0 0.0
          %359 = vmatpush2.msra.mxu0 0.0
          %360 = vmatprep.subr.mxu0 0.0
          %361 = vmatpush2.msra.mxu0 0.0
          %362 = vmatprep.subr.mxu0 0.0
          %363 = vmatpush2.msra.mxu0 0.0
          %364 = vmatprep.subr.mxu0 0.0
          %365 = vmatpush2.msra.mxu0 0.0
          %366 = vmatprep.subr.mxu0 0.0
          %367 = vmatpush2.msra.mxu0 0.0
          %368 = vmatprep.subr.mxu0 0.0
          %369 = vmatpush2.msra.mxu0 0.0
          %370 = vmatprep.subr.mxu0 0.0
          %371 = vmatpush2.msra.mxu0 0.0
          %372 = vmatprep.mubr.f32.mxu0 0.0
          %373 = vmatmul.mubr.f32.gmra.mxu0 %v306
          %v374 = vpop.f32.mrf.mxu0
          %v375 = vadd.f32 0.0, %v374
          %v376 = vpop.f32.mrf.mxu0
          %v377 = vadd.f32 0.0, %v376
          %378 = vdwg.mxu0
          %v380 = vsel %vm304, %v291, 0
          %382 = vmatprep.subr.mxu0 0.0
          %383 = vmatpush1.msra.mxu0 0.0
          %384 = vmatprep.subr.mxu0 0.0
          %385 = vmatpush1.msra.mxu0 0.0
          %386 = vmatprep.subr.mxu0 0.0
          %387 = vmatpush1.msra.mxu0 0.0
          %388 = vmatprep.subr.mxu0 0.0
          %389 = vmatpush1.msra.mxu0 0.0
          %390 = vmatprep.subr.mxu0 0.0
          %391 = vmatpush1.msra.mxu0 0.0
          %392 = vmatprep.subr.mxu0 0.0
          %393 = vmatpush1.msra.mxu0 0.0
          %394 = vmatprep.subr.mxu0 0.0
          %395 = vmatpush1.msra.mxu0 0.0
          %396 = vmatprep.subr.mxu0 0.0
          %397 = vmatpush1.msra.mxu0 0.0
          %398 = vmatprep.subr.mxu0 0.0
          %399 = vmatpush1.msra.mxu0 0.0
          %400 = vmatprep.subr.mxu0 0.0
          %401 = vmatpush1.msra.mxu0 0.0
          %402 = vmatprep.subr.mxu0 0.0
          %403 = vmatpush1.msra.mxu0 0.0
          %404 = vmatprep.subr.mxu0 0.0
          %405 = vmatpush1.msra.mxu0 0.0
          %406 = vmatprep.subr.mxu0 0.0
          %407 = vmatpush1.msra.mxu0 0.0
          %408 = vmatprep.subr.mxu0 0.0
          %409 = vmatpush1.msra.mxu0 0.0
          %410 = vmatprep.subr.mxu0 0.0
          %411 = vmatpush1.msra.mxu0 0.0
          %412 = vmatprep.subr.mxu0 %v290
          %413 = vmatpush1.msra.mxu0 %v288
          %414 = vmatprep.subr.mxu0 0.0
          %415 = vmatpush2.msra.mxu0 0.0
          %416 = vmatprep.subr.mxu0 0.0
          %417 = vmatpush2.msra.mxu0 0.0
          %418 = vmatprep.subr.mxu0 0.0
          %419 = vmatpush2.msra.mxu0 0.0
          %420 = vmatprep.subr.mxu0 0.0
          %421 = vmatpush2.msra.mxu0 0.0
          %422 = vmatprep.subr.mxu0 0.0
          %423 = vmatpush2.msra.mxu0 0.0
          %424 = vmatprep.subr.mxu0 0.0
          %425 = vmatpush2.msra.mxu0 0.0
          %426 = vmatprep.subr.mxu0 0.0
          %427 = vmatpush2.msra.mxu0 0.0
          %428 = vmatprep.subr.mxu0 0.0
          %429 = vmatpush2.msra.mxu0 0.0
          %430 = vmatprep.subr.mxu0 0.0
          %431 = vmatpush2.msra.mxu0 0.0
          %432 = vmatprep.subr.mxu0 0.0
          %433 = vmatpush2.msra.mxu0 0.0
          %434 = vmatprep.subr.mxu0 0.0
          %435 = vmatpush2.msra.mxu0 0.0
          %436 = vmatprep.subr.mxu0 0.0
          %437 = vmatpush2.msra.mxu0 0.0
          %438 = vmatprep.subr.mxu0 0.0
          %439 = vmatpush2.msra.mxu0 0.0
          %440 = vmatprep.subr.mxu0 0.0
          %441 = vmatpush2.msra.mxu0 0.0
          %442 = vmatprep.subr.mxu0 0.0
          %443 = vmatpush2.msra.mxu0 0.0
          %444 = vmatprep.subr.mxu0 0.0
          %445 = vmatpush2.msra.mxu0 0.0
          %446 = vmatprep.mubr.f32.mxu0 0.0
          %447 = vmatmul.mubr.f32.gmra.mxu0 %v380
          %v448 = vpop.f32.mrf.mxu0
          %v449 = vadd.f32 %v375, %v448
          %v450 = vpop.f32.mrf.mxu0
          %v451 = vadd.f32 %v377, %v450
          %452 = vdwg.mxu0
          %s453 = scalar_lea.vmem %s1, 16
          %v454 = vld [vmem:[%s453] sm:$0xff]
          %455 = vrot.lane.b32.xlu0 %v288, 126
          %v456 = vpop.permute.xlu0 %455
          %457 = vrot.lane.b32.xlu0 %v290, 126
          %v458 = vpop.permute.xlu0 %457
          %vm459 = vcmask 1031168
          %v460 = vsel %vm459, %v456, %v458
          %v464 = vsel %vm304, %v454, 0
          %466 = vmatprep.subr.mxu0 0.0
          %467 = vmatpush1.msra.mxu0 0.0
          %468 = vmatprep.subr.mxu0 0.0
          %469 = vmatpush1.msra.mxu0 0.0
          %470 = vmatprep.subr.mxu0 0.0
          %471 = vmatpush1.msra.mxu0 0.0
          %472 = vmatprep.subr.mxu0 0.0
          %473 = vmatpush1.msra.mxu0 0.0
          %474 = vmatprep.subr.mxu0 0.0
          %475 = vmatpush1.msra.mxu0 0.0
          %476 = vmatprep.subr.mxu0 0.0
          %477 = vmatpush1.msra.mxu0 0.0
          %478 = vmatprep.subr.mxu0 0.0
          %479 = vmatpush1.msra.mxu0 0.0
          %480 = vmatprep.subr.mxu0 0.0
          %481 = vmatpush1.msra.mxu0 0.0
          %482 = vmatprep.subr.mxu0 0.0
          %483 = vmatpush1.msra.mxu0 0.0
          %484 = vmatprep.subr.mxu0 0.0
          %485 = vmatpush1.msra.mxu0 0.0
          %486 = vmatprep.subr.mxu0 0.0
          %487 = vmatpush1.msra.mxu0 0.0
          %488 = vmatprep.subr.mxu0 0.0
          %489 = vmatpush1.msra.mxu0 0.0
          %490 = vmatprep.subr.mxu0 0.0
          %491 = vmatpush1.msra.mxu0 0.0
          %492 = vmatprep.subr.mxu0 0.0
          %493 = vmatpush1.msra.mxu0 0.0
          %494 = vmatprep.subr.mxu0 0.0
          %495 = vmatpush1.msra.mxu0 0.0
          %496 = vmatprep.subr.mxu0 %v458
          %497 = vmatpush1.msra.mxu0 %v460
          %498 = vmatprep.subr.mxu0 0.0
          %499 = vmatpush2.msra.mxu0 0.0
          %500 = vmatprep.subr.mxu0 0.0
          %501 = vmatpush2.msra.mxu0 0.0
          %502 = vmatprep.subr.mxu0 0.0
          %503 = vmatpush2.msra.mxu0 0.0
          %504 = vmatprep.subr.mxu0 0.0
          %505 = vmatpush2.msra.mxu0 0.0
          %506 = vmatprep.subr.mxu0 0.0
          %507 = vmatpush2.msra.mxu0 0.0
          %508 = vmatprep.subr.mxu0 0.0
          %509 = vmatpush2.msra.mxu0 0.0
          %510 = vmatprep.subr.mxu0 0.0
          %511 = vmatpush2.msra.mxu0 0.0
          %512 = vmatprep.subr.mxu0 0.0
          %513 = vmatpush2.msra.mxu0 0.0
          %514 = vmatprep.subr.mxu0 0.0
          %515 = vmatpush2.msra.mxu0 0.0
          %516 = vmatprep.subr.mxu0 0.0
          %517 = vmatpush2.msra.mxu0 0.0
          %518 = vmatprep.subr.mxu0 0.0
          %519 = vmatpush2.msra.mxu0 0.0
          %520 = vmatprep.subr.mxu0 0.0
          %521 = vmatpush2.msra.mxu0 0.0
          %522 = vmatprep.subr.mxu0 0.0
          %523 = vmatpush2.msra.mxu0 0.0
          %524 = vmatprep.subr.mxu0 0.0
          %525 = vmatpush2.msra.mxu0 0.0
          %526 = vmatprep.subr.mxu0 0.0
          %527 = vmatpush2.msra.mxu0 0.0
          %528 = vmatprep.subr.mxu0 0.0
          %529 = vmatpush2.msra.mxu0 0.0
          %530 = vmatprep.mubr.f32.mxu0 0.0
          %531 = vmatmul.mubr.f32.gmra.mxu0 %v464
          %v532 = vpop.f32.mrf.mxu0
          %v533 = vadd.f32 0.0, %v532
          %v534 = vpop.f32.mrf.mxu0
          %v535 = vadd.f32 0.0, %v534
          %536 = vdwg.mxu0
          %v537 = vadd.f32 %v449, %v533
          %v538 = vadd.f32 %v451, %v535
          %s539 = scalar_lea.vmem %s1, 24
          %v540 = vld [vmem:[%s539] sm:$0xff]
          %541 = vrot.lane.b32.xlu0 %v288, 125
          %v542 = vpop.permute.xlu0 %541
          %543 = vrot.lane.b32.xlu0 %v290, 125
          %v544 = vpop.permute.xlu0 %543
          %vm545 = vcmask 1022976
          %v546 = vsel %vm545, %v542, %v544
          %v550 = vsel %vm304, %v540, 0
          %552 = vmatprep.subr.mxu0 0.0
          %553 = vmatpush1.msra.mxu0 0.0
          %554 = vmatprep.subr.mxu0 0.0
          %555 = vmatpush1.msra.mxu0 0.0
          %556 = vmatprep.subr.mxu0 0.0
          %557 = vmatpush1.msra.mxu0 0.0
          %558 = vmatprep.subr.mxu0 0.0
          %559 = vmatpush1.msra.mxu0 0.0
          %560 = vmatprep.subr.mxu0 0.0
          %561 = vmatpush1.msra.mxu0 0.0
          %562 = vmatprep.subr.mxu0 0.0
          %563 = vmatpush1.msra.mxu0 0.0
          %564 = vmatprep.subr.mxu0 0.0
          %565 = vmatpush1.msra.mxu0 0.0
          %566 = vmatprep.subr.mxu0 0.0
          %567 = vmatpush1.msra.mxu0 0.0
          %568 = vmatprep.subr.mxu0 0.0
          %569 = vmatpush1.msra.mxu0 0.0
          %570 = vmatprep.subr.mxu0 0.0
          %571 = vmatpush1.msra.mxu0 0.0
          %572 = vmatprep.subr.mxu0 0.0
          %573 = vmatpush1.msra.mxu0 0.0
          %574 = vmatprep.subr.mxu0 0.0
          %575 = vmatpush1.msra.mxu0 0.0
          %576 = vmatprep.subr.mxu0 0.0
          %577 = vmatpush1.msra.mxu0 0.0
          %578 = vmatprep.subr.mxu0 0.0
          %579 = vmatpush1.msra.mxu0 0.0
          %580 = vmatprep.subr.mxu0 0.0
          %581 = vmatpush1.msra.mxu0 0.0
          %582 = vmatprep.subr.mxu0 %v544
          %583 = vmatpush1.msra.mxu0 %v546
          %584 = vmatprep.subr.mxu0 0.0
          %585 = vmatpush2.msra.mxu0 0.0
          %586 = vmatprep.subr.mxu0 0.0
          %587 = vmatpush2.msra.mxu0 0.0
          %588 = vmatprep.subr.mxu0 0.0
          %589 = vmatpush2.msra.mxu0 0.0
          %590 = vmatprep.subr.mxu0 0.0
          %591 = vmatpush2.msra.mxu0 0.0
          %592 = vmatprep.subr.mxu0 0.0
          %593 = vmatpush2.msra.mxu0 0.0
          %594 = vmatprep.subr.mxu0 0.0
          %595 = vmatpush2.msra.mxu0 0.0
          %596 = vmatprep.subr.mxu0 0.0
          %597 = vmatpush2.msra.mxu0 0.0
          %598 = vmatprep.subr.mxu0 0.0
          %599 = vmatpush2.msra.mxu0 0.0
          %600 = vmatprep.subr.mxu0 0.0
          %601 = vmatpush2.msra.mxu0 0.0
          %602 = vmatprep.subr.mxu0 0.0
          %603 = vmatpush2.msra.mxu0 0.0
          %604 = vmatprep.subr.mxu0 0.0
          %605 = vmatpush2.msra.mxu0 0.0
          %606 = vmatprep.subr.mxu0 0.0
          %607 = vmatpush2.msra.mxu0 0.0
          %608 = vmatprep.subr.mxu0 0.0
          %609 = vmatpush2.msra.mxu0 0.0
          %610 = vmatprep.subr.mxu0 0.0
          %611 = vmatpush2.msra.mxu0 0.0
          %612 = vmatprep.subr.mxu0 0.0
          %613 = vmatpush2.msra.mxu0 0.0
          %614 = vmatprep.subr.mxu0 0.0
          %615 = vmatpush2.msra.mxu0 0.0
          %616 = vmatprep.mubr.f32.mxu0 0.0
          %617 = vmatmul.mubr.f32.gmra.mxu0 %v550
          %v618 = vpop.f32.mrf.mxu0
          %v619 = vadd.f32 0.0, %v618
          %v620 = vpop.f32.mrf.mxu0
          %v621 = vadd.f32 0.0, %v620
          %622 = vdwg.mxu0
          %v623 = vadd.f32 %v537, %v619
          %v624 = vadd.f32 %v538, %v621
          %s625 = scalar_lea.vmem %s1, 32
          %v626 = vld [vmem:[%s625] sm:$0xff]
          %627 = vrot.lane.b32.xlu0 %v288, 124
          %v628 = vpop.permute.xlu0 %627
          %629 = vrot.lane.b32.xlu0 %v290, 124
          %v630 = vpop.permute.xlu0 %629
          %vm631 = vcmask 1014784
          %v632 = vsel %vm631, %v628, %v630
          %v636 = vsel %vm304, %v626, 0
          %638 = vmatprep.subr.mxu0 0.0
          %639 = vmatpush1.msra.mxu0 0.0
          %640 = vmatprep.subr.mxu0 0.0
          %641 = vmatpush1.msra.mxu0 0.0
          %642 = vmatprep.subr.mxu0 0.0
          %643 = vmatpush1.msra.mxu0 0.0
          %644 = vmatprep.subr.mxu0 0.0
          %645 = vmatpush1.msra.mxu0 0.0
          %646 = vmatprep.subr.mxu0 0.0
          %647 = vmatpush1.msra.mxu0 0.0
          %648 = vmatprep.subr.mxu0 0.0
          %649 = vmatpush1.msra.mxu0 0.0
          %650 = vmatprep.subr.mxu0 0.0
          %651 = vmatpush1.msra.mxu0 0.0
          %652 = vmatprep.subr.mxu0 0.0
          %653 = vmatpush1.msra.mxu0 0.0
          %654 = vmatprep.subr.mxu0 0.0
          %655 = vmatpush1.msra.mxu0 0.0
          %656 = vmatprep.subr.mxu0 0.0
          %657 = vmatpush1.msra.mxu0 0.0
          %658 = vmatprep.subr.mxu0 0.0
          %659 = vmatpush1.msra.mxu0 0.0
          %660 = vmatprep.subr.mxu0 0.0
          %661 = vmatpush1.msra.mxu0 0.0
          %662 = vmatprep.subr.mxu0 0.0
          %663 = vmatpush1.msra.mxu0 0.0
          %664 = vmatprep.subr.mxu0 0.0
          %665 = vmatpush1.msra.mxu0 0.0
          %666 = vmatprep.subr.mxu0 0.0
          %667 = vmatpush1.msra.mxu0 0.0
          %668 = vmatprep.subr.mxu0 %v630
          %669 = vmatpush1.msra.mxu0 %v632
          %670 = vmatprep.subr.mxu0 0.0
          %671 = vmatpush2.msra.mxu0 0.0
          %672 = vmatprep.subr.mxu0 0.0
          %673 = vmatpush2.msra.mxu0 0.0
          %674 = vmatprep.subr.mxu0 0.0
          %675 = vmatpush2.msra.mxu0 0.0
          %676 = vmatprep.subr.mxu0 0.0
          %677 = vmatpush2.msra.mxu0 0.0
          %678 = vmatprep.subr.mxu0 0.0
          %679 = vmatpush2.msra.mxu0 0.0
          %680 = vmatprep.subr.mxu0 0.0
          %681 = vmatpush2.msra.mxu0 0.0
          %682 = vmatprep.subr.mxu0 0.0
          %683 = vmatpush2.msra.mxu0 0.0
          %684 = vmatprep.subr.mxu0 0.0
          %685 = vmatpush2.msra.mxu0 0.0
          %686 = vmatprep.subr.mxu0 0.0
          %687 = vmatpush2.msra.mxu0 0.0
          %688 = vmatprep.subr.mxu0 0.0
          %689 = vmatpush2.msra.mxu0 0.0
          %690 = vmatprep.subr.mxu0 0.0
          %691 = vmatpush2.msra.mxu0 0.0
          %692 = vmatprep.subr.mxu0 0.0
          %693 = vmatpush2.msra.mxu0 0.0
          %694 = vmatprep.subr.mxu0 0.0
          %695 = vmatpush2.msra.mxu0 0.0
          %696 = vmatprep.subr.mxu0 0.0
          %697 = vmatpush2.msra.mxu0 0.0
          %698 = vmatprep.subr.mxu0 0.0
          %699 = vmatpush2.msra.mxu0 0.0
          %700 = vmatprep.subr.mxu0 0.0
          %701 = vmatpush2.msra.mxu0 0.0
          %702 = vmatprep.mubr.f32.mxu0 0.0
          %703 = vmatmul.mubr.f32.gmra.mxu0 %v636
          %v704 = vpop.f32.mrf.mxu0
          %v705 = vadd.f32 0.0, %v704
          %v706 = vpop.f32.mrf.mxu0
          %v707 = vadd.f32 0.0, %v706
          %708 = vdwg.mxu0
          %v709 = vadd.f32 %v623, %v705
          %v710 = vadd.f32 %v624, %v707
          %s711 = scalar_lea.vmem %s1, 40
          %v712 = vld [vmem:[%s711] sm:$0xff]
          %713 = vrot.lane.b32.xlu0 %v288, 123
          %v714 = vpop.permute.xlu0 %713
          %715 = vrot.lane.b32.xlu0 %v290, 123
          %v716 = vpop.permute.xlu0 %715
          %vm717 = vcmask 1006592
          %v718 = vsel %vm717, %v714, %v716
          %v722 = vsel %vm304, %v712, 0
          %724 = vmatprep.subr.mxu0 0.0
          %725 = vmatpush1.msra.mxu0 0.0
          %726 = vmatprep.subr.mxu0 0.0
          %727 = vmatpush1.msra.mxu0 0.0
          %728 = vmatprep.subr.mxu0 0.0
          %729 = vmatpush1.msra.mxu0 0.0
          %730 = vmatprep.subr.mxu0 0.0
          %731 = vmatpush1.msra.mxu0 0.0
          %732 = vmatprep.subr.mxu0 0.0
          %733 = vmatpush1.msra.mxu0 0.0
          %734 = vmatprep.subr.mxu0 0.0
          %735 = vmatpush1.msra.mxu0 0.0
          %736 = vmatprep.subr.mxu0 0.0
          %737 = vmatpush1.msra.mxu0 0.0
          %738 = vmatprep.subr.mxu0 0.0
          %739 = vmatpush1.msra.mxu0 0.0
          %740 = vmatprep.subr.mxu0 0.0
          %741 = vmatpush1.msra.mxu0 0.0
          %742 = vmatprep.subr.mxu0 0.0
          %743 = vmatpush1.msra.mxu0 0.0
          %744 = vmatprep.subr.mxu0 0.0
          %745 = vmatpush1.msra.mxu0 0.0
          %746 = vmatprep.subr.mxu0 0.0
          %747 = vmatpush1.msra.mxu0 0.0
          %748 = vmatprep.subr.mxu0 0.0
          %749 = vmatpush1.msra.mxu0 0.0
          %750 = vmatprep.subr.mxu0 0.0
          %751 = vmatpush1.msra.mxu0 0.0
          %752 = vmatprep.subr.mxu0 0.0
          %753 = vmatpush1.msra.mxu0 0.0
          %754 = vmatprep.subr.mxu0 %v716
          %755 = vmatpush1.msra.mxu0 %v718
          %756 = vmatprep.subr.mxu0 0.0
          %757 = vmatpush2.msra.mxu0 0.0
          %758 = vmatprep.subr.mxu0 0.0
          %759 = vmatpush2.msra.mxu0 0.0
          %760 = vmatprep.subr.mxu0 0.0
          %761 = vmatpush2.msra.mxu0 0.0
          %762 = vmatprep.subr.mxu0 0.0
          %763 = vmatpush2.msra.mxu0 0.0
          %764 = vmatprep.subr.mxu0 0.0
          %765 = vmatpush2.msra.mxu0 0.0
          %766 = vmatprep.subr.mxu0 0.0
          %767 = vmatpush2.msra.mxu0 0.0
          %768 = vmatprep.subr.mxu0 0.0
          %769 = vmatpush2.msra.mxu0 0.0
          %770 = vmatprep.subr.mxu0 0.0
          %771 = vmatpush2.msra.mxu0 0.0
          %772 = vmatprep.subr.mxu0 0.0
          %773 = vmatpush2.msra.mxu0 0.0
          %774 = vmatprep.subr.mxu0 0.0
          %775 = vmatpush2.msra.mxu0 0.0
          %776 = vmatprep.subr.mxu0 0.0
          %777 = vmatpush2.msra.mxu0 0.0
          %778 = vmatprep.subr.mxu0 0.0
          %779 = vmatpush2.msra.mxu0 0.0
          %780 = vmatprep.subr.mxu0 0.0
          %781 = vmatpush2.msra.mxu0 0.0
          %782 = vmatprep.subr.mxu0 0.0
          %783 = vmatpush2.msra.mxu0 0.0
          %784 = vmatprep.subr.mxu0 0.0
          %785 = vmatpush2.msra.mxu0 0.0
          %786 = vmatprep.subr.mxu0 0.0
          %787 = vmatpush2.msra.mxu0 0.0
          %788 = vmatprep.mubr.f32.mxu0 0.0
          %789 = vmatmul.mubr.f32.gmra.mxu0 %v722
          %v790 = vpop.f32.mrf.mxu0
          %v791 = vadd.f32 0.0, %v790
          %v792 = vpop.f32.mrf.mxu0
          %v793 = vadd.f32 0.0, %v792
          %794 = vdwg.mxu0
          %v795 = vadd.f32 %v709, %v791
          %v796 = vadd.f32 %v710, %v793
          %s797 = scalar_lea.vmem %s1, 48
          %v798 = vld [vmem:[%s797] sm:$0xff]
          %799 = vrot.lane.b32.xlu0 %v288, 122
          %v800 = vpop.permute.xlu0 %799
          %801 = vrot.lane.b32.xlu0 %v290, 122
          %v802 = vpop.permute.xlu0 %801
          %vm803 = vcmask 998400
          %v804 = vsel %vm803, %v800, %v802
          %v808 = vsel %vm304, %v798, 0
          %810 = vmatprep.subr.mxu0 0.0
          %811 = vmatpush1.msra.mxu0 0.0
          %812 = vmatprep.subr.mxu0 0.0
          %813 = vmatpush1.msra.mxu0 0.0
          %814 = vmatprep.subr.mxu0 0.0
          %815 = vmatpush1.msra.mxu0 0.0
          %816 = vmatprep.subr.mxu0 0.0
          %817 = vmatpush1.msra.mxu0 0.0
          %818 = vmatprep.subr.mxu0 0.0
          %819 = vmatpush1.msra.mxu0 0.0
          %820 = vmatprep.subr.mxu0 0.0
          %821 = vmatpush1.msra.mxu0 0.0
          %822 = vmatprep.subr.mxu0 0.0
          %823 = vmatpush1.msra.mxu0 0.0
          %824 = vmatprep.subr.mxu0 0.0
          %825 = vmatpush1.msra.mxu0 0.0
          %826 = vmatprep.subr.mxu0 0.0
          %827 = vmatpush1.msra.mxu0 0.0
          %828 = vmatprep.subr.mxu0 0.0
          %829 = vmatpush1.msra.mxu0 0.0
          %830 = vmatprep.subr.mxu0 0.0
          %831 = vmatpush1.msra.mxu0 0.0
          %832 = vmatprep.subr.mxu0 0.0
          %833 = vmatpush1.msra.mxu0 0.0
          %834 = vmatprep.subr.mxu0 0.0
          %835 = vmatpush1.msra.mxu0 0.0
          %836 = vmatprep.subr.mxu0 0.0
          %837 = vmatpush1.msra.mxu0 0.0
          %838 = vmatprep.subr.mxu0 0.0
          %839 = vmatpush1.msra.mxu0 0.0
          %840 = vmatprep.subr.mxu0 %v802
          %841 = vmatpush1.msra.mxu0 %v804
          %842 = vmatprep.subr.mxu0 0.0
          %843 = vmatpush2.msra.mxu0 0.0
          %844 = vmatprep.subr.mxu0 0.0
          %845 = vmatpush2.msra.mxu0 0.0
          %846 = vmatprep.subr.mxu0 0.0
          %847 = vmatpush2.msra.mxu0 0.0
          %848 = vmatprep.subr.mxu0 0.0
          %849 = vmatpush2.msra.mxu0 0.0
          %850 = vmatprep.subr.mxu0 0.0
          %851 = vmatpush2.msra.mxu0 0.0
          %852 = vmatprep.subr.mxu0 0.0
          %853 = vmatpush2.msra.mxu0 0.0
          %854 = vmatprep.subr.mxu0 0.0
          %855 = vmatpush2.msra.mxu0 0.0
          %856 = vmatprep.subr.mxu0 0.0
          %857 = vmatpush2.msra.mxu0 0.0
          %858 = vmatprep.subr.mxu0 0.0
          %859 = vmatpush2.msra.mxu0 0.0
          %860 = vmatprep.subr.mxu0 0.0
          %861 = vmatpush2.msra.mxu0 0.0
          %862 = vmatprep.subr.mxu0 0.0
          %863 = vmatpush2.msra.mxu0 0.0
          %864 = vmatprep.subr.mxu0 0.0
          %865 = vmatpush2.msra.mxu0 0.0
          %866 = vmatprep.subr.mxu0 0.0
          %867 = vmatpush2.msra.mxu0 0.0
          %868 = vmatprep.subr.mxu0 0.0
          %869 = vmatpush2.msra.mxu0 0.0
          %870 = vmatprep.subr.mxu0 0.0
          %871 = vmatpush2.msra.mxu0 0.0
          %872 = vmatprep.subr.mxu0 0.0
          %873 = vmatpush2.msra.mxu0 0.0
          %874 = vmatprep.mubr.f32.mxu0 0.0
          %875 = vmatmul.mubr.f32.gmra.mxu0 %v808
          %v876 = vpop.f32.mrf.mxu0
          %v877 = vadd.f32 0.0, %v876
          %v878 = vpop.f32.mrf.mxu0
          %v879 = vadd.f32 0.0, %v878
          %880 = vdwg.mxu0
          %v881 = vadd.f32 %v795, %v877
          %v882 = vadd.f32 %v796, %v879
          %s883 = scalar_lea.vmem %s1, 56
          %v884 = vld [vmem:[%s883] sm:$0xff]
          %885 = vrot.lane.b32.xlu0 %v288, 121
          %v886 = vpop.permute.xlu0 %885
          %887 = vrot.lane.b32.xlu0 %v290, 121
          %v888 = vpop.permute.xlu0 %887
          %vm889 = vcmask 990208
          %v890 = vsel %vm889, %v886, %v888
          %v894 = vsel %vm304, %v884, 0
          %896 = vmatprep.subr.mxu0 0.0
          %897 = vmatpush1.msra.mxu0 0.0
          %898 = vmatprep.subr.mxu0 0.0
          %899 = vmatpush1.msra.mxu0 0.0
          %900 = vmatprep.subr.mxu0 0.0
          %901 = vmatpush1.msra.mxu0 0.0
          %902 = vmatprep.subr.mxu0 0.0
          %903 = vmatpush1.msra.mxu0 0.0
          %904 = vmatprep.subr.mxu0 0.0
          %905 = vmatpush1.msra.mxu0 0.0
          %906 = vmatprep.subr.mxu0 0.0
          %907 = vmatpush1.msra.mxu0 0.0
          %908 = vmatprep.subr.mxu0 0.0
          %909 = vmatpush1.msra.mxu0 0.0
          %910 = vmatprep.subr.mxu0 0.0
          %911 = vmatpush1.msra.mxu0 0.0
          %912 = vmatprep.subr.mxu0 0.0
          %913 = vmatpush1.msra.mxu0 0.0
          %914 = vmatprep.subr.mxu0 0.0
          %915 = vmatpush1.msra.mxu0 0.0
          %916 = vmatprep.subr.mxu0 0.0
          %917 = vmatpush1.msra.mxu0 0.0
          %918 = vmatprep.subr.mxu0 0.0
          %919 = vmatpush1.msra.mxu0 0.0
          %920 = vmatprep.subr.mxu0 0.0
          %921 = vmatpush1.msra.mxu0 0.0
          %922 = vmatprep.subr.mxu0 0.0
          %923 = vmatpush1.msra.mxu0 0.0
          %924 = vmatprep.subr.mxu0 0.0
          %925 = vmatpush1.msra.mxu0 0.0
          %926 = vmatprep.subr.mxu0 %v888
          %927 = vmatpush1.msra.mxu0 %v890
          %928 = vmatprep.subr.mxu0 0.0
          %929 = vmatpush2.msra.mxu0 0.0
          %930 = vmatprep.subr.mxu0 0.0
          %931 = vmatpush2.msra.mxu0 0.0
          %932 = vmatprep.subr.mxu0 0.0
          %933 = vmatpush2.msra.mxu0 0.0
          %934 = vmatprep.subr.mxu0 0.0
          %935 = vmatpush2.msra.mxu0 0.0
          %936 = vmatprep.subr.mxu0 0.0
          %937 = vmatpush2.msra.mxu0 0.0
          %938 = vmatprep.subr.mxu0 0.0
          %939 = vmatpush2.msra.mxu0 0.0
          %940 = vmatprep.subr.mxu0 0.0
          %941 = vmatpush2.msra.mxu0 0.0
          %942 = vmatprep.subr.mxu0 0.0
          %943 = vmatpush2.msra.mxu0 0.0
          %944 = vmatprep.subr.mxu0 0.0
          %945 = vmatpush2.msra.mxu0 0.0
          %946 = vmatprep.subr.mxu0 0.0
          %947 = vmatpush2.msra.mxu0 0.0
          %948 = vmatprep.subr.mxu0 0.0
          %949 = vmatpush2.msra.mxu0 0.0
          %950 = vmatprep.subr.mxu0 0.0
          %951 = vmatpush2.msra.mxu0 0.0
          %952 = vmatprep.subr.mxu0 0.0
          %953 = vmatpush2.msra.mxu0 0.0
          %954 = vmatprep.subr.mxu0 0.0
          %955 = vmatpush2.msra.mxu0 0.0
          %956 = vmatprep.subr.mxu0 0.0
          %957 = vmatpush2.msra.mxu0 0.0
          %958 = vmatprep.subr.mxu0 0.0
          %959 = vmatpush2.msra.mxu0 0.0
          %960 = vmatprep.mubr.f32.mxu0 0.0
          %961 = vmatmul.mubr.f32.gmra.mxu0 %v894
          %v962 = vpop.f32.mrf.mxu0
          %v963 = vadd.f32 0.0, %v962
          %v964 = vpop.f32.mrf.mxu0
          %v965 = vadd.f32 0.0, %v964
          %966 = vdwg.mxu0
          %v967 = vadd.f32 %v881, %v963
          %v968 = vadd.f32 %v882, %v965
          %s969 = scalar_lea.vmem %s1, 64
          %v970 = vld [vmem:[%s969] sm:$0xff]
          %971 = vrot.lane.b32.xlu0 %v288, 120
          %v972 = vpop.permute.xlu0 %971
          %973 = vrot.lane.b32.xlu0 %v290, 120
          %v974 = vpop.permute.xlu0 %973
          %vm975 = vcmask 982016
          %v976 = vsel %vm975, %v972, %v974
          %v980 = vsel %vm304, %v970, 0
          %982 = vmatprep.subr.mxu0 0.0
          %983 = vmatpush1.msra.mxu0 0.0
          %984 = vmatprep.subr.mxu0 0.0
          %985 = vmatpush1.msra.mxu0 0.0
          %986 = vmatprep.subr.mxu0 0.0
          %987 = vmatpush1.msra.mxu0 0.0
          %988 = vmatprep.subr.mxu0 0.0
          %989 = vmatpush1.msra.mxu0 0.0
          %990 = vmatprep.subr.mxu0 0.0
          %991 = vmatpush1.msra.mxu0 0.0
          %992 = vmatprep.subr.mxu0 0.0
          %993 = vmatpush1.msra.mxu0 0.0
          %994 = vmatprep.subr.mxu0 0.0
          %995 = vmatpush1.msra.mxu0 0.0
          %996 = vmatprep.subr.mxu0 0.0
          %997 = vmatpush1.msra.mxu0 0.0
          %998 = vmatprep.subr.mxu0 0.0
          %999 = vmatpush1.msra.mxu0 0.0
          %1000 = vmatprep.subr.mxu0 0.0
          %1001 = vmatpush1.msra.mxu0 0.0
          %1002 = vmatprep.subr.mxu0 0.0
          %1003 = vmatpush1.msra.mxu0 0.0
          %1004 = vmatprep.subr.mxu0 0.0
          %1005 = vmatpush1.msra.mxu0 0.0
          %1006 = vmatprep.subr.mxu0 0.0
          %1007 = vmatpush1.msra.mxu0 0.0
          %1008 = vmatprep.subr.mxu0 0.0
          %1009 = vmatpush1.msra.mxu0 0.0
          %1010 = vmatprep.subr.mxu0 0.0
          %1011 = vmatpush1.msra.mxu0 0.0
          %1012 = vmatprep.subr.mxu0 %v974
          %1013 = vmatpush1.msra.mxu0 %v976
          %1014 = vmatprep.subr.mxu0 0.0
          %1015 = vmatpush2.msra.mxu0 0.0
          %1016 = vmatprep.subr.mxu0 0.0
          %1017 = vmatpush2.msra.mxu0 0.0
          %1018 = vmatprep.subr.mxu0 0.0
          %1019 = vmatpush2.msra.mxu0 0.0
          %1020 = vmatprep.subr.mxu0 0.0
          %1021 = vmatpush2.msra.mxu0 0.0
          %1022 = vmatprep.subr.mxu0 0.0
          %1023 = vmatpush2.msra.mxu0 0.0
          %1024 = vmatprep.subr.mxu0 0.0
          %1025 = vmatpush2.msra.mxu0 0.0
          %1026 = vmatprep.subr.mxu0 0.0
          %1027 = vmatpush2.msra.mxu0 0.0
          %1028 = vmatprep.subr.mxu0 0.0
          %1029 = vmatpush2.msra.mxu0 0.0
          %1030 = vmatprep.subr.mxu0 0.0
          %1031 = vmatpush2.msra.mxu0 0.0
          %1032 = vmatprep.subr.mxu0 0.0
          %1033 = vmatpush2.msra.mxu0 0.0
          %1034 = vmatprep.subr.mxu0 0.0
          %1035 = vmatpush2.msra.mxu0 0.0
          %1036 = vmatprep.subr.mxu0 0.0
          %1037 = vmatpush2.msra.mxu0 0.0
          %1038 = vmatprep.subr.mxu0 0.0
          %1039 = vmatpush2.msra.mxu0 0.0
          %1040 = vmatprep.subr.mxu0 0.0
          %1041 = vmatpush2.msra.mxu0 0.0
          %1042 = vmatprep.subr.mxu0 0.0
          %1043 = vmatpush2.msra.mxu0 0.0
          %1044 = vmatprep.subr.mxu0 0.0
          %1045 = vmatpush2.msra.mxu0 0.0
          %1046 = vmatprep.mubr.f32.mxu0 0.0
          %1047 = vmatmul.mubr.f32.gmra.mxu0 %v980
          %v1048 = vpop.f32.mrf.mxu0
          %v1049 = vadd.f32 0.0, %v1048
          %v1050 = vpop.f32.mrf.mxu0
          %v1051 = vadd.f32 0.0, %v1050
          %1052 = vdwg.mxu0
          %v1053 = vadd.f32 %v967, %v1049
          %v1054 = vadd.f32 %v968, %v1051
          %s1055 = scalar_lea.vmem %s1, 72
          %v1056 = vld [vmem:[%s1055] sm:$0xff]
          %1057 = vrot.lane.b32.xlu0 %v288, 119
          %v1058 = vpop.permute.xlu0 %1057
          %1059 = vrot.lane.b32.xlu0 %v290, 119
          %v1060 = vpop.permute.xlu0 %1059
          %vm1061 = vcmask 973824
          %v1062 = vsel %vm1061, %v1058, %v1060
          %v1066 = vsel %vm304, %v1056, 0
          %1068 = vmatprep.subr.mxu0 0.0
          %1069 = vmatpush1.msra.mxu0 0.0
          %1070 = vmatprep.subr.mxu0 0.0
          %1071 = vmatpush1.msra.mxu0 0.0
          %1072 = vmatprep.subr.mxu0 0.0
          %1073 = vmatpush1.msra.mxu0 0.0
          %1074 = vmatprep.subr.mxu0 0.0
          %1075 = vmatpush1.msra.mxu0 0.0
          %1076 = vmatprep.subr.mxu0 0.0
          %1077 = vmatpush1.msra.mxu0 0.0
          %1078 = vmatprep.subr.mxu0 0.0
          %1079 = vmatpush1.msra.mxu0 0.0
          %1080 = vmatprep.subr.mxu0 0.0
          %1081 = vmatpush1.msra.mxu0 0.0
          %1082 = vmatprep.subr.mxu0 0.0
          %1083 = vmatpush1.msra.mxu0 0.0
          %1084 = vmatprep.subr.mxu0 0.0
          %1085 = vmatpush1.msra.mxu0 0.0
          %1086 = vmatprep.subr.mxu0 0.0
          %1087 = vmatpush1.msra.mxu0 0.0
          %1088 = vmatprep.subr.mxu0 0.0
          %1089 = vmatpush1.msra.mxu0 0.0
          %1090 = vmatprep.subr.mxu0 0.0
          %1091 = vmatpush1.msra.mxu0 0.0
          %1092 = vmatprep.subr.mxu0 0.0
          %1093 = vmatpush1.msra.mxu0 0.0
          %1094 = vmatprep.subr.mxu0 0.0
          %1095 = vmatpush1.msra.mxu0 0.0
          %1096 = vmatprep.subr.mxu0 0.0
          %1097 = vmatpush1.msra.mxu0 0.0
          %1098 = vmatprep.subr.mxu0 %v1060
          %1099 = vmatpush1.msra.mxu0 %v1062
          %1100 = vmatprep.subr.mxu0 0.0
          %1101 = vmatpush2.msra.mxu0 0.0
          %1102 = vmatprep.subr.mxu0 0.0
          %1103 = vmatpush2.msra.mxu0 0.0
          %1104 = vmatprep.subr.mxu0 0.0
          %1105 = vmatpush2.msra.mxu0 0.0
          %1106 = vmatprep.subr.mxu0 0.0
          %1107 = vmatpush2.msra.mxu0 0.0
          %1108 = vmatprep.subr.mxu0 0.0
          %1109 = vmatpush2.msra.mxu0 0.0
          %1110 = vmatprep.subr.mxu0 0.0
          %1111 = vmatpush2.msra.mxu0 0.0
          %1112 = vmatprep.subr.mxu0 0.0
          %1113 = vmatpush2.msra.mxu0 0.0
          %1114 = vmatprep.subr.mxu0 0.0
          %1115 = vmatpush2.msra.mxu0 0.0
          %1116 = vmatprep.subr.mxu0 0.0
          %1117 = vmatpush2.msra.mxu0 0.0
          %1118 = vmatprep.subr.mxu0 0.0
          %1119 = vmatpush2.msra.mxu0 0.0
          %1120 = vmatprep.subr.mxu0 0.0
          %1121 = vmatpush2.msra.mxu0 0.0
          %1122 = vmatprep.subr.mxu0 0.0
          %1123 = vmatpush2.msra.mxu0 0.0
          %1124 = vmatprep.subr.mxu0 0.0
          %1125 = vmatpush2.msra.mxu0 0.0
          %1126 = vmatprep.subr.mxu0 0.0
          %1127 = vmatpush2.msra.mxu0 0.0
          %1128 = vmatprep.subr.mxu0 0.0
          %1129 = vmatpush2.msra.mxu0 0.0
          %1130 = vmatprep.subr.mxu0 0.0
          %1131 = vmatpush2.msra.mxu0 0.0
          %1132 = vmatprep.mubr.f32.mxu0 0.0
          %1133 = vmatmul.mubr.f32.gmra.mxu0 %v1066
          %v1134 = vpop.f32.mrf.mxu0
          %v1135 = vadd.f32 0.0, %v1134
          %v1136 = vpop.f32.mrf.mxu0
          %v1137 = vadd.f32 0.0, %v1136
          %1138 = vdwg.mxu0
          %v1139 = vadd.f32 %v1053, %v1135
          %v1140 = vadd.f32 %v1054, %v1137
          %s1141 = scalar_lea.vmem %s1, 80
          %v1142 = vld [vmem:[%s1141] sm:$0xff]
          %1143 = vrot.lane.b32.xlu0 %v288, 118
          %v1144 = vpop.permute.xlu0 %1143
          %1145 = vrot.lane.b32.xlu0 %v290, 118
          %v1146 = vpop.permute.xlu0 %1145
          %vm1147 = vcmask 965632
          %v1148 = vsel %vm1147, %v1144, %v1146
          %v1152 = vsel %vm304, %v1142, 0
          %1154 = vmatprep.subr.mxu0 0.0
          %1155 = vmatpush1.msra.mxu0 0.0
          %1156 = vmatprep.subr.mxu0 0.0
          %1157 = vmatpush1.msra.mxu0 0.0
          %1158 = vmatprep.subr.mxu0 0.0
          %1159 = vmatpush1.msra.mxu0 0.0
          %1160 = vmatprep.subr.mxu0 0.0
          %1161 = vmatpush1.msra.mxu0 0.0
          %1162 = vmatprep.subr.mxu0 0.0
          %1163 = vmatpush1.msra.mxu0 0.0
          %1164 = vmatprep.subr.mxu0 0.0
          %1165 = vmatpush1.msra.mxu0 0.0
          %1166 = vmatprep.subr.mxu0 0.0
          %1167 = vmatpush1.msra.mxu0 0.0
          %1168 = vmatprep.subr.mxu0 0.0
          %1169 = vmatpush1.msra.mxu0 0.0
          %1170 = vmatprep.subr.mxu0 0.0
          %1171 = vmatpush1.msra.mxu0 0.0
          %1172 = vmatprep.subr.mxu0 0.0
          %1173 = vmatpush1.msra.mxu0 0.0
          %1174 = vmatprep.subr.mxu0 0.0
          %1175 = vmatpush1.msra.mxu0 0.0
          %1176 = vmatprep.subr.mxu0 0.0
          %1177 = vmatpush1.msra.mxu0 0.0
          %1178 = vmatprep.subr.mxu0 0.0
          %1179 = vmatpush1.msra.mxu0 0.0
          %1180 = vmatprep.subr.mxu0 0.0
          %1181 = vmatpush1.msra.mxu0 0.0
          %1182 = vmatprep.subr.mxu0 0.0
          %1183 = vmatpush1.msra.mxu0 0.0
          %1184 = vmatprep.subr.mxu0 %v1146
          %1185 = vmatpush1.msra.mxu0 %v1148
          %1186 = vmatprep.subr.mxu0 0.0
          %1187 = vmatpush2.msra.mxu0 0.0
          %1188 = vmatprep.subr.mxu0 0.0
          %1189 = vmatpush2.msra.mxu0 0.0
          %1190 = vmatprep.subr.mxu0 0.0
          %1191 = vmatpush2.msra.mxu0 0.0
          %1192 = vmatprep.subr.mxu0 0.0
          %1193 = vmatpush2.msra.mxu0 0.0
          %1194 = vmatprep.subr.mxu0 0.0
          %1195 = vmatpush2.msra.mxu0 0.0
          %1196 = vmatprep.subr.mxu0 0.0
          %1197 = vmatpush2.msra.mxu0 0.0
          %1198 = vmatprep.subr.mxu0 0.0
          %1199 = vmatpush2.msra.mxu0 0.0
          %1200 = vmatprep.subr.mxu0 0.0
          %1201 = vmatpush2.msra.mxu0 0.0
          %1202 = vmatprep.subr.mxu0 0.0
          %1203 = vmatpush2.msra.mxu0 0.0
          %1204 = vmatprep.subr.mxu0 0.0
          %1205 = vmatpush2.msra.mxu0 0.0
          %1206 = vmatprep.subr.mxu0 0.0
          %1207 = vmatpush2.msra.mxu0 0.0
          %1208 = vmatprep.subr.mxu0 0.0
          %1209 = vmatpush2.msra.mxu0 0.0
          %1210 = vmatprep.subr.mxu0 0.0
          %1211 = vmatpush2.msra.mxu0 0.0
          %1212 = vmatprep.subr.mxu0 0.0
          %1213 = vmatpush2.msra.mxu0 0.0
          %1214 = vmatprep.subr.mxu0 0.0
          %1215 = vmatpush2.msra.mxu0 0.0
          %1216 = vmatprep.subr.mxu0 0.0
          %1217 = vmatpush2.msra.mxu0 0.0
          %1218 = vmatprep.mubr.f32.mxu0 0.0
          %1219 = vmatmul.mubr.f32.gmra.mxu0 %v1152
          %v1220 = vpop.f32.mrf.mxu0
          %v1221 = vadd.f32 0.0, %v1220
          %v1222 = vpop.f32.mrf.mxu0
          %v1223 = vadd.f32 0.0, %v1222
          %1224 = vdwg.mxu0
          %v1225 = vadd.f32 %v1139, %v1221
          %v1226 = vadd.f32 %v1140, %v1223
          %s1227 = scalar_lea.vmem %s1, 88
          %v1228 = vld [vmem:[%s1227] sm:$0xff]
          %1229 = vrot.lane.b32.xlu0 %v288, 117
          %v1230 = vpop.permute.xlu0 %1229
          %1231 = vrot.lane.b32.xlu0 %v290, 117
          %v1232 = vpop.permute.xlu0 %1231
          %vm1233 = vcmask 957440
          %v1234 = vsel %vm1233, %v1230, %v1232
          %v1238 = vsel %vm304, %v1228, 0
          %1240 = vmatprep.subr.mxu0 0.0
          %1241 = vmatpush1.msra.mxu0 0.0
          %1242 = vmatprep.subr.mxu0 0.0
          %1243 = vmatpush1.msra.mxu0 0.0
          %1244 = vmatprep.subr.mxu0 0.0
          %1245 = vmatpush1.msra.mxu0 0.0
          %1246 = vmatprep.subr.mxu0 0.0
          %1247 = vmatpush1.msra.mxu0 0.0
          %1248 = vmatprep.subr.mxu0 0.0
          %1249 = vmatpush1.msra.mxu0 0.0
          %1250 = vmatprep.subr.mxu0 0.0
          %1251 = vmatpush1.msra.mxu0 0.0
          %1252 = vmatprep.subr.mxu0 0.0
          %1253 = vmatpush1.msra.mxu0 0.0
          %1254 = vmatprep.subr.mxu0 0.0
          %1255 = vmatpush1.msra.mxu0 0.0
          %1256 = vmatprep.subr.mxu0 0.0
          %1257 = vmatpush1.msra.mxu0 0.0
          %1258 = vmatprep.subr.mxu0 0.0
          %1259 = vmatpush1.msra.mxu0 0.0
          %1260 = vmatprep.subr.mxu0 0.0
          %1261 = vmatpush1.msra.mxu0 0.0
          %1262 = vmatprep.subr.mxu0 0.0
          %1263 = vmatpush1.msra.mxu0 0.0
          %1264 = vmatprep.subr.mxu0 0.0
          %1265 = vmatpush1.msra.mxu0 0.0
          %1266 = vmatprep.subr.mxu0 0.0
          %1267 = vmatpush1.msra.mxu0 0.0
          %1268 = vmatprep.subr.mxu0 0.0
          %1269 = vmatpush1.msra.mxu0 0.0
          %1270 = vmatprep.subr.mxu0 %v1232
          %1271 = vmatpush1.msra.mxu0 %v1234
          %1272 = vmatprep.subr.mxu0 0.0
          %1273 = vmatpush2.msra.mxu0 0.0
          %1274 = vmatprep.subr.mxu0 0.0
          %1275 = vmatpush2.msra.mxu0 0.0
          %1276 = vmatprep.subr.mxu0 0.0
          %1277 = vmatpush2.msra.mxu0 0.0
          %1278 = vmatprep.subr.mxu0 0.0
          %1279 = vmatpush2.msra.mxu0 0.0
          %1280 = vmatprep.subr.mxu0 0.0
          %1281 = vmatpush2.msra.mxu0 0.0
          %1282 = vmatprep.subr.mxu0 0.0
          %1283 = vmatpush2.msra.mxu0 0.0
          %1284 = vmatprep.subr.mxu0 0.0
          %1285 = vmatpush2.msra.mxu0 0.0
          %1286 = vmatprep.subr.mxu0 0.0
          %1287 = vmatpush2.msra.mxu0 0.0
          %1288 = vmatprep.subr.mxu0 0.0
          %1289 = vmatpush2.msra.mxu0 0.0
          %1290 = vmatprep.subr.mxu0 0.0
          %1291 = vmatpush2.msra.mxu0 0.0
          %1292 = vmatprep.subr.mxu0 0.0
          %1293 = vmatpush2.msra.mxu0 0.0
          %1294 = vmatprep.subr.mxu0 0.0
          %1295 = vmatpush2.msra.mxu0 0.0
          %1296 = vmatprep.subr.mxu0 0.0
          %1297 = vmatpush2.msra.mxu0 0.0
          %1298 = vmatprep.subr.mxu0 0.0
          %1299 = vmatpush2.msra.mxu0 0.0
          %1300 = vmatprep.subr.mxu0 0.0
          %1301 = vmatpush2.msra.mxu0 0.0
          %1302 = vmatprep.subr.mxu0 0.0
          %1303 = vmatpush2.msra.mxu0 0.0
          %1304 = vmatprep.mubr.f32.mxu0 0.0
          %1305 = vmatmul.mubr.f32.gmra.mxu0 %v1238
          %v1306 = vpop.f32.mrf.mxu0
          %v1307 = vadd.f32 0.0, %v1306
          %v1308 = vpop.f32.mrf.mxu0
          %v1309 = vadd.f32 0.0, %v1308
          %1310 = vdwg.mxu0
          %v1311 = vadd.f32 %v1225, %v1307
          %v1312 = vadd.f32 %v1226, %v1309
          %s1313 = scalar_lea.vmem %s1, 96
          %v1314 = vld [vmem:[%s1313] sm:$0xff]
          %1315 = vrot.lane.b32.xlu0 %v288, 116
          %v1316 = vpop.permute.xlu0 %1315
          %1317 = vrot.lane.b32.xlu0 %v290, 116
          %v1318 = vpop.permute.xlu0 %1317
          %vm1319 = vcmask 949248
          %v1320 = vsel %vm1319, %v1316, %v1318
          %v1324 = vsel %vm304, %v1314, 0
          %1326 = vmatprep.subr.mxu0 0.0
          %1327 = vmatpush1.msra.mxu0 0.0
          %1328 = vmatprep.subr.mxu0 0.0
          %1329 = vmatpush1.msra.mxu0 0.0
          %1330 = vmatprep.subr.mxu0 0.0
          %1331 = vmatpush1.msra.mxu0 0.0
          %1332 = vmatprep.subr.mxu0 0.0
          %1333 = vmatpush1.msra.mxu0 0.0
          %1334 = vmatprep.subr.mxu0 0.0
          %1335 = vmatpush1.msra.mxu0 0.0
          %1336 = vmatprep.subr.mxu0 0.0
          %1337 = vmatpush1.msra.mxu0 0.0
          %1338 = vmatprep.subr.mxu0 0.0
          %1339 = vmatpush1.msra.mxu0 0.0
          %1340 = vmatprep.subr.mxu0 0.0
          %1341 = vmatpush1.msra.mxu0 0.0
          %1342 = vmatprep.subr.mxu0 0.0
          %1343 = vmatpush1.msra.mxu0 0.0
          %1344 = vmatprep.subr.mxu0 0.0
          %1345 = vmatpush1.msra.mxu0 0.0
          %1346 = vmatprep.subr.mxu0 0.0
          %1347 = vmatpush1.msra.mxu0 0.0
          %1348 = vmatprep.subr.mxu0 0.0
          %1349 = vmatpush1.msra.mxu0 0.0
          %1350 = vmatprep.subr.mxu0 0.0
          %1351 = vmatpush1.msra.mxu0 0.0
          %1352 = vmatprep.subr.mxu0 0.0
          %1353 = vmatpush1.msra.mxu0 0.0
          %1354 = vmatprep.subr.mxu0 0.0
          %1355 = vmatpush1.msra.mxu0 0.0
          %1356 = vmatprep.subr.mxu0 %v1318
          %1357 = vmatpush1.msra.mxu0 %v1320
          %1358 = vmatprep.subr.mxu0 0.0
          %1359 = vmatpush2.msra.mxu0 0.0
          %1360 = vmatprep.subr.mxu0 0.0
          %1361 = vmatpush2.msra.mxu0 0.0
          %1362 = vmatprep.subr.mxu0 0.0
          %1363 = vmatpush2.msra.mxu0 0.0
          %1364 = vmatprep.subr.mxu0 0.0
          %1365 = vmatpush2.msra.mxu0 0.0
          %1366 = vmatprep.subr.mxu0 0.0
          %1367 = vmatpush2.msra.mxu0 0.0
          %1368 = vmatprep.subr.mxu0 0.0
          %1369 = vmatpush2.msra.mxu0 0.0
          %1370 = vmatprep.subr.mxu0 0.0
          %1371 = vmatpush2.msra.mxu0 0.0
          %1372 = vmatprep.subr.mxu0 0.0
          %1373 = vmatpush2.msra.mxu0 0.0
          %1374 = vmatprep.subr.mxu0 0.0
          %1375 = vmatpush2.msra.mxu0 0.0
          %1376 = vmatprep.subr.mxu0 0.0
          %1377 = vmatpush2.msra.mxu0 0.0
          %1378 = vmatprep.subr.mxu0 0.0
          %1379 = vmatpush2.msra.mxu0 0.0
          %1380 = vmatprep.subr.mxu0 0.0
          %1381 = vmatpush2.msra.mxu0 0.0
          %1382 = vmatprep.subr.mxu0 0.0
          %1383 = vmatpush2.msra.mxu0 0.0
          %1384 = vmatprep.subr.mxu0 0.0
          %1385 = vmatpush2.msra.mxu0 0.0
          %1386 = vmatprep.subr.mxu0 0.0
          %1387 = vmatpush2.msra.mxu0 0.0
          %1388 = vmatprep.subr.mxu0 0.0
          %1389 = vmatpush2.msra.mxu0 0.0
          %1390 = vmatprep.mubr.f32.mxu0 0.0
          %1391 = vmatmul.mubr.f32.gmra.mxu0 %v1324
          %v1392 = vpop.f32.mrf.mxu0
          %v1393 = vadd.f32 0.0, %v1392
          %v1394 = vpop.f32.mrf.mxu0
          %v1395 = vadd.f32 0.0, %v1394
          %1396 = vdwg.mxu0
          %v1397 = vadd.f32 %v1311, %v1393
          %v1398 = vadd.f32 %v1312, %v1395
          %s1399 = scalar_lea.vmem %s1, 104
          %v1400 = vld [vmem:[%s1399] sm:$0xff]
          %1401 = vrot.lane.b32.xlu0 %v288, 115
          %v1402 = vpop.permute.xlu0 %1401
          %1403 = vrot.lane.b32.xlu0 %v290, 115
          %v1404 = vpop.permute.xlu0 %1403
          %vm1405 = vcmask 941056
          %v1406 = vsel %vm1405, %v1402, %v1404
          %v1410 = vsel %vm304, %v1400, 0
          %1412 = vmatprep.subr.mxu0 0.0
          %1413 = vmatpush1.msra.mxu0 0.0
          %1414 = vmatprep.subr.mxu0 0.0
          %1415 = vmatpush1.msra.mxu0 0.0
          %1416 = vmatprep.subr.mxu0 0.0
          %1417 = vmatpush1.msra.mxu0 0.0
          %1418 = vmatprep.subr.mxu0 0.0
          %1419 = vmatpush1.msra.mxu0 0.0
          %1420 = vmatprep.subr.mxu0 0.0
          %1421 = vmatpush1.msra.mxu0 0.0
          %1422 = vmatprep.subr.mxu0 0.0
          %1423 = vmatpush1.msra.mxu0 0.0
          %1424 = vmatprep.subr.mxu0 0.0
          %1425 = vmatpush1.msra.mxu0 0.0
          %1426 = vmatprep.subr.mxu0 0.0
          %1427 = vmatpush1.msra.mxu0 0.0
          %1428 = vmatprep.subr.mxu0 0.0
          %1429 = vmatpush1.msra.mxu0 0.0
          %1430 = vmatprep.subr.mxu0 0.0
          %1431 = vmatpush1.msra.mxu0 0.0
          %1432 = vmatprep.subr.mxu0 0.0
          %1433 = vmatpush1.msra.mxu0 0.0
          %1434 = vmatprep.subr.mxu0 0.0
          %1435 = vmatpush1.msra.mxu0 0.0
          %1436 = vmatprep.subr.mxu0 0.0
          %1437 = vmatpush1.msra.mxu0 0.0
          %1438 = vmatprep.subr.mxu0 0.0
          %1439 = vmatpush1.msra.mxu0 0.0
          %1440 = vmatprep.subr.mxu0 0.0
          %1441 = vmatpush1.msra.mxu0 0.0
          %1442 = vmatprep.subr.mxu0 %v1404
          %1443 = vmatpush1.msra.mxu0 %v1406
          %1444 = vmatprep.subr.mxu0 0.0
          %1445 = vmatpush2.msra.mxu0 0.0
          %1446 = vmatprep.subr.mxu0 0.0
          %1447 = vmatpush2.msra.mxu0 0.0
          %1448 = vmatprep.subr.mxu0 0.0
          %1449 = vmatpush2.msra.mxu0 0.0
          %1450 = vmatprep.subr.mxu0 0.0
          %1451 = vmatpush2.msra.mxu0 0.0
          %1452 = vmatprep.subr.mxu0 0.0
          %1453 = vmatpush2.msra.mxu0 0.0
          %1454 = vmatprep.subr.mxu0 0.0
          %1455 = vmatpush2.msra.mxu0 0.0
          %1456 = vmatprep.subr.mxu0 0.0
          %1457 = vmatpush2.msra.mxu0 0.0
          %1458 = vmatprep.subr.mxu0 0.0
          %1459 = vmatpush2.msra.mxu0 0.0
          %1460 = vmatprep.subr.mxu0 0.0
          %1461 = vmatpush2.msra.mxu0 0.0
          %1462 = vmatprep.subr.mxu0 0.0
          %1463 = vmatpush2.msra.mxu0 0.0
          %1464 = vmatprep.subr.mxu0 0.0
          %1465 = vmatpush2.msra.mxu0 0.0
          %1466 = vmatprep.subr.mxu0 0.0
          %1467 = vmatpush2.msra.mxu0 0.0
          %1468 = vmatprep.subr.mxu0 0.0
          %1469 = vmatpush2.msra.mxu0 0.0
          %1470 = vmatprep.subr.mxu0 0.0
          %1471 = vmatpush2.msra.mxu0 0.0
          %1472 = vmatprep.subr.mxu0 0.0
          %1473 = vmatpush2.msra.mxu0 0.0
          %1474 = vmatprep.subr.mxu0 0.0
          %1475 = vmatpush2.msra.mxu0 0.0
          %1476 = vmatprep.mubr.f32.mxu0 0.0
          %1477 = vmatmul.mubr.f32.gmra.mxu0 %v1410
          %v1478 = vpop.f32.mrf.mxu0
          %v1479 = vadd.f32 0.0, %v1478
          %v1480 = vpop.f32.mrf.mxu0
          %v1481 = vadd.f32 0.0, %v1480
          %1482 = vdwg.mxu0
          %v1483 = vadd.f32 %v1397, %v1479
          %v1484 = vadd.f32 %v1398, %v1481
          %s1485 = scalar_lea.vmem %s1, 112
          %v1486 = vld [vmem:[%s1485] sm:$0xff]
          %1487 = vrot.lane.b32.xlu0 %v288, 114
          %v1488 = vpop.permute.xlu0 %1487
          %1489 = vrot.lane.b32.xlu0 %v290, 114
          %v1490 = vpop.permute.xlu0 %1489
          %vm1491 = vcmask 932864
          %v1492 = vsel %vm1491, %v1488, %v1490
          %v1496 = vsel %vm304, %v1486, 0
          %1498 = vmatprep.subr.mxu0 0.0
          %1499 = vmatpush1.msra.mxu0 0.0
          %1500 = vmatprep.subr.mxu0 0.0
          %1501 = vmatpush1.msra.mxu0 0.0
          %1502 = vmatprep.subr.mxu0 0.0
          %1503 = vmatpush1.msra.mxu0 0.0
          %1504 = vmatprep.subr.mxu0 0.0
          %1505 = vmatpush1.msra.mxu0 0.0
          %1506 = vmatprep.subr.mxu0 0.0
          %1507 = vmatpush1.msra.mxu0 0.0
          %1508 = vmatprep.subr.mxu0 0.0
          %1509 = vmatpush1.msra.mxu0 0.0
          %1510 = vmatprep.subr.mxu0 0.0
          %1511 = vmatpush1.msra.mxu0 0.0
          %1512 = vmatprep.subr.mxu0 0.0
          %1513 = vmatpush1.msra.mxu0 0.0
          %1514 = vmatprep.subr.mxu0 0.0
          %1515 = vmatpush1.msra.mxu0 0.0
          %1516 = vmatprep.subr.mxu0 0.0
          %1517 = vmatpush1.msra.mxu0 0.0
          %1518 = vmatprep.subr.mxu0 0.0
          %1519 = vmatpush1.msra.mxu0 0.0
          %1520 = vmatprep.subr.mxu0 0.0
          %1521 = vmatpush1.msra.mxu0 0.0
          %1522 = vmatprep.subr.mxu0 0.0
          %1523 = vmatpush1.msra.mxu0 0.0
          %1524 = vmatprep.subr.mxu0 0.0
          %1525 = vmatpush1.msra.mxu0 0.0
          %1526 = vmatprep.subr.mxu0 0.0
          %1527 = vmatpush1.msra.mxu0 0.0
          %1528 = vmatprep.subr.mxu0 %v1490
          %1529 = vmatpush1.msra.mxu0 %v1492
          %1530 = vmatprep.subr.mxu0 0.0
          %1531 = vmatpush2.msra.mxu0 0.0
          %1532 = vmatprep.subr.mxu0 0.0
          %1533 = vmatpush2.msra.mxu0 0.0
          %1534 = vmatprep.subr.mxu0 0.0
          %1535 = vmatpush2.msra.mxu0 0.0
          %1536 = vmatprep.subr.mxu0 0.0
          %1537 = vmatpush2.msra.mxu0 0.0
          %1538 = vmatprep.subr.mxu0 0.0
          %1539 = vmatpush2.msra.mxu0 0.0
          %1540 = vmatprep.subr.mxu0 0.0
          %1541 = vmatpush2.msra.mxu0 0.0
          %1542 = vmatprep.subr.mxu0 0.0
          %1543 = vmatpush2.msra.mxu0 0.0
          %1544 = vmatprep.subr.mxu0 0.0
          %1545 = vmatpush2.msra.mxu0 0.0
          %1546 = vmatprep.subr.mxu0 0.0
          %1547 = vmatpush2.msra.mxu0 0.0
          %1548 = vmatprep.subr.mxu0 0.0
          %1549 = vmatpush2.msra.mxu0 0.0
          %1550 = vmatprep.subr.mxu0 0.0
          %1551 = vmatpush2.msra.mxu0 0.0
          %1552 = vmatprep.subr.mxu0 0.0
          %1553 = vmatpush2.msra.mxu0 0.0
          %1554 = vmatprep.subr.mxu0 0.0
          %1555 = vmatpush2.msra.mxu0 0.0
          %1556 = vmatprep.subr.mxu0 0.0
          %1557 = vmatpush2.msra.mxu0 0.0
          %1558 = vmatprep.subr.mxu0 0.0
          %1559 = vmatpush2.msra.mxu0 0.0
          %1560 = vmatprep.subr.mxu0 0.0
          %1561 = vmatpush2.msra.mxu0 0.0
          %1562 = vmatprep.mubr.f32.mxu0 0.0
          %1563 = vmatmul.mubr.f32.gmra.mxu0 %v1496
          %v1564 = vpop.f32.mrf.mxu0
          %v1565 = vadd.f32 0.0, %v1564
          %v1566 = vpop.f32.mrf.mxu0
          %v1567 = vadd.f32 0.0, %v1566
          %1568 = vdwg.mxu0
          %v1569 = vadd.f32 %v1483, %v1565
          %v1570 = vadd.f32 %v1484, %v1567
          %s1571 = scalar_lea.vmem %s1, 120
          %v1572 = vld [vmem:[%s1571] sm:$0xff]
          %1573 = vrot.lane.b32.xlu0 %v288, 113
          %v1574 = vpop.permute.xlu0 %1573
          %1575 = vrot.lane.b32.xlu0 %v290, 113
          %v1576 = vpop.permute.xlu0 %1575
          %vm1577 = vcmask 924672
          %v1578 = vsel %vm1577, %v1574, %v1576
          %v1582 = vsel %vm304, %v1572, 0
          %1584 = vmatprep.subr.mxu0 0.0
          %1585 = vmatpush1.msra.mxu0 0.0
          %1586 = vmatprep.subr.mxu0 0.0
          %1587 = vmatpush1.msra.mxu0 0.0
          %1588 = vmatprep.subr.mxu0 0.0
          %1589 = vmatpush1.msra.mxu0 0.0
          %1590 = vmatprep.subr.mxu0 0.0
          %1591 = vmatpush1.msra.mxu0 0.0
          %1592 = vmatprep.subr.mxu0 0.0
          %1593 = vmatpush1.msra.mxu0 0.0
          %1594 = vmatprep.subr.mxu0 0.0
          %1595 = vmatpush1.msra.mxu0 0.0
          %1596 = vmatprep.subr.mxu0 0.0
          %1597 = vmatpush1.msra.mxu0 0.0
          %1598 = vmatprep.subr.mxu0 0.0
          %1599 = vmatpush1.msra.mxu0 0.0
          %1600 = vmatprep.subr.mxu0 0.0
          %1601 = vmatpush1.msra.mxu0 0.0
          %1602 = vmatprep.subr.mxu0 0.0
          %1603 = vmatpush1.msra.mxu0 0.0
          %1604 = vmatprep.subr.mxu0 0.0
          %1605 = vmatpush1.msra.mxu0 0.0
          %1606 = vmatprep.subr.mxu0 0.0
          %1607 = vmatpush1.msra.mxu0 0.0
          %1608 = vmatprep.subr.mxu0 0.0
          %1609 = vmatpush1.msra.mxu0 0.0
          %1610 = vmatprep.subr.mxu0 0.0
          %1611 = vmatpush1.msra.mxu0 0.0
          %1612 = vmatprep.subr.mxu0 0.0
          %1613 = vmatpush1.msra.mxu0 0.0
          %1614 = vmatprep.subr.mxu0 %v1576
          %1615 = vmatpush1.msra.mxu0 %v1578
          %1616 = vmatprep.subr.mxu0 0.0
          %1617 = vmatpush2.msra.mxu0 0.0
          %1618 = vmatprep.subr.mxu0 0.0
          %1619 = vmatpush2.msra.mxu0 0.0
          %1620 = vmatprep.subr.mxu0 0.0
          %1621 = vmatpush2.msra.mxu0 0.0
          %1622 = vmatprep.subr.mxu0 0.0
          %1623 = vmatpush2.msra.mxu0 0.0
          %1624 = vmatprep.subr.mxu0 0.0
          %1625 = vmatpush2.msra.mxu0 0.0
          %1626 = vmatprep.subr.mxu0 0.0
          %1627 = vmatpush2.msra.mxu0 0.0
          %1628 = vmatprep.subr.mxu0 0.0
          %1629 = vmatpush2.msra.mxu0 0.0
          %1630 = vmatprep.subr.mxu0 0.0
          %1631 = vmatpush2.msra.mxu0 0.0
          %1632 = vmatprep.subr.mxu0 0.0
          %1633 = vmatpush2.msra.mxu0 0.0
          %1634 = vmatprep.subr.mxu0 0.0
          %1635 = vmatpush2.msra.mxu0 0.0
          %1636 = vmatprep.subr.mxu0 0.0
          %1637 = vmatpush2.msra.mxu0 0.0
          %1638 = vmatprep.subr.mxu0 0.0
          %1639 = vmatpush2.msra.mxu0 0.0
          %1640 = vmatprep.subr.mxu0 0.0
          %1641 = vmatpush2.msra.mxu0 0.0
          %1642 = vmatprep.subr.mxu0 0.0
          %1643 = vmatpush2.msra.mxu0 0.0
          %1644 = vmatprep.subr.mxu0 0.0
          %1645 = vmatpush2.msra.mxu0 0.0
          %1646 = vmatprep.subr.mxu0 0.0
          %1647 = vmatpush2.msra.mxu0 0.0
          %1648 = vmatprep.mubr.f32.mxu0 0.0
          %1649 = vmatmul.mubr.f32.gmra.mxu0 %v1582
          %v1650 = vpop.f32.mrf.mxu0
          %v1651 = vadd.f32 0.0, %v1650
          %v1652 = vpop.f32.mrf.mxu0
          %v1653 = vadd.f32 0.0, %v1652
          %1654 = vdwg.mxu0
          %v1655 = vadd.f32 %v1569, %v1651
          %v1656 = vadd.f32 %v1570, %v1653
          %s1657 = scalar_lea.vmem %s1, 128
          %v1658 = vld [vmem:[%s1657] sm:$0xff]
          %1659 = vrot.lane.b32.xlu0 %v288, 112
          %v1660 = vpop.permute.xlu0 %1659
          %1661 = vrot.lane.b32.xlu0 %v290, 112
          %v1662 = vpop.permute.xlu0 %1661
          %vm1663 = vcmask 916480
          %v1664 = vsel %vm1663, %v1660, %v1662
          %v1668 = vsel %vm304, %v1658, 0
          %1670 = vmatprep.subr.mxu0 0.0
          %1671 = vmatpush1.msra.mxu0 0.0
          %1672 = vmatprep.subr.mxu0 0.0
          %1673 = vmatpush1.msra.mxu0 0.0
          %1674 = vmatprep.subr.mxu0 0.0
          %1675 = vmatpush1.msra.mxu0 0.0
          %1676 = vmatprep.subr.mxu0 0.0
          %1677 = vmatpush1.msra.mxu0 0.0
          %1678 = vmatprep.subr.mxu0 0.0
          %1679 = vmatpush1.msra.mxu0 0.0
          %1680 = vmatprep.subr.mxu0 0.0
          %1681 = vmatpush1.msra.mxu0 0.0
          %1682 = vmatprep.subr.mxu0 0.0
          %1683 = vmatpush1.msra.mxu0 0.0
          %1684 = vmatprep.subr.mxu0 0.0
          %1685 = vmatpush1.msra.mxu0 0.0
          %1686 = vmatprep.subr.mxu0 0.0
          %1687 = vmatpush1.msra.mxu0 0.0
          %1688 = vmatprep.subr.mxu0 0.0
          %1689 = vmatpush1.msra.mxu0 0.0
          %1690 = vmatprep.subr.mxu0 0.0
          %1691 = vmatpush1.msra.mxu0 0.0
          %1692 = vmatprep.subr.mxu0 0.0
          %1693 = vmatpush1.msra.mxu0 0.0
          %1694 = vmatprep.subr.mxu0 0.0
          %1695 = vmatpush1.msra.mxu0 0.0
          %1696 = vmatprep.subr.mxu0 0.0
          %1697 = vmatpush1.msra.mxu0 0.0
          %1698 = vmatprep.subr.mxu0 0.0
          %1699 = vmatpush1.msra.mxu0 0.0
          %1700 = vmatprep.subr.mxu0 %v1662
          %1701 = vmatpush1.msra.mxu0 %v1664
          %1702 = vmatprep.subr.mxu0 0.0
          %1703 = vmatpush2.msra.mxu0 0.0
          %1704 = vmatprep.subr.mxu0 0.0
          %1705 = vmatpush2.msra.mxu0 0.0
          %1706 = vmatprep.subr.mxu0 0.0
          %1707 = vmatpush2.msra.mxu0 0.0
          %1708 = vmatprep.subr.mxu0 0.0
          %1709 = vmatpush2.msra.mxu0 0.0
          %1710 = vmatprep.subr.mxu0 0.0
          %1711 = vmatpush2.msra.mxu0 0.0
          %1712 = vmatprep.subr.mxu0 0.0
          %1713 = vmatpush2.msra.mxu0 0.0
          %1714 = vmatprep.subr.mxu0 0.0
          %1715 = vmatpush2.msra.mxu0 0.0
          %1716 = vmatprep.subr.mxu0 0.0
          %1717 = vmatpush2.msra.mxu0 0.0
          %1718 = vmatprep.subr.mxu0 0.0
          %1719 = vmatpush2.msra.mxu0 0.0
          %1720 = vmatprep.subr.mxu0 0.0
          %1721 = vmatpush2.msra.mxu0 0.0
          %1722 = vmatprep.subr.mxu0 0.0
          %1723 = vmatpush2.msra.mxu0 0.0
          %1724 = vmatprep.subr.mxu0 0.0
          %1725 = vmatpush2.msra.mxu0 0.0
          %1726 = vmatprep.subr.mxu0 0.0
          %1727 = vmatpush2.msra.mxu0 0.0
          %1728 = vmatprep.subr.mxu0 0.0
          %1729 = vmatpush2.msra.mxu0 0.0
          %1730 = vmatprep.subr.mxu0 0.0
          %1731 = vmatpush2.msra.mxu0 0.0
          %1732 = vmatprep.subr.mxu0 0.0
          %1733 = vmatpush2.msra.mxu0 0.0
          %1734 = vmatprep.mubr.f32.mxu0 0.0
          %1735 = vmatmul.mubr.f32.gmra.mxu0 %v1668
          %v1736 = vpop.f32.mrf.mxu0
          %v1737 = vadd.f32 0.0, %v1736
          %v1738 = vpop.f32.mrf.mxu0
          %v1739 = vadd.f32 0.0, %v1738
          %1740 = vdwg.mxu0
          %v1741 = vadd.f32 %v1655, %v1737
          %v1742 = vadd.f32 %v1656, %v1739
          %s1743 = scalar_lea.vmem %s1, 136
          %v1744 = vld [vmem:[%s1743] sm:$0xff]
          %1745 = vrot.lane.b32.xlu0 %v288, 111
          %v1746 = vpop.permute.xlu0 %1745
          %1747 = vrot.lane.b32.xlu0 %v290, 111
          %v1748 = vpop.permute.xlu0 %1747
          %vm1749 = vcmask 908288
          %v1750 = vsel %vm1749, %v1746, %v1748
          %v1754 = vsel %vm304, %v1744, 0
          %1756 = vmatprep.subr.mxu0 0.0
          %1757 = vmatpush1.msra.mxu0 0.0
          %1758 = vmatprep.subr.mxu0 0.0
          %1759 = vmatpush1.msra.mxu0 0.0
          %1760 = vmatprep.subr.mxu0 0.0
          %1761 = vmatpush1.msra.mxu0 0.0
          %1762 = vmatprep.subr.mxu0 0.0
          %1763 = vmatpush1.msra.mxu0 0.0
          %1764 = vmatprep.subr.mxu0 0.0
          %1765 = vmatpush1.msra.mxu0 0.0
          %1766 = vmatprep.subr.mxu0 0.0
          %1767 = vmatpush1.msra.mxu0 0.0
          %1768 = vmatprep.subr.mxu0 0.0
          %1769 = vmatpush1.msra.mxu0 0.0
          %1770 = vmatprep.subr.mxu0 0.0
          %1771 = vmatpush1.msra.mxu0 0.0
          %1772 = vmatprep.subr.mxu0 0.0
          %1773 = vmatpush1.msra.mxu0 0.0
          %1774 = vmatprep.subr.mxu0 0.0
          %1775 = vmatpush1.msra.mxu0 0.0
          %1776 = vmatprep.subr.mxu0 0.0
          %1777 = vmatpush1.msra.mxu0 0.0
          %1778 = vmatprep.subr.mxu0 0.0
          %1779 = vmatpush1.msra.mxu0 0.0
          %1780 = vmatprep.subr.mxu0 0.0
          %1781 = vmatpush1.msra.mxu0 0.0
          %1782 = vmatprep.subr.mxu0 0.0
          %1783 = vmatpush1.msra.mxu0 0.0
          %1784 = vmatprep.subr.mxu0 0.0
          %1785 = vmatpush1.msra.mxu0 0.0
          %1786 = vmatprep.subr.mxu0 %v1748
          %1787 = vmatpush1.msra.mxu0 %v1750
          %1788 = vmatprep.subr.mxu0 0.0
          %1789 = vmatpush2.msra.mxu0 0.0
          %1790 = vmatprep.subr.mxu0 0.0
          %1791 = vmatpush2.msra.mxu0 0.0
          %1792 = vmatprep.subr.mxu0 0.0
          %1793 = vmatpush2.msra.mxu0 0.0
          %1794 = vmatprep.subr.mxu0 0.0
          %1795 = vmatpush2.msra.mxu0 0.0
          %1796 = vmatprep.subr.mxu0 0.0
          %1797 = vmatpush2.msra.mxu0 0.0
          %1798 = vmatprep.subr.mxu0 0.0
          %1799 = vmatpush2.msra.mxu0 0.0
          %1800 = vmatprep.subr.mxu0 0.0
          %1801 = vmatpush2.msra.mxu0 0.0
          %1802 = vmatprep.subr.mxu0 0.0
          %1803 = vmatpush2.msra.mxu0 0.0
          %1804 = vmatprep.subr.mxu0 0.0
          %1805 = vmatpush2.msra.mxu0 0.0
          %1806 = vmatprep.subr.mxu0 0.0
          %1807 = vmatpush2.msra.mxu0 0.0
          %1808 = vmatprep.subr.mxu0 0.0
          %1809 = vmatpush2.msra.mxu0 0.0
          %1810 = vmatprep.subr.mxu0 0.0
          %1811 = vmatpush2.msra.mxu0 0.0
          %1812 = vmatprep.subr.mxu0 0.0
          %1813 = vmatpush2.msra.mxu0 0.0
          %1814 = vmatprep.subr.mxu0 0.0
          %1815 = vmatpush2.msra.mxu0 0.0
          %1816 = vmatprep.subr.mxu0 0.0
          %1817 = vmatpush2.msra.mxu0 0.0
          %1818 = vmatprep.subr.mxu0 0.0
          %1819 = vmatpush2.msra.mxu0 0.0
          %1820 = vmatprep.mubr.f32.mxu0 0.0
          %1821 = vmatmul.mubr.f32.gmra.mxu0 %v1754
          %v1822 = vpop.f32.mrf.mxu0
          %v1823 = vadd.f32 0.0, %v1822
          %v1824 = vpop.f32.mrf.mxu0
          %v1825 = vadd.f32 0.0, %v1824
          %1826 = vdwg.mxu0
          %v1827 = vadd.f32 %v1741, %v1823
          %v1828 = vadd.f32 %v1742, %v1825
          %s1829 = scalar_lea.vmem %s1, 144
          %v1830 = vld [vmem:[%s1829] sm:$0xff]
          %1831 = vrot.lane.b32.xlu0 %v288, 110
          %v1832 = vpop.permute.xlu0 %1831
          %1833 = vrot.lane.b32.xlu0 %v290, 110
          %v1834 = vpop.permute.xlu0 %1833
          %vm1835 = vcmask 900096
          %v1836 = vsel %vm1835, %v1832, %v1834
          %v1840 = vsel %vm304, %v1830, 0
          %1842 = vmatprep.subr.mxu0 0.0
          %1843 = vmatpush1.msra.mxu0 0.0
          %1844 = vmatprep.subr.mxu0 0.0
          %1845 = vmatpush1.msra.mxu0 0.0
          %1846 = vmatprep.subr.mxu0 0.0
          %1847 = vmatpush1.msra.mxu0 0.0
          %1848 = vmatprep.subr.mxu0 0.0
          %1849 = vmatpush1.msra.mxu0 0.0
          %1850 = vmatprep.subr.mxu0 0.0
          %1851 = vmatpush1.msra.mxu0 0.0
          %1852 = vmatprep.subr.mxu0 0.0
          %1853 = vmatpush1.msra.mxu0 0.0
          %1854 = vmatprep.subr.mxu0 0.0
          %1855 = vmatpush1.msra.mxu0 0.0
          %1856 = vmatprep.subr.mxu0 0.0
          %1857 = vmatpush1.msra.mxu0 0.0
          %1858 = vmatprep.subr.mxu0 0.0
          %1859 = vmatpush1.msra.mxu0 0.0
          %1860 = vmatprep.subr.mxu0 0.0
          %1861 = vmatpush1.msra.mxu0 0.0
          %1862 = vmatprep.subr.mxu0 0.0
          %1863 = vmatpush1.msra.mxu0 0.0
          %1864 = vmatprep.subr.mxu0 0.0
          %1865 = vmatpush1.msra.mxu0 0.0
          %1866 = vmatprep.subr.mxu0 0.0
          %1867 = vmatpush1.msra.mxu0 0.0
          %1868 = vmatprep.subr.mxu0 0.0
          %1869 = vmatpush1.msra.mxu0 0.0
          %1870 = vmatprep.subr.mxu0 0.0
          %1871 = vmatpush1.msra.mxu0 0.0
          %1872 = vmatprep.subr.mxu0 %v1834
          %1873 = vmatpush1.msra.mxu0 %v1836
          %1874 = vmatprep.subr.mxu0 0.0
          %1875 = vmatpush2.msra.mxu0 0.0
          %1876 = vmatprep.subr.mxu0 0.0
          %1877 = vmatpush2.msra.mxu0 0.0
          %1878 = vmatprep.subr.mxu0 0.0
          %1879 = vmatpush2.msra.mxu0 0.0
          %1880 = vmatprep.subr.mxu0 0.0
          %1881 = vmatpush2.msra.mxu0 0.0
          %1882 = vmatprep.subr.mxu0 0.0
          %1883 = vmatpush2.msra.mxu0 0.0
          %1884 = vmatprep.subr.mxu0 0.0
          %1885 = vmatpush2.msra.mxu0 0.0
          %1886 = vmatprep.subr.mxu0 0.0
          %1887 = vmatpush2.msra.mxu0 0.0
          %1888 = vmatprep.subr.mxu0 0.0
          %1889 = vmatpush2.msra.mxu0 0.0
          %1890 = vmatprep.subr.mxu0 0.0
          %1891 = vmatpush2.msra.mxu0 0.0
          %1892 = vmatprep.subr.mxu0 0.0
          %1893 = vmatpush2.msra.mxu0 0.0
          %1894 = vmatprep.subr.mxu0 0.0
          %1895 = vmatpush2.msra.mxu0 0.0
          %1896 = vmatprep.subr.mxu0 0.0
          %1897 = vmatpush2.msra.mxu0 0.0
          %1898 = vmatprep.subr.mxu0 0.0
          %1899 = vmatpush2.msra.mxu0 0.0
          %1900 = vmatprep.subr.mxu0 0.0
          %1901 = vmatpush2.msra.mxu0 0.0
          %1902 = vmatprep.subr.mxu0 0.0
          %1903 = vmatpush2.msra.mxu0 0.0
          %1904 = vmatprep.subr.mxu0 0.0
          %1905 = vmatpush2.msra.mxu0 0.0
          %1906 = vmatprep.mubr.f32.mxu0 0.0
          %1907 = vmatmul.mubr.f32.gmra.mxu0 %v1840
          %v1908 = vpop.f32.mrf.mxu0
          %v1909 = vadd.f32 0.0, %v1908
          %v1910 = vpop.f32.mrf.mxu0
          %v1911 = vadd.f32 0.0, %v1910
          %1912 = vdwg.mxu0
          %v1913 = vadd.f32 %v1827, %v1909
          %v1914 = vadd.f32 %v1828, %v1911
          %s1915 = scalar_lea.vmem %s1, 152
          %v1916 = vld [vmem:[%s1915] sm:$0xff]
          %1917 = vrot.lane.b32.xlu0 %v288, 109
          %v1918 = vpop.permute.xlu0 %1917
          %1919 = vrot.lane.b32.xlu0 %v290, 109
          %v1920 = vpop.permute.xlu0 %1919
          %vm1921 = vcmask 891904
          %v1922 = vsel %vm1921, %v1918, %v1920
          %v1926 = vsel %vm304, %v1916, 0
          %1928 = vmatprep.subr.mxu0 0.0
          %1929 = vmatpush1.msra.mxu0 0.0
          %1930 = vmatprep.subr.mxu0 0.0
          %1931 = vmatpush1.msra.mxu0 0.0
          %1932 = vmatprep.subr.mxu0 0.0
          %1933 = vmatpush1.msra.mxu0 0.0
          %1934 = vmatprep.subr.mxu0 0.0
          %1935 = vmatpush1.msra.mxu0 0.0
          %1936 = vmatprep.subr.mxu0 0.0
          %1937 = vmatpush1.msra.mxu0 0.0
          %1938 = vmatprep.subr.mxu0 0.0
          %1939 = vmatpush1.msra.mxu0 0.0
          %1940 = vmatprep.subr.mxu0 0.0
          %1941 = vmatpush1.msra.mxu0 0.0
          %1942 = vmatprep.subr.mxu0 0.0
          %1943 = vmatpush1.msra.mxu0 0.0
          %1944 = vmatprep.subr.mxu0 0.0
          %1945 = vmatpush1.msra.mxu0 0.0
          %1946 = vmatprep.subr.mxu0 0.0
          %1947 = vmatpush1.msra.mxu0 0.0
          %1948 = vmatprep.subr.mxu0 0.0
          %1949 = vmatpush1.msra.mxu0 0.0
          %1950 = vmatprep.subr.mxu0 0.0
          %1951 = vmatpush1.msra.mxu0 0.0
          %1952 = vmatprep.subr.mxu0 0.0
          %1953 = vmatpush1.msra.mxu0 0.0
          %1954 = vmatprep.subr.mxu0 0.0
          %1955 = vmatpush1.msra.mxu0 0.0
          %1956 = vmatprep.subr.mxu0 0.0
          %1957 = vmatpush1.msra.mxu0 0.0
          %1958 = vmatprep.subr.mxu0 %v1920
          %1959 = vmatpush1.msra.mxu0 %v1922
          %1960 = vmatprep.subr.mxu0 0.0
          %1961 = vmatpush2.msra.mxu0 0.0
          %1962 = vmatprep.subr.mxu0 0.0
          %1963 = vmatpush2.msra.mxu0 0.0
          %1964 = vmatprep.subr.mxu0 0.0
          %1965 = vmatpush2.msra.mxu0 0.0
          %1966 = vmatprep.subr.mxu0 0.0
          %1967 = vmatpush2.msra.mxu0 0.0
          %1968 = vmatprep.subr.mxu0 0.0
          %1969 = vmatpush2.msra.mxu0 0.0
          %1970 = vmatprep.subr.mxu0 0.0
          %1971 = vmatpush2.msra.mxu0 0.0
          %1972 = vmatprep.subr.mxu0 0.0
          %1973 = vmatpush2.msra.mxu0 0.0
          %1974 = vmatprep.subr.mxu0 0.0
          %1975 = vmatpush2.msra.mxu0 0.0
          %1976 = vmatprep.subr.mxu0 0.0
          %1977 = vmatpush2.msra.mxu0 0.0
          %1978 = vmatprep.subr.mxu0 0.0
          %1979 = vmatpush2.msra.mxu0 0.0
          %1980 = vmatprep.subr.mxu0 0.0
          %1981 = vmatpush2.msra.mxu0 0.0
          %1982 = vmatprep.subr.mxu0 0.0
          %1983 = vmatpush2.msra.mxu0 0.0
          %1984 = vmatprep.subr.mxu0 0.0
          %1985 = vmatpush2.msra.mxu0 0.0
          %1986 = vmatprep.subr.mxu0 0.0
          %1987 = vmatpush2.msra.mxu0 0.0
          %1988 = vmatprep.subr.mxu0 0.0
          %1989 = vmatpush2.msra.mxu0 0.0
          %1990 = vmatprep.subr.mxu0 0.0
          %1991 = vmatpush2.msra.mxu0 0.0
          %1992 = vmatprep.mubr.f32.mxu0 0.0
          %1993 = vmatmul.mubr.f32.gmra.mxu0 %v1926
          %v1994 = vpop.f32.mrf.mxu0
          %v1995 = vadd.f32 0.0, %v1994
          %v1996 = vpop.f32.mrf.mxu0
          %v1997 = vadd.f32 0.0, %v1996
          %1998 = vdwg.mxu0
          %v1999 = vadd.f32 %v1913, %v1995
          %v2000 = vadd.f32 %v1914, %v1997
          %s2001 = scalar_lea.vmem %s1, 160
          %v2002 = vld [vmem:[%s2001] sm:$0xff]
          %2003 = vrot.lane.b32.xlu0 %v288, 108
          %v2004 = vpop.permute.xlu0 %2003
          %2005 = vrot.lane.b32.xlu0 %v290, 108
          %v2006 = vpop.permute.xlu0 %2005
          %vm2007 = vcmask 883712
          %v2008 = vsel %vm2007, %v2004, %v2006
          %v2012 = vsel %vm304, %v2002, 0
          %2014 = vmatprep.subr.mxu0 0.0
          %2015 = vmatpush1.msra.mxu0 0.0
          %2016 = vmatprep.subr.mxu0 0.0
          %2017 = vmatpush1.msra.mxu0 0.0
          %2018 = vmatprep.subr.mxu0 0.0
          %2019 = vmatpush1.msra.mxu0 0.0
          %2020 = vmatprep.subr.mxu0 0.0
          %2021 = vmatpush1.msra.mxu0 0.0
          %2022 = vmatprep.subr.mxu0 0.0
          %2023 = vmatpush1.msra.mxu0 0.0
          %2024 = vmatprep.subr.mxu0 0.0
          %2025 = vmatpush1.msra.mxu0 0.0
          %2026 = vmatprep.subr.mxu0 0.0
          %2027 = vmatpush1.msra.mxu0 0.0
          %2028 = vmatprep.subr.mxu0 0.0
          %2029 = vmatpush1.msra.mxu0 0.0
          %2030 = vmatprep.subr.mxu0 0.0
          %2031 = vmatpush1.msra.mxu0 0.0
          %2032 = vmatprep.subr.mxu0 0.0
          %2033 = vmatpush1.msra.mxu0 0.0
          %2034 = vmatprep.subr.mxu0 0.0
          %2035 = vmatpush1.msra.mxu0 0.0
          %2036 = vmatprep.subr.mxu0 0.0
          %2037 = vmatpush1.msra.mxu0 0.0
          %2038 = vmatprep.subr.mxu0 0.0
          %2039 = vmatpush1.msra.mxu0 0.0
          %2040 = vmatprep.subr.mxu0 0.0
          %2041 = vmatpush1.msra.mxu0 0.0
          %2042 = vmatprep.subr.mxu0 0.0
          %2043 = vmatpush1.msra.mxu0 0.0
          %2044 = vmatprep.subr.mxu0 %v2006
          %2045 = vmatpush1.msra.mxu0 %v2008
          %2046 = vmatprep.subr.mxu0 0.0
          %2047 = vmatpush2.msra.mxu0 0.0
          %2048 = vmatprep.subr.mxu0 0.0
          %2049 = vmatpush2.msra.mxu0 0.0
          %2050 = vmatprep.subr.mxu0 0.0
          %2051 = vmatpush2.msra.mxu0 0.0
          %2052 = vmatprep.subr.mxu0 0.0
          %2053 = vmatpush2.msra.mxu0 0.0
          %2054 = vmatprep.subr.mxu0 0.0
          %2055 = vmatpush2.msra.mxu0 0.0
          %2056 = vmatprep.subr.mxu0 0.0
          %2057 = vmatpush2.msra.mxu0 0.0
          %2058 = vmatprep.subr.mxu0 0.0
          %2059 = vmatpush2.msra.mxu0 0.0
          %2060 = vmatprep.subr.mxu0 0.0
          %2061 = vmatpush2.msra.mxu0 0.0
          %2062 = vmatprep.subr.mxu0 0.0
          %2063 = vmatpush2.msra.mxu0 0.0
          %2064 = vmatprep.subr.mxu0 0.0
          %2065 = vmatpush2.msra.mxu0 0.0
          %2066 = vmatprep.subr.mxu0 0.0
          %2067 = vmatpush2.msra.mxu0 0.0
          %2068 = vmatprep.subr.mxu0 0.0
          %2069 = vmatpush2.msra.mxu0 0.0
          %2070 = vmatprep.subr.mxu0 0.0
          %2071 = vmatpush2.msra.mxu0 0.0
          %2072 = vmatprep.subr.mxu0 0.0
          %2073 = vmatpush2.msra.mxu0 0.0
          %2074 = vmatprep.subr.mxu0 0.0
          %2075 = vmatpush2.msra.mxu0 0.0
          %2076 = vmatprep.subr.mxu0 0.0
          %2077 = vmatpush2.msra.mxu0 0.0
          %2078 = vmatprep.mubr.f32.mxu0 0.0
          %2079 = vmatmul.mubr.f32.gmra.mxu0 %v2012
          %v2080 = vpop.f32.mrf.mxu0
          %v2081 = vadd.f32 0.0, %v2080
          %v2082 = vpop.f32.mrf.mxu0
          %v2083 = vadd.f32 0.0, %v2082
          %2084 = vdwg.mxu0
          %v2085 = vadd.f32 %v1999, %v2081
          %v2086 = vadd.f32 %v2000, %v2083
          %s2087 = scalar_lea.vmem %s1, 168
          %v2088 = vld [vmem:[%s2087] sm:$0xff]
          %2089 = vrot.lane.b32.xlu0 %v288, 107
          %v2090 = vpop.permute.xlu0 %2089
          %2091 = vrot.lane.b32.xlu0 %v290, 107
          %v2092 = vpop.permute.xlu0 %2091
          %vm2093 = vcmask 875520
          %v2094 = vsel %vm2093, %v2090, %v2092
          %v2098 = vsel %vm304, %v2088, 0
          %2100 = vmatprep.subr.mxu0 0.0
          %2101 = vmatpush1.msra.mxu0 0.0
          %2102 = vmatprep.subr.mxu0 0.0
          %2103 = vmatpush1.msra.mxu0 0.0
          %2104 = vmatprep.subr.mxu0 0.0
          %2105 = vmatpush1.msra.mxu0 0.0
          %2106 = vmatprep.subr.mxu0 0.0
          %2107 = vmatpush1.msra.mxu0 0.0
          %2108 = vmatprep.subr.mxu0 0.0
          %2109 = vmatpush1.msra.mxu0 0.0
          %2110 = vmatprep.subr.mxu0 0.0
          %2111 = vmatpush1.msra.mxu0 0.0
          %2112 = vmatprep.subr.mxu0 0.0
          %2113 = vmatpush1.msra.mxu0 0.0
          %2114 = vmatprep.subr.mxu0 0.0
          %2115 = vmatpush1.msra.mxu0 0.0
          %2116 = vmatprep.subr.mxu0 0.0
          %2117 = vmatpush1.msra.mxu0 0.0
          %2118 = vmatprep.subr.mxu0 0.0
          %2119 = vmatpush1.msra.mxu0 0.0
          %2120 = vmatprep.subr.mxu0 0.0
          %2121 = vmatpush1.msra.mxu0 0.0
          %2122 = vmatprep.subr.mxu0 0.0
          %2123 = vmatpush1.msra.mxu0 0.0
          %2124 = vmatprep.subr.mxu0 0.0
          %2125 = vmatpush1.msra.mxu0 0.0
          %2126 = vmatprep.subr.mxu0 0.0
          %2127 = vmatpush1.msra.mxu0 0.0
          %2128 = vmatprep.subr.mxu0 0.0
          %2129 = vmatpush1.msra.mxu0 0.0
          %2130 = vmatprep.subr.mxu0 %v2092
          %2131 = vmatpush1.msra.mxu0 %v2094
          %2132 = vmatprep.subr.mxu0 0.0
          %2133 = vmatpush2.msra.mxu0 0.0
          %2134 = vmatprep.subr.mxu0 0.0
          %2135 = vmatpush2.msra.mxu0 0.0
          %2136 = vmatprep.subr.mxu0 0.0
          %2137 = vmatpush2.msra.mxu0 0.0
          %2138 = vmatprep.subr.mxu0 0.0
          %2139 = vmatpush2.msra.mxu0 0.0
          %2140 = vmatprep.subr.mxu0 0.0
          %2141 = vmatpush2.msra.mxu0 0.0
          %2142 = vmatprep.subr.mxu0 0.0
          %2143 = vmatpush2.msra.mxu0 0.0
          %2144 = vmatprep.subr.mxu0 0.0
          %2145 = vmatpush2.msra.mxu0 0.0
          %2146 = vmatprep.subr.mxu0 0.0
          %2147 = vmatpush2.msra.mxu0 0.0
          %2148 = vmatprep.subr.mxu0 0.0
          %2149 = vmatpush2.msra.mxu0 0.0
          %2150 = vmatprep.subr.mxu0 0.0
          %2151 = vmatpush2.msra.mxu0 0.0
          %2152 = vmatprep.subr.mxu0 0.0
          %2153 = vmatpush2.msra.mxu0 0.0
          %2154 = vmatprep.subr.mxu0 0.0
          %2155 = vmatpush2.msra.mxu0 0.0
          %2156 = vmatprep.subr.mxu0 0.0
          %2157 = vmatpush2.msra.mxu0 0.0
          %2158 = vmatprep.subr.mxu0 0.0
          %2159 = vmatpush2.msra.mxu0 0.0
          %2160 = vmatprep.subr.mxu0 0.0
          %2161 = vmatpush2.msra.mxu0 0.0
          %2162 = vmatprep.subr.mxu0 0.0
          %2163 = vmatpush2.msra.mxu0 0.0
          %2164 = vmatprep.mubr.f32.mxu0 0.0
          %2165 = vmatmul.mubr.f32.gmra.mxu0 %v2098
          %v2166 = vpop.f32.mrf.mxu0
          %v2167 = vadd.f32 0.0, %v2166
          %v2168 = vpop.f32.mrf.mxu0
          %v2169 = vadd.f32 0.0, %v2168
          %2170 = vdwg.mxu0
          %v2171 = vadd.f32 %v2085, %v2167
          %v2172 = vadd.f32 %v2086, %v2169
          %s2173 = scalar_lea.vmem %s1, 176
          %v2174 = vld [vmem:[%s2173] sm:$0xff]
          %2175 = vrot.lane.b32.xlu0 %v288, 106
          %v2176 = vpop.permute.xlu0 %2175
          %2177 = vrot.lane.b32.xlu0 %v290, 106
          %v2178 = vpop.permute.xlu0 %2177
          %vm2179 = vcmask 867328
          %v2180 = vsel %vm2179, %v2176, %v2178
          %v2184 = vsel %vm304, %v2174, 0
          %2186 = vmatprep.subr.mxu0 0.0
          %2187 = vmatpush1.msra.mxu0 0.0
          %2188 = vmatprep.subr.mxu0 0.0
          %2189 = vmatpush1.msra.mxu0 0.0
          %2190 = vmatprep.subr.mxu0 0.0
          %2191 = vmatpush1.msra.mxu0 0.0
          %2192 = vmatprep.subr.mxu0 0.0
          %2193 = vmatpush1.msra.mxu0 0.0
          %2194 = vmatprep.subr.mxu0 0.0
          %2195 = vmatpush1.msra.mxu0 0.0
          %2196 = vmatprep.subr.mxu0 0.0
          %2197 = vmatpush1.msra.mxu0 0.0
          %2198 = vmatprep.subr.mxu0 0.0
          %2199 = vmatpush1.msra.mxu0 0.0
          %2200 = vmatprep.subr.mxu0 0.0
          %2201 = vmatpush1.msra.mxu0 0.0
          %2202 = vmatprep.subr.mxu0 0.0
          %2203 = vmatpush1.msra.mxu0 0.0
          %2204 = vmatprep.subr.mxu0 0.0
          %2205 = vmatpush1.msra.mxu0 0.0
          %2206 = vmatprep.subr.mxu0 0.0
          %2207 = vmatpush1.msra.mxu0 0.0
          %2208 = vmatprep.subr.mxu0 0.0
          %2209 = vmatpush1.msra.mxu0 0.0
          %2210 = vmatprep.subr.mxu0 0.0
          %2211 = vmatpush1.msra.mxu0 0.0
          %2212 = vmatprep.subr.mxu0 0.0
          %2213 = vmatpush1.msra.mxu0 0.0
          %2214 = vmatprep.subr.mxu0 0.0
          %2215 = vmatpush1.msra.mxu0 0.0
          %2216 = vmatprep.subr.mxu0 %v2178
          %2217 = vmatpush1.msra.mxu0 %v2180
          %2218 = vmatprep.subr.mxu0 0.0
          %2219 = vmatpush2.msra.mxu0 0.0
          %2220 = vmatprep.subr.mxu0 0.0
          %2221 = vmatpush2.msra.mxu0 0.0
          %2222 = vmatprep.subr.mxu0 0.0
          %2223 = vmatpush2.msra.mxu0 0.0
          %2224 = vmatprep.subr.mxu0 0.0
          %2225 = vmatpush2.msra.mxu0 0.0
          %2226 = vmatprep.subr.mxu0 0.0
          %2227 = vmatpush2.msra.mxu0 0.0
          %2228 = vmatprep.subr.mxu0 0.0
          %2229 = vmatpush2.msra.mxu0 0.0
          %2230 = vmatprep.subr.mxu0 0.0
          %2231 = vmatpush2.msra.mxu0 0.0
          %2232 = vmatprep.subr.mxu0 0.0
          %2233 = vmatpush2.msra.mxu0 0.0
          %2234 = vmatprep.subr.mxu0 0.0
          %2235 = vmatpush2.msra.mxu0 0.0
          %2236 = vmatprep.subr.mxu0 0.0
          %2237 = vmatpush2.msra.mxu0 0.0
          %2238 = vmatprep.subr.mxu0 0.0
          %2239 = vmatpush2.msra.mxu0 0.0
          %2240 = vmatprep.subr.mxu0 0.0
          %2241 = vmatpush2.msra.mxu0 0.0
          %2242 = vmatprep.subr.mxu0 0.0
          %2243 = vmatpush2.msra.mxu0 0.0
          %2244 = vmatprep.subr.mxu0 0.0
          %2245 = vmatpush2.msra.mxu0 0.0
          %2246 = vmatprep.subr.mxu0 0.0
          %2247 = vmatpush2.msra.mxu0 0.0
          %2248 = vmatprep.subr.mxu0 0.0
          %2249 = vmatpush2.msra.mxu0 0.0
          %2250 = vmatprep.mubr.f32.mxu0 0.0
          %2251 = vmatmul.mubr.f32.gmra.mxu0 %v2184
          %v2252 = vpop.f32.mrf.mxu0
          %v2253 = vadd.f32 0.0, %v2252
          %v2254 = vpop.f32.mrf.mxu0
          %v2255 = vadd.f32 0.0, %v2254
          %2256 = vdwg.mxu0
          %v2257 = vadd.f32 %v2171, %v2253
          %v2258 = vadd.f32 %v2172, %v2255
          %s2259 = scalar_lea.vmem %s1, 184
          %v2260 = vld [vmem:[%s2259] sm:$0xff]
          %2261 = vrot.lane.b32.xlu0 %v288, 105
          %v2262 = vpop.permute.xlu0 %2261
          %2263 = vrot.lane.b32.xlu0 %v290, 105
          %v2264 = vpop.permute.xlu0 %2263
          %vm2265 = vcmask 859136
          %v2266 = vsel %vm2265, %v2262, %v2264
          %v2270 = vsel %vm304, %v2260, 0
          %2272 = vmatprep.subr.mxu0 0.0
          %2273 = vmatpush1.msra.mxu0 0.0
          %2274 = vmatprep.subr.mxu0 0.0
          %2275 = vmatpush1.msra.mxu0 0.0
          %2276 = vmatprep.subr.mxu0 0.0
          %2277 = vmatpush1.msra.mxu0 0.0
          %2278 = vmatprep.subr.mxu0 0.0
          %2279 = vmatpush1.msra.mxu0 0.0
          %2280 = vmatprep.subr.mxu0 0.0
          %2281 = vmatpush1.msra.mxu0 0.0
          %2282 = vmatprep.subr.mxu0 0.0
          %2283 = vmatpush1.msra.mxu0 0.0
          %2284 = vmatprep.subr.mxu0 0.0
          %2285 = vmatpush1.msra.mxu0 0.0
          %2286 = vmatprep.subr.mxu0 0.0
          %2287 = vmatpush1.msra.mxu0 0.0
          %2288 = vmatprep.subr.mxu0 0.0
          %2289 = vmatpush1.msra.mxu0 0.0
          %2290 = vmatprep.subr.mxu0 0.0
          %2291 = vmatpush1.msra.mxu0 0.0
          %2292 = vmatprep.subr.mxu0 0.0
          %2293 = vmatpush1.msra.mxu0 0.0
          %2294 = vmatprep.subr.mxu0 0.0
          %2295 = vmatpush1.msra.mxu0 0.0
          %2296 = vmatprep.subr.mxu0 0.0
          %2297 = vmatpush1.msra.mxu0 0.0
          %2298 = vmatprep.subr.mxu0 0.0
          %2299 = vmatpush1.msra.mxu0 0.0
          %2300 = vmatprep.subr.mxu0 0.0
          %2301 = vmatpush1.msra.mxu0 0.0
          %2302 = vmatprep.subr.mxu0 %v2264
          %2303 = vmatpush1.msra.mxu0 %v2266
          %2304 = vmatprep.subr.mxu0 0.0
          %2305 = vmatpush2.msra.mxu0 0.0
          %2306 = vmatprep.subr.mxu0 0.0
          %2307 = vmatpush2.msra.mxu0 0.0
          %2308 = vmatprep.subr.mxu0 0.0
          %2309 = vmatpush2.msra.mxu0 0.0
          %2310 = vmatprep.subr.mxu0 0.0
          %2311 = vmatpush2.msra.mxu0 0.0
          %2312 = vmatprep.subr.mxu0 0.0
          %2313 = vmatpush2.msra.mxu0 0.0
          %2314 = vmatprep.subr.mxu0 0.0
          %2315 = vmatpush2.msra.mxu0 0.0
          %2316 = vmatprep.subr.mxu0 0.0
          %2317 = vmatpush2.msra.mxu0 0.0
          %2318 = vmatprep.subr.mxu0 0.0
          %2319 = vmatpush2.msra.mxu0 0.0
          %2320 = vmatprep.subr.mxu0 0.0
          %2321 = vmatpush2.msra.mxu0 0.0
          %2322 = vmatprep.subr.mxu0 0.0
          %2323 = vmatpush2.msra.mxu0 0.0
          %2324 = vmatprep.subr.mxu0 0.0
          %2325 = vmatpush2.msra.mxu0 0.0
          %2326 = vmatprep.subr.mxu0 0.0
          %2327 = vmatpush2.msra.mxu0 0.0
          %2328 = vmatprep.subr.mxu0 0.0
          %2329 = vmatpush2.msra.mxu0 0.0
          %2330 = vmatprep.subr.mxu0 0.0
          %2331 = vmatpush2.msra.mxu0 0.0
          %2332 = vmatprep.subr.mxu0 0.0
          %2333 = vmatpush2.msra.mxu0 0.0
          %2334 = vmatprep.subr.mxu0 0.0
          %2335 = vmatpush2.msra.mxu0 0.0
          %2336 = vmatprep.mubr.f32.mxu0 0.0
          %2337 = vmatmul.mubr.f32.gmra.mxu0 %v2270
          %v2338 = vpop.f32.mrf.mxu0
          %v2339 = vadd.f32 0.0, %v2338
          %v2340 = vpop.f32.mrf.mxu0
          %v2341 = vadd.f32 0.0, %v2340
          %2342 = vdwg.mxu0
          %v2343 = vadd.f32 %v2257, %v2339
          %v2344 = vadd.f32 %v2258, %v2341
          %s2345 = scalar_lea.vmem %s1, 192
          %v2346 = vld [vmem:[%s2345] sm:$0xff]
          %2347 = vrot.lane.b32.xlu0 %v288, 104
          %v2348 = vpop.permute.xlu0 %2347
          %2349 = vrot.lane.b32.xlu0 %v290, 104
          %v2350 = vpop.permute.xlu0 %2349
          %vm2351 = vcmask 850944
          %v2352 = vsel %vm2351, %v2348, %v2350
          %v2356 = vsel %vm304, %v2346, 0
          %2358 = vmatprep.subr.mxu0 0.0
          %2359 = vmatpush1.msra.mxu0 0.0
          %2360 = vmatprep.subr.mxu0 0.0
          %2361 = vmatpush1.msra.mxu0 0.0
          %2362 = vmatprep.subr.mxu0 0.0
          %2363 = vmatpush1.msra.mxu0 0.0
          %2364 = vmatprep.subr.mxu0 0.0
          %2365 = vmatpush1.msra.mxu0 0.0
          %2366 = vmatprep.subr.mxu0 0.0
          %2367 = vmatpush1.msra.mxu0 0.0
          %2368 = vmatprep.subr.mxu0 0.0
          %2369 = vmatpush1.msra.mxu0 0.0
          %2370 = vmatprep.subr.mxu0 0.0
          %2371 = vmatpush1.msra.mxu0 0.0
          %2372 = vmatprep.subr.mxu0 0.0
          %2373 = vmatpush1.msra.mxu0 0.0
          %2374 = vmatprep.subr.mxu0 0.0
          %2375 = vmatpush1.msra.mxu0 0.0
          %2376 = vmatprep.subr.mxu0 0.0
          %2377 = vmatpush1.msra.mxu0 0.0
          %2378 = vmatprep.subr.mxu0 0.0
          %2379 = vmatpush1.msra.mxu0 0.0
          %2380 = vmatprep.subr.mxu0 0.0
          %2381 = vmatpush1.msra.mxu0 0.0
          %2382 = vmatprep.subr.mxu0 0.0
          %2383 = vmatpush1.msra.mxu0 0.0
          %2384 = vmatprep.subr.mxu0 0.0
          %2385 = vmatpush1.msra.mxu0 0.0
          %2386 = vmatprep.subr.mxu0 0.0
          %2387 = vmatpush1.msra.mxu0 0.0
          %2388 = vmatprep.subr.mxu0 %v2350
          %2389 = vmatpush1.msra.mxu0 %v2352
          %2390 = vmatprep.subr.mxu0 0.0
          %2391 = vmatpush2.msra.mxu0 0.0
          %2392 = vmatprep.subr.mxu0 0.0
          %2393 = vmatpush2.msra.mxu0 0.0
          %2394 = vmatprep.subr.mxu0 0.0
          %2395 = vmatpush2.msra.mxu0 0.0
          %2396 = vmatprep.subr.mxu0 0.0
          %2397 = vmatpush2.msra.mxu0 0.0
          %2398 = vmatprep.subr.mxu0 0.0
          %2399 = vmatpush2.msra.mxu0 0.0
          %2400 = vmatprep.subr.mxu0 0.0
          %2401 = vmatpush2.msra.mxu0 0.0
          %2402 = vmatprep.subr.mxu0 0.0
          %2403 = vmatpush2.msra.mxu0 0.0
          %2404 = vmatprep.subr.mxu0 0.0
          %2405 = vmatpush2.msra.mxu0 0.0
          %2406 = vmatprep.subr.mxu0 0.0
          %2407 = vmatpush2.msra.mxu0 0.0
          %2408 = vmatprep.subr.mxu0 0.0
          %2409 = vmatpush2.msra.mxu0 0.0
          %2410 = vmatprep.subr.mxu0 0.0
          %2411 = vmatpush2.msra.mxu0 0.0
          %2412 = vmatprep.subr.mxu0 0.0
          %2413 = vmatpush2.msra.mxu0 0.0
          %2414 = vmatprep.subr.mxu0 0.0
          %2415 = vmatpush2.msra.mxu0 0.0
          %2416 = vmatprep.subr.mxu0 0.0
          %2417 = vmatpush2.msra.mxu0 0.0
          %2418 = vmatprep.subr.mxu0 0.0
          %2419 = vmatpush2.msra.mxu0 0.0
          %2420 = vmatprep.subr.mxu0 0.0
          %2421 = vmatpush2.msra.mxu0 0.0
          %2422 = vmatprep.mubr.f32.mxu0 0.0
          %2423 = vmatmul.mubr.f32.gmra.mxu0 %v2356
          %v2424 = vpop.f32.mrf.mxu0
          %v2425 = vadd.f32 0.0, %v2424
          %v2426 = vpop.f32.mrf.mxu0
          %v2427 = vadd.f32 0.0, %v2426
          %2428 = vdwg.mxu0
          %v2429 = vadd.f32 %v2343, %v2425
          %v2430 = vadd.f32 %v2344, %v2427
          %s2431 = scalar_lea.vmem %s1, 200
          %v2432 = vld [vmem:[%s2431] sm:$0xff]
          %2433 = vrot.lane.b32.xlu0 %v288, 103
          %v2434 = vpop.permute.xlu0 %2433
          %2435 = vrot.lane.b32.xlu0 %v290, 103
          %v2436 = vpop.permute.xlu0 %2435
          %vm2437 = vcmask 842752
          %v2438 = vsel %vm2437, %v2434, %v2436
          %v2442 = vsel %vm304, %v2432, 0
          %2444 = vmatprep.subr.mxu0 0.0
          %2445 = vmatpush1.msra.mxu0 0.0
          %2446 = vmatprep.subr.mxu0 0.0
          %2447 = vmatpush1.msra.mxu0 0.0
          %2448 = vmatprep.subr.mxu0 0.0
          %2449 = vmatpush1.msra.mxu0 0.0
          %2450 = vmatprep.subr.mxu0 0.0
          %2451 = vmatpush1.msra.mxu0 0.0
          %2452 = vmatprep.subr.mxu0 0.0
          %2453 = vmatpush1.msra.mxu0 0.0
          %2454 = vmatprep.subr.mxu0 0.0
          %2455 = vmatpush1.msra.mxu0 0.0
          %2456 = vmatprep.subr.mxu0 0.0
          %2457 = vmatpush1.msra.mxu0 0.0
          %2458 = vmatprep.subr.mxu0 0.0
          %2459 = vmatpush1.msra.mxu0 0.0
          %2460 = vmatprep.subr.mxu0 0.0
          %2461 = vmatpush1.msra.mxu0 0.0
          %2462 = vmatprep.subr.mxu0 0.0
          %2463 = vmatpush1.msra.mxu0 0.0
          %2464 = vmatprep.subr.mxu0 0.0
          %2465 = vmatpush1.msra.mxu0 0.0
          %2466 = vmatprep.subr.mxu0 0.0
          %2467 = vmatpush1.msra.mxu0 0.0
          %2468 = vmatprep.subr.mxu0 0.0
          %2469 = vmatpush1.msra.mxu0 0.0
          %2470 = vmatprep.subr.mxu0 0.0
          %2471 = vmatpush1.msra.mxu0 0.0
          %2472 = vmatprep.subr.mxu0 0.0
          %2473 = vmatpush1.msra.mxu0 0.0
          %2474 = vmatprep.subr.mxu0 %v2436
          %2475 = vmatpush1.msra.mxu0 %v2438
          %2476 = vmatprep.subr.mxu0 0.0
          %2477 = vmatpush2.msra.mxu0 0.0
          %2478 = vmatprep.subr.mxu0 0.0
          %2479 = vmatpush2.msra.mxu0 0.0
          %2480 = vmatprep.subr.mxu0 0.0
          %2481 = vmatpush2.msra.mxu0 0.0
          %2482 = vmatprep.subr.mxu0 0.0
          %2483 = vmatpush2.msra.mxu0 0.0
          %2484 = vmatprep.subr.mxu0 0.0
          %2485 = vmatpush2.msra.mxu0 0.0
          %2486 = vmatprep.subr.mxu0 0.0
          %2487 = vmatpush2.msra.mxu0 0.0
          %2488 = vmatprep.subr.mxu0 0.0
          %2489 = vmatpush2.msra.mxu0 0.0
          %2490 = vmatprep.subr.mxu0 0.0
          %2491 = vmatpush2.msra.mxu0 0.0
          %2492 = vmatprep.subr.mxu0 0.0
          %2493 = vmatpush2.msra.mxu0 0.0
          %2494 = vmatprep.subr.mxu0 0.0
          %2495 = vmatpush2.msra.mxu0 0.0
          %2496 = vmatprep.subr.mxu0 0.0
          %2497 = vmatpush2.msra.mxu0 0.0
          %2498 = vmatprep.subr.mxu0 0.0
          %2499 = vmatpush2.msra.mxu0 0.0
          %2500 = vmatprep.subr.mxu0 0.0
          %2501 = vmatpush2.msra.mxu0 0.0
          %2502 = vmatprep.subr.mxu0 0.0
          %2503 = vmatpush2.msra.mxu0 0.0
          %2504 = vmatprep.subr.mxu0 0.0
          %2505 = vmatpush2.msra.mxu0 0.0
          %2506 = vmatprep.subr.mxu0 0.0
          %2507 = vmatpush2.msra.mxu0 0.0
          %2508 = vmatprep.mubr.f32.mxu0 0.0
          %2509 = vmatmul.mubr.f32.gmra.mxu0 %v2442
          %v2510 = vpop.f32.mrf.mxu0
          %v2511 = vadd.f32 0.0, %v2510
          %v2512 = vpop.f32.mrf.mxu0
          %v2513 = vadd.f32 0.0, %v2512
          %2514 = vdwg.mxu0
          %v2515 = vadd.f32 %v2429, %v2511
          %v2516 = vadd.f32 %v2430, %v2513
          %s2517 = scalar_lea.vmem %s1, 208
          %v2518 = vld [vmem:[%s2517] sm:$0xff]
          %2519 = vrot.lane.b32.xlu0 %v288, 102
          %v2520 = vpop.permute.xlu0 %2519
          %2521 = vrot.lane.b32.xlu0 %v290, 102
          %v2522 = vpop.permute.xlu0 %2521
          %vm2523 = vcmask 834560
          %v2524 = vsel %vm2523, %v2520, %v2522
          %v2528 = vsel %vm304, %v2518, 0
          %2530 = vmatprep.subr.mxu0 0.0
          %2531 = vmatpush1.msra.mxu0 0.0
          %2532 = vmatprep.subr.mxu0 0.0
          %2533 = vmatpush1.msra.mxu0 0.0
          %2534 = vmatprep.subr.mxu0 0.0
          %2535 = vmatpush1.msra.mxu0 0.0
          %2536 = vmatprep.subr.mxu0 0.0
          %2537 = vmatpush1.msra.mxu0 0.0
          %2538 = vmatprep.subr.mxu0 0.0
          %2539 = vmatpush1.msra.mxu0 0.0
          %2540 = vmatprep.subr.mxu0 0.0
          %2541 = vmatpush1.msra.mxu0 0.0
          %2542 = vmatprep.subr.mxu0 0.0
          %2543 = vmatpush1.msra.mxu0 0.0
          %2544 = vmatprep.subr.mxu0 0.0
          %2545 = vmatpush1.msra.mxu0 0.0
          %2546 = vmatprep.subr.mxu0 0.0
          %2547 = vmatpush1.msra.mxu0 0.0
          %2548 = vmatprep.subr.mxu0 0.0
          %2549 = vmatpush1.msra.mxu0 0.0
          %2550 = vmatprep.subr.mxu0 0.0
          %2551 = vmatpush1.msra.mxu0 0.0
          %2552 = vmatprep.subr.mxu0 0.0
          %2553 = vmatpush1.msra.mxu0 0.0
          %2554 = vmatprep.subr.mxu0 0.0
          %2555 = vmatpush1.msra.mxu0 0.0
          %2556 = vmatprep.subr.mxu0 0.0
          %2557 = vmatpush1.msra.mxu0 0.0
          %2558 = vmatprep.subr.mxu0 0.0
          %2559 = vmatpush1.msra.mxu0 0.0
          %2560 = vmatprep.subr.mxu0 %v2522
          %2561 = vmatpush1.msra.mxu0 %v2524
          %2562 = vmatprep.subr.mxu0 0.0
          %2563 = vmatpush2.msra.mxu0 0.0
          %2564 = vmatprep.subr.mxu0 0.0
          %2565 = vmatpush2.msra.mxu0 0.0
          %2566 = vmatprep.subr.mxu0 0.0
          %2567 = vmatpush2.msra.mxu0 0.0
          %2568 = vmatprep.subr.mxu0 0.0
          %2569 = vmatpush2.msra.mxu0 0.0
          %2570 = vmatprep.subr.mxu0 0.0
          %2571 = vmatpush2.msra.mxu0 0.0
          %2572 = vmatprep.subr.mxu0 0.0
          %2573 = vmatpush2.msra.mxu0 0.0
          %2574 = vmatprep.subr.mxu0 0.0
          %2575 = vmatpush2.msra.mxu0 0.0
          %2576 = vmatprep.subr.mxu0 0.0
          %2577 = vmatpush2.msra.mxu0 0.0
          %2578 = vmatprep.subr.mxu0 0.0
          %2579 = vmatpush2.msra.mxu0 0.0
          %2580 = vmatprep.subr.mxu0 0.0
          %2581 = vmatpush2.msra.mxu0 0.0
          %2582 = vmatprep.subr.mxu0 0.0
          %2583 = vmatpush2.msra.mxu0 0.0
          %2584 = vmatprep.subr.mxu0 0.0
          %2585 = vmatpush2.msra.mxu0 0.0
          %2586 = vmatprep.subr.mxu0 0.0
          %2587 = vmatpush2.msra.mxu0 0.0
          %2588 = vmatprep.subr.mxu0 0.0
          %2589 = vmatpush2.msra.mxu0 0.0
          %2590 = vmatprep.subr.mxu0 0.0
          %2591 = vmatpush2.msra.mxu0 0.0
          %2592 = vmatprep.subr.mxu0 0.0
          %2593 = vmatpush2.msra.mxu0 0.0
          %2594 = vmatprep.mubr.f32.mxu0 0.0
          %2595 = vmatmul.mubr.f32.gmra.mxu0 %v2528
          %v2596 = vpop.f32.mrf.mxu0
          %v2597 = vadd.f32 0.0, %v2596
          %v2598 = vpop.f32.mrf.mxu0
          %v2599 = vadd.f32 0.0, %v2598
          %2600 = vdwg.mxu0
          %v2601 = vadd.f32 %v2515, %v2597
          %v2602 = vadd.f32 %v2516, %v2599
          %s2603 = scalar_lea.vmem %s1, 216
          %v2604 = vld [vmem:[%s2603] sm:$0xff]
          %2605 = vrot.lane.b32.xlu0 %v288, 101
          %v2606 = vpop.permute.xlu0 %2605
          %2607 = vrot.lane.b32.xlu0 %v290, 101
          %v2608 = vpop.permute.xlu0 %2607
          %vm2609 = vcmask 826368
          %v2610 = vsel %vm2609, %v2606, %v2608
          %v2614 = vsel %vm304, %v2604, 0
          %2616 = vmatprep.subr.mxu0 0.0
          %2617 = vmatpush1.msra.mxu0 0.0
          %2618 = vmatprep.subr.mxu0 0.0
          %2619 = vmatpush1.msra.mxu0 0.0
          %2620 = vmatprep.subr.mxu0 0.0
          %2621 = vmatpush1.msra.mxu0 0.0
          %2622 = vmatprep.subr.mxu0 0.0
          %2623 = vmatpush1.msra.mxu0 0.0
          %2624 = vmatprep.subr.mxu0 0.0
          %2625 = vmatpush1.msra.mxu0 0.0
          %2626 = vmatprep.subr.mxu0 0.0
          %2627 = vmatpush1.msra.mxu0 0.0
          %2628 = vmatprep.subr.mxu0 0.0
          %2629 = vmatpush1.msra.mxu0 0.0
          %2630 = vmatprep.subr.mxu0 0.0
          %2631 = vmatpush1.msra.mxu0 0.0
          %2632 = vmatprep.subr.mxu0 0.0
          %2633 = vmatpush1.msra.mxu0 0.0
          %2634 = vmatprep.subr.mxu0 0.0
          %2635 = vmatpush1.msra.mxu0 0.0
          %2636 = vmatprep.subr.mxu0 0.0
          %2637 = vmatpush1.msra.mxu0 0.0
          %2638 = vmatprep.subr.mxu0 0.0
          %2639 = vmatpush1.msra.mxu0 0.0
          %2640 = vmatprep.subr.mxu0 0.0
          %2641 = vmatpush1.msra.mxu0 0.0
          %2642 = vmatprep.subr.mxu0 0.0
          %2643 = vmatpush1.msra.mxu0 0.0
          %2644 = vmatprep.subr.mxu0 0.0
          %2645 = vmatpush1.msra.mxu0 0.0
          %2646 = vmatprep.subr.mxu0 %v2608
          %2647 = vmatpush1.msra.mxu0 %v2610
          %2648 = vmatprep.subr.mxu0 0.0
          %2649 = vmatpush2.msra.mxu0 0.0
          %2650 = vmatprep.subr.mxu0 0.0
          %2651 = vmatpush2.msra.mxu0 0.0
          %2652 = vmatprep.subr.mxu0 0.0
          %2653 = vmatpush2.msra.mxu0 0.0
          %2654 = vmatprep.subr.mxu0 0.0
          %2655 = vmatpush2.msra.mxu0 0.0
          %2656 = vmatprep.subr.mxu0 0.0
          %2657 = vmatpush2.msra.mxu0 0.0
          %2658 = vmatprep.subr.mxu0 0.0
          %2659 = vmatpush2.msra.mxu0 0.0
          %2660 = vmatprep.subr.mxu0 0.0
          %2661 = vmatpush2.msra.mxu0 0.0
          %2662 = vmatprep.subr.mxu0 0.0
          %2663 = vmatpush2.msra.mxu0 0.0
          %2664 = vmatprep.subr.mxu0 0.0
          %2665 = vmatpush2.msra.mxu0 0.0
          %2666 = vmatprep.subr.mxu0 0.0
          %2667 = vmatpush2.msra.mxu0 0.0
          %2668 = vmatprep.subr.mxu0 0.0
          %2669 = vmatpush2.msra.mxu0 0.0
          %2670 = vmatprep.subr.mxu0 0.0
          %2671 = vmatpush2.msra.mxu0 0.0
          %2672 = vmatprep.subr.mxu0 0.0
          %2673 = vmatpush2.msra.mxu0 0.0
          %2674 = vmatprep.subr.mxu0 0.0
          %2675 = vmatpush2.msra.mxu0 0.0
          %2676 = vmatprep.subr.mxu0 0.0
          %2677 = vmatpush2.msra.mxu0 0.0
          %2678 = vmatprep.subr.mxu0 0.0
          %2679 = vmatpush2.msra.mxu0 0.0
          %2680 = vmatprep.mubr.f32.mxu0 0.0
          %2681 = vmatmul.mubr.f32.gmra.mxu0 %v2614
          %v2682 = vpop.f32.mrf.mxu0
          %v2683 = vadd.f32 0.0, %v2682
          %v2684 = vpop.f32.mrf.mxu0
          %v2685 = vadd.f32 0.0, %v2684
          %2686 = vdwg.mxu0
          %v2687 = vadd.f32 %v2601, %v2683
          %v2688 = vadd.f32 %v2602, %v2685
          %s2689 = scalar_lea.vmem %s1, 224
          %v2690 = vld [vmem:[%s2689] sm:$0xff]
          %2691 = vrot.lane.b32.xlu0 %v288, 100
          %v2692 = vpop.permute.xlu0 %2691
          %2693 = vrot.lane.b32.xlu0 %v290, 100
          %v2694 = vpop.permute.xlu0 %2693
          %vm2695 = vcmask 818176
          %v2696 = vsel %vm2695, %v2692, %v2694
          %v2700 = vsel %vm304, %v2690, 0
          %2702 = vmatprep.subr.mxu0 0.0
          %2703 = vmatpush1.msra.mxu0 0.0
          %2704 = vmatprep.subr.mxu0 0.0
          %2705 = vmatpush1.msra.mxu0 0.0
          %2706 = vmatprep.subr.mxu0 0.0
          %2707 = vmatpush1.msra.mxu0 0.0
          %2708 = vmatprep.subr.mxu0 0.0
          %2709 = vmatpush1.msra.mxu0 0.0
          %2710 = vmatprep.subr.mxu0 0.0
          %2711 = vmatpush1.msra.mxu0 0.0
          %2712 = vmatprep.subr.mxu0 0.0
          %2713 = vmatpush1.msra.mxu0 0.0
          %2714 = vmatprep.subr.mxu0 0.0
          %2715 = vmatpush1.msra.mxu0 0.0
          %2716 = vmatprep.subr.mxu0 0.0
          %2717 = vmatpush1.msra.mxu0 0.0
          %2718 = vmatprep.subr.mxu0 0.0
          %2719 = vmatpush1.msra.mxu0 0.0
          %2720 = vmatprep.subr.mxu0 0.0
          %2721 = vmatpush1.msra.mxu0 0.0
          %2722 = vmatprep.subr.mxu0 0.0
          %2723 = vmatpush1.msra.mxu0 0.0
          %2724 = vmatprep.subr.mxu0 0.0
          %2725 = vmatpush1.msra.mxu0 0.0
          %2726 = vmatprep.subr.mxu0 0.0
          %2727 = vmatpush1.msra.mxu0 0.0
          %2728 = vmatprep.subr.mxu0 0.0
          %2729 = vmatpush1.msra.mxu0 0.0
          %2730 = vmatprep.subr.mxu0 0.0
          %2731 = vmatpush1.msra.mxu0 0.0
          %2732 = vmatprep.subr.mxu0 %v2694
          %2733 = vmatpush1.msra.mxu0 %v2696
          %2734 = vmatprep.subr.mxu0 0.0
          %2735 = vmatpush2.msra.mxu0 0.0
          %2736 = vmatprep.subr.mxu0 0.0
          %2737 = vmatpush2.msra.mxu0 0.0
          %2738 = vmatprep.subr.mxu0 0.0
          %2739 = vmatpush2.msra.mxu0 0.0
          %2740 = vmatprep.subr.mxu0 0.0
          %2741 = vmatpush2.msra.mxu0 0.0
          %2742 = vmatprep.subr.mxu0 0.0
          %2743 = vmatpush2.msra.mxu0 0.0
          %2744 = vmatprep.subr.mxu0 0.0
          %2745 = vmatpush2.msra.mxu0 0.0
          %2746 = vmatprep.subr.mxu0 0.0
          %2747 = vmatpush2.msra.mxu0 0.0
          %2748 = vmatprep.subr.mxu0 0.0
          %2749 = vmatpush2.msra.mxu0 0.0
          %2750 = vmatprep.subr.mxu0 0.0
          %2751 = vmatpush2.msra.mxu0 0.0
          %2752 = vmatprep.subr.mxu0 0.0
          %2753 = vmatpush2.msra.mxu0 0.0
          %2754 = vmatprep.subr.mxu0 0.0
          %2755 = vmatpush2.msra.mxu0 0.0
          %2756 = vmatprep.subr.mxu0 0.0
          %2757 = vmatpush2.msra.mxu0 0.0
          %2758 = vmatprep.subr.mxu0 0.0
          %2759 = vmatpush2.msra.mxu0 0.0
          %2760 = vmatprep.subr.mxu0 0.0
          %2761 = vmatpush2.msra.mxu0 0.0
          %2762 = vmatprep.subr.mxu0 0.0
          %2763 = vmatpush2.msra.mxu0 0.0
          %2764 = vmatprep.subr.mxu0 0.0
          %2765 = vmatpush2.msra.mxu0 0.0
          %2766 = vmatprep.mubr.f32.mxu0 0.0
          %2767 = vmatmul.mubr.f32.gmra.mxu0 %v2700
          %v2768 = vpop.f32.mrf.mxu0
          %v2769 = vadd.f32 0.0, %v2768
          %v2770 = vpop.f32.mrf.mxu0
          %v2771 = vadd.f32 0.0, %v2770
          %2772 = vdwg.mxu0
          %v2773 = vadd.f32 %v2687, %v2769
          %v2774 = vadd.f32 %v2688, %v2771
          %s2775 = scalar_lea.vmem %s1, 232
          %v2776 = vld [vmem:[%s2775] sm:$0xff]
          %2777 = vrot.lane.b32.xlu0 %v288, 99
          %v2778 = vpop.permute.xlu0 %2777
          %2779 = vrot.lane.b32.xlu0 %v290, 99
          %v2780 = vpop.permute.xlu0 %2779
          %vm2781 = vcmask 809984
          %v2782 = vsel %vm2781, %v2778, %v2780
          %v2786 = vsel %vm304, %v2776, 0
          %2788 = vmatprep.subr.mxu0 0.0
          %2789 = vmatpush1.msra.mxu0 0.0
          %2790 = vmatprep.subr.mxu0 0.0
          %2791 = vmatpush1.msra.mxu0 0.0
          %2792 = vmatprep.subr.mxu0 0.0
          %2793 = vmatpush1.msra.mxu0 0.0
          %2794 = vmatprep.subr.mxu0 0.0
          %2795 = vmatpush1.msra.mxu0 0.0
          %2796 = vmatprep.subr.mxu0 0.0
          %2797 = vmatpush1.msra.mxu0 0.0
          %2798 = vmatprep.subr.mxu0 0.0
          %2799 = vmatpush1.msra.mxu0 0.0
          %2800 = vmatprep.subr.mxu0 0.0
          %2801 = vmatpush1.msra.mxu0 0.0
          %2802 = vmatprep.subr.mxu0 0.0
          %2803 = vmatpush1.msra.mxu0 0.0
          %2804 = vmatprep.subr.mxu0 0.0
          %2805 = vmatpush1.msra.mxu0 0.0
          %2806 = vmatprep.subr.mxu0 0.0
          %2807 = vmatpush1.msra.mxu0 0.0
          %2808 = vmatprep.subr.mxu0 0.0
          %2809 = vmatpush1.msra.mxu0 0.0
          %2810 = vmatprep.subr.mxu0 0.0
          %2811 = vmatpush1.msra.mxu0 0.0
          %2812 = vmatprep.subr.mxu0 0.0
          %2813 = vmatpush1.msra.mxu0 0.0
          %2814 = vmatprep.subr.mxu0 0.0
          %2815 = vmatpush1.msra.mxu0 0.0
          %2816 = vmatprep.subr.mxu0 0.0
          %2817 = vmatpush1.msra.mxu0 0.0
          %2818 = vmatprep.subr.mxu0 %v2780
          %2819 = vmatpush1.msra.mxu0 %v2782
          %2820 = vmatprep.subr.mxu0 0.0
          %2821 = vmatpush2.msra.mxu0 0.0
          %2822 = vmatprep.subr.mxu0 0.0
          %2823 = vmatpush2.msra.mxu0 0.0
          %2824 = vmatprep.subr.mxu0 0.0
          %2825 = vmatpush2.msra.mxu0 0.0
          %2826 = vmatprep.subr.mxu0 0.0
          %2827 = vmatpush2.msra.mxu0 0.0
          %2828 = vmatprep.subr.mxu0 0.0
          %2829 = vmatpush2.msra.mxu0 0.0
          %2830 = vmatprep.subr.mxu0 0.0
          %2831 = vmatpush2.msra.mxu0 0.0
          %2832 = vmatprep.subr.mxu0 0.0
          %2833 = vmatpush2.msra.mxu0 0.0
          %2834 = vmatprep.subr.mxu0 0.0
          %2835 = vmatpush2.msra.mxu0 0.0
          %2836 = vmatprep.subr.mxu0 0.0
          %2837 = vmatpush2.msra.mxu0 0.0
          %2838 = vmatprep.subr.mxu0 0.0
          %2839 = vmatpush2.msra.mxu0 0.0
          %2840 = vmatprep.subr.mxu0 0.0
          %2841 = vmatpush2.msra.mxu0 0.0
          %2842 = vmatprep.subr.mxu0 0.0
          %2843 = vmatpush2.msra.mxu0 0.0
          %2844 = vmatprep.subr.mxu0 0.0
          %2845 = vmatpush2.msra.mxu0 0.0
          %2846 = vmatprep.subr.mxu0 0.0
          %2847 = vmatpush2.msra.mxu0 0.0
          %2848 = vmatprep.subr.mxu0 0.0
          %2849 = vmatpush2.msra.mxu0 0.0
          %2850 = vmatprep.subr.mxu0 0.0
          %2851 = vmatpush2.msra.mxu0 0.0
          %2852 = vmatprep.mubr.f32.mxu0 0.0
          %2853 = vmatmul.mubr.f32.gmra.mxu0 %v2786
          %v2854 = vpop.f32.mrf.mxu0
          %v2855 = vadd.f32 0.0, %v2854
          %v2856 = vpop.f32.mrf.mxu0
          %v2857 = vadd.f32 0.0, %v2856
          %2858 = vdwg.mxu0
          %v2859 = vadd.f32 %v2773, %v2855
          %v2860 = vadd.f32 %v2774, %v2857
          %s2861 = scalar_lea.vmem %s1, 240
          %v2862 = vld [vmem:[%s2861] sm:$0xff]
          %2863 = vrot.lane.b32.xlu0 %v288, 98
          %v2864 = vpop.permute.xlu0 %2863
          %2865 = vrot.lane.b32.xlu0 %v290, 98
          %v2866 = vpop.permute.xlu0 %2865
          %vm2867 = vcmask 801792
          %v2868 = vsel %vm2867, %v2864, %v2866
          %v2872 = vsel %vm304, %v2862, 0
          %2874 = vmatprep.subr.mxu0 0.0
          %2875 = vmatpush1.msra.mxu0 0.0
          %2876 = vmatprep.subr.mxu0 0.0
          %2877 = vmatpush1.msra.mxu0 0.0
          %2878 = vmatprep.subr.mxu0 0.0
          %2879 = vmatpush1.msra.mxu0 0.0
          %2880 = vmatprep.subr.mxu0 0.0
          %2881 = vmatpush1.msra.mxu0 0.0
          %2882 = vmatprep.subr.mxu0 0.0
          %2883 = vmatpush1.msra.mxu0 0.0
          %2884 = vmatprep.subr.mxu0 0.0
          %2885 = vmatpush1.msra.mxu0 0.0
          %2886 = vmatprep.subr.mxu0 0.0
          %2887 = vmatpush1.msra.mxu0 0.0
          %2888 = vmatprep.subr.mxu0 0.0
          %2889 = vmatpush1.msra.mxu0 0.0
          %2890 = vmatprep.subr.mxu0 0.0
          %2891 = vmatpush1.msra.mxu0 0.0
          %2892 = vmatprep.subr.mxu0 0.0
          %2893 = vmatpush1.msra.mxu0 0.0
          %2894 = vmatprep.subr.mxu0 0.0
          %2895 = vmatpush1.msra.mxu0 0.0
          %2896 = vmatprep.subr.mxu0 0.0
          %2897 = vmatpush1.msra.mxu0 0.0
          %2898 = vmatprep.subr.mxu0 0.0
          %2899 = vmatpush1.msra.mxu0 0.0
          %2900 = vmatprep.subr.mxu0 0.0
          %2901 = vmatpush1.msra.mxu0 0.0
          %2902 = vmatprep.subr.mxu0 0.0
          %2903 = vmatpush1.msra.mxu0 0.0
          %2904 = vmatprep.subr.mxu0 %v2866
          %2905 = vmatpush1.msra.mxu0 %v2868
          %2906 = vmatprep.subr.mxu0 0.0
          %2907 = vmatpush2.msra.mxu0 0.0
          %2908 = vmatprep.subr.mxu0 0.0
          %2909 = vmatpush2.msra.mxu0 0.0
          %2910 = vmatprep.subr.mxu0 0.0
          %2911 = vmatpush2.msra.mxu0 0.0
          %2912 = vmatprep.subr.mxu0 0.0
          %2913 = vmatpush2.msra.mxu0 0.0
          %2914 = vmatprep.subr.mxu0 0.0
          %2915 = vmatpush2.msra.mxu0 0.0
          %2916 = vmatprep.subr.mxu0 0.0
          %2917 = vmatpush2.msra.mxu0 0.0
          %2918 = vmatprep.subr.mxu0 0.0
          %2919 = vmatpush2.msra.mxu0 0.0
          %2920 = vmatprep.subr.mxu0 0.0
          %2921 = vmatpush2.msra.mxu0 0.0
          %2922 = vmatprep.subr.mxu0 0.0
          %2923 = vmatpush2.msra.mxu0 0.0
          %2924 = vmatprep.subr.mxu0 0.0
          %2925 = vmatpush2.msra.mxu0 0.0
          %2926 = vmatprep.subr.mxu0 0.0
          %2927 = vmatpush2.msra.mxu0 0.0
          %2928 = vmatprep.subr.mxu0 0.0
          %2929 = vmatpush2.msra.mxu0 0.0
          %2930 = vmatprep.subr.mxu0 0.0
          %2931 = vmatpush2.msra.mxu0 0.0
          %2932 = vmatprep.subr.mxu0 0.0
          %2933 = vmatpush2.msra.mxu0 0.0
          %2934 = vmatprep.subr.mxu0 0.0
          %2935 = vmatpush2.msra.mxu0 0.0
          %2936 = vmatprep.subr.mxu0 0.0
          %2937 = vmatpush2.msra.mxu0 0.0
          %2938 = vmatprep.mubr.f32.mxu0 0.0
          %2939 = vmatmul.mubr.f32.gmra.mxu0 %v2872
          %v2940 = vpop.f32.mrf.mxu0
          %v2941 = vadd.f32 0.0, %v2940
          %v2942 = vpop.f32.mrf.mxu0
          %v2943 = vadd.f32 0.0, %v2942
          %2944 = vdwg.mxu0
          %v2945 = vadd.f32 %v2859, %v2941
          %v2946 = vadd.f32 %v2860, %v2943
          %s2947 = scalar_lea.vmem %s1, 248
          %v2948 = vld [vmem:[%s2947] sm:$0xff]
          %2949 = vrot.lane.b32.xlu0 %v288, 97
          %v2950 = vpop.permute.xlu0 %2949
          %2951 = vrot.lane.b32.xlu0 %v290, 97
          %v2952 = vpop.permute.xlu0 %2951
          %vm2953 = vcmask 793600
          %v2954 = vsel %vm2953, %v2950, %v2952
          %v2958 = vsel %vm304, %v2948, 0
          %2960 = vmatprep.subr.mxu0 0.0
          %2961 = vmatpush1.msra.mxu0 0.0
          %2962 = vmatprep.subr.mxu0 0.0
          %2963 = vmatpush1.msra.mxu0 0.0
          %2964 = vmatprep.subr.mxu0 0.0
          %2965 = vmatpush1.msra.mxu0 0.0
          %2966 = vmatprep.subr.mxu0 0.0
          %2967 = vmatpush1.msra.mxu0 0.0
          %2968 = vmatprep.subr.mxu0 0.0
          %2969 = vmatpush1.msra.mxu0 0.0
          %2970 = vmatprep.subr.mxu0 0.0
          %2971 = vmatpush1.msra.mxu0 0.0
          %2972 = vmatprep.subr.mxu0 0.0
          %2973 = vmatpush1.msra.mxu0 0.0
          %2974 = vmatprep.subr.mxu0 0.0
          %2975 = vmatpush1.msra.mxu0 0.0
          %2976 = vmatprep.subr.mxu0 0.0
          %2977 = vmatpush1.msra.mxu0 0.0
          %2978 = vmatprep.subr.mxu0 0.0
          %2979 = vmatpush1.msra.mxu0 0.0
          %2980 = vmatprep.subr.mxu0 0.0
          %2981 = vmatpush1.msra.mxu0 0.0
          %2982 = vmatprep.subr.mxu0 0.0
          %2983 = vmatpush1.msra.mxu0 0.0
          %2984 = vmatprep.subr.mxu0 0.0
          %2985 = vmatpush1.msra.mxu0 0.0
          %2986 = vmatprep.subr.mxu0 0.0
          %2987 = vmatpush1.msra.mxu0 0.0
          %2988 = vmatprep.subr.mxu0 0.0
          %2989 = vmatpush1.msra.mxu0 0.0
          %2990 = vmatprep.subr.mxu0 %v2952
          %2991 = vmatpush1.msra.mxu0 %v2954
          %2992 = vmatprep.subr.mxu0 0.0
          %2993 = vmatpush2.msra.mxu0 0.0
          %2994 = vmatprep.subr.mxu0 0.0
          %2995 = vmatpush2.msra.mxu0 0.0
          %2996 = vmatprep.subr.mxu0 0.0
          %2997 = vmatpush2.msra.mxu0 0.0
          %2998 = vmatprep.subr.mxu0 0.0
          %2999 = vmatpush2.msra.mxu0 0.0
          %3000 = vmatprep.subr.mxu0 0.0
          %3001 = vmatpush2.msra.mxu0 0.0
          %3002 = vmatprep.subr.mxu0 0.0
          %3003 = vmatpush2.msra.mxu0 0.0
          %3004 = vmatprep.subr.mxu0 0.0
          %3005 = vmatpush2.msra.mxu0 0.0
          %3006 = vmatprep.subr.mxu0 0.0
          %3007 = vmatpush2.msra.mxu0 0.0
          %3008 = vmatprep.subr.mxu0 0.0
          %3009 = vmatpush2.msra.mxu0 0.0
          %3010 = vmatprep.subr.mxu0 0.0
          %3011 = vmatpush2.msra.mxu0 0.0
          %3012 = vmatprep.subr.mxu0 0.0
          %3013 = vmatpush2.msra.mxu0 0.0
          %3014 = vmatprep.subr.mxu0 0.0
          %3015 = vmatpush2.msra.mxu0 0.0
          %3016 = vmatprep.subr.mxu0 0.0
          %3017 = vmatpush2.msra.mxu0 0.0
          %3018 = vmatprep.subr.mxu0 0.0
          %3019 = vmatpush2.msra.mxu0 0.0
          %3020 = vmatprep.subr.mxu0 0.0
          %3021 = vmatpush2.msra.mxu0 0.0
          %3022 = vmatprep.subr.mxu0 0.0
          %3023 = vmatpush2.msra.mxu0 0.0
          %3024 = vmatprep.mubr.f32.mxu0 0.0
          %3025 = vmatmul.mubr.f32.gmra.mxu0 %v2958
          %v3026 = vpop.f32.mrf.mxu0
          %v3027 = vadd.f32 0.0, %v3026
          %v3028 = vpop.f32.mrf.mxu0
          %v3029 = vadd.f32 0.0, %v3028
          %3030 = vdwg.mxu0
          %v3031 = vadd.f32 %v2945, %v3027
          %v3032 = vadd.f32 %v2946, %v3029
          %s3033 = scalar_lea.vmem %s1, 256
          %v3034 = vld [vmem:[%s3033] sm:$0xff]
          %3035 = vrot.lane.b32.xlu0 %v288, 96
          %v3036 = vpop.permute.xlu0 %3035
          %3037 = vrot.lane.b32.xlu0 %v290, 96
          %v3038 = vpop.permute.xlu0 %3037
          %vm3039 = vcmask 785408
          %v3040 = vsel %vm3039, %v3036, %v3038
          %v3044 = vsel %vm304, %v3034, 0
          %3046 = vmatprep.subr.mxu0 0.0
          %3047 = vmatpush1.msra.mxu0 0.0
          %3048 = vmatprep.subr.mxu0 0.0
          %3049 = vmatpush1.msra.mxu0 0.0
          %3050 = vmatprep.subr.mxu0 0.0
          %3051 = vmatpush1.msra.mxu0 0.0
          %3052 = vmatprep.subr.mxu0 0.0
          %3053 = vmatpush1.msra.mxu0 0.0
          %3054 = vmatprep.subr.mxu0 0.0
          %3055 = vmatpush1.msra.mxu0 0.0
          %3056 = vmatprep.subr.mxu0 0.0
          %3057 = vmatpush1.msra.mxu0 0.0
          %3058 = vmatprep.subr.mxu0 0.0
          %3059 = vmatpush1.msra.mxu0 0.0
          %3060 = vmatprep.subr.mxu0 0.0
          %3061 = vmatpush1.msra.mxu0 0.0
          %3062 = vmatprep.subr.mxu0 0.0
          %3063 = vmatpush1.msra.mxu0 0.0
          %3064 = vmatprep.subr.mxu0 0.0
          %3065 = vmatpush1.msra.mxu0 0.0
          %3066 = vmatprep.subr.mxu0 0.0
          %3067 = vmatpush1.msra.mxu0 0.0
          %3068 = vmatprep.subr.mxu0 0.0
          %3069 = vmatpush1.msra.mxu0 0.0
          %3070 = vmatprep.subr.mxu0 0.0
          %3071 = vmatpush1.msra.mxu0 0.0
          %3072 = vmatprep.subr.mxu0 0.0
          %3073 = vmatpush1.msra.mxu0 0.0
          %3074 = vmatprep.subr.mxu0 0.0
          %3075 = vmatpush1.msra.mxu0 0.0
          %3076 = vmatprep.subr.mxu0 %v3038
          %3077 = vmatpush1.msra.mxu0 %v3040
          %3078 = vmatprep.subr.mxu0 0.0
          %3079 = vmatpush2.msra.mxu0 0.0
          %3080 = vmatprep.subr.mxu0 0.0
          %3081 = vmatpush2.msra.mxu0 0.0
          %3082 = vmatprep.subr.mxu0 0.0
          %3083 = vmatpush2.msra.mxu0 0.0
          %3084 = vmatprep.subr.mxu0 0.0
          %3085 = vmatpush2.msra.mxu0 0.0
          %3086 = vmatprep.subr.mxu0 0.0
          %3087 = vmatpush2.msra.mxu0 0.0
          %3088 = vmatprep.subr.mxu0 0.0
          %3089 = vmatpush2.msra.mxu0 0.0
          %3090 = vmatprep.subr.mxu0 0.0
          %3091 = vmatpush2.msra.mxu0 0.0
          %3092 = vmatprep.subr.mxu0 0.0
          %3093 = vmatpush2.msra.mxu0 0.0
          %3094 = vmatprep.subr.mxu0 0.0
          %3095 = vmatpush2.msra.mxu0 0.0
          %3096 = vmatprep.subr.mxu0 0.0
          %3097 = vmatpush2.msra.mxu0 0.0
          %3098 = vmatprep.subr.mxu0 0.0
          %3099 = vmatpush2.msra.mxu0 0.0
          %3100 = vmatprep.subr.mxu0 0.0
          %3101 = vmatpush2.msra.mxu0 0.0
          %3102 = vmatprep.subr.mxu0 0.0
          %3103 = vmatpush2.msra.mxu0 0.0
          %3104 = vmatprep.subr.mxu0 0.0
          %3105 = vmatpush2.msra.mxu0 0.0
          %3106 = vmatprep.subr.mxu0 0.0
          %3107 = vmatpush2.msra.mxu0 0.0
          %3108 = vmatprep.subr.mxu0 0.0
          %3109 = vmatpush2.msra.mxu0 0.0
          %3110 = vmatprep.mubr.f32.mxu0 0.0
          %3111 = vmatmul.mubr.f32.gmra.mxu0 %v3044
          %v3112 = vpop.f32.mrf.mxu0
          %v3113 = vadd.f32 0.0, %v3112
          %v3114 = vpop.f32.mrf.mxu0
          %v3115 = vadd.f32 0.0, %v3114
          %3116 = vdwg.mxu0
          %v3117 = vadd.f32 %v3031, %v3113
          %v3118 = vadd.f32 %v3032, %v3115
          %3120 = vset.pattern.permute.xlu0 0
          %3121 = vperm.xlu0 %3120, %v258
          %v3122 = vpop.permute.xlu0 %3121
          %v3124 = vadd.f32 %v3117, %v3122
          %v3125 = vadd.f32 %v3118, %v3122
          %v3126 = vmax.f32 %v3124, 0.0
          %v3127 = vmax.f32 %v3125, 0.0
          %v3128 = vsel %vm262, 1, 0
          %v3129 = vsel %vm263, 1, 0
          %vm3130 = vcmp.eq.s32.totalorder %v3128, 1
          %vm3131 = vcmp.eq.s32.totalorder %v3129, 1
          %v3132 = vsel %vm3130, %v3126, 0.0
          %v3133 = vsel %vm3131, %v3127, 0.0
          %3136 = vrot.lane.b32.xlu0 %v3132, 1
          %v3137 = vpop.permute.xlu0 %3136
          %3138 = vrot.lane.b32.xlu0 %v3133, 1
          %v3139 = vpop.permute.xlu0 %3138
          %v3140 = vsel %vm284, %v3137, %v3139
          %v3142 = vsel %vm284, 0.0, %v3137
          %v3143 = vld [vmem:[%s2] sm:$0xff]
          %s3144 = scalar_lea.vmem %s2, 8
          %v3145 = vld [vmem:[%s3144] sm:$0xff]
          %3147 = vrot.lane.b32.xlu0 %v3142, 127
          %v3148 = vpop.permute.xlu0 %3147
          %3149 = vrot.lane.b32.xlu0 %v3140, 127
          %v3150 = vpop.permute.xlu0 %3149
          %v3151 = vsel %vm300, %v3148, %v3150
          %v3154 = vsel %vm304, %v3145, 0
          %3156 = vmatprep.subr.mxu0 0.0
          %3157 = vmatpush1.msra.mxu0 0.0
          %3158 = vmatprep.subr.mxu0 0.0
          %3159 = vmatpush1.msra.mxu0 0.0
          %3160 = vmatprep.subr.mxu0 0.0
          %3161 = vmatpush1.msra.mxu0 0.0
          %3162 = vmatprep.subr.mxu0 0.0
          %3163 = vmatpush1.msra.mxu0 0.0
          %3164 = vmatprep.subr.mxu0 0.0
          %3165 = vmatpush1.msra.mxu0 0.0
          %3166 = vmatprep.subr.mxu0 0.0
          %3167 = vmatpush1.msra.mxu0 0.0
          %3168 = vmatprep.subr.mxu0 0.0
          %3169 = vmatpush1.msra.mxu0 0.0
          %3170 = vmatprep.subr.mxu0 0.0
          %3171 = vmatpush1.msra.mxu0 0.0
          %3172 = vmatprep.subr.mxu0 0.0
          %3173 = vmatpush1.msra.mxu0 0.0
          %3174 = vmatprep.subr.mxu0 0.0
          %3175 = vmatpush1.msra.mxu0 0.0
          %3176 = vmatprep.subr.mxu0 0.0
          %3177 = vmatpush1.msra.mxu0 0.0
          %3178 = vmatprep.subr.mxu0 0.0
          %3179 = vmatpush1.msra.mxu0 0.0
          %3180 = vmatprep.subr.mxu0 0.0
          %3181 = vmatpush1.msra.mxu0 0.0
          %3182 = vmatprep.subr.mxu0 0.0
          %3183 = vmatpush1.msra.mxu0 0.0
          %3184 = vmatprep.subr.mxu0 0.0
          %3185 = vmatpush1.msra.mxu0 0.0
          %3186 = vmatprep.subr.mxu0 0.0
          %3187 = vmatpush1.msra.mxu0 %v3151
          %3188 = vmatprep.subr.mxu0 0.0
          %3189 = vmatpush2.msra.mxu0 0.0
          %3190 = vmatprep.subr.mxu0 0.0
          %3191 = vmatpush2.msra.mxu0 0.0
          %3192 = vmatprep.subr.mxu0 0.0
          %3193 = vmatpush2.msra.mxu0 0.0
          %3194 = vmatprep.subr.mxu0 0.0
          %3195 = vmatpush2.msra.mxu0 0.0
          %3196 = vmatprep.subr.mxu0 0.0
          %3197 = vmatpush2.msra.mxu0 0.0
          %3198 = vmatprep.subr.mxu0 0.0
          %3199 = vmatpush2.msra.mxu0 0.0
          %3200 = vmatprep.subr.mxu0 0.0
          %3201 = vmatpush2.msra.mxu0 0.0
          %3202 = vmatprep.subr.mxu0 0.0
          %3203 = vmatpush2.msra.mxu0 0.0
          %3204 = vmatprep.subr.mxu0 0.0
          %3205 = vmatpush2.msra.mxu0 0.0
          %3206 = vmatprep.subr.mxu0 0.0
          %3207 = vmatpush2.msra.mxu0 0.0
          %3208 = vmatprep.subr.mxu0 0.0
          %3209 = vmatpush2.msra.mxu0 0.0
          %3210 = vmatprep.subr.mxu0 0.0
          %3211 = vmatpush2.msra.mxu0 0.0
          %3212 = vmatprep.subr.mxu0 0.0
          %3213 = vmatpush2.msra.mxu0 0.0
          %3214 = vmatprep.subr.mxu0 0.0
          %3215 = vmatpush2.msra.mxu0 0.0
          %3216 = vmatprep.subr.mxu0 0.0
          %3217 = vmatpush2.msra.mxu0 0.0
          %3218 = vmatprep.subr.mxu0 0.0
          %3219 = vmatpush2.msra.mxu0 0.0
          %3220 = vmatprep.mubr.f32.mxu0 0.0
          %3221 = vmatmul.mubr.f32.gmra.mxu0 %v3154
          %v3222 = vpop.f32.mrf.mxu0
          %v3223 = vadd.f32 0.0, %v3222
          %v3224 = vpop.f32.mrf.mxu0
          %3225 = vdwg.mxu0
          %v3227 = vsel %vm304, %v3143, 0
          %3229 = vmatprep.subr.mxu0 0.0
          %3230 = vmatpush1.msra.mxu0 0.0
          %3231 = vmatprep.subr.mxu0 0.0
          %3232 = vmatpush1.msra.mxu0 0.0
          %3233 = vmatprep.subr.mxu0 0.0
          %3234 = vmatpush1.msra.mxu0 0.0
          %3235 = vmatprep.subr.mxu0 0.0
          %3236 = vmatpush1.msra.mxu0 0.0
          %3237 = vmatprep.subr.mxu0 0.0
          %3238 = vmatpush1.msra.mxu0 0.0
          %3239 = vmatprep.subr.mxu0 0.0
          %3240 = vmatpush1.msra.mxu0 0.0
          %3241 = vmatprep.subr.mxu0 0.0
          %3242 = vmatpush1.msra.mxu0 0.0
          %3243 = vmatprep.subr.mxu0 0.0
          %3244 = vmatpush1.msra.mxu0 0.0
          %3245 = vmatprep.subr.mxu0 0.0
          %3246 = vmatpush1.msra.mxu0 0.0
          %3247 = vmatprep.subr.mxu0 0.0
          %3248 = vmatpush1.msra.mxu0 0.0
          %3249 = vmatprep.subr.mxu0 0.0
          %3250 = vmatpush1.msra.mxu0 0.0
          %3251 = vmatprep.subr.mxu0 0.0
          %3252 = vmatpush1.msra.mxu0 0.0
          %3253 = vmatprep.subr.mxu0 0.0
          %3254 = vmatpush1.msra.mxu0 0.0
          %3255 = vmatprep.subr.mxu0 0.0
          %3256 = vmatpush1.msra.mxu0 0.0
          %3257 = vmatprep.subr.mxu0 0.0
          %3258 = vmatpush1.msra.mxu0 0.0
          %3259 = vmatprep.subr.mxu0 0.0
          %3260 = vmatpush1.msra.mxu0 %v3142
          %3261 = vmatprep.subr.mxu0 0.0
          %3262 = vmatpush2.msra.mxu0 0.0
          %3263 = vmatprep.subr.mxu0 0.0
          %3264 = vmatpush2.msra.mxu0 0.0
          %3265 = vmatprep.subr.mxu0 0.0
          %3266 = vmatpush2.msra.mxu0 0.0
          %3267 = vmatprep.subr.mxu0 0.0
          %3268 = vmatpush2.msra.mxu0 0.0
          %3269 = vmatprep.subr.mxu0 0.0
          %3270 = vmatpush2.msra.mxu0 0.0
          %3271 = vmatprep.subr.mxu0 0.0
          %3272 = vmatpush2.msra.mxu0 0.0
          %3273 = vmatprep.subr.mxu0 0.0
          %3274 = vmatpush2.msra.mxu0 0.0
          %3275 = vmatprep.subr.mxu0 0.0
          %3276 = vmatpush2.msra.mxu0 0.0
          %3277 = vmatprep.subr.mxu0 0.0
          %3278 = vmatpush2.msra.mxu0 0.0
          %3279 = vmatprep.subr.mxu0 0.0
          %3280 = vmatpush2.msra.mxu0 0.0
          %3281 = vmatprep.subr.mxu0 0.0
          %3282 = vmatpush2.msra.mxu0 0.0
          %3283 = vmatprep.subr.mxu0 0.0
          %3284 = vmatpush2.msra.mxu0 0.0
          %3285 = vmatprep.subr.mxu0 0.0
          %3286 = vmatpush2.msra.mxu0 0.0
          %3287 = vmatprep.subr.mxu0 0.0
          %3288 = vmatpush2.msra.mxu0 0.0
          %3289 = vmatprep.subr.mxu0 0.0
          %3290 = vmatpush2.msra.mxu0 0.0
          %3291 = vmatprep.subr.mxu0 0.0
          %3292 = vmatpush2.msra.mxu0 0.0
          %3293 = vmatprep.mubr.f32.mxu0 0.0
          %3294 = vmatmul.mubr.f32.gmra.mxu0 %v3227
          %v3295 = vpop.f32.mrf.mxu0
          %v3296 = vadd.f32 %v3223, %v3295
          %v3297 = vpop.f32.mrf.mxu0
          %3298 = vdwg.mxu0
          %s3299 = scalar_lea.vmem %s2, 16
          %v3300 = vld [vmem:[%s3299] sm:$0xff]
          %3301 = vrot.lane.b32.xlu0 %v3142, 126
          %v3302 = vpop.permute.xlu0 %3301
          %3303 = vrot.lane.b32.xlu0 %v3140, 126
          %v3304 = vpop.permute.xlu0 %3303
          %v3305 = vsel %vm459, %v3302, %v3304
          %v3308 = vsel %vm304, %v3300, 0
          %3310 = vmatprep.subr.mxu0 0.0
          %3311 = vmatpush1.msra.mxu0 0.0
          %3312 = vmatprep.subr.mxu0 0.0
          %3313 = vmatpush1.msra.mxu0 0.0
          %3314 = vmatprep.subr.mxu0 0.0
          %3315 = vmatpush1.msra.mxu0 0.0
          %3316 = vmatprep.subr.mxu0 0.0
          %3317 = vmatpush1.msra.mxu0 0.0
          %3318 = vmatprep.subr.mxu0 0.0
          %3319 = vmatpush1.msra.mxu0 0.0
          %3320 = vmatprep.subr.mxu0 0.0
          %3321 = vmatpush1.msra.mxu0 0.0
          %3322 = vmatprep.subr.mxu0 0.0
          %3323 = vmatpush1.msra.mxu0 0.0
          %3324 = vmatprep.subr.mxu0 0.0
          %3325 = vmatpush1.msra.mxu0 0.0
          %3326 = vmatprep.subr.mxu0 0.0
          %3327 = vmatpush1.msra.mxu0 0.0
          %3328 = vmatprep.subr.mxu0 0.0
          %3329 = vmatpush1.msra.mxu0 0.0
          %3330 = vmatprep.subr.mxu0 0.0
          %3331 = vmatpush1.msra.mxu0 0.0
          %3332 = vmatprep.subr.mxu0 0.0
          %3333 = vmatpush1.msra.mxu0 0.0
          %3334 = vmatprep.subr.mxu0 0.0
          %3335 = vmatpush1.msra.mxu0 0.0
          %3336 = vmatprep.subr.mxu0 0.0
          %3337 = vmatpush1.msra.mxu0 0.0
          %3338 = vmatprep.subr.mxu0 0.0
          %3339 = vmatpush1.msra.mxu0 0.0
          %3340 = vmatprep.subr.mxu0 0.0
          %3341 = vmatpush1.msra.mxu0 %v3305
          %3342 = vmatprep.subr.mxu0 0.0
          %3343 = vmatpush2.msra.mxu0 0.0
          %3344 = vmatprep.subr.mxu0 0.0
          %3345 = vmatpush2.msra.mxu0 0.0
          %3346 = vmatprep.subr.mxu0 0.0
          %3347 = vmatpush2.msra.mxu0 0.0
          %3348 = vmatprep.subr.mxu0 0.0
          %3349 = vmatpush2.msra.mxu0 0.0
          %3350 = vmatprep.subr.mxu0 0.0
          %3351 = vmatpush2.msra.mxu0 0.0
          %3352 = vmatprep.subr.mxu0 0.0
          %3353 = vmatpush2.msra.mxu0 0.0
          %3354 = vmatprep.subr.mxu0 0.0
          %3355 = vmatpush2.msra.mxu0 0.0
          %3356 = vmatprep.subr.mxu0 0.0
          %3357 = vmatpush2.msra.mxu0 0.0
          %3358 = vmatprep.subr.mxu0 0.0
          %3359 = vmatpush2.msra.mxu0 0.0
          %3360 = vmatprep.subr.mxu0 0.0
          %3361 = vmatpush2.msra.mxu0 0.0
          %3362 = vmatprep.subr.mxu0 0.0
          %3363 = vmatpush2.msra.mxu0 0.0
          %3364 = vmatprep.subr.mxu0 0.0
          %3365 = vmatpush2.msra.mxu0 0.0
          %3366 = vmatprep.subr.mxu0 0.0
          %3367 = vmatpush2.msra.mxu0 0.0
          %3368 = vmatprep.subr.mxu0 0.0
          %3369 = vmatpush2.msra.mxu0 0.0
          %3370 = vmatprep.subr.mxu0 0.0
          %3371 = vmatpush2.msra.mxu0 0.0
          %3372 = vmatprep.subr.mxu0 0.0
          %3373 = vmatpush2.msra.mxu0 0.0
          %3374 = vmatprep.mubr.f32.mxu0 0.0
          %3375 = vmatmul.mubr.f32.gmra.mxu0 %v3308
          %v3376 = vpop.f32.mrf.mxu0
          %v3377 = vadd.f32 0.0, %v3376
          %v3378 = vpop.f32.mrf.mxu0
          %3379 = vdwg.mxu0
          %v3380 = vadd.f32 %v3296, %v3377
          %s3381 = scalar_lea.vmem %s2, 24
          %v3382 = vld [vmem:[%s3381] sm:$0xff]
          %3383 = vrot.lane.b32.xlu0 %v3142, 125
          %v3384 = vpop.permute.xlu0 %3383
          %3385 = vrot.lane.b32.xlu0 %v3140, 125
          %v3386 = vpop.permute.xlu0 %3385
          %v3387 = vsel %vm545, %v3384, %v3386
          %v3390 = vsel %vm304, %v3382, 0
          %3392 = vmatprep.subr.mxu0 0.0
          %3393 = vmatpush1.msra.mxu0 0.0
          %3394 = vmatprep.subr.mxu0 0.0
          %3395 = vmatpush1.msra.mxu0 0.0
          %3396 = vmatprep.subr.mxu0 0.0
          %3397 = vmatpush1.msra.mxu0 0.0
          %3398 = vmatprep.subr.mxu0 0.0
          %3399 = vmatpush1.msra.mxu0 0.0
          %3400 = vmatprep.subr.mxu0 0.0
          %3401 = vmatpush1.msra.mxu0 0.0
          %3402 = vmatprep.subr.mxu0 0.0
          %3403 = vmatpush1.msra.mxu0 0.0
          %3404 = vmatprep.subr.mxu0 0.0
          %3405 = vmatpush1.msra.mxu0 0.0
          %3406 = vmatprep.subr.mxu0 0.0
          %3407 = vmatpush1.msra.mxu0 0.0
          %3408 = vmatprep.subr.mxu0 0.0
          %3409 = vmatpush1.msra.mxu0 0.0
          %3410 = vmatprep.subr.mxu0 0.0
          %3411 = vmatpush1.msra.mxu0 0.0
          %3412 = vmatprep.subr.mxu0 0.0
          %3413 = vmatpush1.msra.mxu0 0.0
          %3414 = vmatprep.subr.mxu0 0.0
          %3415 = vmatpush1.msra.mxu0 0.0
          %3416 = vmatprep.subr.mxu0 0.0
          %3417 = vmatpush1.msra.mxu0 0.0
          %3418 = vmatprep.subr.mxu0 0.0
          %3419 = vmatpush1.msra.mxu0 0.0
          %3420 = vmatprep.subr.mxu0 0.0
          %3421 = vmatpush1.msra.mxu0 0.0
          %3422 = vmatprep.subr.mxu0 0.0
          %3423 = vmatpush1.msra.mxu0 %v3387
          %3424 = vmatprep.subr.mxu0 0.0
          %3425 = vmatpush2.msra.mxu0 0.0
          %3426 = vmatprep.subr.mxu0 0.0
          %3427 = vmatpush2.msra.mxu0 0.0
          %3428 = vmatprep.subr.mxu0 0.0
          %3429 = vmatpush2.msra.mxu0 0.0
          %3430 = vmatprep.subr.mxu0 0.0
          %3431 = vmatpush2.msra.mxu0 0.0
          %3432 = vmatprep.subr.mxu0 0.0
          %3433 = vmatpush2.msra.mxu0 0.0
          %3434 = vmatprep.subr.mxu0 0.0
          %3435 = vmatpush2.msra.mxu0 0.0
          %3436 = vmatprep.subr.mxu0 0.0
          %3437 = vmatpush2.msra.mxu0 0.0
          %3438 = vmatprep.subr.mxu0 0.0
          %3439 = vmatpush2.msra.mxu0 0.0
          %3440 = vmatprep.subr.mxu0 0.0
          %3441 = vmatpush2.msra.mxu0 0.0
          %3442 = vmatprep.subr.mxu0 0.0
          %3443 = vmatpush2.msra.mxu0 0.0
          %3444 = vmatprep.subr.mxu0 0.0
          %3445 = vmatpush2.msra.mxu0 0.0
          %3446 = vmatprep.subr.mxu0 0.0
          %3447 = vmatpush2.msra.mxu0 0.0
          %3448 = vmatprep.subr.mxu0 0.0
          %3449 = vmatpush2.msra.mxu0 0.0
          %3450 = vmatprep.subr.mxu0 0.0
          %3451 = vmatpush2.msra.mxu0 0.0
          %3452 = vmatprep.subr.mxu0 0.0
          %3453 = vmatpush2.msra.mxu0 0.0
          %3454 = vmatprep.subr.mxu0 0.0
          %3455 = vmatpush2.msra.mxu0 0.0
          %3456 = vmatprep.mubr.f32.mxu0 0.0
          %3457 = vmatmul.mubr.f32.gmra.mxu0 %v3390
          %v3458 = vpop.f32.mrf.mxu0
          %v3459 = vadd.f32 0.0, %v3458
          %v3460 = vpop.f32.mrf.mxu0
          %3461 = vdwg.mxu0
          %v3462 = vadd.f32 %v3380, %v3459
          %s3463 = scalar_lea.vmem %s2, 32
          %v3464 = vld [vmem:[%s3463] sm:$0xff]
          %3465 = vrot.lane.b32.xlu0 %v3142, 124
          %v3466 = vpop.permute.xlu0 %3465
          %3467 = vrot.lane.b32.xlu0 %v3140, 124
          %v3468 = vpop.permute.xlu0 %3467
          %v3469 = vsel %vm631, %v3466, %v3468
          %v3472 = vsel %vm304, %v3464, 0
          %3474 = vmatprep.subr.mxu0 0.0
          %3475 = vmatpush1.msra.mxu0 0.0
          %3476 = vmatprep.subr.mxu0 0.0
          %3477 = vmatpush1.msra.mxu0 0.0
          %3478 = vmatprep.subr.mxu0 0.0
          %3479 = vmatpush1.msra.mxu0 0.0
          %3480 = vmatprep.subr.mxu0 0.0
          %3481 = vmatpush1.msra.mxu0 0.0
          %3482 = vmatprep.subr.mxu0 0.0
          %3483 = vmatpush1.msra.mxu0 0.0
          %3484 = vmatprep.subr.mxu0 0.0
          %3485 = vmatpush1.msra.mxu0 0.0
          %3486 = vmatprep.subr.mxu0 0.0
          %3487 = vmatpush1.msra.mxu0 0.0
          %3488 = vmatprep.subr.mxu0 0.0
          %3489 = vmatpush1.msra.mxu0 0.0
          %3490 = vmatprep.subr.mxu0 0.0
          %3491 = vmatpush1.msra.mxu0 0.0
          %3492 = vmatprep.subr.mxu0 0.0
          %3493 = vmatpush1.msra.mxu0 0.0
          %3494 = vmatprep.subr.mxu0 0.0
          %3495 = vmatpush1.msra.mxu0 0.0
          %3496 = vmatprep.subr.mxu0 0.0
          %3497 = vmatpush1.msra.mxu0 0.0
          %3498 = vmatprep.subr.mxu0 0.0
          %3499 = vmatpush1.msra.mxu0 0.0
          %3500 = vmatprep.subr.mxu0 0.0
          %3501 = vmatpush1.msra.mxu0 0.0
          %3502 = vmatprep.subr.mxu0 0.0
          %3503 = vmatpush1.msra.mxu0 0.0
          %3504 = vmatprep.subr.mxu0 0.0
          %3505 = vmatpush1.msra.mxu0 %v3469
          %3506 = vmatprep.subr.mxu0 0.0
          %3507 = vmatpush2.msra.mxu0 0.0
          %3508 = vmatprep.subr.mxu0 0.0
          %3509 = vmatpush2.msra.mxu0 0.0
          %3510 = vmatprep.subr.mxu0 0.0
          %3511 = vmatpush2.msra.mxu0 0.0
          %3512 = vmatprep.subr.mxu0 0.0
          %3513 = vmatpush2.msra.mxu0 0.0
          %3514 = vmatprep.subr.mxu0 0.0
          %3515 = vmatpush2.msra.mxu0 0.0
          %3516 = vmatprep.subr.mxu0 0.0
          %3517 = vmatpush2.msra.mxu0 0.0
          %3518 = vmatprep.subr.mxu0 0.0
          %3519 = vmatpush2.msra.mxu0 0.0
          %3520 = vmatprep.subr.mxu0 0.0
          %3521 = vmatpush2.msra.mxu0 0.0
          %3522 = vmatprep.subr.mxu0 0.0
          %3523 = vmatpush2.msra.mxu0 0.0
          %3524 = vmatprep.subr.mxu0 0.0
          %3525 = vmatpush2.msra.mxu0 0.0
          %3526 = vmatprep.subr.mxu0 0.0
          %3527 = vmatpush2.msra.mxu0 0.0
          %3528 = vmatprep.subr.mxu0 0.0
          %3529 = vmatpush2.msra.mxu0 0.0
          %3530 = vmatprep.subr.mxu0 0.0
          %3531 = vmatpush2.msra.mxu0 0.0
          %3532 = vmatprep.subr.mxu0 0.0
          %3533 = vmatpush2.msra.mxu0 0.0
          %3534 = vmatprep.subr.mxu0 0.0
          %3535 = vmatpush2.msra.mxu0 0.0
          %3536 = vmatprep.subr.mxu0 0.0
          %3537 = vmatpush2.msra.mxu0 0.0
          %3538 = vmatprep.mubr.f32.mxu0 0.0
          %3539 = vmatmul.mubr.f32.gmra.mxu0 %v3472
          %v3540 = vpop.f32.mrf.mxu0
          %v3541 = vadd.f32 0.0, %v3540
          %v3542 = vpop.f32.mrf.mxu0
          %3543 = vdwg.mxu0
          %v3544 = vadd.f32 %v3462, %v3541
          %s3545 = scalar_lea.vmem %s2, 40
          %v3546 = vld [vmem:[%s3545] sm:$0xff]
          %3547 = vrot.lane.b32.xlu0 %v3142, 123
          %v3548 = vpop.permute.xlu0 %3547
          %3549 = vrot.lane.b32.xlu0 %v3140, 123
          %v3550 = vpop.permute.xlu0 %3549
          %v3551 = vsel %vm717, %v3548, %v3550
          %v3554 = vsel %vm304, %v3546, 0
          %3556 = vmatprep.subr.mxu0 0.0
          %3557 = vmatpush1.msra.mxu0 0.0
          %3558 = vmatprep.subr.mxu0 0.0
          %3559 = vmatpush1.msra.mxu0 0.0
          %3560 = vmatprep.subr.mxu0 0.0
          %3561 = vmatpush1.msra.mxu0 0.0
          %3562 = vmatprep.subr.mxu0 0.0
          %3563 = vmatpush1.msra.mxu0 0.0
          %3564 = vmatprep.subr.mxu0 0.0
          %3565 = vmatpush1.msra.mxu0 0.0
          %3566 = vmatprep.subr.mxu0 0.0
          %3567 = vmatpush1.msra.mxu0 0.0
          %3568 = vmatprep.subr.mxu0 0.0
          %3569 = vmatpush1.msra.mxu0 0.0
          %3570 = vmatprep.subr.mxu0 0.0
          %3571 = vmatpush1.msra.mxu0 0.0
          %3572 = vmatprep.subr.mxu0 0.0
          %3573 = vmatpush1.msra.mxu0 0.0
          %3574 = vmatprep.subr.mxu0 0.0
          %3575 = vmatpush1.msra.mxu0 0.0
          %3576 = vmatprep.subr.mxu0 0.0
          %3577 = vmatpush1.msra.mxu0 0.0
          %3578 = vmatprep.subr.mxu0 0.0
          %3579 = vmatpush1.msra.mxu0 0.0
          %3580 = vmatprep.subr.mxu0 0.0
          %3581 = vmatpush1.msra.mxu0 0.0
          %3582 = vmatprep.subr.mxu0 0.0
          %3583 = vmatpush1.msra.mxu0 0.0
          %3584 = vmatprep.subr.mxu0 0.0
          %3585 = vmatpush1.msra.mxu0 0.0
          %3586 = vmatprep.subr.mxu0 0.0
          %3587 = vmatpush1.msra.mxu0 %v3551
          %3588 = vmatprep.subr.mxu0 0.0
          %3589 = vmatpush2.msra.mxu0 0.0
          %3590 = vmatprep.subr.mxu0 0.0
          %3591 = vmatpush2.msra.mxu0 0.0
          %3592 = vmatprep.subr.mxu0 0.0
          %3593 = vmatpush2.msra.mxu0 0.0
          %3594 = vmatprep.subr.mxu0 0.0
          %3595 = vmatpush2.msra.mxu0 0.0
          %3596 = vmatprep.subr.mxu0 0.0
          %3597 = vmatpush2.msra.mxu0 0.0
          %3598 = vmatprep.subr.mxu0 0.0
          %3599 = vmatpush2.msra.mxu0 0.0
          %3600 = vmatprep.subr.mxu0 0.0
          %3601 = vmatpush2.msra.mxu0 0.0
          %3602 = vmatprep.subr.mxu0 0.0
          %3603 = vmatpush2.msra.mxu0 0.0
          %3604 = vmatprep.subr.mxu0 0.0
          %3605 = vmatpush2.msra.mxu0 0.0
          %3606 = vmatprep.subr.mxu0 0.0
          %3607 = vmatpush2.msra.mxu0 0.0
          %3608 = vmatprep.subr.mxu0 0.0
          %3609 = vmatpush2.msra.mxu0 0.0
          %3610 = vmatprep.subr.mxu0 0.0
          %3611 = vmatpush2.msra.mxu0 0.0
          %3612 = vmatprep.subr.mxu0 0.0
          %3613 = vmatpush2.msra.mxu0 0.0
          %3614 = vmatprep.subr.mxu0 0.0
          %3615 = vmatpush2.msra.mxu0 0.0
          %3616 = vmatprep.subr.mxu0 0.0
          %3617 = vmatpush2.msra.mxu0 0.0
          %3618 = vmatprep.subr.mxu0 0.0
          %3619 = vmatpush2.msra.mxu0 0.0
          %3620 = vmatprep.mubr.f32.mxu0 0.0
          %3621 = vmatmul.mubr.f32.gmra.mxu0 %v3554
          %v3622 = vpop.f32.mrf.mxu0
          %v3623 = vadd.f32 0.0, %v3622
          %v3624 = vpop.f32.mrf.mxu0
          %3625 = vdwg.mxu0
          %v3626 = vadd.f32 %v3544, %v3623
          %s3627 = scalar_lea.vmem %s2, 48
          %v3628 = vld [vmem:[%s3627] sm:$0xff]
          %3629 = vrot.lane.b32.xlu0 %v3142, 122
          %v3630 = vpop.permute.xlu0 %3629
          %3631 = vrot.lane.b32.xlu0 %v3140, 122
          %v3632 = vpop.permute.xlu0 %3631
          %v3633 = vsel %vm803, %v3630, %v3632
          %v3636 = vsel %vm304, %v3628, 0
          %3638 = vmatprep.subr.mxu0 0.0
          %3639 = vmatpush1.msra.mxu0 0.0
          %3640 = vmatprep.subr.mxu0 0.0
          %3641 = vmatpush1.msra.mxu0 0.0
          %3642 = vmatprep.subr.mxu0 0.0
          %3643 = vmatpush1.msra.mxu0 0.0
          %3644 = vmatprep.subr.mxu0 0.0
          %3645 = vmatpush1.msra.mxu0 0.0
          %3646 = vmatprep.subr.mxu0 0.0
          %3647 = vmatpush1.msra.mxu0 0.0
          %3648 = vmatprep.subr.mxu0 0.0
          %3649 = vmatpush1.msra.mxu0 0.0
          %3650 = vmatprep.subr.mxu0 0.0
          %3651 = vmatpush1.msra.mxu0 0.0
          %3652 = vmatprep.subr.mxu0 0.0
          %3653 = vmatpush1.msra.mxu0 0.0
          %3654 = vmatprep.subr.mxu0 0.0
          %3655 = vmatpush1.msra.mxu0 0.0
          %3656 = vmatprep.subr.mxu0 0.0
          %3657 = vmatpush1.msra.mxu0 0.0
          %3658 = vmatprep.subr.mxu0 0.0
          %3659 = vmatpush1.msra.mxu0 0.0
          %3660 = vmatprep.subr.mxu0 0.0
          %3661 = vmatpush1.msra.mxu0 0.0
          %3662 = vmatprep.subr.mxu0 0.0
          %3663 = vmatpush1.msra.mxu0 0.0
          %3664 = vmatprep.subr.mxu0 0.0
          %3665 = vmatpush1.msra.mxu0 0.0
          %3666 = vmatprep.subr.mxu0 0.0
          %3667 = vmatpush1.msra.mxu0 0.0
          %3668 = vmatprep.subr.mxu0 0.0
          %3669 = vmatpush1.msra.mxu0 %v3633
          %3670 = vmatprep.subr.mxu0 0.0
          %3671 = vmatpush2.msra.mxu0 0.0
          %3672 = vmatprep.subr.mxu0 0.0
          %3673 = vmatpush2.msra.mxu0 0.0
          %3674 = vmatprep.subr.mxu0 0.0
          %3675 = vmatpush2.msra.mxu0 0.0
          %3676 = vmatprep.subr.mxu0 0.0
          %3677 = vmatpush2.msra.mxu0 0.0
          %3678 = vmatprep.subr.mxu0 0.0
          %3679 = vmatpush2.msra.mxu0 0.0
          %3680 = vmatprep.subr.mxu0 0.0
          %3681 = vmatpush2.msra.mxu0 0.0
          %3682 = vmatprep.subr.mxu0 0.0
          %3683 = vmatpush2.msra.mxu0 0.0
          %3684 = vmatprep.subr.mxu0 0.0
          %3685 = vmatpush2.msra.mxu0 0.0
          %3686 = vmatprep.subr.mxu0 0.0
          %3687 = vmatpush2.msra.mxu0 0.0
          %3688 = vmatprep.subr.mxu0 0.0
          %3689 = vmatpush2.msra.mxu0 0.0
          %3690 = vmatprep.subr.mxu0 0.0
          %3691 = vmatpush2.msra.mxu0 0.0
          %3692 = vmatprep.subr.mxu0 0.0
          %3693 = vmatpush2.msra.mxu0 0.0
          %3694 = vmatprep.subr.mxu0 0.0
          %3695 = vmatpush2.msra.mxu0 0.0
          %3696 = vmatprep.subr.mxu0 0.0
          %3697 = vmatpush2.msra.mxu0 0.0
          %3698 = vmatprep.subr.mxu0 0.0
          %3699 = vmatpush2.msra.mxu0 0.0
          %3700 = vmatprep.subr.mxu0 0.0
          %3701 = vmatpush2.msra.mxu0 0.0
          %3702 = vmatprep.mubr.f32.mxu0 0.0
          %3703 = vmatmul.mubr.f32.gmra.mxu0 %v3636
          %v3704 = vpop.f32.mrf.mxu0
          %v3705 = vadd.f32 0.0, %v3704
          %v3706 = vpop.f32.mrf.mxu0
          %3707 = vdwg.mxu0
          %v3708 = vadd.f32 %v3626, %v3705
          %s3709 = scalar_lea.vmem %s2, 56
          %v3710 = vld [vmem:[%s3709] sm:$0xff]
          %3711 = vrot.lane.b32.xlu0 %v3142, 121
          %v3712 = vpop.permute.xlu0 %3711
          %3713 = vrot.lane.b32.xlu0 %v3140, 121
          %v3714 = vpop.permute.xlu0 %3713
          %v3715 = vsel %vm889, %v3712, %v3714
          %v3718 = vsel %vm304, %v3710, 0
          %3720 = vmatprep.subr.mxu0 0.0
          %3721 = vmatpush1.msra.mxu0 0.0
          %3722 = vmatprep.subr.mxu0 0.0
          %3723 = vmatpush1.msra.mxu0 0.0
          %3724 = vmatprep.subr.mxu0 0.0
          %3725 = vmatpush1.msra.mxu0 0.0
          %3726 = vmatprep.subr.mxu0 0.0
          %3727 = vmatpush1.msra.mxu0 0.0
          %3728 = vmatprep.subr.mxu0 0.0
          %3729 = vmatpush1.msra.mxu0 0.0
          %3730 = vmatprep.subr.mxu0 0.0
          %3731 = vmatpush1.msra.mxu0 0.0
          %3732 = vmatprep.subr.mxu0 0.0
          %3733 = vmatpush1.msra.mxu0 0.0
          %3734 = vmatprep.subr.mxu0 0.0
          %3735 = vmatpush1.msra.mxu0 0.0
          %3736 = vmatprep.subr.mxu0 0.0
          %3737 = vmatpush1.msra.mxu0 0.0
          %3738 = vmatprep.subr.mxu0 0.0
          %3739 = vmatpush1.msra.mxu0 0.0
          %3740 = vmatprep.subr.mxu0 0.0
          %3741 = vmatpush1.msra.mxu0 0.0
          %3742 = vmatprep.subr.mxu0 0.0
          %3743 = vmatpush1.msra.mxu0 0.0
          %3744 = vmatprep.subr.mxu0 0.0
          %3745 = vmatpush1.msra.mxu0 0.0
          %3746 = vmatprep.subr.mxu0 0.0
          %3747 = vmatpush1.msra.mxu0 0.0
          %3748 = vmatprep.subr.mxu0 0.0
          %3749 = vmatpush1.msra.mxu0 0.0
          %3750 = vmatprep.subr.mxu0 0.0
          %3751 = vmatpush1.msra.mxu0 %v3715
          %3752 = vmatprep.subr.mxu0 0.0
          %3753 = vmatpush2.msra.mxu0 0.0
          %3754 = vmatprep.subr.mxu0 0.0
          %3755 = vmatpush2.msra.mxu0 0.0
          %3756 = vmatprep.subr.mxu0 0.0
          %3757 = vmatpush2.msra.mxu0 0.0
          %3758 = vmatprep.subr.mxu0 0.0
          %3759 = vmatpush2.msra.mxu0 0.0
          %3760 = vmatprep.subr.mxu0 0.0
          %3761 = vmatpush2.msra.mxu0 0.0
          %3762 = vmatprep.subr.mxu0 0.0
          %3763 = vmatpush2.msra.mxu0 0.0
          %3764 = vmatprep.subr.mxu0 0.0
          %3765 = vmatpush2.msra.mxu0 0.0
          %3766 = vmatprep.subr.mxu0 0.0
          %3767 = vmatpush2.msra.mxu0 0.0
          %3768 = vmatprep.subr.mxu0 0.0
          %3769 = vmatpush2.msra.mxu0 0.0
          %3770 = vmatprep.subr.mxu0 0.0
          %3771 = vmatpush2.msra.mxu0 0.0
          %3772 = vmatprep.subr.mxu0 0.0
          %3773 = vmatpush2.msra.mxu0 0.0
          %3774 = vmatprep.subr.mxu0 0.0
          %3775 = vmatpush2.msra.mxu0 0.0
          %3776 = vmatprep.subr.mxu0 0.0
          %3777 = vmatpush2.msra.mxu0 0.0
          %3778 = vmatprep.subr.mxu0 0.0
          %3779 = vmatpush2.msra.mxu0 0.0
          %3780 = vmatprep.subr.mxu0 0.0
          %3781 = vmatpush2.msra.mxu0 0.0
          %3782 = vmatprep.subr.mxu0 0.0
          %3783 = vmatpush2.msra.mxu0 0.0
          %3784 = vmatprep.mubr.f32.mxu0 0.0
          %3785 = vmatmul.mubr.f32.gmra.mxu0 %v3718
          %v3786 = vpop.f32.mrf.mxu0
          %v3787 = vadd.f32 0.0, %v3786
          %v3788 = vpop.f32.mrf.mxu0
          %3789 = vdwg.mxu0
          %v3790 = vadd.f32 %v3708, %v3787
          %s3791 = scalar_lea.vmem %s2, 64
          %v3792 = vld [vmem:[%s3791] sm:$0xff]
          %3793 = vrot.lane.b32.xlu0 %v3142, 120
          %v3794 = vpop.permute.xlu0 %3793
          %3795 = vrot.lane.b32.xlu0 %v3140, 120
          %v3796 = vpop.permute.xlu0 %3795
          %v3797 = vsel %vm975, %v3794, %v3796
          %v3800 = vsel %vm304, %v3792, 0
          %3802 = vmatprep.subr.mxu0 0.0
          %3803 = vmatpush1.msra.mxu0 0.0
          %3804 = vmatprep.subr.mxu0 0.0
          %3805 = vmatpush1.msra.mxu0 0.0
          %3806 = vmatprep.subr.mxu0 0.0
          %3807 = vmatpush1.msra.mxu0 0.0
          %3808 = vmatprep.subr.mxu0 0.0
          %3809 = vmatpush1.msra.mxu0 0.0
          %3810 = vmatprep.subr.mxu0 0.0
          %3811 = vmatpush1.msra.mxu0 0.0
          %3812 = vmatprep.subr.mxu0 0.0
          %3813 = vmatpush1.msra.mxu0 0.0
          %3814 = vmatprep.subr.mxu0 0.0
          %3815 = vmatpush1.msra.mxu0 0.0
          %3816 = vmatprep.subr.mxu0 0.0
          %3817 = vmatpush1.msra.mxu0 0.0
          %3818 = vmatprep.subr.mxu0 0.0
          %3819 = vmatpush1.msra.mxu0 0.0
          %3820 = vmatprep.subr.mxu0 0.0
          %3821 = vmatpush1.msra.mxu0 0.0
          %3822 = vmatprep.subr.mxu0 0.0
          %3823 = vmatpush1.msra.mxu0 0.0
          %3824 = vmatprep.subr.mxu0 0.0
          %3825 = vmatpush1.msra.mxu0 0.0
          %3826 = vmatprep.subr.mxu0 0.0
          %3827 = vmatpush1.msra.mxu0 0.0
          %3828 = vmatprep.subr.mxu0 0.0
          %3829 = vmatpush1.msra.mxu0 0.0
          %3830 = vmatprep.subr.mxu0 0.0
          %3831 = vmatpush1.msra.mxu0 0.0
          %3832 = vmatprep.subr.mxu0 0.0
          %3833 = vmatpush1.msra.mxu0 %v3797
          %3834 = vmatprep.subr.mxu0 0.0
          %3835 = vmatpush2.msra.mxu0 0.0
          %3836 = vmatprep.subr.mxu0 0.0
          %3837 = vmatpush2.msra.mxu0 0.0
          %3838 = vmatprep.subr.mxu0 0.0
          %3839 = vmatpush2.msra.mxu0 0.0
          %3840 = vmatprep.subr.mxu0 0.0
          %3841 = vmatpush2.msra.mxu0 0.0
          %3842 = vmatprep.subr.mxu0 0.0
          %3843 = vmatpush2.msra.mxu0 0.0
          %3844 = vmatprep.subr.mxu0 0.0
          %3845 = vmatpush2.msra.mxu0 0.0
          %3846 = vmatprep.subr.mxu0 0.0
          %3847 = vmatpush2.msra.mxu0 0.0
          %3848 = vmatprep.subr.mxu0 0.0
          %3849 = vmatpush2.msra.mxu0 0.0
          %3850 = vmatprep.subr.mxu0 0.0
          %3851 = vmatpush2.msra.mxu0 0.0
          %3852 = vmatprep.subr.mxu0 0.0
          %3853 = vmatpush2.msra.mxu0 0.0
          %3854 = vmatprep.subr.mxu0 0.0
          %3855 = vmatpush2.msra.mxu0 0.0
          %3856 = vmatprep.subr.mxu0 0.0
          %3857 = vmatpush2.msra.mxu0 0.0
          %3858 = vmatprep.subr.mxu0 0.0
          %3859 = vmatpush2.msra.mxu0 0.0
          %3860 = vmatprep.subr.mxu0 0.0
          %3861 = vmatpush2.msra.mxu0 0.0
          %3862 = vmatprep.subr.mxu0 0.0
          %3863 = vmatpush2.msra.mxu0 0.0
          %3864 = vmatprep.subr.mxu0 0.0
          %3865 = vmatpush2.msra.mxu0 0.0
          %3866 = vmatprep.mubr.f32.mxu0 0.0
          %3867 = vmatmul.mubr.f32.gmra.mxu0 %v3800
          %v3868 = vpop.f32.mrf.mxu0
          %v3869 = vadd.f32 0.0, %v3868
          %v3870 = vpop.f32.mrf.mxu0
          %3871 = vdwg.mxu0
          %v3872 = vadd.f32 %v3790, %v3869
          %s3873 = scalar_lea.vmem %s2, 72
          %v3874 = vld [vmem:[%s3873] sm:$0xff]
          %3875 = vrot.lane.b32.xlu0 %v3142, 119
          %v3876 = vpop.permute.xlu0 %3875
          %3877 = vrot.lane.b32.xlu0 %v3140, 119
          %v3878 = vpop.permute.xlu0 %3877
          %v3879 = vsel %vm1061, %v3876, %v3878
          %v3882 = vsel %vm304, %v3874, 0
          %3884 = vmatprep.subr.mxu0 0.0
          %3885 = vmatpush1.msra.mxu0 0.0
          %3886 = vmatprep.subr.mxu0 0.0
          %3887 = vmatpush1.msra.mxu0 0.0
          %3888 = vmatprep.subr.mxu0 0.0
          %3889 = vmatpush1.msra.mxu0 0.0
          %3890 = vmatprep.subr.mxu0 0.0
          %3891 = vmatpush1.msra.mxu0 0.0
          %3892 = vmatprep.subr.mxu0 0.0
          %3893 = vmatpush1.msra.mxu0 0.0
          %3894 = vmatprep.subr.mxu0 0.0
          %3895 = vmatpush1.msra.mxu0 0.0
          %3896 = vmatprep.subr.mxu0 0.0
          %3897 = vmatpush1.msra.mxu0 0.0
          %3898 = vmatprep.subr.mxu0 0.0
          %3899 = vmatpush1.msra.mxu0 0.0
          %3900 = vmatprep.subr.mxu0 0.0
          %3901 = vmatpush1.msra.mxu0 0.0
          %3902 = vmatprep.subr.mxu0 0.0
          %3903 = vmatpush1.msra.mxu0 0.0
          %3904 = vmatprep.subr.mxu0 0.0
          %3905 = vmatpush1.msra.mxu0 0.0
          %3906 = vmatprep.subr.mxu0 0.0
          %3907 = vmatpush1.msra.mxu0 0.0
          %3908 = vmatprep.subr.mxu0 0.0
          %3909 = vmatpush1.msra.mxu0 0.0
          %3910 = vmatprep.subr.mxu0 0.0
          %3911 = vmatpush1.msra.mxu0 0.0
          %3912 = vmatprep.subr.mxu0 0.0
          %3913 = vmatpush1.msra.mxu0 0.0
          %3914 = vmatprep.subr.mxu0 0.0
          %3915 = vmatpush1.msra.mxu0 %v3879
          %3916 = vmatprep.subr.mxu0 0.0
          %3917 = vmatpush2.msra.mxu0 0.0
          %3918 = vmatprep.subr.mxu0 0.0
          %3919 = vmatpush2.msra.mxu0 0.0
          %3920 = vmatprep.subr.mxu0 0.0
          %3921 = vmatpush2.msra.mxu0 0.0
          %3922 = vmatprep.subr.mxu0 0.0
          %3923 = vmatpush2.msra.mxu0 0.0
          %3924 = vmatprep.subr.mxu0 0.0
          %3925 = vmatpush2.msra.mxu0 0.0
          %3926 = vmatprep.subr.mxu0 0.0
          %3927 = vmatpush2.msra.mxu0 0.0
          %3928 = vmatprep.subr.mxu0 0.0
          %3929 = vmatpush2.msra.mxu0 0.0
          %3930 = vmatprep.subr.mxu0 0.0
          %3931 = vmatpush2.msra.mxu0 0.0
          %3932 = vmatprep.subr.mxu0 0.0
          %3933 = vmatpush2.msra.mxu0 0.0
          %3934 = vmatprep.subr.mxu0 0.0
          %3935 = vmatpush2.msra.mxu0 0.0
          %3936 = vmatprep.subr.mxu0 0.0
          %3937 = vmatpush2.msra.mxu0 0.0
          %3938 = vmatprep.subr.mxu0 0.0
          %3939 = vmatpush2.msra.mxu0 0.0
          %3940 = vmatprep.subr.mxu0 0.0
          %3941 = vmatpush2.msra.mxu0 0.0
          %3942 = vmatprep.subr.mxu0 0.0
          %3943 = vmatpush2.msra.mxu0 0.0
          %3944 = vmatprep.subr.mxu0 0.0
          %3945 = vmatpush2.msra.mxu0 0.0
          %3946 = vmatprep.subr.mxu0 0.0
          %3947 = vmatpush2.msra.mxu0 0.0
          %3948 = vmatprep.mubr.f32.mxu0 0.0
          %3949 = vmatmul.mubr.f32.gmra.mxu0 %v3882
          %v3950 = vpop.f32.mrf.mxu0
          %v3951 = vadd.f32 0.0, %v3950
          %v3952 = vpop.f32.mrf.mxu0
          %3953 = vdwg.mxu0
          %v3954 = vadd.f32 %v3872, %v3951
          %s3955 = scalar_lea.vmem %s2, 80
          %v3956 = vld [vmem:[%s3955] sm:$0xff]
          %3957 = vrot.lane.b32.xlu0 %v3142, 118
          %v3958 = vpop.permute.xlu0 %3957
          %3959 = vrot.lane.b32.xlu0 %v3140, 118
          %v3960 = vpop.permute.xlu0 %3959
          %v3961 = vsel %vm1147, %v3958, %v3960
          %v3964 = vsel %vm304, %v3956, 0
          %3966 = vmatprep.subr.mxu0 0.0
          %3967 = vmatpush1.msra.mxu0 0.0
          %3968 = vmatprep.subr.mxu0 0.0
          %3969 = vmatpush1.msra.mxu0 0.0
          %3970 = vmatprep.subr.mxu0 0.0
          %3971 = vmatpush1.msra.mxu0 0.0
          %3972 = vmatprep.subr.mxu0 0.0
          %3973 = vmatpush1.msra.mxu0 0.0
          %3974 = vmatprep.subr.mxu0 0.0
          %3975 = vmatpush1.msra.mxu0 0.0
          %3976 = vmatprep.subr.mxu0 0.0
          %3977 = vmatpush1.msra.mxu0 0.0
          %3978 = vmatprep.subr.mxu0 0.0
          %3979 = vmatpush1.msra.mxu0 0.0
          %3980 = vmatprep.subr.mxu0 0.0
          %3981 = vmatpush1.msra.mxu0 0.0
          %3982 = vmatprep.subr.mxu0 0.0
          %3983 = vmatpush1.msra.mxu0 0.0
          %3984 = vmatprep.subr.mxu0 0.0
          %3985 = vmatpush1.msra.mxu0 0.0
          %3986 = vmatprep.subr.mxu0 0.0
          %3987 = vmatpush1.msra.mxu0 0.0
          %3988 = vmatprep.subr.mxu0 0.0
          %3989 = vmatpush1.msra.mxu0 0.0
          %3990 = vmatprep.subr.mxu0 0.0
          %3991 = vmatpush1.msra.mxu0 0.0
          %3992 = vmatprep.subr.mxu0 0.0
          %3993 = vmatpush1.msra.mxu0 0.0
          %3994 = vmatprep.subr.mxu0 0.0
          %3995 = vmatpush1.msra.mxu0 0.0
          %3996 = vmatprep.subr.mxu0 0.0
          %3997 = vmatpush1.msra.mxu0 %v3961
          %3998 = vmatprep.subr.mxu0 0.0
          %3999 = vmatpush2.msra.mxu0 0.0
          %4000 = vmatprep.subr.mxu0 0.0
          %4001 = vmatpush2.msra.mxu0 0.0
          %4002 = vmatprep.subr.mxu0 0.0
          %4003 = vmatpush2.msra.mxu0 0.0
          %4004 = vmatprep.subr.mxu0 0.0
          %4005 = vmatpush2.msra.mxu0 0.0
          %4006 = vmatprep.subr.mxu0 0.0
          %4007 = vmatpush2.msra.mxu0 0.0
          %4008 = vmatprep.subr.mxu0 0.0
          %4009 = vmatpush2.msra.mxu0 0.0
          %4010 = vmatprep.subr.mxu0 0.0
          %4011 = vmatpush2.msra.mxu0 0.0
          %4012 = vmatprep.subr.mxu0 0.0
          %4013 = vmatpush2.msra.mxu0 0.0
          %4014 = vmatprep.subr.mxu0 0.0
          %4015 = vmatpush2.msra.mxu0 0.0
          %4016 = vmatprep.subr.mxu0 0.0
          %4017 = vmatpush2.msra.mxu0 0.0
          %4018 = vmatprep.subr.mxu0 0.0
          %4019 = vmatpush2.msra.mxu0 0.0
          %4020 = vmatprep.subr.mxu0 0.0
          %4021 = vmatpush2.msra.mxu0 0.0
          %4022 = vmatprep.subr.mxu0 0.0
          %4023 = vmatpush2.msra.mxu0 0.0
          %4024 = vmatprep.subr.mxu0 0.0
          %4025 = vmatpush2.msra.mxu0 0.0
          %4026 = vmatprep.subr.mxu0 0.0
          %4027 = vmatpush2.msra.mxu0 0.0
          %4028 = vmatprep.subr.mxu0 0.0
          %4029 = vmatpush2.msra.mxu0 0.0
          %4030 = vmatprep.mubr.f32.mxu0 0.0
          %4031 = vmatmul.mubr.f32.gmra.mxu0 %v3964
          %v4032 = vpop.f32.mrf.mxu0
          %v4033 = vadd.f32 0.0, %v4032
          %v4034 = vpop.f32.mrf.mxu0
          %4035 = vdwg.mxu0
          %v4036 = vadd.f32 %v3954, %v4033
          %s4037 = scalar_lea.vmem %s2, 88
          %v4038 = vld [vmem:[%s4037] sm:$0xff]
          %4039 = vrot.lane.b32.xlu0 %v3142, 117
          %v4040 = vpop.permute.xlu0 %4039
          %4041 = vrot.lane.b32.xlu0 %v3140, 117
          %v4042 = vpop.permute.xlu0 %4041
          %v4043 = vsel %vm1233, %v4040, %v4042
          %v4046 = vsel %vm304, %v4038, 0
          %4048 = vmatprep.subr.mxu0 0.0
          %4049 = vmatpush1.msra.mxu0 0.0
          %4050 = vmatprep.subr.mxu0 0.0
          %4051 = vmatpush1.msra.mxu0 0.0
          %4052 = vmatprep.subr.mxu0 0.0
          %4053 = vmatpush1.msra.mxu0 0.0
          %4054 = vmatprep.subr.mxu0 0.0
          %4055 = vmatpush1.msra.mxu0 0.0
          %4056 = vmatprep.subr.mxu0 0.0
          %4057 = vmatpush1.msra.mxu0 0.0
          %4058 = vmatprep.subr.mxu0 0.0
          %4059 = vmatpush1.msra.mxu0 0.0
          %4060 = vmatprep.subr.mxu0 0.0
          %4061 = vmatpush1.msra.mxu0 0.0
          %4062 = vmatprep.subr.mxu0 0.0
          %4063 = vmatpush1.msra.mxu0 0.0
          %4064 = vmatprep.subr.mxu0 0.0
          %4065 = vmatpush1.msra.mxu0 0.0
          %4066 = vmatprep.subr.mxu0 0.0
          %4067 = vmatpush1.msra.mxu0 0.0
          %4068 = vmatprep.subr.mxu0 0.0
          %4069 = vmatpush1.msra.mxu0 0.0
          %4070 = vmatprep.subr.mxu0 0.0
          %4071 = vmatpush1.msra.mxu0 0.0
          %4072 = vmatprep.subr.mxu0 0.0
          %4073 = vmatpush1.msra.mxu0 0.0
          %4074 = vmatprep.subr.mxu0 0.0
          %4075 = vmatpush1.msra.mxu0 0.0
          %4076 = vmatprep.subr.mxu0 0.0
          %4077 = vmatpush1.msra.mxu0 0.0
          %4078 = vmatprep.subr.mxu0 0.0
          %4079 = vmatpush1.msra.mxu0 %v4043
          %4080 = vmatprep.subr.mxu0 0.0
          %4081 = vmatpush2.msra.mxu0 0.0
          %4082 = vmatprep.subr.mxu0 0.0
          %4083 = vmatpush2.msra.mxu0 0.0
          %4084 = vmatprep.subr.mxu0 0.0
          %4085 = vmatpush2.msra.mxu0 0.0
          %4086 = vmatprep.subr.mxu0 0.0
          %4087 = vmatpush2.msra.mxu0 0.0
          %4088 = vmatprep.subr.mxu0 0.0
          %4089 = vmatpush2.msra.mxu0 0.0
          %4090 = vmatprep.subr.mxu0 0.0
          %4091 = vmatpush2.msra.mxu0 0.0
          %4092 = vmatprep.subr.mxu0 0.0
          %4093 = vmatpush2.msra.mxu0 0.0
          %4094 = vmatprep.subr.mxu0 0.0
          %4095 = vmatpush2.msra.mxu0 0.0
          %4096 = vmatprep.subr.mxu0 0.0
          %4097 = vmatpush2.msra.mxu0 0.0
          %4098 = vmatprep.subr.mxu0 0.0
          %4099 = vmatpush2.msra.mxu0 0.0
          %4100 = vmatprep.subr.mxu0 0.0
          %4101 = vmatpush2.msra.mxu0 0.0
          %4102 = vmatprep.subr.mxu0 0.0
          %4103 = vmatpush2.msra.mxu0 0.0
          %4104 = vmatprep.subr.mxu0 0.0
          %4105 = vmatpush2.msra.mxu0 0.0
          %4106 = vmatprep.subr.mxu0 0.0
          %4107 = vmatpush2.msra.mxu0 0.0
          %4108 = vmatprep.subr.mxu0 0.0
          %4109 = vmatpush2.msra.mxu0 0.0
          %4110 = vmatprep.subr.mxu0 0.0
          %4111 = vmatpush2.msra.mxu0 0.0
          %4112 = vmatprep.mubr.f32.mxu0 0.0
          %4113 = vmatmul.mubr.f32.gmra.mxu0 %v4046
          %v4114 = vpop.f32.mrf.mxu0
          %v4115 = vadd.f32 0.0, %v4114
          %v4116 = vpop.f32.mrf.mxu0
          %4117 = vdwg.mxu0
          %v4118 = vadd.f32 %v4036, %v4115
          %s4119 = scalar_lea.vmem %s2, 96
          %v4120 = vld [vmem:[%s4119] sm:$0xff]
          %4121 = vrot.lane.b32.xlu0 %v3142, 116
          %v4122 = vpop.permute.xlu0 %4121
          %4123 = vrot.lane.b32.xlu0 %v3140, 116
          %v4124 = vpop.permute.xlu0 %4123
          %v4125 = vsel %vm1319, %v4122, %v4124
          %v4128 = vsel %vm304, %v4120, 0
          %4130 = vmatprep.subr.mxu0 0.0
          %4131 = vmatpush1.msra.mxu0 0.0
          %4132 = vmatprep.subr.mxu0 0.0
          %4133 = vmatpush1.msra.mxu0 0.0
          %4134 = vmatprep.subr.mxu0 0.0
          %4135 = vmatpush1.msra.mxu0 0.0
          %4136 = vmatprep.subr.mxu0 0.0
          %4137 = vmatpush1.msra.mxu0 0.0
          %4138 = vmatprep.subr.mxu0 0.0
          %4139 = vmatpush1.msra.mxu0 0.0
          %4140 = vmatprep.subr.mxu0 0.0
          %4141 = vmatpush1.msra.mxu0 0.0
          %4142 = vmatprep.subr.mxu0 0.0
          %4143 = vmatpush1.msra.mxu0 0.0
          %4144 = vmatprep.subr.mxu0 0.0
          %4145 = vmatpush1.msra.mxu0 0.0
          %4146 = vmatprep.subr.mxu0 0.0
          %4147 = vmatpush1.msra.mxu0 0.0
          %4148 = vmatprep.subr.mxu0 0.0
          %4149 = vmatpush1.msra.mxu0 0.0
          %4150 = vmatprep.subr.mxu0 0.0
          %4151 = vmatpush1.msra.mxu0 0.0
          %4152 = vmatprep.subr.mxu0 0.0
          %4153 = vmatpush1.msra.mxu0 0.0
          %4154 = vmatprep.subr.mxu0 0.0
          %4155 = vmatpush1.msra.mxu0 0.0
          %4156 = vmatprep.subr.mxu0 0.0
          %4157 = vmatpush1.msra.mxu0 0.0
          %4158 = vmatprep.subr.mxu0 0.0
          %4159 = vmatpush1.msra.mxu0 0.0
          %4160 = vmatprep.subr.mxu0 0.0
          %4161 = vmatpush1.msra.mxu0 %v4125
          %4162 = vmatprep.subr.mxu0 0.0
          %4163 = vmatpush2.msra.mxu0 0.0
          %4164 = vmatprep.subr.mxu0 0.0
          %4165 = vmatpush2.msra.mxu0 0.0
          %4166 = vmatprep.subr.mxu0 0.0
          %4167 = vmatpush2.msra.mxu0 0.0
          %4168 = vmatprep.subr.mxu0 0.0
          %4169 = vmatpush2.msra.mxu0 0.0
          %4170 = vmatprep.subr.mxu0 0.0
          %4171 = vmatpush2.msra.mxu0 0.0
          %4172 = vmatprep.subr.mxu0 0.0
          %4173 = vmatpush2.msra.mxu0 0.0
          %4174 = vmatprep.subr.mxu0 0.0
          %4175 = vmatpush2.msra.mxu0 0.0
          %4176 = vmatprep.subr.mxu0 0.0
          %4177 = vmatpush2.msra.mxu0 0.0
          %4178 = vmatprep.subr.mxu0 0.0
          %4179 = vmatpush2.msra.mxu0 0.0
          %4180 = vmatprep.subr.mxu0 0.0
          %4181 = vmatpush2.msra.mxu0 0.0
          %4182 = vmatprep.subr.mxu0 0.0
          %4183 = vmatpush2.msra.mxu0 0.0
          %4184 = vmatprep.subr.mxu0 0.0
          %4185 = vmatpush2.msra.mxu0 0.0
          %4186 = vmatprep.subr.mxu0 0.0
          %4187 = vmatpush2.msra.mxu0 0.0
          %4188 = vmatprep.subr.mxu0 0.0
          %4189 = vmatpush2.msra.mxu0 0.0
          %4190 = vmatprep.subr.mxu0 0.0
          %4191 = vmatpush2.msra.mxu0 0.0
          %4192 = vmatprep.subr.mxu0 0.0
          %4193 = vmatpush2.msra.mxu0 0.0
          %4194 = vmatprep.mubr.f32.mxu0 0.0
          %4195 = vmatmul.mubr.f32.gmra.mxu0 %v4128
          %v4196 = vpop.f32.mrf.mxu0
          %v4197 = vadd.f32 0.0, %v4196
          %v4198 = vpop.f32.mrf.mxu0
          %4199 = vdwg.mxu0
          %v4200 = vadd.f32 %v4118, %v4197
          %s4201 = scalar_lea.vmem %s2, 104
          %v4202 = vld [vmem:[%s4201] sm:$0xff]
          %4203 = vrot.lane.b32.xlu0 %v3142, 115
          %v4204 = vpop.permute.xlu0 %4203
          %4205 = vrot.lane.b32.xlu0 %v3140, 115
          %v4206 = vpop.permute.xlu0 %4205
          %v4207 = vsel %vm1405, %v4204, %v4206
          %v4210 = vsel %vm304, %v4202, 0
          %4212 = vmatprep.subr.mxu0 0.0
          %4213 = vmatpush1.msra.mxu0 0.0
          %4214 = vmatprep.subr.mxu0 0.0
          %4215 = vmatpush1.msra.mxu0 0.0
          %4216 = vmatprep.subr.mxu0 0.0
          %4217 = vmatpush1.msra.mxu0 0.0
          %4218 = vmatprep.subr.mxu0 0.0
          %4219 = vmatpush1.msra.mxu0 0.0
          %4220 = vmatprep.subr.mxu0 0.0
          %4221 = vmatpush1.msra.mxu0 0.0
          %4222 = vmatprep.subr.mxu0 0.0
          %4223 = vmatpush1.msra.mxu0 0.0
          %4224 = vmatprep.subr.mxu0 0.0
          %4225 = vmatpush1.msra.mxu0 0.0
          %4226 = vmatprep.subr.mxu0 0.0
          %4227 = vmatpush1.msra.mxu0 0.0
          %4228 = vmatprep.subr.mxu0 0.0
          %4229 = vmatpush1.msra.mxu0 0.0
          %4230 = vmatprep.subr.mxu0 0.0
          %4231 = vmatpush1.msra.mxu0 0.0
          %4232 = vmatprep.subr.mxu0 0.0
          %4233 = vmatpush1.msra.mxu0 0.0
          %4234 = vmatprep.subr.mxu0 0.0
          %4235 = vmatpush1.msra.mxu0 0.0
          %4236 = vmatprep.subr.mxu0 0.0
          %4237 = vmatpush1.msra.mxu0 0.0
          %4238 = vmatprep.subr.mxu0 0.0
          %4239 = vmatpush1.msra.mxu0 0.0
          %4240 = vmatprep.subr.mxu0 0.0
          %4241 = vmatpush1.msra.mxu0 0.0
          %4242 = vmatprep.subr.mxu0 0.0
          %4243 = vmatpush1.msra.mxu0 %v4207
          %4244 = vmatprep.subr.mxu0 0.0
          %4245 = vmatpush2.msra.mxu0 0.0
          %4246 = vmatprep.subr.mxu0 0.0
          %4247 = vmatpush2.msra.mxu0 0.0
          %4248 = vmatprep.subr.mxu0 0.0
          %4249 = vmatpush2.msra.mxu0 0.0
          %4250 = vmatprep.subr.mxu0 0.0
          %4251 = vmatpush2.msra.mxu0 0.0
          %4252 = vmatprep.subr.mxu0 0.0
          %4253 = vmatpush2.msra.mxu0 0.0
          %4254 = vmatprep.subr.mxu0 0.0
          %4255 = vmatpush2.msra.mxu0 0.0
          %4256 = vmatprep.subr.mxu0 0.0
          %4257 = vmatpush2.msra.mxu0 0.0
          %4258 = vmatprep.subr.mxu0 0.0
          %4259 = vmatpush2.msra.mxu0 0.0
          %4260 = vmatprep.subr.mxu0 0.0
          %4261 = vmatpush2.msra.mxu0 0.0
          %4262 = vmatprep.subr.mxu0 0.0
          %4263 = vmatpush2.msra.mxu0 0.0
          %4264 = vmatprep.subr.mxu0 0.0
          %4265 = vmatpush2.msra.mxu0 0.0
          %4266 = vmatprep.subr.mxu0 0.0
          %4267 = vmatpush2.msra.mxu0 0.0
          %4268 = vmatprep.subr.mxu0 0.0
          %4269 = vmatpush2.msra.mxu0 0.0
          %4270 = vmatprep.subr.mxu0 0.0
          %4271 = vmatpush2.msra.mxu0 0.0
          %4272 = vmatprep.subr.mxu0 0.0
          %4273 = vmatpush2.msra.mxu0 0.0
          %4274 = vmatprep.subr.mxu0 0.0
          %4275 = vmatpush2.msra.mxu0 0.0
          %4276 = vmatprep.mubr.f32.mxu0 0.0
          %4277 = vmatmul.mubr.f32.gmra.mxu0 %v4210
          %v4278 = vpop.f32.mrf.mxu0
          %v4279 = vadd.f32 0.0, %v4278
          %v4280 = vpop.f32.mrf.mxu0
          %4281 = vdwg.mxu0
          %v4282 = vadd.f32 %v4200, %v4279
          %s4283 = scalar_lea.vmem %s2, 112
          %v4284 = vld [vmem:[%s4283] sm:$0xff]
          %4285 = vrot.lane.b32.xlu0 %v3142, 114
          %v4286 = vpop.permute.xlu0 %4285
          %4287 = vrot.lane.b32.xlu0 %v3140, 114
          %v4288 = vpop.permute.xlu0 %4287
          %v4289 = vsel %vm1491, %v4286, %v4288
          %v4292 = vsel %vm304, %v4284, 0
          %4294 = vmatprep.subr.mxu0 0.0
          %4295 = vmatpush1.msra.mxu0 0.0
          %4296 = vmatprep.subr.mxu0 0.0
          %4297 = vmatpush1.msra.mxu0 0.0
          %4298 = vmatprep.subr.mxu0 0.0
          %4299 = vmatpush1.msra.mxu0 0.0
          %4300 = vmatprep.subr.mxu0 0.0
          %4301 = vmatpush1.msra.mxu0 0.0
          %4302 = vmatprep.subr.mxu0 0.0
          %4303 = vmatpush1.msra.mxu0 0.0
          %4304 = vmatprep.subr.mxu0 0.0
          %4305 = vmatpush1.msra.mxu0 0.0
          %4306 = vmatprep.subr.mxu0 0.0
          %4307 = vmatpush1.msra.mxu0 0.0
          %4308 = vmatprep.subr.mxu0 0.0
          %4309 = vmatpush1.msra.mxu0 0.0
          %4310 = vmatprep.subr.mxu0 0.0
          %4311 = vmatpush1.msra.mxu0 0.0
          %4312 = vmatprep.subr.mxu0 0.0
          %4313 = vmatpush1.msra.mxu0 0.0
          %4314 = vmatprep.subr.mxu0 0.0
          %4315 = vmatpush1.msra.mxu0 0.0
          %4316 = vmatprep.subr.mxu0 0.0
          %4317 = vmatpush1.msra.mxu0 0.0
          %4318 = vmatprep.subr.mxu0 0.0
          %4319 = vmatpush1.msra.mxu0 0.0
          %4320 = vmatprep.subr.mxu0 0.0
          %4321 = vmatpush1.msra.mxu0 0.0
          %4322 = vmatprep.subr.mxu0 0.0
          %4323 = vmatpush1.msra.mxu0 0.0
          %4324 = vmatprep.subr.mxu0 0.0
          %4325 = vmatpush1.msra.mxu0 %v4289
          %4326 = vmatprep.subr.mxu0 0.0
          %4327 = vmatpush2.msra.mxu0 0.0
          %4328 = vmatprep.subr.mxu0 0.0
          %4329 = vmatpush2.msra.mxu0 0.0
          %4330 = vmatprep.subr.mxu0 0.0
          %4331 = vmatpush2.msra.mxu0 0.0
          %4332 = vmatprep.subr.mxu0 0.0
          %4333 = vmatpush2.msra.mxu0 0.0
          %4334 = vmatprep.subr.mxu0 0.0
          %4335 = vmatpush2.msra.mxu0 0.0
          %4336 = vmatprep.subr.mxu0 0.0
          %4337 = vmatpush2.msra.mxu0 0.0
          %4338 = vmatprep.subr.mxu0 0.0
          %4339 = vmatpush2.msra.mxu0 0.0
          %4340 = vmatprep.subr.mxu0 0.0
          %4341 = vmatpush2.msra.mxu0 0.0
          %4342 = vmatprep.subr.mxu0 0.0
          %4343 = vmatpush2.msra.mxu0 0.0
          %4344 = vmatprep.subr.mxu0 0.0
          %4345 = vmatpush2.msra.mxu0 0.0
          %4346 = vmatprep.subr.mxu0 0.0
          %4347 = vmatpush2.msra.mxu0 0.0
          %4348 = vmatprep.subr.mxu0 0.0
          %4349 = vmatpush2.msra.mxu0 0.0
          %4350 = vmatprep.subr.mxu0 0.0
          %4351 = vmatpush2.msra.mxu0 0.0
          %4352 = vmatprep.subr.mxu0 0.0
          %4353 = vmatpush2.msra.mxu0 0.0
          %4354 = vmatprep.subr.mxu0 0.0
          %4355 = vmatpush2.msra.mxu0 0.0
          %4356 = vmatprep.subr.mxu0 0.0
          %4357 = vmatpush2.msra.mxu0 0.0
          %4358 = vmatprep.mubr.f32.mxu0 0.0
          %4359 = vmatmul.mubr.f32.gmra.mxu0 %v4292
          %v4360 = vpop.f32.mrf.mxu0
          %v4361 = vadd.f32 0.0, %v4360
          %v4362 = vpop.f32.mrf.mxu0
          %4363 = vdwg.mxu0
          %v4364 = vadd.f32 %v4282, %v4361
          %s4365 = scalar_lea.vmem %s2, 120
          %v4366 = vld [vmem:[%s4365] sm:$0xff]
          %4367 = vrot.lane.b32.xlu0 %v3142, 113
          %v4368 = vpop.permute.xlu0 %4367
          %4369 = vrot.lane.b32.xlu0 %v3140, 113
          %v4370 = vpop.permute.xlu0 %4369
          %v4371 = vsel %vm1577, %v4368, %v4370
          %v4374 = vsel %vm304, %v4366, 0
          %4376 = vmatprep.subr.mxu0 0.0
          %4377 = vmatpush1.msra.mxu0 0.0
          %4378 = vmatprep.subr.mxu0 0.0
          %4379 = vmatpush1.msra.mxu0 0.0
          %4380 = vmatprep.subr.mxu0 0.0
          %4381 = vmatpush1.msra.mxu0 0.0
          %4382 = vmatprep.subr.mxu0 0.0
          %4383 = vmatpush1.msra.mxu0 0.0
          %4384 = vmatprep.subr.mxu0 0.0
          %4385 = vmatpush1.msra.mxu0 0.0
          %4386 = vmatprep.subr.mxu0 0.0
          %4387 = vmatpush1.msra.mxu0 0.0
          %4388 = vmatprep.subr.mxu0 0.0
          %4389 = vmatpush1.msra.mxu0 0.0
          %4390 = vmatprep.subr.mxu0 0.0
          %4391 = vmatpush1.msra.mxu0 0.0
          %4392 = vmatprep.subr.mxu0 0.0
          %4393 = vmatpush1.msra.mxu0 0.0
          %4394 = vmatprep.subr.mxu0 0.0
          %4395 = vmatpush1.msra.mxu0 0.0
          %4396 = vmatprep.subr.mxu0 0.0
          %4397 = vmatpush1.msra.mxu0 0.0
          %4398 = vmatprep.subr.mxu0 0.0
          %4399 = vmatpush1.msra.mxu0 0.0
          %4400 = vmatprep.subr.mxu0 0.0
          %4401 = vmatpush1.msra.mxu0 0.0
          %4402 = vmatprep.subr.mxu0 0.0
          %4403 = vmatpush1.msra.mxu0 0.0
          %4404 = vmatprep.subr.mxu0 0.0
          %4405 = vmatpush1.msra.mxu0 0.0
          %4406 = vmatprep.subr.mxu0 0.0
          %4407 = vmatpush1.msra.mxu0 %v4371
          %4408 = vmatprep.subr.mxu0 0.0
          %4409 = vmatpush2.msra.mxu0 0.0
          %4410 = vmatprep.subr.mxu0 0.0
          %4411 = vmatpush2.msra.mxu0 0.0
          %4412 = vmatprep.subr.mxu0 0.0
          %4413 = vmatpush2.msra.mxu0 0.0
          %4414 = vmatprep.subr.mxu0 0.0
          %4415 = vmatpush2.msra.mxu0 0.0
          %4416 = vmatprep.subr.mxu0 0.0
          %4417 = vmatpush2.msra.mxu0 0.0
          %4418 = vmatprep.subr.mxu0 0.0
          %4419 = vmatpush2.msra.mxu0 0.0
          %4420 = vmatprep.subr.mxu0 0.0
          %4421 = vmatpush2.msra.mxu0 0.0
          %4422 = vmatprep.subr.mxu0 0.0
          %4423 = vmatpush2.msra.mxu0 0.0
          %4424 = vmatprep.subr.mxu0 0.0
          %4425 = vmatpush2.msra.mxu0 0.0
          %4426 = vmatprep.subr.mxu0 0.0
          %4427 = vmatpush2.msra.mxu0 0.0
          %4428 = vmatprep.subr.mxu0 0.0
          %4429 = vmatpush2.msra.mxu0 0.0
          %4430 = vmatprep.subr.mxu0 0.0
          %4431 = vmatpush2.msra.mxu0 0.0
          %4432 = vmatprep.subr.mxu0 0.0
          %4433 = vmatpush2.msra.mxu0 0.0
          %4434 = vmatprep.subr.mxu0 0.0
          %4435 = vmatpush2.msra.mxu0 0.0
          %4436 = vmatprep.subr.mxu0 0.0
          %4437 = vmatpush2.msra.mxu0 0.0
          %4438 = vmatprep.subr.mxu0 0.0
          %4439 = vmatpush2.msra.mxu0 0.0
          %4440 = vmatprep.mubr.f32.mxu0 0.0
          %4441 = vmatmul.mubr.f32.gmra.mxu0 %v4374
          %v4442 = vpop.f32.mrf.mxu0
          %v4443 = vadd.f32 0.0, %v4442
          %v4444 = vpop.f32.mrf.mxu0
          %4445 = vdwg.mxu0
          %v4446 = vadd.f32 %v4364, %v4443
          %s4447 = scalar_lea.vmem %s2, 128
          %v4448 = vld [vmem:[%s4447] sm:$0xff]
          %4449 = vrot.lane.b32.xlu0 %v3142, 112
          %v4450 = vpop.permute.xlu0 %4449
          %4451 = vrot.lane.b32.xlu0 %v3140, 112
          %v4452 = vpop.permute.xlu0 %4451
          %v4453 = vsel %vm1663, %v4450, %v4452
          %v4456 = vsel %vm304, %v4448, 0
          %4458 = vmatprep.subr.mxu0 0.0
          %4459 = vmatpush1.msra.mxu0 0.0
          %4460 = vmatprep.subr.mxu0 0.0
          %4461 = vmatpush1.msra.mxu0 0.0
          %4462 = vmatprep.subr.mxu0 0.0
          %4463 = vmatpush1.msra.mxu0 0.0
          %4464 = vmatprep.subr.mxu0 0.0
          %4465 = vmatpush1.msra.mxu0 0.0
          %4466 = vmatprep.subr.mxu0 0.0
          %4467 = vmatpush1.msra.mxu0 0.0
          %4468 = vmatprep.subr.mxu0 0.0
          %4469 = vmatpush1.msra.mxu0 0.0
          %4470 = vmatprep.subr.mxu0 0.0
          %4471 = vmatpush1.msra.mxu0 0.0
          %4472 = vmatprep.subr.mxu0 0.0
          %4473 = vmatpush1.msra.mxu0 0.0
          %4474 = vmatprep.subr.mxu0 0.0
          %4475 = vmatpush1.msra.mxu0 0.0
          %4476 = vmatprep.subr.mxu0 0.0
          %4477 = vmatpush1.msra.mxu0 0.0
          %4478 = vmatprep.subr.mxu0 0.0
          %4479 = vmatpush1.msra.mxu0 0.0
          %4480 = vmatprep.subr.mxu0 0.0
          %4481 = vmatpush1.msra.mxu0 0.0
          %4482 = vmatprep.subr.mxu0 0.0
          %4483 = vmatpush1.msra.mxu0 0.0
          %4484 = vmatprep.subr.mxu0 0.0
          %4485 = vmatpush1.msra.mxu0 0.0
          %4486 = vmatprep.subr.mxu0 0.0
          %4487 = vmatpush1.msra.mxu0 0.0
          %4488 = vmatprep.subr.mxu0 0.0
          %4489 = vmatpush1.msra.mxu0 %v4453
          %4490 = vmatprep.subr.mxu0 0.0
          %4491 = vmatpush2.msra.mxu0 0.0
          %4492 = vmatprep.subr.mxu0 0.0
          %4493 = vmatpush2.msra.mxu0 0.0
          %4494 = vmatprep.subr.mxu0 0.0
          %4495 = vmatpush2.msra.mxu0 0.0
          %4496 = vmatprep.subr.mxu0 0.0
          %4497 = vmatpush2.msra.mxu0 0.0
          %4498 = vmatprep.subr.mxu0 0.0
          %4499 = vmatpush2.msra.mxu0 0.0
          %4500 = vmatprep.subr.mxu0 0.0
          %4501 = vmatpush2.msra.mxu0 0.0
          %4502 = vmatprep.subr.mxu0 0.0
          %4503 = vmatpush2.msra.mxu0 0.0
          %4504 = vmatprep.subr.mxu0 0.0
          %4505 = vmatpush2.msra.mxu0 0.0
          %4506 = vmatprep.subr.mxu0 0.0
          %4507 = vmatpush2.msra.mxu0 0.0
          %4508 = vmatprep.subr.mxu0 0.0
          %4509 = vmatpush2.msra.mxu0 0.0
          %4510 = vmatprep.subr.mxu0 0.0
          %4511 = vmatpush2.msra.mxu0 0.0
          %4512 = vmatprep.subr.mxu0 0.0
          %4513 = vmatpush2.msra.mxu0 0.0
          %4514 = vmatprep.subr.mxu0 0.0
          %4515 = vmatpush2.msra.mxu0 0.0
          %4516 = vmatprep.subr.mxu0 0.0
          %4517 = vmatpush2.msra.mxu0 0.0
          %4518 = vmatprep.subr.mxu0 0.0
          %4519 = vmatpush2.msra.mxu0 0.0
          %4520 = vmatprep.subr.mxu0 0.0
          %4521 = vmatpush2.msra.mxu0 0.0
          %4522 = vmatprep.mubr.f32.mxu0 0.0
          %4523 = vmatmul.mubr.f32.gmra.mxu0 %v4456
          %v4524 = vpop.f32.mrf.mxu0
          %v4525 = vadd.f32 0.0, %v4524
          %v4526 = vpop.f32.mrf.mxu0
          %4527 = vdwg.mxu0
          %v4528 = vadd.f32 %v4446, %v4525
          %s4529 = scalar_lea.vmem %s2, 136
          %v4530 = vld [vmem:[%s4529] sm:$0xff]
          %4531 = vrot.lane.b32.xlu0 %v3142, 111
          %v4532 = vpop.permute.xlu0 %4531
          %4533 = vrot.lane.b32.xlu0 %v3140, 111
          %v4534 = vpop.permute.xlu0 %4533
          %v4535 = vsel %vm1749, %v4532, %v4534
          %v4538 = vsel %vm304, %v4530, 0
          %4540 = vmatprep.subr.mxu0 0.0
          %4541 = vmatpush1.msra.mxu0 0.0
          %4542 = vmatprep.subr.mxu0 0.0
          %4543 = vmatpush1.msra.mxu0 0.0
          %4544 = vmatprep.subr.mxu0 0.0
          %4545 = vmatpush1.msra.mxu0 0.0
          %4546 = vmatprep.subr.mxu0 0.0
          %4547 = vmatpush1.msra.mxu0 0.0
          %4548 = vmatprep.subr.mxu0 0.0
          %4549 = vmatpush1.msra.mxu0 0.0
          %4550 = vmatprep.subr.mxu0 0.0
          %4551 = vmatpush1.msra.mxu0 0.0
          %4552 = vmatprep.subr.mxu0 0.0
          %4553 = vmatpush1.msra.mxu0 0.0
          %4554 = vmatprep.subr.mxu0 0.0
          %4555 = vmatpush1.msra.mxu0 0.0
          %4556 = vmatprep.subr.mxu0 0.0
          %4557 = vmatpush1.msra.mxu0 0.0
          %4558 = vmatprep.subr.mxu0 0.0
          %4559 = vmatpush1.msra.mxu0 0.0
          %4560 = vmatprep.subr.mxu0 0.0
          %4561 = vmatpush1.msra.mxu0 0.0
          %4562 = vmatprep.subr.mxu0 0.0
          %4563 = vmatpush1.msra.mxu0 0.0
          %4564 = vmatprep.subr.mxu0 0.0
          %4565 = vmatpush1.msra.mxu0 0.0
          %4566 = vmatprep.subr.mxu0 0.0
          %4567 = vmatpush1.msra.mxu0 0.0
          %4568 = vmatprep.subr.mxu0 0.0
          %4569 = vmatpush1.msra.mxu0 0.0
          %4570 = vmatprep.subr.mxu0 0.0
          %4571 = vmatpush1.msra.mxu0 %v4535
          %4572 = vmatprep.subr.mxu0 0.0
          %4573 = vmatpush2.msra.mxu0 0.0
          %4574 = vmatprep.subr.mxu0 0.0
          %4575 = vmatpush2.msra.mxu0 0.0
          %4576 = vmatprep.subr.mxu0 0.0
          %4577 = vmatpush2.msra.mxu0 0.0
          %4578 = vmatprep.subr.mxu0 0.0
          %4579 = vmatpush2.msra.mxu0 0.0
          %4580 = vmatprep.subr.mxu0 0.0
          %4581 = vmatpush2.msra.mxu0 0.0
          %4582 = vmatprep.subr.mxu0 0.0
          %4583 = vmatpush2.msra.mxu0 0.0
          %4584 = vmatprep.subr.mxu0 0.0
          %4585 = vmatpush2.msra.mxu0 0.0
          %4586 = vmatprep.subr.mxu0 0.0
          %4587 = vmatpush2.msra.mxu0 0.0
          %4588 = vmatprep.subr.mxu0 0.0
          %4589 = vmatpush2.msra.mxu0 0.0
          %4590 = vmatprep.subr.mxu0 0.0
          %4591 = vmatpush2.msra.mxu0 0.0
          %4592 = vmatprep.subr.mxu0 0.0
          %4593 = vmatpush2.msra.mxu0 0.0
          %4594 = vmatprep.subr.mxu0 0.0
          %4595 = vmatpush2.msra.mxu0 0.0
          %4596 = vmatprep.subr.mxu0 0.0
          %4597 = vmatpush2.msra.mxu0 0.0
          %4598 = vmatprep.subr.mxu0 0.0
          %4599 = vmatpush2.msra.mxu0 0.0
          %4600 = vmatprep.subr.mxu0 0.0
          %4601 = vmatpush2.msra.mxu0 0.0
          %4602 = vmatprep.subr.mxu0 0.0
          %4603 = vmatpush2.msra.mxu0 0.0
          %4604 = vmatprep.mubr.f32.mxu0 0.0
          %4605 = vmatmul.mubr.f32.gmra.mxu0 %v4538
          %v4606 = vpop.f32.mrf.mxu0
          %v4607 = vadd.f32 0.0, %v4606
          %v4608 = vpop.f32.mrf.mxu0
          %4609 = vdwg.mxu0
          %v4610 = vadd.f32 %v4528, %v4607
          %s4611 = scalar_lea.vmem %s2, 144
          %v4612 = vld [vmem:[%s4611] sm:$0xff]
          %4613 = vrot.lane.b32.xlu0 %v3142, 110
          %v4614 = vpop.permute.xlu0 %4613
          %4615 = vrot.lane.b32.xlu0 %v3140, 110
          %v4616 = vpop.permute.xlu0 %4615
          %v4617 = vsel %vm1835, %v4614, %v4616
          %v4620 = vsel %vm304, %v4612, 0
          %4622 = vmatprep.subr.mxu0 0.0
          %4623 = vmatpush1.msra.mxu0 0.0
          %4624 = vmatprep.subr.mxu0 0.0
          %4625 = vmatpush1.msra.mxu0 0.0
          %4626 = vmatprep.subr.mxu0 0.0
          %4627 = vmatpush1.msra.mxu0 0.0
          %4628 = vmatprep.subr.mxu0 0.0
          %4629 = vmatpush1.msra.mxu0 0.0
          %4630 = vmatprep.subr.mxu0 0.0
          %4631 = vmatpush1.msra.mxu0 0.0
          %4632 = vmatprep.subr.mxu0 0.0
          %4633 = vmatpush1.msra.mxu0 0.0
          %4634 = vmatprep.subr.mxu0 0.0
          %4635 = vmatpush1.msra.mxu0 0.0
          %4636 = vmatprep.subr.mxu0 0.0
          %4637 = vmatpush1.msra.mxu0 0.0
          %4638 = vmatprep.subr.mxu0 0.0
          %4639 = vmatpush1.msra.mxu0 0.0
          %4640 = vmatprep.subr.mxu0 0.0
          %4641 = vmatpush1.msra.mxu0 0.0
          %4642 = vmatprep.subr.mxu0 0.0
          %4643 = vmatpush1.msra.mxu0 0.0
          %4644 = vmatprep.subr.mxu0 0.0
          %4645 = vmatpush1.msra.mxu0 0.0
          %4646 = vmatprep.subr.mxu0 0.0
          %4647 = vmatpush1.msra.mxu0 0.0
          %4648 = vmatprep.subr.mxu0 0.0
          %4649 = vmatpush1.msra.mxu0 0.0
          %4650 = vmatprep.subr.mxu0 0.0
          %4651 = vmatpush1.msra.mxu0 0.0
          %4652 = vmatprep.subr.mxu0 0.0
          %4653 = vmatpush1.msra.mxu0 %v4617
          %4654 = vmatprep.subr.mxu0 0.0
          %4655 = vmatpush2.msra.mxu0 0.0
          %4656 = vmatprep.subr.mxu0 0.0
          %4657 = vmatpush2.msra.mxu0 0.0
          %4658 = vmatprep.subr.mxu0 0.0
          %4659 = vmatpush2.msra.mxu0 0.0
          %4660 = vmatprep.subr.mxu0 0.0
          %4661 = vmatpush2.msra.mxu0 0.0
          %4662 = vmatprep.subr.mxu0 0.0
          %4663 = vmatpush2.msra.mxu0 0.0
          %4664 = vmatprep.subr.mxu0 0.0
          %4665 = vmatpush2.msra.mxu0 0.0
          %4666 = vmatprep.subr.mxu0 0.0
          %4667 = vmatpush2.msra.mxu0 0.0
          %4668 = vmatprep.subr.mxu0 0.0
          %4669 = vmatpush2.msra.mxu0 0.0
          %4670 = vmatprep.subr.mxu0 0.0
          %4671 = vmatpush2.msra.mxu0 0.0
          %4672 = vmatprep.subr.mxu0 0.0
          %4673 = vmatpush2.msra.mxu0 0.0
          %4674 = vmatprep.subr.mxu0 0.0
          %4675 = vmatpush2.msra.mxu0 0.0
          %4676 = vmatprep.subr.mxu0 0.0
          %4677 = vmatpush2.msra.mxu0 0.0
          %4678 = vmatprep.subr.mxu0 0.0
          %4679 = vmatpush2.msra.mxu0 0.0
          %4680 = vmatprep.subr.mxu0 0.0
          %4681 = vmatpush2.msra.mxu0 0.0
          %4682 = vmatprep.subr.mxu0 0.0
          %4683 = vmatpush2.msra.mxu0 0.0
          %4684 = vmatprep.subr.mxu0 0.0
          %4685 = vmatpush2.msra.mxu0 0.0
          %4686 = vmatprep.mubr.f32.mxu0 0.0
          %4687 = vmatmul.mubr.f32.gmra.mxu0 %v4620
          %v4688 = vpop.f32.mrf.mxu0
          %v4689 = vadd.f32 0.0, %v4688
          %v4690 = vpop.f32.mrf.mxu0
          %4691 = vdwg.mxu0
          %v4692 = vadd.f32 %v4610, %v4689
          %s4693 = scalar_lea.vmem %s2, 152
          %v4694 = vld [vmem:[%s4693] sm:$0xff]
          %4695 = vrot.lane.b32.xlu0 %v3142, 109
          %v4696 = vpop.permute.xlu0 %4695
          %4697 = vrot.lane.b32.xlu0 %v3140, 109
          %v4698 = vpop.permute.xlu0 %4697
          %v4699 = vsel %vm1921, %v4696, %v4698
          %v4702 = vsel %vm304, %v4694, 0
          %4704 = vmatprep.subr.mxu0 0.0
          %4705 = vmatpush1.msra.mxu0 0.0
          %4706 = vmatprep.subr.mxu0 0.0
          %4707 = vmatpush1.msra.mxu0 0.0
          %4708 = vmatprep.subr.mxu0 0.0
          %4709 = vmatpush1.msra.mxu0 0.0
          %4710 = vmatprep.subr.mxu0 0.0
          %4711 = vmatpush1.msra.mxu0 0.0
          %4712 = vmatprep.subr.mxu0 0.0
          %4713 = vmatpush1.msra.mxu0 0.0
          %4714 = vmatprep.subr.mxu0 0.0
          %4715 = vmatpush1.msra.mxu0 0.0
          %4716 = vmatprep.subr.mxu0 0.0
          %4717 = vmatpush1.msra.mxu0 0.0
          %4718 = vmatprep.subr.mxu0 0.0
          %4719 = vmatpush1.msra.mxu0 0.0
          %4720 = vmatprep.subr.mxu0 0.0
          %4721 = vmatpush1.msra.mxu0 0.0
          %4722 = vmatprep.subr.mxu0 0.0
          %4723 = vmatpush1.msra.mxu0 0.0
          %4724 = vmatprep.subr.mxu0 0.0
          %4725 = vmatpush1.msra.mxu0 0.0
          %4726 = vmatprep.subr.mxu0 0.0
          %4727 = vmatpush1.msra.mxu0 0.0
          %4728 = vmatprep.subr.mxu0 0.0
          %4729 = vmatpush1.msra.mxu0 0.0
          %4730 = vmatprep.subr.mxu0 0.0
          %4731 = vmatpush1.msra.mxu0 0.0
          %4732 = vmatprep.subr.mxu0 0.0
          %4733 = vmatpush1.msra.mxu0 0.0
          %4734 = vmatprep.subr.mxu0 0.0
          %4735 = vmatpush1.msra.mxu0 %v4699
          %4736 = vmatprep.subr.mxu0 0.0
          %4737 = vmatpush2.msra.mxu0 0.0
          %4738 = vmatprep.subr.mxu0 0.0
          %4739 = vmatpush2.msra.mxu0 0.0
          %4740 = vmatprep.subr.mxu0 0.0
          %4741 = vmatpush2.msra.mxu0 0.0
          %4742 = vmatprep.subr.mxu0 0.0
          %4743 = vmatpush2.msra.mxu0 0.0
          %4744 = vmatprep.subr.mxu0 0.0
          %4745 = vmatpush2.msra.mxu0 0.0
          %4746 = vmatprep.subr.mxu0 0.0
          %4747 = vmatpush2.msra.mxu0 0.0
          %4748 = vmatprep.subr.mxu0 0.0
          %4749 = vmatpush2.msra.mxu0 0.0
          %4750 = vmatprep.subr.mxu0 0.0
          %4751 = vmatpush2.msra.mxu0 0.0
          %4752 = vmatprep.subr.mxu0 0.0
          %4753 = vmatpush2.msra.mxu0 0.0
          %4754 = vmatprep.subr.mxu0 0.0
          %4755 = vmatpush2.msra.mxu0 0.0
          %4756 = vmatprep.subr.mxu0 0.0
          %4757 = vmatpush2.msra.mxu0 0.0
          %4758 = vmatprep.subr.mxu0 0.0
          %4759 = vmatpush2.msra.mxu0 0.0
          %4760 = vmatprep.subr.mxu0 0.0
          %4761 = vmatpush2.msra.mxu0 0.0
          %4762 = vmatprep.subr.mxu0 0.0
          %4763 = vmatpush2.msra.mxu0 0.0
          %4764 = vmatprep.subr.mxu0 0.0
          %4765 = vmatpush2.msra.mxu0 0.0
          %4766 = vmatprep.subr.mxu0 0.0
          %4767 = vmatpush2.msra.mxu0 0.0
          %4768 = vmatprep.mubr.f32.mxu0 0.0
          %4769 = vmatmul.mubr.f32.gmra.mxu0 %v4702
          %v4770 = vpop.f32.mrf.mxu0
          %v4771 = vadd.f32 0.0, %v4770
          %v4772 = vpop.f32.mrf.mxu0
          %4773 = vdwg.mxu0
          %v4774 = vadd.f32 %v4692, %v4771
          %s4775 = scalar_lea.vmem %s2, 160
          %v4776 = vld [vmem:[%s4775] sm:$0xff]
          %4777 = vrot.lane.b32.xlu0 %v3142, 108
          %v4778 = vpop.permute.xlu0 %4777
          %4779 = vrot.lane.b32.xlu0 %v3140, 108
          %v4780 = vpop.permute.xlu0 %4779
          %v4781 = vsel %vm2007, %v4778, %v4780
          %v4784 = vsel %vm304, %v4776, 0
          %4786 = vmatprep.subr.mxu0 0.0
          %4787 = vmatpush1.msra.mxu0 0.0
          %4788 = vmatprep.subr.mxu0 0.0
          %4789 = vmatpush1.msra.mxu0 0.0
          %4790 = vmatprep.subr.mxu0 0.0
          %4791 = vmatpush1.msra.mxu0 0.0
          %4792 = vmatprep.subr.mxu0 0.0
          %4793 = vmatpush1.msra.mxu0 0.0
          %4794 = vmatprep.subr.mxu0 0.0
          %4795 = vmatpush1.msra.mxu0 0.0
          %4796 = vmatprep.subr.mxu0 0.0
          %4797 = vmatpush1.msra.mxu0 0.0
          %4798 = vmatprep.subr.mxu0 0.0
          %4799 = vmatpush1.msra.mxu0 0.0
          %4800 = vmatprep.subr.mxu0 0.0
          %4801 = vmatpush1.msra.mxu0 0.0
          %4802 = vmatprep.subr.mxu0 0.0
          %4803 = vmatpush1.msra.mxu0 0.0
          %4804 = vmatprep.subr.mxu0 0.0
          %4805 = vmatpush1.msra.mxu0 0.0
          %4806 = vmatprep.subr.mxu0 0.0
          %4807 = vmatpush1.msra.mxu0 0.0
          %4808 = vmatprep.subr.mxu0 0.0
          %4809 = vmatpush1.msra.mxu0 0.0
          %4810 = vmatprep.subr.mxu0 0.0
          %4811 = vmatpush1.msra.mxu0 0.0
          %4812 = vmatprep.subr.mxu0 0.0
          %4813 = vmatpush1.msra.mxu0 0.0
          %4814 = vmatprep.subr.mxu0 0.0
          %4815 = vmatpush1.msra.mxu0 0.0
          %4816 = vmatprep.subr.mxu0 0.0
          %4817 = vmatpush1.msra.mxu0 %v4781
          %4818 = vmatprep.subr.mxu0 0.0
          %4819 = vmatpush2.msra.mxu0 0.0
          %4820 = vmatprep.subr.mxu0 0.0
          %4821 = vmatpush2.msra.mxu0 0.0
          %4822 = vmatprep.subr.mxu0 0.0
          %4823 = vmatpush2.msra.mxu0 0.0
          %4824 = vmatprep.subr.mxu0 0.0
          %4825 = vmatpush2.msra.mxu0 0.0
          %4826 = vmatprep.subr.mxu0 0.0
          %4827 = vmatpush2.msra.mxu0 0.0
          %4828 = vmatprep.subr.mxu0 0.0
          %4829 = vmatpush2.msra.mxu0 0.0
          %4830 = vmatprep.subr.mxu0 0.0
          %4831 = vmatpush2.msra.mxu0 0.0
          %4832 = vmatprep.subr.mxu0 0.0
          %4833 = vmatpush2.msra.mxu0 0.0
          %4834 = vmatprep.subr.mxu0 0.0
          %4835 = vmatpush2.msra.mxu0 0.0
          %4836 = vmatprep.subr.mxu0 0.0
          %4837 = vmatpush2.msra.mxu0 0.0
          %4838 = vmatprep.subr.mxu0 0.0
          %4839 = vmatpush2.msra.mxu0 0.0
          %4840 = vmatprep.subr.mxu0 0.0
          %4841 = vmatpush2.msra.mxu0 0.0
          %4842 = vmatprep.subr.mxu0 0.0
          %4843 = vmatpush2.msra.mxu0 0.0
          %4844 = vmatprep.subr.mxu0 0.0
          %4845 = vmatpush2.msra.mxu0 0.0
          %4846 = vmatprep.subr.mxu0 0.0
          %4847 = vmatpush2.msra.mxu0 0.0
          %4848 = vmatprep.subr.mxu0 0.0
          %4849 = vmatpush2.msra.mxu0 0.0
          %4850 = vmatprep.mubr.f32.mxu0 0.0
          %4851 = vmatmul.mubr.f32.gmra.mxu0 %v4784
          %v4852 = vpop.f32.mrf.mxu0
          %v4853 = vadd.f32 0.0, %v4852
          %v4854 = vpop.f32.mrf.mxu0
          %4855 = vdwg.mxu0
          %v4856 = vadd.f32 %v4774, %v4853
          %s4857 = scalar_lea.vmem %s2, 168
          %v4858 = vld [vmem:[%s4857] sm:$0xff]
          %4859 = vrot.lane.b32.xlu0 %v3142, 107
          %v4860 = vpop.permute.xlu0 %4859
          %4861 = vrot.lane.b32.xlu0 %v3140, 107
          %v4862 = vpop.permute.xlu0 %4861
          %v4863 = vsel %vm2093, %v4860, %v4862
          %v4866 = vsel %vm304, %v4858, 0
          %4868 = vmatprep.subr.mxu0 0.0
          %4869 = vmatpush1.msra.mxu0 0.0
          %4870 = vmatprep.subr.mxu0 0.0
          %4871 = vmatpush1.msra.mxu0 0.0
          %4872 = vmatprep.subr.mxu0 0.0
          %4873 = vmatpush1.msra.mxu0 0.0
          %4874 = vmatprep.subr.mxu0 0.0
          %4875 = vmatpush1.msra.mxu0 0.0
          %4876 = vmatprep.subr.mxu0 0.0
          %4877 = vmatpush1.msra.mxu0 0.0
          %4878 = vmatprep.subr.mxu0 0.0
          %4879 = vmatpush1.msra.mxu0 0.0
          %4880 = vmatprep.subr.mxu0 0.0
          %4881 = vmatpush1.msra.mxu0 0.0
          %4882 = vmatprep.subr.mxu0 0.0
          %4883 = vmatpush1.msra.mxu0 0.0
          %4884 = vmatprep.subr.mxu0 0.0
          %4885 = vmatpush1.msra.mxu0 0.0
          %4886 = vmatprep.subr.mxu0 0.0
          %4887 = vmatpush1.msra.mxu0 0.0
          %4888 = vmatprep.subr.mxu0 0.0
          %4889 = vmatpush1.msra.mxu0 0.0
          %4890 = vmatprep.subr.mxu0 0.0
          %4891 = vmatpush1.msra.mxu0 0.0
          %4892 = vmatprep.subr.mxu0 0.0
          %4893 = vmatpush1.msra.mxu0 0.0
          %4894 = vmatprep.subr.mxu0 0.0
          %4895 = vmatpush1.msra.mxu0 0.0
          %4896 = vmatprep.subr.mxu0 0.0
          %4897 = vmatpush1.msra.mxu0 0.0
          %4898 = vmatprep.subr.mxu0 0.0
          %4899 = vmatpush1.msra.mxu0 %v4863
          %4900 = vmatprep.subr.mxu0 0.0
          %4901 = vmatpush2.msra.mxu0 0.0
          %4902 = vmatprep.subr.mxu0 0.0
          %4903 = vmatpush2.msra.mxu0 0.0
          %4904 = vmatprep.subr.mxu0 0.0
          %4905 = vmatpush2.msra.mxu0 0.0
          %4906 = vmatprep.subr.mxu0 0.0
          %4907 = vmatpush2.msra.mxu0 0.0
          %4908 = vmatprep.subr.mxu0 0.0
          %4909 = vmatpush2.msra.mxu0 0.0
          %4910 = vmatprep.subr.mxu0 0.0
          %4911 = vmatpush2.msra.mxu0 0.0
          %4912 = vmatprep.subr.mxu0 0.0
          %4913 = vmatpush2.msra.mxu0 0.0
          %4914 = vmatprep.subr.mxu0 0.0
          %4915 = vmatpush2.msra.mxu0 0.0
          %4916 = vmatprep.subr.mxu0 0.0
          %4917 = vmatpush2.msra.mxu0 0.0
          %4918 = vmatprep.subr.mxu0 0.0
          %4919 = vmatpush2.msra.mxu0 0.0
          %4920 = vmatprep.subr.mxu0 0.0
          %4921 = vmatpush2.msra.mxu0 0.0
          %4922 = vmatprep.subr.mxu0 0.0
          %4923 = vmatpush2.msra.mxu0 0.0
          %4924 = vmatprep.subr.mxu0 0.0
          %4925 = vmatpush2.msra.mxu0 0.0
          %4926 = vmatprep.subr.mxu0 0.0
          %4927 = vmatpush2.msra.mxu0 0.0
          %4928 = vmatprep.subr.mxu0 0.0
          %4929 = vmatpush2.msra.mxu0 0.0
          %4930 = vmatprep.subr.mxu0 0.0
          %4931 = vmatpush2.msra.mxu0 0.0
          %4932 = vmatprep.mubr.f32.mxu0 0.0
          %4933 = vmatmul.mubr.f32.gmra.mxu0 %v4866
          %v4934 = vpop.f32.mrf.mxu0
          %v4935 = vadd.f32 0.0, %v4934
          %v4936 = vpop.f32.mrf.mxu0
          %4937 = vdwg.mxu0
          %v4938 = vadd.f32 %v4856, %v4935
          %s4939 = scalar_lea.vmem %s2, 176
          %v4940 = vld [vmem:[%s4939] sm:$0xff]
          %4941 = vrot.lane.b32.xlu0 %v3142, 106
          %v4942 = vpop.permute.xlu0 %4941
          %4943 = vrot.lane.b32.xlu0 %v3140, 106
          %v4944 = vpop.permute.xlu0 %4943
          %v4945 = vsel %vm2179, %v4942, %v4944
          %v4948 = vsel %vm304, %v4940, 0
          %4950 = vmatprep.subr.mxu0 0.0
          %4951 = vmatpush1.msra.mxu0 0.0
          %4952 = vmatprep.subr.mxu0 0.0
          %4953 = vmatpush1.msra.mxu0 0.0
          %4954 = vmatprep.subr.mxu0 0.0
          %4955 = vmatpush1.msra.mxu0 0.0
          %4956 = vmatprep.subr.mxu0 0.0
          %4957 = vmatpush1.msra.mxu0 0.0
          %4958 = vmatprep.subr.mxu0 0.0
          %4959 = vmatpush1.msra.mxu0 0.0
          %4960 = vmatprep.subr.mxu0 0.0
          %4961 = vmatpush1.msra.mxu0 0.0
          %4962 = vmatprep.subr.mxu0 0.0
          %4963 = vmatpush1.msra.mxu0 0.0
          %4964 = vmatprep.subr.mxu0 0.0
          %4965 = vmatpush1.msra.mxu0 0.0
          %4966 = vmatprep.subr.mxu0 0.0
          %4967 = vmatpush1.msra.mxu0 0.0
          %4968 = vmatprep.subr.mxu0 0.0
          %4969 = vmatpush1.msra.mxu0 0.0
          %4970 = vmatprep.subr.mxu0 0.0
          %4971 = vmatpush1.msra.mxu0 0.0
          %4972 = vmatprep.subr.mxu0 0.0
          %4973 = vmatpush1.msra.mxu0 0.0
          %4974 = vmatprep.subr.mxu0 0.0
          %4975 = vmatpush1.msra.mxu0 0.0
          %4976 = vmatprep.subr.mxu0 0.0
          %4977 = vmatpush1.msra.mxu0 0.0
          %4978 = vmatprep.subr.mxu0 0.0
          %4979 = vmatpush1.msra.mxu0 0.0
          %4980 = vmatprep.subr.mxu0 0.0
          %4981 = vmatpush1.msra.mxu0 %v4945
          %4982 = vmatprep.subr.mxu0 0.0
          %4983 = vmatpush2.msra.mxu0 0.0
          %4984 = vmatprep.subr.mxu0 0.0
          %4985 = vmatpush2.msra.mxu0 0.0
          %4986 = vmatprep.subr.mxu0 0.0
          %4987 = vmatpush2.msra.mxu0 0.0
          %4988 = vmatprep.subr.mxu0 0.0
          %4989 = vmatpush2.msra.mxu0 0.0
          %4990 = vmatprep.subr.mxu0 0.0
          %4991 = vmatpush2.msra.mxu0 0.0
          %4992 = vmatprep.subr.mxu0 0.0
          %4993 = vmatpush2.msra.mxu0 0.0
          %4994 = vmatprep.subr.mxu0 0.0
          %4995 = vmatpush2.msra.mxu0 0.0
          %4996 = vmatprep.subr.mxu0 0.0
          %4997 = vmatpush2.msra.mxu0 0.0
          %4998 = vmatprep.subr.mxu0 0.0
          %4999 = vmatpush2.msra.mxu0 0.0
          %5000 = vmatprep.subr.mxu0 0.0
          %5001 = vmatpush2.msra.mxu0 0.0
          %5002 = vmatprep.subr.mxu0 0.0
          %5003 = vmatpush2.msra.mxu0 0.0
          %5004 = vmatprep.subr.mxu0 0.0
          %5005 = vmatpush2.msra.mxu0 0.0
          %5006 = vmatprep.subr.mxu0 0.0
          %5007 = vmatpush2.msra.mxu0 0.0
          %5008 = vmatprep.subr.mxu0 0.0
          %5009 = vmatpush2.msra.mxu0 0.0
          %5010 = vmatprep.subr.mxu0 0.0
          %5011 = vmatpush2.msra.mxu0 0.0
          %5012 = vmatprep.subr.mxu0 0.0
          %5013 = vmatpush2.msra.mxu0 0.0
          %5014 = vmatprep.mubr.f32.mxu0 0.0
          %5015 = vmatmul.mubr.f32.gmra.mxu0 %v4948
          %v5016 = vpop.f32.mrf.mxu0
          %v5017 = vadd.f32 0.0, %v5016
          %v5018 = vpop.f32.mrf.mxu0
          %5019 = vdwg.mxu0
          %v5020 = vadd.f32 %v4938, %v5017
          %s5021 = scalar_lea.vmem %s2, 184
          %v5022 = vld [vmem:[%s5021] sm:$0xff]
          %5023 = vrot.lane.b32.xlu0 %v3142, 105
          %v5024 = vpop.permute.xlu0 %5023
          %5025 = vrot.lane.b32.xlu0 %v3140, 105
          %v5026 = vpop.permute.xlu0 %5025
          %v5027 = vsel %vm2265, %v5024, %v5026
          %v5030 = vsel %vm304, %v5022, 0
          %5032 = vmatprep.subr.mxu0 0.0
          %5033 = vmatpush1.msra.mxu0 0.0
          %5034 = vmatprep.subr.mxu0 0.0
          %5035 = vmatpush1.msra.mxu0 0.0
          %5036 = vmatprep.subr.mxu0 0.0
          %5037 = vmatpush1.msra.mxu0 0.0
          %5038 = vmatprep.subr.mxu0 0.0
          %5039 = vmatpush1.msra.mxu0 0.0
          %5040 = vmatprep.subr.mxu0 0.0
          %5041 = vmatpush1.msra.mxu0 0.0
          %5042 = vmatprep.subr.mxu0 0.0
          %5043 = vmatpush1.msra.mxu0 0.0
          %5044 = vmatprep.subr.mxu0 0.0
          %5045 = vmatpush1.msra.mxu0 0.0
          %5046 = vmatprep.subr.mxu0 0.0
          %5047 = vmatpush1.msra.mxu0 0.0
          %5048 = vmatprep.subr.mxu0 0.0
          %5049 = vmatpush1.msra.mxu0 0.0
          %5050 = vmatprep.subr.mxu0 0.0
          %5051 = vmatpush1.msra.mxu0 0.0
          %5052 = vmatprep.subr.mxu0 0.0
          %5053 = vmatpush1.msra.mxu0 0.0
          %5054 = vmatprep.subr.mxu0 0.0
          %5055 = vmatpush1.msra.mxu0 0.0
          %5056 = vmatprep.subr.mxu0 0.0
          %5057 = vmatpush1.msra.mxu0 0.0
          %5058 = vmatprep.subr.mxu0 0.0
          %5059 = vmatpush1.msra.mxu0 0.0
          %5060 = vmatprep.subr.mxu0 0.0
          %5061 = vmatpush1.msra.mxu0 0.0
          %5062 = vmatprep.subr.mxu0 0.0
          %5063 = vmatpush1.msra.mxu0 %v5027
          %5064 = vmatprep.subr.mxu0 0.0
          %5065 = vmatpush2.msra.mxu0 0.0
          %5066 = vmatprep.subr.mxu0 0.0
          %5067 = vmatpush2.msra.mxu0 0.0
          %5068 = vmatprep.subr.mxu0 0.0
          %5069 = vmatpush2.msra.mxu0 0.0
          %5070 = vmatprep.subr.mxu0 0.0
          %5071 = vmatpush2.msra.mxu0 0.0
          %5072 = vmatprep.subr.mxu0 0.0
          %5073 = vmatpush2.msra.mxu0 0.0
          %5074 = vmatprep.subr.mxu0 0.0
          %5075 = vmatpush2.msra.mxu0 0.0
          %5076 = vmatprep.subr.mxu0 0.0
          %5077 = vmatpush2.msra.mxu0 0.0
          %5078 = vmatprep.subr.mxu0 0.0
          %5079 = vmatpush2.msra.mxu0 0.0
          %5080 = vmatprep.subr.mxu0 0.0
          %5081 = vmatpush2.msra.mxu0 0.0
          %5082 = vmatprep.subr.mxu0 0.0
          %5083 = vmatpush2.msra.mxu0 0.0
          %5084 = vmatprep.subr.mxu0 0.0
          %5085 = vmatpush2.msra.mxu0 0.0
          %5086 = vmatprep.subr.mxu0 0.0
          %5087 = vmatpush2.msra.mxu0 0.0
          %5088 = vmatprep.subr.mxu0 0.0
          %5089 = vmatpush2.msra.mxu0 0.0
          %5090 = vmatprep.subr.mxu0 0.0
          %5091 = vmatpush2.msra.mxu0 0.0
          %5092 = vmatprep.subr.mxu0 0.0
          %5093 = vmatpush2.msra.mxu0 0.0
          %5094 = vmatprep.subr.mxu0 0.0
          %5095 = vmatpush2.msra.mxu0 0.0
          %5096 = vmatprep.mubr.f32.mxu0 0.0
          %5097 = vmatmul.mubr.f32.gmra.mxu0 %v5030
          %v5098 = vpop.f32.mrf.mxu0
          %v5099 = vadd.f32 0.0, %v5098
          %v5100 = vpop.f32.mrf.mxu0
          %5101 = vdwg.mxu0
          %v5102 = vadd.f32 %v5020, %v5099
          %s5103 = scalar_lea.vmem %s2, 192
          %v5104 = vld [vmem:[%s5103] sm:$0xff]
          %5105 = vrot.lane.b32.xlu0 %v3142, 104
          %v5106 = vpop.permute.xlu0 %5105
          %5107 = vrot.lane.b32.xlu0 %v3140, 104
          %v5108 = vpop.permute.xlu0 %5107
          %v5109 = vsel %vm2351, %v5106, %v5108
          %v5112 = vsel %vm304, %v5104, 0
          %5114 = vmatprep.subr.mxu0 0.0
          %5115 = vmatpush1.msra.mxu0 0.0
          %5116 = vmatprep.subr.mxu0 0.0
          %5117 = vmatpush1.msra.mxu0 0.0
          %5118 = vmatprep.subr.mxu0 0.0
          %5119 = vmatpush1.msra.mxu0 0.0
          %5120 = vmatprep.subr.mxu0 0.0
          %5121 = vmatpush1.msra.mxu0 0.0
          %5122 = vmatprep.subr.mxu0 0.0
          %5123 = vmatpush1.msra.mxu0 0.0
          %5124 = vmatprep.subr.mxu0 0.0
          %5125 = vmatpush1.msra.mxu0 0.0
          %5126 = vmatprep.subr.mxu0 0.0
          %5127 = vmatpush1.msra.mxu0 0.0
          %5128 = vmatprep.subr.mxu0 0.0
          %5129 = vmatpush1.msra.mxu0 0.0
          %5130 = vmatprep.subr.mxu0 0.0
          %5131 = vmatpush1.msra.mxu0 0.0
          %5132 = vmatprep.subr.mxu0 0.0
          %5133 = vmatpush1.msra.mxu0 0.0
          %5134 = vmatprep.subr.mxu0 0.0
          %5135 = vmatpush1.msra.mxu0 0.0
          %5136 = vmatprep.subr.mxu0 0.0
          %5137 = vmatpush1.msra.mxu0 0.0
          %5138 = vmatprep.subr.mxu0 0.0
          %5139 = vmatpush1.msra.mxu0 0.0
          %5140 = vmatprep.subr.mxu0 0.0
          %5141 = vmatpush1.msra.mxu0 0.0
          %5142 = vmatprep.subr.mxu0 0.0
          %5143 = vmatpush1.msra.mxu0 0.0
          %5144 = vmatprep.subr.mxu0 0.0
          %5145 = vmatpush1.msra.mxu0 %v5109
          %5146 = vmatprep.subr.mxu0 0.0
          %5147 = vmatpush2.msra.mxu0 0.0
          %5148 = vmatprep.subr.mxu0 0.0
          %5149 = vmatpush2.msra.mxu0 0.0
          %5150 = vmatprep.subr.mxu0 0.0
          %5151 = vmatpush2.msra.mxu0 0.0
          %5152 = vmatprep.subr.mxu0 0.0
          %5153 = vmatpush2.msra.mxu0 0.0
          %5154 = vmatprep.subr.mxu0 0.0
          %5155 = vmatpush2.msra.mxu0 0.0
          %5156 = vmatprep.subr.mxu0 0.0
          %5157 = vmatpush2.msra.mxu0 0.0
          %5158 = vmatprep.subr.mxu0 0.0
          %5159 = vmatpush2.msra.mxu0 0.0
          %5160 = vmatprep.subr.mxu0 0.0
          %5161 = vmatpush2.msra.mxu0 0.0
          %5162 = vmatprep.subr.mxu0 0.0
          %5163 = vmatpush2.msra.mxu0 0.0
          %5164 = vmatprep.subr.mxu0 0.0
          %5165 = vmatpush2.msra.mxu0 0.0
          %5166 = vmatprep.subr.mxu0 0.0
          %5167 = vmatpush2.msra.mxu0 0.0
          %5168 = vmatprep.subr.mxu0 0.0
          %5169 = vmatpush2.msra.mxu0 0.0
          %5170 = vmatprep.subr.mxu0 0.0
          %5171 = vmatpush2.msra.mxu0 0.0
          %5172 = vmatprep.subr.mxu0 0.0
          %5173 = vmatpush2.msra.mxu0 0.0
          %5174 = vmatprep.subr.mxu0 0.0
          %5175 = vmatpush2.msra.mxu0 0.0
          %5176 = vmatprep.subr.mxu0 0.0
          %5177 = vmatpush2.msra.mxu0 0.0
          %5178 = vmatprep.mubr.f32.mxu0 0.0
          %5179 = vmatmul.mubr.f32.gmra.mxu0 %v5112
          %v5180 = vpop.f32.mrf.mxu0
          %v5181 = vadd.f32 0.0, %v5180
          %v5182 = vpop.f32.mrf.mxu0
          %5183 = vdwg.mxu0
          %v5184 = vadd.f32 %v5102, %v5181
          %s5185 = scalar_lea.vmem %s2, 200
          %v5186 = vld [vmem:[%s5185] sm:$0xff]
          %5187 = vrot.lane.b32.xlu0 %v3142, 103
          %v5188 = vpop.permute.xlu0 %5187
          %5189 = vrot.lane.b32.xlu0 %v3140, 103
          %v5190 = vpop.permute.xlu0 %5189
          %v5191 = vsel %vm2437, %v5188, %v5190
          %v5194 = vsel %vm304, %v5186, 0
          %5196 = vmatprep.subr.mxu0 0.0
          %5197 = vmatpush1.msra.mxu0 0.0
          %5198 = vmatprep.subr.mxu0 0.0
          %5199 = vmatpush1.msra.mxu0 0.0
          %5200 = vmatprep.subr.mxu0 0.0
          %5201 = vmatpush1.msra.mxu0 0.0
          %5202 = vmatprep.subr.mxu0 0.0
          %5203 = vmatpush1.msra.mxu0 0.0
          %5204 = vmatprep.subr.mxu0 0.0
          %5205 = vmatpush1.msra.mxu0 0.0
          %5206 = vmatprep.subr.mxu0 0.0
          %5207 = vmatpush1.msra.mxu0 0.0
          %5208 = vmatprep.subr.mxu0 0.0
          %5209 = vmatpush1.msra.mxu0 0.0
          %5210 = vmatprep.subr.mxu0 0.0
          %5211 = vmatpush1.msra.mxu0 0.0
          %5212 = vmatprep.subr.mxu0 0.0
          %5213 = vmatpush1.msra.mxu0 0.0
          %5214 = vmatprep.subr.mxu0 0.0
          %5215 = vmatpush1.msra.mxu0 0.0
          %5216 = vmatprep.subr.mxu0 0.0
          %5217 = vmatpush1.msra.mxu0 0.0
          %5218 = vmatprep.subr.mxu0 0.0
          %5219 = vmatpush1.msra.mxu0 0.0
          %5220 = vmatprep.subr.mxu0 0.0
          %5221 = vmatpush1.msra.mxu0 0.0
          %5222 = vmatprep.subr.mxu0 0.0
          %5223 = vmatpush1.msra.mxu0 0.0
          %5224 = vmatprep.subr.mxu0 0.0
          %5225 = vmatpush1.msra.mxu0 0.0
          %5226 = vmatprep.subr.mxu0 0.0
          %5227 = vmatpush1.msra.mxu0 %v5191
          %5228 = vmatprep.subr.mxu0 0.0
          %5229 = vmatpush2.msra.mxu0 0.0
          %5230 = vmatprep.subr.mxu0 0.0
          %5231 = vmatpush2.msra.mxu0 0.0
          %5232 = vmatprep.subr.mxu0 0.0
          %5233 = vmatpush2.msra.mxu0 0.0
          %5234 = vmatprep.subr.mxu0 0.0
          %5235 = vmatpush2.msra.mxu0 0.0
          %5236 = vmatprep.subr.mxu0 0.0
          %5237 = vmatpush2.msra.mxu0 0.0
          %5238 = vmatprep.subr.mxu0 0.0
          %5239 = vmatpush2.msra.mxu0 0.0
          %5240 = vmatprep.subr.mxu0 0.0
          %5241 = vmatpush2.msra.mxu0 0.0
          %5242 = vmatprep.subr.mxu0 0.0
          %5243 = vmatpush2.msra.mxu0 0.0
          %5244 = vmatprep.subr.mxu0 0.0
          %5245 = vmatpush2.msra.mxu0 0.0
          %5246 = vmatprep.subr.mxu0 0.0
          %5247 = vmatpush2.msra.mxu0 0.0
          %5248 = vmatprep.subr.mxu0 0.0
          %5249 = vmatpush2.msra.mxu0 0.0
          %5250 = vmatprep.subr.mxu0 0.0
          %5251 = vmatpush2.msra.mxu0 0.0
          %5252 = vmatprep.subr.mxu0 0.0
          %5253 = vmatpush2.msra.mxu0 0.0
          %5254 = vmatprep.subr.mxu0 0.0
          %5255 = vmatpush2.msra.mxu0 0.0
          %5256 = vmatprep.subr.mxu0 0.0
          %5257 = vmatpush2.msra.mxu0 0.0
          %5258 = vmatprep.subr.mxu0 0.0
          %5259 = vmatpush2.msra.mxu0 0.0
          %5260 = vmatprep.mubr.f32.mxu0 0.0
          %5261 = vmatmul.mubr.f32.gmra.mxu0 %v5194
          %v5262 = vpop.f32.mrf.mxu0
          %v5263 = vadd.f32 0.0, %v5262
          %v5264 = vpop.f32.mrf.mxu0
          %5265 = vdwg.mxu0
          %v5266 = vadd.f32 %v5184, %v5263
          %s5267 = scalar_lea.vmem %s2, 208
          %v5268 = vld [vmem:[%s5267] sm:$0xff]
          %5269 = vrot.lane.b32.xlu0 %v3142, 102
          %v5270 = vpop.permute.xlu0 %5269
          %5271 = vrot.lane.b32.xlu0 %v3140, 102
          %v5272 = vpop.permute.xlu0 %5271
          %v5273 = vsel %vm2523, %v5270, %v5272
          %v5276 = vsel %vm304, %v5268, 0
          %5278 = vmatprep.subr.mxu0 0.0
          %5279 = vmatpush1.msra.mxu0 0.0
          %5280 = vmatprep.subr.mxu0 0.0
          %5281 = vmatpush1.msra.mxu0 0.0
          %5282 = vmatprep.subr.mxu0 0.0
          %5283 = vmatpush1.msra.mxu0 0.0
          %5284 = vmatprep.subr.mxu0 0.0
          %5285 = vmatpush1.msra.mxu0 0.0
          %5286 = vmatprep.subr.mxu0 0.0
          %5287 = vmatpush1.msra.mxu0 0.0
          %5288 = vmatprep.subr.mxu0 0.0
          %5289 = vmatpush1.msra.mxu0 0.0
          %5290 = vmatprep.subr.mxu0 0.0
          %5291 = vmatpush1.msra.mxu0 0.0
          %5292 = vmatprep.subr.mxu0 0.0
          %5293 = vmatpush1.msra.mxu0 0.0
          %5294 = vmatprep.subr.mxu0 0.0
          %5295 = vmatpush1.msra.mxu0 0.0
          %5296 = vmatprep.subr.mxu0 0.0
          %5297 = vmatpush1.msra.mxu0 0.0
          %5298 = vmatprep.subr.mxu0 0.0
          %5299 = vmatpush1.msra.mxu0 0.0
          %5300 = vmatprep.subr.mxu0 0.0
          %5301 = vmatpush1.msra.mxu0 0.0
          %5302 = vmatprep.subr.mxu0 0.0
          %5303 = vmatpush1.msra.mxu0 0.0
          %5304 = vmatprep.subr.mxu0 0.0
          %5305 = vmatpush1.msra.mxu0 0.0
          %5306 = vmatprep.subr.mxu0 0.0
          %5307 = vmatpush1.msra.mxu0 0.0
          %5308 = vmatprep.subr.mxu0 0.0
          %5309 = vmatpush1.msra.mxu0 %v5273
          %5310 = vmatprep.subr.mxu0 0.0
          %5311 = vmatpush2.msra.mxu0 0.0
          %5312 = vmatprep.subr.mxu0 0.0
          %5313 = vmatpush2.msra.mxu0 0.0
          %5314 = vmatprep.subr.mxu0 0.0
          %5315 = vmatpush2.msra.mxu0 0.0
          %5316 = vmatprep.subr.mxu0 0.0
          %5317 = vmatpush2.msra.mxu0 0.0
          %5318 = vmatprep.subr.mxu0 0.0
          %5319 = vmatpush2.msra.mxu0 0.0
          %5320 = vmatprep.subr.mxu0 0.0
          %5321 = vmatpush2.msra.mxu0 0.0
          %5322 = vmatprep.subr.mxu0 0.0
          %5323 = vmatpush2.msra.mxu0 0.0
          %5324 = vmatprep.subr.mxu0 0.0
          %5325 = vmatpush2.msra.mxu0 0.0
          %5326 = vmatprep.subr.mxu0 0.0
          %5327 = vmatpush2.msra.mxu0 0.0
          %5328 = vmatprep.subr.mxu0 0.0
          %5329 = vmatpush2.msra.mxu0 0.0
          %5330 = vmatprep.subr.mxu0 0.0
          %5331 = vmatpush2.msra.mxu0 0.0
          %5332 = vmatprep.subr.mxu0 0.0
          %5333 = vmatpush2.msra.mxu0 0.0
          %5334 = vmatprep.subr.mxu0 0.0
          %5335 = vmatpush2.msra.mxu0 0.0
          %5336 = vmatprep.subr.mxu0 0.0
          %5337 = vmatpush2.msra.mxu0 0.0
          %5338 = vmatprep.subr.mxu0 0.0
          %5339 = vmatpush2.msra.mxu0 0.0
          %5340 = vmatprep.subr.mxu0 0.0
          %5341 = vmatpush2.msra.mxu0 0.0
          %5342 = vmatprep.mubr.f32.mxu0 0.0
          %5343 = vmatmul.mubr.f32.gmra.mxu0 %v5276
          %v5344 = vpop.f32.mrf.mxu0
          %v5345 = vadd.f32 0.0, %v5344
          %v5346 = vpop.f32.mrf.mxu0
          %5347 = vdwg.mxu0
          %v5348 = vadd.f32 %v5266, %v5345
          %s5349 = scalar_lea.vmem %s2, 216
          %v5350 = vld [vmem:[%s5349] sm:$0xff]
          %5351 = vrot.lane.b32.xlu0 %v3142, 101
          %v5352 = vpop.permute.xlu0 %5351
          %5353 = vrot.lane.b32.xlu0 %v3140, 101
          %v5354 = vpop.permute.xlu0 %5353
          %v5355 = vsel %vm2609, %v5352, %v5354
          %v5358 = vsel %vm304, %v5350, 0
          %5360 = vmatprep.subr.mxu0 0.0
          %5361 = vmatpush1.msra.mxu0 0.0
          %5362 = vmatprep.subr.mxu0 0.0
          %5363 = vmatpush1.msra.mxu0 0.0
          %5364 = vmatprep.subr.mxu0 0.0
          %5365 = vmatpush1.msra.mxu0 0.0
          %5366 = vmatprep.subr.mxu0 0.0
          %5367 = vmatpush1.msra.mxu0 0.0
          %5368 = vmatprep.subr.mxu0 0.0
          %5369 = vmatpush1.msra.mxu0 0.0
          %5370 = vmatprep.subr.mxu0 0.0
          %5371 = vmatpush1.msra.mxu0 0.0
          %5372 = vmatprep.subr.mxu0 0.0
          %5373 = vmatpush1.msra.mxu0 0.0
          %5374 = vmatprep.subr.mxu0 0.0
          %5375 = vmatpush1.msra.mxu0 0.0
          %5376 = vmatprep.subr.mxu0 0.0
          %5377 = vmatpush1.msra.mxu0 0.0
          %5378 = vmatprep.subr.mxu0 0.0
          %5379 = vmatpush1.msra.mxu0 0.0
          %5380 = vmatprep.subr.mxu0 0.0
          %5381 = vmatpush1.msra.mxu0 0.0
          %5382 = vmatprep.subr.mxu0 0.0
          %5383 = vmatpush1.msra.mxu0 0.0
          %5384 = vmatprep.subr.mxu0 0.0
          %5385 = vmatpush1.msra.mxu0 0.0
          %5386 = vmatprep.subr.mxu0 0.0
          %5387 = vmatpush1.msra.mxu0 0.0
          %5388 = vmatprep.subr.mxu0 0.0
          %5389 = vmatpush1.msra.mxu0 0.0
          %5390 = vmatprep.subr.mxu0 0.0
          %5391 = vmatpush1.msra.mxu0 %v5355
          %5392 = vmatprep.subr.mxu0 0.0
          %5393 = vmatpush2.msra.mxu0 0.0
          %5394 = vmatprep.subr.mxu0 0.0
          %5395 = vmatpush2.msra.mxu0 0.0
          %5396 = vmatprep.subr.mxu0 0.0
          %5397 = vmatpush2.msra.mxu0 0.0
          %5398 = vmatprep.subr.mxu0 0.0
          %5399 = vmatpush2.msra.mxu0 0.0
          %5400 = vmatprep.subr.mxu0 0.0
          %5401 = vmatpush2.msra.mxu0 0.0
          %5402 = vmatprep.subr.mxu0 0.0
          %5403 = vmatpush2.msra.mxu0 0.0
          %5404 = vmatprep.subr.mxu0 0.0
          %5405 = vmatpush2.msra.mxu0 0.0
          %5406 = vmatprep.subr.mxu0 0.0
          %5407 = vmatpush2.msra.mxu0 0.0
          %5408 = vmatprep.subr.mxu0 0.0
          %5409 = vmatpush2.msra.mxu0 0.0
          %5410 = vmatprep.subr.mxu0 0.0
          %5411 = vmatpush2.msra.mxu0 0.0
          %5412 = vmatprep.subr.mxu0 0.0
          %5413 = vmatpush2.msra.mxu0 0.0
          %5414 = vmatprep.subr.mxu0 0.0
          %5415 = vmatpush2.msra.mxu0 0.0
          %5416 = vmatprep.subr.mxu0 0.0
          %5417 = vmatpush2.msra.mxu0 0.0
          %5418 = vmatprep.subr.mxu0 0.0
          %5419 = vmatpush2.msra.mxu0 0.0
          %5420 = vmatprep.subr.mxu0 0.0
          %5421 = vmatpush2.msra.mxu0 0.0
          %5422 = vmatprep.subr.mxu0 0.0
          %5423 = vmatpush2.msra.mxu0 0.0
          %5424 = vmatprep.mubr.f32.mxu0 0.0
          %5425 = vmatmul.mubr.f32.gmra.mxu0 %v5358
          %v5426 = vpop.f32.mrf.mxu0
          %v5427 = vadd.f32 0.0, %v5426
          %v5428 = vpop.f32.mrf.mxu0
          %5429 = vdwg.mxu0
          %v5430 = vadd.f32 %v5348, %v5427
          %s5431 = scalar_lea.vmem %s2, 224
          %v5432 = vld [vmem:[%s5431] sm:$0xff]
          %5433 = vrot.lane.b32.xlu0 %v3142, 100
          %v5434 = vpop.permute.xlu0 %5433
          %5435 = vrot.lane.b32.xlu0 %v3140, 100
          %v5436 = vpop.permute.xlu0 %5435
          %v5437 = vsel %vm2695, %v5434, %v5436
          %v5440 = vsel %vm304, %v5432, 0
          %5442 = vmatprep.subr.mxu0 0.0
          %5443 = vmatpush1.msra.mxu0 0.0
          %5444 = vmatprep.subr.mxu0 0.0
          %5445 = vmatpush1.msra.mxu0 0.0
          %5446 = vmatprep.subr.mxu0 0.0
          %5447 = vmatpush1.msra.mxu0 0.0
          %5448 = vmatprep.subr.mxu0 0.0
          %5449 = vmatpush1.msra.mxu0 0.0
          %5450 = vmatprep.subr.mxu0 0.0
          %5451 = vmatpush1.msra.mxu0 0.0
          %5452 = vmatprep.subr.mxu0 0.0
          %5453 = vmatpush1.msra.mxu0 0.0
          %5454 = vmatprep.subr.mxu0 0.0
          %5455 = vmatpush1.msra.mxu0 0.0
          %5456 = vmatprep.subr.mxu0 0.0
          %5457 = vmatpush1.msra.mxu0 0.0
          %5458 = vmatprep.subr.mxu0 0.0
          %5459 = vmatpush1.msra.mxu0 0.0
          %5460 = vmatprep.subr.mxu0 0.0
          %5461 = vmatpush1.msra.mxu0 0.0
          %5462 = vmatprep.subr.mxu0 0.0
          %5463 = vmatpush1.msra.mxu0 0.0
          %5464 = vmatprep.subr.mxu0 0.0
          %5465 = vmatpush1.msra.mxu0 0.0
          %5466 = vmatprep.subr.mxu0 0.0
          %5467 = vmatpush1.msra.mxu0 0.0
          %5468 = vmatprep.subr.mxu0 0.0
          %5469 = vmatpush1.msra.mxu0 0.0
          %5470 = vmatprep.subr.mxu0 0.0
          %5471 = vmatpush1.msra.mxu0 0.0
          %5472 = vmatprep.subr.mxu0 0.0
          %5473 = vmatpush1.msra.mxu0 %v5437
          %5474 = vmatprep.subr.mxu0 0.0
          %5475 = vmatpush2.msra.mxu0 0.0
          %5476 = vmatprep.subr.mxu0 0.0
          %5477 = vmatpush2.msra.mxu0 0.0
          %5478 = vmatprep.subr.mxu0 0.0
          %5479 = vmatpush2.msra.mxu0 0.0
          %5480 = vmatprep.subr.mxu0 0.0
          %5481 = vmatpush2.msra.mxu0 0.0
          %5482 = vmatprep.subr.mxu0 0.0
          %5483 = vmatpush2.msra.mxu0 0.0
          %5484 = vmatprep.subr.mxu0 0.0
          %5485 = vmatpush2.msra.mxu0 0.0
          %5486 = vmatprep.subr.mxu0 0.0
          %5487 = vmatpush2.msra.mxu0 0.0
          %5488 = vmatprep.subr.mxu0 0.0
          %5489 = vmatpush2.msra.mxu0 0.0
          %5490 = vmatprep.subr.mxu0 0.0
          %5491 = vmatpush2.msra.mxu0 0.0
          %5492 = vmatprep.subr.mxu0 0.0
          %5493 = vmatpush2.msra.mxu0 0.0
          %5494 = vmatprep.subr.mxu0 0.0
          %5495 = vmatpush2.msra.mxu0 0.0
          %5496 = vmatprep.subr.mxu0 0.0
          %5497 = vmatpush2.msra.mxu0 0.0
          %5498 = vmatprep.subr.mxu0 0.0
          %5499 = vmatpush2.msra.mxu0 0.0
          %5500 = vmatprep.subr.mxu0 0.0
          %5501 = vmatpush2.msra.mxu0 0.0
          %5502 = vmatprep.subr.mxu0 0.0
          %5503 = vmatpush2.msra.mxu0 0.0
          %5504 = vmatprep.subr.mxu0 0.0
          %5505 = vmatpush2.msra.mxu0 0.0
          %5506 = vmatprep.mubr.f32.mxu0 0.0
          %5507 = vmatmul.mubr.f32.gmra.mxu0 %v5440
          %v5508 = vpop.f32.mrf.mxu0
          %v5509 = vadd.f32 0.0, %v5508
          %v5510 = vpop.f32.mrf.mxu0
          %5511 = vdwg.mxu0
          %v5512 = vadd.f32 %v5430, %v5509
          %s5513 = scalar_lea.vmem %s2, 232
          %v5514 = vld [vmem:[%s5513] sm:$0xff]
          %5515 = vrot.lane.b32.xlu0 %v3142, 99
          %v5516 = vpop.permute.xlu0 %5515
          %5517 = vrot.lane.b32.xlu0 %v3140, 99
          %v5518 = vpop.permute.xlu0 %5517
          %v5519 = vsel %vm2781, %v5516, %v5518
          %v5522 = vsel %vm304, %v5514, 0
          %5524 = vmatprep.subr.mxu0 0.0
          %5525 = vmatpush1.msra.mxu0 0.0
          %5526 = vmatprep.subr.mxu0 0.0
          %5527 = vmatpush1.msra.mxu0 0.0
          %5528 = vmatprep.subr.mxu0 0.0
          %5529 = vmatpush1.msra.mxu0 0.0
          %5530 = vmatprep.subr.mxu0 0.0
          %5531 = vmatpush1.msra.mxu0 0.0
          %5532 = vmatprep.subr.mxu0 0.0
          %5533 = vmatpush1.msra.mxu0 0.0
          %5534 = vmatprep.subr.mxu0 0.0
          %5535 = vmatpush1.msra.mxu0 0.0
          %5536 = vmatprep.subr.mxu0 0.0
          %5537 = vmatpush1.msra.mxu0 0.0
          %5538 = vmatprep.subr.mxu0 0.0
          %5539 = vmatpush1.msra.mxu0 0.0
          %5540 = vmatprep.subr.mxu0 0.0
          %5541 = vmatpush1.msra.mxu0 0.0
          %5542 = vmatprep.subr.mxu0 0.0
          %5543 = vmatpush1.msra.mxu0 0.0
          %5544 = vmatprep.subr.mxu0 0.0
          %5545 = vmatpush1.msra.mxu0 0.0
          %5546 = vmatprep.subr.mxu0 0.0
          %5547 = vmatpush1.msra.mxu0 0.0
          %5548 = vmatprep.subr.mxu0 0.0
          %5549 = vmatpush1.msra.mxu0 0.0
          %5550 = vmatprep.subr.mxu0 0.0
          %5551 = vmatpush1.msra.mxu0 0.0
          %5552 = vmatprep.subr.mxu0 0.0
          %5553 = vmatpush1.msra.mxu0 0.0
          %5554 = vmatprep.subr.mxu0 0.0
          %5555 = vmatpush1.msra.mxu0 %v5519
          %5556 = vmatprep.subr.mxu0 0.0
          %5557 = vmatpush2.msra.mxu0 0.0
          %5558 = vmatprep.subr.mxu0 0.0
          %5559 = vmatpush2.msra.mxu0 0.0
          %5560 = vmatprep.subr.mxu0 0.0
          %5561 = vmatpush2.msra.mxu0 0.0
          %5562 = vmatprep.subr.mxu0 0.0
          %5563 = vmatpush2.msra.mxu0 0.0
          %5564 = vmatprep.subr.mxu0 0.0
          %5565 = vmatpush2.msra.mxu0 0.0
          %5566 = vmatprep.subr.mxu0 0.0
          %5567 = vmatpush2.msra.mxu0 0.0
          %5568 = vmatprep.subr.mxu0 0.0
          %5569 = vmatpush2.msra.mxu0 0.0
          %5570 = vmatprep.subr.mxu0 0.0
          %5571 = vmatpush2.msra.mxu0 0.0
          %5572 = vmatprep.subr.mxu0 0.0
          %5573 = vmatpush2.msra.mxu0 0.0
          %5574 = vmatprep.subr.mxu0 0.0
          %5575 = vmatpush2.msra.mxu0 0.0
          %5576 = vmatprep.subr.mxu0 0.0
          %5577 = vmatpush2.msra.mxu0 0.0
          %5578 = vmatprep.subr.mxu0 0.0
          %5579 = vmatpush2.msra.mxu0 0.0
          %5580 = vmatprep.subr.mxu0 0.0
          %5581 = vmatpush2.msra.mxu0 0.0
          %5582 = vmatprep.subr.mxu0 0.0
          %5583 = vmatpush2.msra.mxu0 0.0
          %5584 = vmatprep.subr.mxu0 0.0
          %5585 = vmatpush2.msra.mxu0 0.0
          %5586 = vmatprep.subr.mxu0 0.0
          %5587 = vmatpush2.msra.mxu0 0.0
          %5588 = vmatprep.mubr.f32.mxu0 0.0
          %5589 = vmatmul.mubr.f32.gmra.mxu0 %v5522
          %v5590 = vpop.f32.mrf.mxu0
          %v5591 = vadd.f32 0.0, %v5590
          %v5592 = vpop.f32.mrf.mxu0
          %5593 = vdwg.mxu0
          %v5594 = vadd.f32 %v5512, %v5591
          %s5595 = scalar_lea.vmem %s2, 240
          %v5596 = vld [vmem:[%s5595] sm:$0xff]
          %5597 = vrot.lane.b32.xlu0 %v3142, 98
          %v5598 = vpop.permute.xlu0 %5597
          %5599 = vrot.lane.b32.xlu0 %v3140, 98
          %v5600 = vpop.permute.xlu0 %5599
          %v5601 = vsel %vm2867, %v5598, %v5600
          %v5604 = vsel %vm304, %v5596, 0
          %5606 = vmatprep.subr.mxu0 0.0
          %5607 = vmatpush1.msra.mxu0 0.0
          %5608 = vmatprep.subr.mxu0 0.0
          %5609 = vmatpush1.msra.mxu0 0.0
          %5610 = vmatprep.subr.mxu0 0.0
          %5611 = vmatpush1.msra.mxu0 0.0
          %5612 = vmatprep.subr.mxu0 0.0
          %5613 = vmatpush1.msra.mxu0 0.0
          %5614 = vmatprep.subr.mxu0 0.0
          %5615 = vmatpush1.msra.mxu0 0.0
          %5616 = vmatprep.subr.mxu0 0.0
          %5617 = vmatpush1.msra.mxu0 0.0
          %5618 = vmatprep.subr.mxu0 0.0
          %5619 = vmatpush1.msra.mxu0 0.0
          %5620 = vmatprep.subr.mxu0 0.0
          %5621 = vmatpush1.msra.mxu0 0.0
          %5622 = vmatprep.subr.mxu0 0.0
          %5623 = vmatpush1.msra.mxu0 0.0
          %5624 = vmatprep.subr.mxu0 0.0
          %5625 = vmatpush1.msra.mxu0 0.0
          %5626 = vmatprep.subr.mxu0 0.0
          %5627 = vmatpush1.msra.mxu0 0.0
          %5628 = vmatprep.subr.mxu0 0.0
          %5629 = vmatpush1.msra.mxu0 0.0
          %5630 = vmatprep.subr.mxu0 0.0
          %5631 = vmatpush1.msra.mxu0 0.0
          %5632 = vmatprep.subr.mxu0 0.0
          %5633 = vmatpush1.msra.mxu0 0.0
          %5634 = vmatprep.subr.mxu0 0.0
          %5635 = vmatpush1.msra.mxu0 0.0
          %5636 = vmatprep.subr.mxu0 0.0
          %5637 = vmatpush1.msra.mxu0 %v5601
          %5638 = vmatprep.subr.mxu0 0.0
          %5639 = vmatpush2.msra.mxu0 0.0
          %5640 = vmatprep.subr.mxu0 0.0
          %5641 = vmatpush2.msra.mxu0 0.0
          %5642 = vmatprep.subr.mxu0 0.0
          %5643 = vmatpush2.msra.mxu0 0.0
          %5644 = vmatprep.subr.mxu0 0.0
          %5645 = vmatpush2.msra.mxu0 0.0
          %5646 = vmatprep.subr.mxu0 0.0
          %5647 = vmatpush2.msra.mxu0 0.0
          %5648 = vmatprep.subr.mxu0 0.0
          %5649 = vmatpush2.msra.mxu0 0.0
          %5650 = vmatprep.subr.mxu0 0.0
          %5651 = vmatpush2.msra.mxu0 0.0
          %5652 = vmatprep.subr.mxu0 0.0
          %5653 = vmatpush2.msra.mxu0 0.0
          %5654 = vmatprep.subr.mxu0 0.0
          %5655 = vmatpush2.msra.mxu0 0.0
          %5656 = vmatprep.subr.mxu0 0.0
          %5657 = vmatpush2.msra.mxu0 0.0
          %5658 = vmatprep.subr.mxu0 0.0
          %5659 = vmatpush2.msra.mxu0 0.0
          %5660 = vmatprep.subr.mxu0 0.0
          %5661 = vmatpush2.msra.mxu0 0.0
          %5662 = vmatprep.subr.mxu0 0.0
          %5663 = vmatpush2.msra.mxu0 0.0
          %5664 = vmatprep.subr.mxu0 0.0
          %5665 = vmatpush2.msra.mxu0 0.0
          %5666 = vmatprep.subr.mxu0 0.0
          %5667 = vmatpush2.msra.mxu0 0.0
          %5668 = vmatprep.subr.mxu0 0.0
          %5669 = vmatpush2.msra.mxu0 0.0
          %5670 = vmatprep.mubr.f32.mxu0 0.0
          %5671 = vmatmul.mubr.f32.gmra.mxu0 %v5604
          %v5672 = vpop.f32.mrf.mxu0
          %v5673 = vadd.f32 0.0, %v5672
          %v5674 = vpop.f32.mrf.mxu0
          %5675 = vdwg.mxu0
          %v5676 = vadd.f32 %v5594, %v5673
          %s5677 = scalar_lea.vmem %s2, 248
          %v5678 = vld [vmem:[%s5677] sm:$0xff]
          %5679 = vrot.lane.b32.xlu0 %v3142, 97
          %v5680 = vpop.permute.xlu0 %5679
          %5681 = vrot.lane.b32.xlu0 %v3140, 97
          %v5682 = vpop.permute.xlu0 %5681
          %v5683 = vsel %vm2953, %v5680, %v5682
          %v5686 = vsel %vm304, %v5678, 0
          %5688 = vmatprep.subr.mxu0 0.0
          %5689 = vmatpush1.msra.mxu0 0.0
          %5690 = vmatprep.subr.mxu0 0.0
          %5691 = vmatpush1.msra.mxu0 0.0
          %5692 = vmatprep.subr.mxu0 0.0
          %5693 = vmatpush1.msra.mxu0 0.0
          %5694 = vmatprep.subr.mxu0 0.0
          %5695 = vmatpush1.msra.mxu0 0.0
          %5696 = vmatprep.subr.mxu0 0.0
          %5697 = vmatpush1.msra.mxu0 0.0
          %5698 = vmatprep.subr.mxu0 0.0
          %5699 = vmatpush1.msra.mxu0 0.0
          %5700 = vmatprep.subr.mxu0 0.0
          %5701 = vmatpush1.msra.mxu0 0.0
          %5702 = vmatprep.subr.mxu0 0.0
          %5703 = vmatpush1.msra.mxu0 0.0
          %5704 = vmatprep.subr.mxu0 0.0
          %5705 = vmatpush1.msra.mxu0 0.0
          %5706 = vmatprep.subr.mxu0 0.0
          %5707 = vmatpush1.msra.mxu0 0.0
          %5708 = vmatprep.subr.mxu0 0.0
          %5709 = vmatpush1.msra.mxu0 0.0
          %5710 = vmatprep.subr.mxu0 0.0
          %5711 = vmatpush1.msra.mxu0 0.0
          %5712 = vmatprep.subr.mxu0 0.0
          %5713 = vmatpush1.msra.mxu0 0.0
          %5714 = vmatprep.subr.mxu0 0.0
          %5715 = vmatpush1.msra.mxu0 0.0
          %5716 = vmatprep.subr.mxu0 0.0
          %5717 = vmatpush1.msra.mxu0 0.0
          %5718 = vmatprep.subr.mxu0 0.0
          %5719 = vmatpush1.msra.mxu0 %v5683
          %5720 = vmatprep.subr.mxu0 0.0
          %5721 = vmatpush2.msra.mxu0 0.0
          %5722 = vmatprep.subr.mxu0 0.0
          %5723 = vmatpush2.msra.mxu0 0.0
          %5724 = vmatprep.subr.mxu0 0.0
          %5725 = vmatpush2.msra.mxu0 0.0
          %5726 = vmatprep.subr.mxu0 0.0
          %5727 = vmatpush2.msra.mxu0 0.0
          %5728 = vmatprep.subr.mxu0 0.0
          %5729 = vmatpush2.msra.mxu0 0.0
          %5730 = vmatprep.subr.mxu0 0.0
          %5731 = vmatpush2.msra.mxu0 0.0
          %5732 = vmatprep.subr.mxu0 0.0
          %5733 = vmatpush2.msra.mxu0 0.0
          %5734 = vmatprep.subr.mxu0 0.0
          %5735 = vmatpush2.msra.mxu0 0.0
          %5736 = vmatprep.subr.mxu0 0.0
          %5737 = vmatpush2.msra.mxu0 0.0
          %5738 = vmatprep.subr.mxu0 0.0
          %5739 = vmatpush2.msra.mxu0 0.0
          %5740 = vmatprep.subr.mxu0 0.0
          %5741 = vmatpush2.msra.mxu0 0.0
          %5742 = vmatprep.subr.mxu0 0.0
          %5743 = vmatpush2.msra.mxu0 0.0
          %5744 = vmatprep.subr.mxu0 0.0
          %5745 = vmatpush2.msra.mxu0 0.0
          %5746 = vmatprep.subr.mxu0 0.0
          %5747 = vmatpush2.msra.mxu0 0.0
          %5748 = vmatprep.subr.mxu0 0.0
          %5749 = vmatpush2.msra.mxu0 0.0
          %5750 = vmatprep.subr.mxu0 0.0
          %5751 = vmatpush2.msra.mxu0 0.0
          %5752 = vmatprep.mubr.f32.mxu0 0.0
          %5753 = vmatmul.mubr.f32.gmra.mxu0 %v5686
          %v5754 = vpop.f32.mrf.mxu0
          %v5755 = vadd.f32 0.0, %v5754
          %v5756 = vpop.f32.mrf.mxu0
          %5757 = vdwg.mxu0
          %v5758 = vadd.f32 %v5676, %v5755
          %s5759 = scalar_lea.vmem %s2, 256
          %v5760 = vld [vmem:[%s5759] sm:$0xff]
          %5761 = vrot.lane.b32.xlu0 %v3142, 96
          %v5762 = vpop.permute.xlu0 %5761
          %5763 = vrot.lane.b32.xlu0 %v3140, 96
          %v5764 = vpop.permute.xlu0 %5763
          %v5765 = vsel %vm3039, %v5762, %v5764
          %v5768 = vsel %vm304, %v5760, 0
          %5770 = vmatprep.subr.mxu0 0.0
          %5771 = vmatpush1.msra.mxu0 0.0
          %5772 = vmatprep.subr.mxu0 0.0
          %5773 = vmatpush1.msra.mxu0 0.0
          %5774 = vmatprep.subr.mxu0 0.0
          %5775 = vmatpush1.msra.mxu0 0.0
          %5776 = vmatprep.subr.mxu0 0.0
          %5777 = vmatpush1.msra.mxu0 0.0
          %5778 = vmatprep.subr.mxu0 0.0
          %5779 = vmatpush1.msra.mxu0 0.0
          %5780 = vmatprep.subr.mxu0 0.0
          %5781 = vmatpush1.msra.mxu0 0.0
          %5782 = vmatprep.subr.mxu0 0.0
          %5783 = vmatpush1.msra.mxu0 0.0
          %5784 = vmatprep.subr.mxu0 0.0
          %5785 = vmatpush1.msra.mxu0 0.0
          %5786 = vmatprep.subr.mxu0 0.0
          %5787 = vmatpush1.msra.mxu0 0.0
          %5788 = vmatprep.subr.mxu0 0.0
          %5789 = vmatpush1.msra.mxu0 0.0
          %5790 = vmatprep.subr.mxu0 0.0
          %5791 = vmatpush1.msra.mxu0 0.0
          %5792 = vmatprep.subr.mxu0 0.0
          %5793 = vmatpush1.msra.mxu0 0.0
          %5794 = vmatprep.subr.mxu0 0.0
          %5795 = vmatpush1.msra.mxu0 0.0
          %5796 = vmatprep.subr.mxu0 0.0
          %5797 = vmatpush1.msra.mxu0 0.0
          %5798 = vmatprep.subr.mxu0 0.0
          %5799 = vmatpush1.msra.mxu0 0.0
          %5800 = vmatprep.subr.mxu0 0.0
          %5801 = vmatpush1.msra.mxu0 %v5765
          %5802 = vmatprep.subr.mxu0 0.0
          %5803 = vmatpush2.msra.mxu0 0.0
          %5804 = vmatprep.subr.mxu0 0.0
          %5805 = vmatpush2.msra.mxu0 0.0
          %5806 = vmatprep.subr.mxu0 0.0
          %5807 = vmatpush2.msra.mxu0 0.0
          %5808 = vmatprep.subr.mxu0 0.0
          %5809 = vmatpush2.msra.mxu0 0.0
          %5810 = vmatprep.subr.mxu0 0.0
          %5811 = vmatpush2.msra.mxu0 0.0
          %5812 = vmatprep.subr.mxu0 0.0
          %5813 = vmatpush2.msra.mxu0 0.0
          %5814 = vmatprep.subr.mxu0 0.0
          %5815 = vmatpush2.msra.mxu0 0.0
          %5816 = vmatprep.subr.mxu0 0.0
          %5817 = vmatpush2.msra.mxu0 0.0
          %5818 = vmatprep.subr.mxu0 0.0
          %5819 = vmatpush2.msra.mxu0 0.0
          %5820 = vmatprep.subr.mxu0 0.0
          %5821 = vmatpush2.msra.mxu0 0.0
          %5822 = vmatprep.subr.mxu0 0.0
          %5823 = vmatpush2.msra.mxu0 0.0
          %5824 = vmatprep.subr.mxu0 0.0
          %5825 = vmatpush2.msra.mxu0 0.0
          %5826 = vmatprep.subr.mxu0 0.0
          %5827 = vmatpush2.msra.mxu0 0.0
          %5828 = vmatprep.subr.mxu0 0.0
          %5829 = vmatpush2.msra.mxu0 0.0
          %5830 = vmatprep.subr.mxu0 0.0
          %5831 = vmatpush2.msra.mxu0 0.0
          %5832 = vmatprep.subr.mxu0 0.0
          %5833 = vmatpush2.msra.mxu0 0.0
          %5834 = vmatprep.mubr.f32.mxu0 0.0
          %5835 = vmatmul.mubr.f32.gmra.mxu0 %v5768
          %v5836 = vpop.f32.mrf.mxu0
          %v5837 = vadd.f32 0.0, %v5836
          %v5838 = vpop.f32.mrf.mxu0
          %5839 = vdwg.mxu0
          %v5840 = vadd.f32 %v5758, %v5837
          %5841 = vset.pattern.permute.xlu0 1
          %5842 = vperm.xlu0 %5841, %v258
          %v5843 = vpop.permute.xlu0 %5842
          %v5845 = vadd.f32 %v5840, %v5843
          %v5846 = vand.u32 2147483647, %v5845
          %v5847 = vmul.f32 %v5846, %v266
          %5848 = vadd.xlane.f32.xlu0 %v5847
          %v5849 = vpop.xlane.xlu0 %5848
          %v5850 = vmul.f32 %v5849, 0.0078125
          %5851 = vrot.lane.b32.xlu0 %v258, 126
          %v5852 = vpop.permute.xlu0 %5851
          %v5855 = vsel %vm304, %v256, 0
          %5857 = vmatprep.subr.mxu0 0.0
          %5858 = vmatpush1.msra.mxu0 0.0
          %5859 = vmatprep.subr.mxu0 0.0
          %5860 = vmatpush1.msra.mxu0 0.0
          %5861 = vmatprep.subr.mxu0 0.0
          %5862 = vmatpush1.msra.mxu0 0.0
          %5863 = vmatprep.subr.mxu0 0.0
          %5864 = vmatpush1.msra.mxu0 0.0
          %5865 = vmatprep.subr.mxu0 0.0
          %5866 = vmatpush1.msra.mxu0 0.0
          %5867 = vmatprep.subr.mxu0 0.0
          %5868 = vmatpush1.msra.mxu0 0.0
          %5869 = vmatprep.subr.mxu0 0.0
          %5870 = vmatpush1.msra.mxu0 0.0
          %5871 = vmatprep.subr.mxu0 0.0
          %5872 = vmatpush1.msra.mxu0 0.0
          %5873 = vmatprep.subr.mxu0 0.0
          %5874 = vmatpush1.msra.mxu0 0.0
          %5875 = vmatprep.subr.mxu0 0.0
          %5876 = vmatpush1.msra.mxu0 0.0
          %5877 = vmatprep.subr.mxu0 0.0
          %5878 = vmatpush1.msra.mxu0 0.0
          %5879 = vmatprep.subr.mxu0 0.0
          %5880 = vmatpush1.msra.mxu0 0.0
          %5881 = vmatprep.subr.mxu0 0.0
          %5882 = vmatpush1.msra.mxu0 0.0
          %5883 = vmatprep.subr.mxu0 0.0
          %5884 = vmatpush1.msra.mxu0 0.0
          %5885 = vmatprep.subr.mxu0 0.0
          %5886 = vmatpush1.msra.mxu0 0.0
          %5887 = vmatprep.subr.mxu0 0.0
          %5888 = vmatpush1.msra.mxu0 %v5850
          %5889 = vmatprep.subr.mxu0 0.0
          %5890 = vmatpush2.msra.mxu0 0.0
          %5891 = vmatprep.subr.mxu0 0.0
          %5892 = vmatpush2.msra.mxu0 0.0
          %5893 = vmatprep.subr.mxu0 0.0
          %5894 = vmatpush2.msra.mxu0 0.0
          %5895 = vmatprep.subr.mxu0 0.0
          %5896 = vmatpush2.msra.mxu0 0.0
          %5897 = vmatprep.subr.mxu0 0.0
          %5898 = vmatpush2.msra.mxu0 0.0
          %5899 = vmatprep.subr.mxu0 0.0
          %5900 = vmatpush2.msra.mxu0 0.0
          %5901 = vmatprep.subr.mxu0 0.0
          %5902 = vmatpush2.msra.mxu0 0.0
          %5903 = vmatprep.subr.mxu0 0.0
          %5904 = vmatpush2.msra.mxu0 0.0
          %5905 = vmatprep.subr.mxu0 0.0
          %5906 = vmatpush2.msra.mxu0 0.0
          %5907 = vmatprep.subr.mxu0 0.0
          %5908 = vmatpush2.msra.mxu0 0.0
          %5909 = vmatprep.subr.mxu0 0.0
          %5910 = vmatpush2.msra.mxu0 0.0
          %5911 = vmatprep.subr.mxu0 0.0
          %5912 = vmatpush2.msra.mxu0 0.0
          %5913 = vmatprep.subr.mxu0 0.0
          %5914 = vmatpush2.msra.mxu0 0.0
          %5915 = vmatprep.subr.mxu0 0.0
          %5916 = vmatpush2.msra.mxu0 0.0
          %5917 = vmatprep.subr.mxu0 0.0
          %5918 = vmatpush2.msra.mxu0 0.0
          %5919 = vmatprep.subr.mxu0 0.0
          %5920 = vmatpush2.msra.mxu0 0.0
          %5921 = vmatprep.mubr.f32.mxu0 0.0
          %5922 = vmatmul.mubr.f32.gmra.mxu0 %v5855
          %v5923 = vpop.f32.mrf.mxu0
          %v5924 = vadd.f32 %v5852, %v5923
          %v5925 = vpop.f32.mrf.mxu0
          %5926 = vdwg.mxu0
          %5927 = vrot.lane.b32.xlu0 %v258, 125
          %v5928 = vpop.permute.xlu0 %5927
          %v5930 = vmul.f32 %v5924, %v5928
          %5931 = vrot.lane.b32.xlu0 %v258, 124
          %v5932 = vpop.permute.xlu0 %5931
          %v5934 = vadd.f32 %v5930, %v5932
          %v5935 = vmax.f32 %v5934, 0.0
          %5936 = vrot.lane.b32.xlu0 %v258, 123
          %v5937 = vpop.permute.xlu0 %5936
          %v5940 = vsel %vm304, %v257, 0
          %5942 = vmatprep.subr.mxu0 0.0
          %5943 = vmatpush1.msra.mxu0 0.0
          %5944 = vmatprep.subr.mxu0 0.0
          %5945 = vmatpush1.msra.mxu0 0.0
          %5946 = vmatprep.subr.mxu0 0.0
          %5947 = vmatpush1.msra.mxu0 0.0
          %5948 = vmatprep.subr.mxu0 0.0
          %5949 = vmatpush1.msra.mxu0 0.0
          %5950 = vmatprep.subr.mxu0 0.0
          %5951 = vmatpush1.msra.mxu0 0.0
          %5952 = vmatprep.subr.mxu0 0.0
          %5953 = vmatpush1.msra.mxu0 0.0
          %5954 = vmatprep.subr.mxu0 0.0
          %5955 = vmatpush1.msra.mxu0 0.0
          %5956 = vmatprep.subr.mxu0 0.0
          %5957 = vmatpush1.msra.mxu0 0.0
          %5958 = vmatprep.subr.mxu0 0.0
          %5959 = vmatpush1.msra.mxu0 0.0
          %5960 = vmatprep.subr.mxu0 0.0
          %5961 = vmatpush1.msra.mxu0 0.0
          %5962 = vmatprep.subr.mxu0 0.0
          %5963 = vmatpush1.msra.mxu0 0.0
          %5964 = vmatprep.subr.mxu0 0.0
          %5965 = vmatpush1.msra.mxu0 0.0
          %5966 = vmatprep.subr.mxu0 0.0
          %5967 = vmatpush1.msra.mxu0 0.0
          %5968 = vmatprep.subr.mxu0 0.0
          %5969 = vmatpush1.msra.mxu0 0.0
          %5970 = vmatprep.subr.mxu0 0.0
          %5971 = vmatpush1.msra.mxu0 0.0
          %5972 = vmatprep.subr.mxu0 0.0
          %5973 = vmatpush1.msra.mxu0 %v5935
          %5974 = vmatprep.subr.mxu0 0.0
          %5975 = vmatpush2.msra.mxu0 0.0
          %5976 = vmatprep.subr.mxu0 0.0
          %5977 = vmatpush2.msra.mxu0 0.0
          %5978 = vmatprep.subr.mxu0 0.0
          %5979 = vmatpush2.msra.mxu0 0.0
          %5980 = vmatprep.subr.mxu0 0.0
          %5981 = vmatpush2.msra.mxu0 0.0
          %5982 = vmatprep.subr.mxu0 0.0
          %5983 = vmatpush2.msra.mxu0 0.0
          %5984 = vmatprep.subr.mxu0 0.0
          %5985 = vmatpush2.msra.mxu0 0.0
          %5986 = vmatprep.subr.mxu0 0.0
          %5987 = vmatpush2.msra.mxu0 0.0
          %5988 = vmatprep.subr.mxu0 0.0
          %5989 = vmatpush2.msra.mxu0 0.0
          %5990 = vmatprep.subr.mxu0 0.0
          %5991 = vmatpush2.msra.mxu0 0.0
          %5992 = vmatprep.subr.mxu0 0.0
          %5993 = vmatpush2.msra.mxu0 0.0
          %5994 = vmatprep.subr.mxu0 0.0
          %5995 = vmatpush2.msra.mxu0 0.0
          %5996 = vmatprep.subr.mxu0 0.0
          %5997 = vmatpush2.msra.mxu0 0.0
          %5998 = vmatprep.subr.mxu0 0.0
          %5999 = vmatpush2.msra.mxu0 0.0
          %6000 = vmatprep.subr.mxu0 0.0
          %6001 = vmatpush2.msra.mxu0 0.0
          %6002 = vmatprep.subr.mxu0 0.0
          %6003 = vmatpush2.msra.mxu0 0.0
          %6004 = vmatprep.subr.mxu0 0.0
          %6005 = vmatpush2.msra.mxu0 0.0
          %6006 = vmatprep.mubr.f32.mxu0 0.0
          %6007 = vmatmul.mubr.f32.gmra.mxu0 %v5940
          %v6008 = vpop.f32.mrf.mxu0
          %v6009 = vadd.f32 %v5937, %v6008
          %v6010 = vpop.f32.mrf.mxu0
          %6011 = vdwg.mxu0
          %v6012 = vsub.f32 0.0, %v6009
          %v6013 = vmul.f32 %v6012, 1.442695
          %v6014 = vpow.pop %v6013
          %v6015 = vadd.f32 %v6014, 1.0
          %v6016 = vrcp.pop %v6015
          %v6017 = vmul.f32 1.0, %v6016
          %v6018 = vmul.f32 %v5850, %v6017
          %6020 = vset.pattern.permute.xlu0 0
          %6021 = vperm.xlu0 %6020, %v6018
          %v6022 = vpop.permute.xlu0 %6021
          %v6024 = vsub.f32 %v5845, %v6022
          %v6025 = vmul.f32 %v6024, %v6024
          %v6026 = vadd.f32 %v6025, 0.003
          %v6027 = vrsqrt.pop %v6026
          %v6028 = vmul.f32 %v6026, %v6027
          %vm6029 = vcmp.eq.f32.partialorder %v6026, inf
          %v6030 = vsel %vm6029, %v6026, %v6028
          %vm6031 = vcmp.eq.f32.partialorder %v6026, 0.0
          %v6032 = vand.u32 %v6026, 2147483648
          %v6033 = vsel %vm6031, %v6032, %v6030
          %v6034 = vadd.f32 %v5845, %v6022
          %v6035 = vmul.f32 %v6034, %v6034
          %v6036 = vadd.f32 %v6035, 0.003
          %v6037 = vrsqrt.pop %v6036
          %v6038 = vmul.f32 %v6036, %v6037
          %vm6039 = vcmp.eq.f32.partialorder %v6036, inf
          %v6040 = vsel %vm6039, %v6036, %v6038
          %vm6041 = vcmp.eq.f32.partialorder %v6036, 0.0
          %v6042 = vand.u32 %v6036, 2147483648
          %v6043 = vsel %vm6041, %v6042, %v6040
          %v6044 = vsub.f32 %v6033, %v6043
          %v6045 = vmul.f32 %v6044, 0.5
          %v6046 = vadd.f32 %v5845, %v6045
          %6048 = vrot.lane.b32.xlu0 %v6046, 1
          %v6049 = vpop.permute.xlu0 %6048
          %v6051 = vadd.f32 %v288, %v6049
          %v6052 = vadd.f32 %v290, %v6049
          %v6053 = vmax.f32 %v6051, 0.0
          %v6054 = vmax.f32 %v6052, 0.0
          %6057 = vrot.lane.b32.xlu0 %v6053, 127
          %v6058 = vpop.permute.xlu0 %6057
          %6059 = vrot.lane.b32.xlu0 %v6054, 127
          %v6060 = vpop.permute.xlu0 %6059
          %v6061 = vsel %vm300, %v6058, %v6060
          %s6063 = smul.u32 %s268, 8
          %s6064 = scalar_lea.vmem %s247, %s6063 [#allocation2]
          %6065 = vst [vmem:[%s6064] sm:$0xff] %v6061
        $region49: #{tpu_custom_call.1} parent=43 // loop_footer
          %s272 = sadd.s32 1, %s268
        $region50: #{tpu_custom_call.1} parent=43 // loop_footer_branch
          %267 = sbr.rel target = $region46
        $region51: #{tpu_custom_call.1} parent=43 // loop_exit
          _
        %s6066 = sand.u32 %s159, 1
        %s6067 = scalar_lea.sflag [#allocation3], %s6066
        %s6068 = sand.u32 %s159, 1
        %s6069 = smul.addr %s6068, 32
        %s6070 = scalar_lea.vmem [#allocation2], %s6069
        // Predicated region
        $region52: #{tpu_custom_call.1} parent=43 // pred_check
          %p6071 = pneg %p169
        $region53: #{tpu_custom_call.1} parent=43 // pred_check_branch
          %6073 = sbr.rel (%p6071) target = $region55
        $region54: #{tpu_custom_call.1} parent=43 // pred_region
          %s6074 = smul.u32 4, %s20
          %s6076 = ssub.s32 512, 512
          %6077 = vsyncadd %s6067, %s6076
          %s6078 = smul.addr %s6074, 128
          %s6079 = scalar_lea.hbm %s6, %s6078
          %s6080 = sshll.u32 %s6070, 4
          %s6081 = int_to_ptr.vmem [resolvable:$true] %s6080
          %6086 = dma.vmem_to_hbm [thread:$0]  %s6081, 512, %s6079, %s6067, 128, 128, 8
        $region55: #{tpu_custom_call.1} parent=43 // pred_fallthru
          _
      $region44: #{tpu_custom_call.1} parent=5 // pred_fallthru
        _
      %p6087 = scmp.le.s32.totalorder 2, %s15
      // Predicated region
      $region56: #{tpu_custom_call.1} parent=5 // pred_check
        %p6088 = pneg %p6087
      $region57: #{tpu_custom_call.1} parent=5 // pred_check_branch
        %6090 = sbr.rel (%p6088) target = $region59
      $region58: #{tpu_custom_call.1} parent=5 // pred_region
        %s6091 = ssub.s32 %s15, 2
        // Predicated region
        $region60: #{tpu_custom_call.1} parent=58 // pred_check
          %p6092 = pneg %p175
        $region61: #{tpu_custom_call.1} parent=58 // pred_check_branch
          %6094 = sbr.rel (%p6092) target = $region63
        $region62: #{tpu_custom_call.1} parent=58 // pred_region
          %s6095 = sand.u32 %s160, 1
          %s6096 = scalar_lea.sflag [#allocation3], %s6095
          %s6097 = sand.u32 %s160, 1
          %s6098 = smul.addr %s6097, 32
          %s6099 = scalar_lea.vmem [#allocation2], %s6098
          %6100 = dma.done %s6096, 512
        $region63: #{tpu_custom_call.1} parent=58 // pred_fallthru
          _
      $region59: #{tpu_custom_call.1} parent=5 // pred_fallthru
        _
    $region6: #{tpu_custom_call.1} parent=1 // loop_footer
      %s19 = sadd.s32 1, %s15
    $region7: #{tpu_custom_call.1} parent=1 // loop_footer_branch
      %14 = sbr.rel target = $region3
    $region8: #{tpu_custom_call.1} parent=1 // loop_exit
      _
    %6101 = vsyncpa [#allocation3], 1
    %s6102 = scalar_lea.sflag [#allocation3], 1
    %6103 = vsyncpa %s6102, 1

</llo_original>
